<compile_context>
chip_gen: v6e
topology: v6e:2x2x1
jax: 0.10.0
libtpu: 0.0.40
codegen_flags: <defaults>
</compile_context>

<pallas_src>
import math

import numpy as np
import jax
import jax.numpy as jnp
from jax import lax
from jax.experimental import pallas as pl
from jax.experimental.pallas import tpu as pltpu

# ---- small, module-consistent config -------------------------------------
B = 2              # batch
T = 16             # sequence length (time)
BT = B * T
IN_DIM = 768       # phone feature dim (fixed by the module name)
HIDDEN = 64        # hidden_channels
FILTER = 128       # filter_channels
N_HEADS = 2
N_LAYERS = 2
KERNEL_SIZE = 3    # FFN conv kernel size
OUT_CHANNELS = 4
WINDOW = 10        # VITS relative-attention window_size (Encoder default)
KC = HIDDEN // N_HEADS
BH = B * N_HEADS
BHT = BH * T

VW = 3 * HIDDEN            # vector-slab lane width (widest vector = bqkv)
N_GLOBAL_VEC_ROWS = 2      # row 0: emb_phone_b, row 1: proj_b
N_VEC_ROWS_PER_LAYER = 8   # bqkv, bo, ln1_g, ln1_b, b1, b2, ln2_g, ln2_b


# ---------------------------------------------------------------------------
# Fused kernel: embed -> N_LAYERS x (rel-pos MHA + LN, FFN + LN) -> proj
# ---------------------------------------------------------------------------
def _fused_encoder_kernel(lengths_ref, phone_ref, embw_ref, pemb_ref,
                          expk_ref, expt_ref, attnw_ref, relk_ref, relv_ref,
                          ffn1_ref, ffn2_ref, vec_ref, out_ref):
    scale = math.sqrt(HIDDEN)

    # ---- masks built once from SMEM lengths --------------------------------
    t_col = lax.broadcasted_iota(jnp.int32, (T, 1), 0)      # (T, 1)
    t_row = lax.broadcasted_iota(jnp.int32, (1, T), 1)      # (1, T)
    mcol_b, bias_bh = [], []
    for bi in range(B):
        ln = lengths_ref[bi]
        mc = (t_col < ln).astype(jnp.float32)                # (T, 1)
        mr = (t_row < ln).astype(jnp.float32)                # (1, T)
        mcol_b.append(mc)
        # additive attention-mask bias (masked keys get -1e4); since x is re-masked at
        # each layer top this is numerically equivalent to VITS masked_fill for valid rows.
        bias_bh += [-1e4 * (1.0 - mc * mr)] * N_HEADS        # per (b, h) block
    mcol = jnp.concatenate(mcol_b, axis=0)                   # (BT, 1)
    mask_bias = jnp.concatenate(bias_bh, axis=0).reshape(BH, T, T)
    t_idx = jnp.concatenate([t_col] * B, axis=0)             # (BT, 1)
    ok_m = (t_idx >= 1).astype(jnp.float32)                  # row t-1 exists in-sequence
    ok_p = (t_idx < (T - 1)).astype(jnp.float32)             # row t+1 exists in-sequence

    # ---- embed: Linear(768->H) [bf16 MXU operands] + pitch + *sqrt(H) + LeakyReLU ----
    x = jnp.dot(phone_ref[...], embw_ref[...], preferred_element_type=jnp.float32)
    x = (x + vec_ref[0:1, 0:HIDDEN] + pemb_ref[...]) * scale
    x = jnp.where(x > 0, x, 0.1 * x)                         # LeakyReLU(0.1)

    # ---- encoder layers -----------------------------------------------------
    for li in range(N_LAYERS):
        aw = attnw_ref[li * HIDDEN:(li + 1) * HIDDEN, :]     # (H, 4H) = [wqkv | wo]
        wqkv = aw[:, 0:3 * HIDDEN]
        wo = aw[:, 3 * HIDDEN:4 * HIDDEN]
        vr = N_GLOBAL_VEC_ROWS + li * N_VEC_ROWS_PER_LAYER
        bqkv = vec_ref[vr + 0:vr + 1, 0:3 * HIDDEN]
        bo   = vec_ref[vr + 1:vr + 2, 0:HIDDEN]
        g1   = vec_ref[vr + 2:vr + 3, 0:HIDDEN]
        be1  = vec_ref[vr + 3:vr + 4, 0:HIDDEN]
        c1b  = vec_ref[vr + 4:vr + 5, 0:FILTER]
        c2b  = vec_ref[vr + 5:vr + 6, 0:HIDDEN]
        g2   = vec_ref[vr + 6:vr + 7, 0:HIDDEN]
        be2  = vec_ref[vr + 7:vr + 8, 0:HIDDEN]
        rk_flat = relk_ref[li * T * KC:(li + 1) * T * KC, :]              # (T*KC, T)
        rv_flat = relv_ref[li * T * T:(li + 1) * T * T, :]                # (T*T, KC)
        w1 = ffn1_ref[li * KERNEL_SIZE * HIDDEN:(li + 1) * KERNEL_SIZE * HIDDEN, :]
        w2 = ffn2_ref[li * KERNEL_SIZE * FILTER:(li + 1) * KERNEL_SIZE * FILTER, :]

        x = x * mcol                      # VITS: x = x * x_mask at the top of every layer

        # --- multi-head attention with VITS relative-position bias ---
        # fused QKV (wq/bq already scaled by 1/sqrt(KC) at pack time)
        qkv = jnp.dot(x, wqkv, preferred_element_type=jnp.float32) + bqkv  # (BT, 3H)

        # stack heads along sublanes once per layer; block order (b0h0, b0h1, b1h0, b1h1)
        qb, kb, vb = [], [], []
        for bi in range(B):
            for h in range(N_HEADS):
                r0, c0 = bi * T, h * KC
                qb.append(qkv[r0:r0 + T, c0:c0 + KC])
                kb.append(qkv[r0:r0 + T, HIDDEN + c0:HIDDEN + c0 + KC])
                vb.append(qkv[r0:r0 + T, 2 * HIDDEN + c0:2 * HIDDEN + c0 + KC])
        q_stack = jnp.concatenate(qb, axis=0)                              # (BHT, KC)
        k_stack = jnp.concatenate(kb, axis=0)
        v_stack = jnp.concatenate(vb, axis=0)
        q3 = q_stack.reshape(BH, T, KC)
        k3 = k_stack.reshape(BH, T, KC)
        v3 = v_stack.reshape(BH, T, KC)

        # batched scores for all (b, h) blocks
        scores = jnp.einsum('bqd,bkd->bqk', q3, k3,
                            preferred_element_type=jnp.float32)            # (BH, T, T)
        # relative-key bias: scores[i,j] += q[i] . rel_k[j-i+W] (0 outside window),
        # batched over all (b, h) via the clamp+mask expansion matmuls.
        q_exp = jnp.dot(q_stack, expk_ref[0:KC, :],
                        preferred_element_type=jnp.float32) * expk_ref[KC:KC + BHT, :]
        rel_k_bias = jnp.dot(q_exp, rk_flat, preferred_element_type=jnp.float32)
        scores = scores + rel_k_bias.reshape(BH, T, T) + mask_bias

        # softmax over keys (dropout = identity); divide on the EUP slot
        smax = jnp.max(scores, axis=-1, keepdims=True)
        e = jnp.exp(scores - smax)
        p = e * pl.reciprocal(jnp.sum(e, axis=-1, keepdims=True), approx=True)

        out3 = jnp.einsum('bqk,bkd->bqd', p, v3,
                          preferred_element_type=jnp.float32)               # (BH, T, KC)
        # relative-value term: out[i] += sum_j p[i,j] * rel_v[j-i+W]
        p_exp = jnp.dot(p.reshape(BHT, T), expt_ref[0:T, :],
                        preferred_element_type=jnp.float32) * expt_ref[T:T + BHT, :]
        out_stack = out3.reshape(BHT, KC) + jnp.dot(p_exp, rv_flat,
                                                    preferred_element_type=jnp.float32)

        # merge heads back to (BT, H) and apply the 1x1 output conv in ONE matmul
        merged = jnp.concatenate(
            [jnp.concatenate(
                [out_stack[(bi * N_HEADS + h) * T:(bi * N_HEADS + h + 1) * T, :]
                 for h in range(N_HEADS)], axis=1)
             for bi in range(B)], axis=0)                                   # (BT, H)
        y = jnp.dot(merged, wo, preferred_element_type=jnp.float32) + bo

        # residual + LayerNorm over channels (eps = 1e-5)
        z = x + y
        mean = jnp.mean(z, axis=-1, keepdims=True)
        var = jnp.mean((z - mean) ** 2, axis=-1, keepdims=True)
        x = (z - mean) * lax.rsqrt(var + 1e-5) * g1 + be1

        # --- FFN: Conv1d(k=3, same) -> ReLU -> Conv1d(k=3, same), masked ---
        # conv taps realized as XLU sublane rolls + boundary masks, lane-concatenated so
        # each conv is a single matmul against a (3*in, out) weight.
        xm = x * mcol
        xcat = jnp.concatenate(
            [pltpu.roll(xm, shift=1, axis=0) * ok_m,          # tap dt=0  -> x[t-1]
             xm,                                              # tap dt=1  -> x[t]
             pltpu.roll(xm, shift=BT - 1, axis=0) * ok_p],    # tap dt=2  -> x[t+1]
            axis=1)                                           # (BT, 3H)
        y1 = jnp.dot(xcat, w1, preferred_element_type=jnp.float32) + c1b
        y1 = jnp.maximum(y1, 0.0) * mcol                      # relu (dropout = id) + mask
        ycat = jnp.concatenate(
            [pltpu.roll(y1, shift=1, axis=0) * ok_m,
             y1,
             pltpu.roll(y1, shift=BT - 1, axis=0) * ok_p],
            axis=1)                                           # (BT, 3F)
        y2 = (jnp.dot(ycat, w2, preferred_element_type=jnp.float32) + c2b) * mcol

        # residual + LayerNorm over channels
        z = x + y2
        mean = jnp.mean(z, axis=-1, keepdims=True)
        var = jnp.mean((z - mean) ** 2, axis=-1, keepdims=True)
        x = (z - mean) * lax.rsqrt(var + 1e-5) * g2 + be2

    # ---- final mask + proj Conv1d(1x1) + mask ----
    xm = x * mcol                                             # encoder's trailing x * x_mask
    proj_w = attnw_ref[N_LAYERS * HIDDEN:N_LAYERS * HIDDEN + HIDDEN, 0:2 * OUT_CHANNELS]
    proj_b = vec_ref[1:2, 0:2 * OUT_CHANNELS]
    out_ref[...] = (jnp.dot(xm, proj_w, preferred_element_type=jnp.float32) + proj_b) * mcol


# ---------------------------------------------------------------------------
# single pallas_call wrapper (grid-less, whole arrays resident in VMEM/SMEM)
# ---------------------------------------------------------------------------
def _fused_call(args, out_shape):
    in_specs = [pl.BlockSpec(memory_space=pltpu.MemorySpace.SMEM)]          # lengths
    in_specs += [pl.BlockSpec(memory_space=pltpu.MemorySpace.VMEM)] * (len(args) - 1)
    return pl.pallas_call(
        _fused_encoder_kernel,
        out_shape=out_shape,
        in_specs=in_specs,
        out_specs=pl.BlockSpec(memory_space=pltpu.MemorySpace.VMEM),
        compiler_params=pltpu.CompilerParams(vmem_limit_bytes=16 * 1024 * 1024),
    )(*args)


# ---------------------------------------------------------------------------
# weight-layout preprocessing (plain JAX / numpy, one-time parameter transform)
# ---------------------------------------------------------------------------
def _expansion_constants():
    """Constant matrices used to turn the relative-position bias into batched matmuls."""
    kk = np.arange(T * KC)
    tile_k = (kk[None, :] % KC == np.arange(KC)[:, None]).astype(np.float32)   # (KC, T*KC)
    iexp_k = (kk[None, :] // KC == np.arange(T)[:, None]).astype(np.float32)   # (T,  T*KC)
    tt = np.arange(T * T)
    tile_t = (tt[None, :] % T == np.arange(T)[:, None]).astype(np.float32)     # (T,  T*T)
    iexp_t = (tt[None, :] // T == np.arange(T)[:, None]).astype(np.float32)    # (T,  T*T)
    iexp_k_bh = np.tile(iexp_k, (BH, 1))                                       # (BHT, T*KC)
    iexp_t_bh = np.tile(iexp_t, (BH, 1))                                       # (BHT, T*T)
    return (jnp.asarray(tile_k), jnp.asarray(iexp_k_bh),
            jnp.asarray(tile_t), jnp.asarray(iexp_t_bh))


def _rel_abs_expand(rel):
    """(2W+1, KC) -> (T, T, KC): E[i, j] = rel[j-i+W] inside the window, 0 outside
    (clamp + mask, matching VITS's zero-padded relative embeddings)."""
    d = jnp.arange(T)[None, :] - jnp.arange(T)[:, None] + WINDOW
    valid = ((d >= 0) & (d <= 2 * WINDOW)).astype(jnp.float32)
    dcl = jnp.clip(d, 0, 2 * WINDOW)
    return rel[dcl] * valid[..., None]


def _rel_flat_k(rel_k):
    e = _rel_abs_expand(rel_k)                                        # (T, T, KC)
    return jnp.transpose(e, (0, 2, 1)).reshape(T * KC, T)             # [(i, c), j]


def _rel_flat_v(rel_v):
    e = _rel_abs_expand(rel_v)                                        # (T, T, KC)
    return e.reshape(T * T, KC)                                       # [(i, j), c]


def _vrow(v):
    r = jnp.zeros((1, VW), jnp.float32)
    return r.at[:, :v.shape[1]].set(v)


def pack_params(params):
    """Fold scalings into weights and pack everything into a few VMEM slabs."""
    layers = params["layers"]
    q_scale = 1.0 / math.sqrt(KC)

    attn_rows = []
    for lay in layers:
        wqkv = jnp.concatenate([lay["wq"] * q_scale, lay["wk"], lay["wv"]], axis=1)
        attn_rows.append(jnp.concatenate([wqkv, lay["wo"]], axis=1))              # (H, 4H)
    proj_block = jnp.zeros((HIDDEN, 4 * HIDDEN), jnp.float32)
    proj_block = proj_block.at[:, :2 * OUT_CHANNELS].set(params["proj_w"])
    attn_slab = jnp.concatenate(attn_rows + [proj_block], axis=0)                 # (L*H+H, 4H)

    relk_slab = jnp.concatenate([_rel_flat_k(l["rel_k"]) for l in layers], axis=0)
    relv_slab = jnp.concatenate([_rel_flat_v(l["rel_v"]) for l in layers], axis=0)
    ffn1_slab = jnp.concatenate(
        [l["w1"].reshape(KERNEL_SIZE * HIDDEN, FILTER) for l in layers], axis=0)
    ffn2_slab = jnp.concatenate(
        [l["w2"].reshape(KERNEL_SIZE * FILTER, HIDDEN) for l in layers], axis=0)

    vec_rows = [_vrow(params["emb_phone_b"]), _vrow(params["proj_b"])]
    for lay in layers:
        bqkv = jnp.concatenate([lay["bq"] * q_scale, lay["bk"], lay["bv"]], axis=1)
        vec_rows += [_vrow(bqkv), _vrow(lay["bo"]), _vrow(lay["ln1_g"]), _vrow(lay["ln1_b"]),
                     _vrow(lay["b1"]), _vrow(lay["b2"]), _vrow(lay["ln2_g"]), _vrow(lay["ln2_b"])]
    vec_slab = jnp.concatenate(vec_rows, axis=0)

    tile_k, iexp_k_bh, tile_t, iexp_t_bh = _expansion_constants()
    expk_slab = jnp.concatenate([tile_k, iexp_k_bh], axis=0)          # (KC+BHT, T*KC)
    expt_slab = jnp.concatenate([tile_t, iexp_t_bh], axis=0)          # (T+BHT,  T*T)

    return {
        "emb_phone_w": params["emb_phone_w"].astype(jnp.bfloat16),    # bf16 MXU operand
        "emb_pitch": params["emb_pitch"],
        "attn_slab": attn_slab, "relk_slab": relk_slab, "relv_slab": relv_slab,
        "ffn1_slab": ffn1_slab, "ffn2_slab": ffn2_slab, "vec_slab": vec_slab,
        "expk_slab": expk_slab, "expt_slab": expt_slab,
    }


# ---------------------------------------------------------------------------
# Parameters (deterministic synthetic init; shapes follow the nn.Module)
# ---------------------------------------------------------------------------
def init_params(key):
    keys = iter(jax.random.split(key, 64))

    def nrm(shape, scale):
        return (scale * jax.random.normal(next(keys), shape)).astype(jnp.float32)

    params = {
        # nn.Linear(768, H): stored pre-transposed so kernel does x @ W
        "emb_phone_w": nrm((IN_DIM, HIDDEN), IN_DIM ** -0.5),
        "emb_phone_b": nrm((1, HIDDEN), 0.02),
        # nn.Embedding(256, H)
        "emb_pitch": nrm((256, HIDDEN), 0.1),
        # nn.Conv1d(H, 2*out, 1): weight stored pre-transposed (H, 2*out)
        "proj_w": nrm((HIDDEN, 2 * OUT_CHANNELS), HIDDEN ** -0.5),
        "proj_b": nrm((1, 2 * OUT_CHANNELS), 0.02),
        "layers": [],
    }
    for _ in range(N_LAYERS):
        lay = {
            # 1x1 conv_q/k/v/o weights stored pre-transposed (in, out)
            "wq": nrm((HIDDEN, HIDDEN), HIDDEN ** -0.5), "bq": nrm((1, HIDDEN), 0.02),
            "wk": nrm((HIDDEN, HIDDEN), HIDDEN ** -0.5), "bk": nrm((1, HIDDEN), 0.02),
            "wv": nrm((HIDDEN, HIDDEN), HIDDEN ** -0.5), "bv": nrm((1, HIDDEN), 0.02),
            "wo": nrm((HIDDEN, HIDDEN), HIDDEN ** -0.5), "bo": nrm((1, HIDDEN), 0.02),
            # emb_rel_k / emb_rel_v: (1, 2W+1, KC) shared across heads -> stored (2W+1, KC)
            "rel_k": nrm((2 * WINDOW + 1, KC), KC ** -0.5),
            "rel_v": nrm((2 * WINDOW + 1, KC), KC ** -0.5),
            "ln1_g": jnp.ones((1, HIDDEN), jnp.float32),
            "ln1_b": jnp.zeros((1, HIDDEN), jnp.float32),
            # FFN conv_1 (F, H, k) / conv_2 (H, F, k) stored as per-tap (k, in, out)
            "w1": nrm((KERNEL_SIZE, HIDDEN, FILTER), (HIDDEN * KERNEL_SIZE) ** -0.5),
            "b1": nrm((1, FILTER), 0.02),
            "w2": nrm((KERNEL_SIZE, FILTER, HIDDEN), (FILTER * KERNEL_SIZE) ** -0.5),
            "b2": nrm((1, HIDDEN), 0.02),
            "ln2_g": jnp.ones((1, HIDDEN), jnp.float32),
            "ln2_b": jnp.zeros((1, HIDDEN), jnp.float32),
        }
        params["layers"].append(lay)
    return params


# ---------------------------------------------------------------------------
# Forward (glue: gather, flatten, arg packing, final transpose/split)
# ---------------------------------------------------------------------------
def text_encoder_768_forward(packed, phone, pitch, lengths):
    pemb = jnp.take(packed["emb_pitch"], pitch, axis=0).reshape(BT, HIDDEN)   # gather glue
    phone_flat = phone.reshape(BT, IN_DIM).astype(jnp.bfloat16)               # bf16 MXU operand
    lengths = lengths.astype(jnp.int32)

    args = [lengths, phone_flat, packed["emb_phone_w"], pemb,
            packed["expk_slab"], packed["expt_slab"], packed["attn_slab"],
            packed["relk_slab"], packed["relv_slab"],
            packed["ffn1_slab"], packed["ffn2_slab"], packed["vec_slab"]]

    stats = _fused_call(args,
                        jax.ShapeDtypeStruct((BT, 2 * OUT_CHANNELS), jnp.float32))

    # back to PyTorch channels-first layout and split
    stats_pt = jnp.transpose(stats.reshape(B, T, 2 * OUT_CHANNELS), (0, 2, 1))
    m = stats_pt[:, :OUT_CHANNELS, :]
    logs = stats_pt[:, OUT_CHANNELS:, :]
    x_mask = (jnp.arange(T)[None, :] < lengths[:, None]).astype(jnp.float32)[:, None, :]
    return m, logs, x_mask


if __name__ == "__main__":
    key = jax.random.PRNGKey(0)
    k_params, k_phone, k_pitch = jax.random.split(key, 3)
    params = init_params(k_params)
    packed = pack_params(params)                      # one-time parameter transform

    phone = jax.random.normal(k_phone, (B, T, IN_DIM), jnp.float32)
    pitch = jax.random.randint(k_pitch, (B, T), 0, 256, dtype=jnp.int32)
    lengths = jnp.array([T, T - 5], dtype=jnp.int32)

    m, logs, x_mask = text_encoder_768_forward(packed, phone, pitch, lengths)
    jax.block_until_ready((m, logs, x_mask))

    assert m.shape == (B, OUT_CHANNELS, T)
    assert logs.shape == (B, OUT_CHANNELS, T)
    assert x_mask.shape == (B, 1, T)
    assert bool(jnp.all(jnp.isfinite(m))) and bool(jnp.all(jnp.isfinite(logs)))
    print("KERNEL_OK")
</pallas_src>

<mosaic_0001>
module attributes {stable_mosaic.version = 11 : i64} {
  func.func @_fused_encoder_kernel(%arg0: memref<2xi32, #tpu.memory_space<smem>>, %arg1: memref<32x768xbf16, #tpu.memory_space<vmem>>, %arg2: memref<768x64xbf16, #tpu.memory_space<vmem>>, %arg3: memref<32x64xf32, #tpu.memory_space<vmem>>, %arg4: memref<96x512xf32, #tpu.memory_space<vmem>>, %arg5: memref<80x256xf32, #tpu.memory_space<vmem>>, %arg6: memref<192x256xf32, #tpu.memory_space<vmem>>, %arg7: memref<1024x16xf32, #tpu.memory_space<vmem>>, %arg8: memref<512x32xf32, #tpu.memory_space<vmem>>, %arg9: memref<384x128xf32, #tpu.memory_space<vmem>>, %arg10: memref<768x64xf32, #tpu.memory_space<vmem>>, %arg11: memref<18x192xf32, #tpu.memory_space<vmem>>, %arg12: memref<32x8xf32, #tpu.memory_space<vmem>>) attributes {dimension_semantics = [], scalar_prefetch = 0 : i64, scratch_operands = 0 : i64, tpu.core_type = #tpu.core_type<tc>} {
    %0 = tpu.iota {dimensions = array<i32: 0>} : vector<16x1xi32>
    %1 = tpu.iota {dimensions = array<i32: 1>} : vector<1x16xi32>
    %c0 = arith.constant 0 : index
    %2 = memref.load %arg0[%c0] : memref<2xi32, #tpu.memory_space<smem>>
    %3 = vector.broadcast %2 : i32 to vector<16x1xi32>
    %4 = arith.cmpi slt, %0, %3 : vector<16x1xi32>
    %5 = arith.extui %4 : vector<16x1xi1> to vector<16x1xi32>
    %6 = arith.sitofp %5 : vector<16x1xi32> to vector<16x1xf32>
    %7 = vector.broadcast %2 : i32 to vector<1x16xi32>
    %8 = arith.cmpi slt, %1, %7 : vector<1x16xi32>
    %9 = arith.extui %8 : vector<1x16xi1> to vector<1x16xi32>
    %10 = arith.sitofp %9 : vector<1x16xi32> to vector<1x16xf32>
    %11 = vector.broadcast %6 : vector<16x1xf32> to vector<16x16xf32>
    %12 = vector.broadcast %10 : vector<1x16xf32> to vector<16x16xf32>
    %13 = arith.mulf %11, %12 : vector<16x16xf32>
    %cst = arith.constant 1.000000e+00 : f32
    %14 = vector.broadcast %cst : f32 to vector<16x16xf32>
    %15 = arith.subf %14, %13 : vector<16x16xf32>
    %cst_0 = arith.constant -1.000000e+04 : f32
    %16 = vector.broadcast %cst_0 : f32 to vector<16x16xf32>
    %17 = arith.mulf %16, %15 : vector<16x16xf32>
    %c1 = arith.constant 1 : index
    %18 = memref.load %arg0[%c1] : memref<2xi32, #tpu.memory_space<smem>>
    %19 = vector.broadcast %18 : i32 to vector<16x1xi32>
    %20 = arith.cmpi slt, %0, %19 : vector<16x1xi32>
    %21 = arith.extui %20 : vector<16x1xi1> to vector<16x1xi32>
    %22 = arith.sitofp %21 : vector<16x1xi32> to vector<16x1xf32>
    %23 = vector.broadcast %18 : i32 to vector<1x16xi32>
    %24 = arith.cmpi slt, %1, %23 : vector<1x16xi32>
    %25 = arith.extui %24 : vector<1x16xi1> to vector<1x16xi32>
    %26 = arith.sitofp %25 : vector<1x16xi32> to vector<1x16xf32>
    %27 = vector.broadcast %22 : vector<16x1xf32> to vector<16x16xf32>
    %28 = vector.broadcast %26 : vector<1x16xf32> to vector<16x16xf32>
    %29 = arith.mulf %27, %28 : vector<16x16xf32>
    %cst_1 = arith.constant 1.000000e+00 : f32
    %30 = vector.broadcast %cst_1 : f32 to vector<16x16xf32>
    %31 = arith.subf %30, %29 : vector<16x16xf32>
    %cst_2 = arith.constant -1.000000e+04 : f32
    %32 = vector.broadcast %cst_2 : f32 to vector<16x16xf32>
    %33 = arith.mulf %32, %31 : vector<16x16xf32>
    %34 = tpu.concatenate %6, %22 in 0 : vector<16x1xf32>, vector<16x1xf32> -> vector<32x1xf32>
    %35 = tpu.concatenate %17, %17, %33, %33 in 0 : vector<16x16xf32>, vector<16x16xf32>, vector<16x16xf32>, vector<16x16xf32> -> vector<64x16xf32>
    %36 = vector.shape_cast %35 : vector<64x16xf32> to vector<4x16x16xf32>
    %37 = tpu.concatenate %0, %0 in 0 : vector<16x1xi32>, vector<16x1xi32> -> vector<32x1xi32>
    %c1_i32 = arith.constant 1 : i32
    %38 = vector.broadcast %c1_i32 : i32 to vector<32x1xi32>
    %39 = arith.cmpi sge, %37, %38 : vector<32x1xi32>
    %40 = arith.extui %39 : vector<32x1xi1> to vector<32x1xi32>
    %41 = arith.sitofp %40 : vector<32x1xi32> to vector<32x1xf32>
    %c15_i32 = arith.constant 15 : i32
    %42 = vector.broadcast %c15_i32 : i32 to vector<32x1xi32>
    %43 = arith.cmpi slt, %37, %42 : vector<32x1xi32>
    %44 = arith.extui %43 : vector<32x1xi1> to vector<32x1xi32>
    %45 = arith.sitofp %44 : vector<32x1xi32> to vector<32x1xf32>
    %c0_3 = arith.constant 0 : index
    %c0_4 = arith.constant 0 : index
    %46 = vector.load %arg1[%c0_3, %c0_4] : memref<32x768xbf16, #tpu.memory_space<vmem>>, vector<32x768xbf16>
    %c0_5 = arith.constant 0 : index
    %c0_6 = arith.constant 0 : index
    %47 = vector.load %arg2[%c0_5, %c0_6] : memref<768x64xbf16, #tpu.memory_space<vmem>>, vector<768x64xbf16>
    %cst_7 = arith.constant dense<0.000000e+00> : vector<32x64xf32>
    %48 = tpu.matmul %46, %47, %cst_7 {dimension_numbers = #tpu.dot_dimension_numbers<[1], [0], [0], [1], [0, 0, 1, 1], [], []>} : vector<32x768xbf16>, vector<768x64xbf16>, vector<32x64xf32> -> vector<32x64xf32>
    %c0_8 = arith.constant 0 : index
    %c0_9 = arith.constant 0 : index
    %49 = vector.load %arg11[%c0_8, %c0_9] : memref<18x192xf32, #tpu.memory_space<vmem>>, vector<1x64xf32>
    %50 = vector.broadcast %49 : vector<1x64xf32> to vector<32x64xf32>
    %51 = arith.addf %48, %50 : vector<32x64xf32>
    %c0_10 = arith.constant 0 : index
    %c0_11 = arith.constant 0 : index
    %52 = vector.load %arg3[%c0_10, %c0_11] : memref<32x64xf32, #tpu.memory_space<vmem>>, vector<32x64xf32>
    %53 = arith.addf %51, %52 : vector<32x64xf32>
    %cst_12 = arith.constant 8.000000e+00 : f32
    %54 = vector.broadcast %cst_12 : f32 to vector<32x64xf32>
    %55 = arith.mulf %53, %54 : vector<32x64xf32>
    %cst_13 = arith.constant 0.000000e+00 : f32
    %56 = vector.broadcast %cst_13 : f32 to vector<32x64xf32>
    %57 = arith.cmpf ogt, %55, %56 : vector<32x64xf32>
    %cst_14 = arith.constant 1.000000e-01 : f32
    %58 = vector.broadcast %cst_14 : f32 to vector<32x64xf32>
    %59 = arith.mulf %58, %55 : vector<32x64xf32>
    %60 = arith.select %57, %55, %59 : vector<32x64xi1>, vector<32x64xf32>
    %c0_15 = arith.constant 0 : index
    %c0_16 = arith.constant 0 : index
    %61 = vector.load %arg6[%c0_15, %c0_16] : memref<192x256xf32, #tpu.memory_space<vmem>>, vector<64x256xf32>
    %62 = vector.extract_strided_slice %61 {offsets = [0, 0], sizes = [64, 192], strides = [1, 1]} : vector<64x256xf32> to vector<64x192xf32>
    %63 = vector.extract_strided_slice %61 {offsets = [0, 192], sizes = [64, 64], strides = [1, 1]} : vector<64x256xf32> to vector<64x64xf32>
    %c2 = arith.constant 2 : index
    %c0_17 = arith.constant 0 : index
    %64 = vector.load %arg11[%c2, %c0_17] : memref<18x192xf32, #tpu.memory_space<vmem>>, vector<1x192xf32>
    %c3 = arith.constant 3 : index
    %c0_18 = arith.constant 0 : index
    %65 = vector.load %arg11[%c3, %c0_18] : memref<18x192xf32, #tpu.memory_space<vmem>>, vector<1x64xf32>
    %c4 = arith.constant 4 : index
    %c0_19 = arith.constant 0 : index
    %66 = vector.load %arg11[%c4, %c0_19] : memref<18x192xf32, #tpu.memory_space<vmem>>, vector<1x64xf32>
    %c5 = arith.constant 5 : index
    %c0_20 = arith.constant 0 : index
    %67 = vector.load %arg11[%c5, %c0_20] : memref<18x192xf32, #tpu.memory_space<vmem>>, vector<1x64xf32>
    %c6 = arith.constant 6 : index
    %c0_21 = arith.constant 0 : index
    %68 = vector.load %arg11[%c6, %c0_21] : memref<18x192xf32, #tpu.memory_space<vmem>>, vector<1x128xf32>
    %c7 = arith.constant 7 : index
    %c0_22 = arith.constant 0 : index
    %69 = vector.load %arg11[%c7, %c0_22] : memref<18x192xf32, #tpu.memory_space<vmem>>, vector<1x64xf32>
    %c8 = arith.constant 8 : index
    %c0_23 = arith.constant 0 : index
    %70 = vector.load %arg11[%c8, %c0_23] : memref<18x192xf32, #tpu.memory_space<vmem>>, vector<1x64xf32>
    %c9 = arith.constant 9 : index
    %c0_24 = arith.constant 0 : index
    %71 = vector.load %arg11[%c9, %c0_24] : memref<18x192xf32, #tpu.memory_space<vmem>>, vector<1x64xf32>
    %c0_25 = arith.constant 0 : index
    %c0_26 = arith.constant 0 : index
    %72 = vector.load %arg7[%c0_25, %c0_26] : memref<1024x16xf32, #tpu.memory_space<vmem>>, vector<512x16xf32>
    %c0_27 = arith.constant 0 : index
    %c0_28 = arith.constant 0 : index
    %73 = vector.load %arg8[%c0_27, %c0_28] : memref<512x32xf32, #tpu.memory_space<vmem>>, vector<256x32xf32>
    %c0_29 = arith.constant 0 : index
    %c0_30 = arith.constant 0 : index
    %74 = vector.load %arg9[%c0_29, %c0_30] : memref<384x128xf32, #tpu.memory_space<vmem>>, vector<192x128xf32>
    %c0_31 = arith.constant 0 : index
    %c0_32 = arith.constant 0 : index
    %75 = vector.load %arg10[%c0_31, %c0_32] : memref<768x64xf32, #tpu.memory_space<vmem>>, vector<384x64xf32>
    %76 = vector.broadcast %34 : vector<32x1xf32> to vector<32x64xf32>
    %77 = arith.mulf %60, %76 : vector<32x64xf32>
    %cst_33 = arith.constant dense<0.000000e+00> : vector<32x192xf32>
    %78 = tpu.matmul %77, %62, %cst_33 {dimension_numbers = #tpu.dot_dimension_numbers<[1], [0], [0], [1], [0, 0, 1, 1], [], []>} : vector<32x64xf32>, vector<64x192xf32>, vector<32x192xf32> -> vector<32x192xf32>
    %79 = vector.broadcast %64 : vector<1x192xf32> to vector<32x192xf32>
    %80 = arith.addf %78, %79 : vector<32x192xf32>
    %81 = vector.extract_strided_slice %80 {offsets = [0, 0], sizes = [16, 32], strides = [1, 1]} : vector<32x192xf32> to vector<16x32xf32>
    %82 = vector.extract_strided_slice %80 {offsets = [0, 64], sizes = [16, 32], strides = [1, 1]} : vector<32x192xf32> to vector<16x32xf32>
    %83 = vector.extract_strided_slice %80 {offsets = [0, 128], sizes = [16, 32], strides = [1, 1]} : vector<32x192xf32> to vector<16x32xf32>
    %84 = vector.extract_strided_slice %80 {offsets = [0, 32], sizes = [16, 32], strides = [1, 1]} : vector<32x192xf32> to vector<16x32xf32>
    %85 = vector.extract_strided_slice %80 {offsets = [0, 96], sizes = [16, 32], strides = [1, 1]} : vector<32x192xf32> to vector<16x32xf32>
    %86 = vector.extract_strided_slice %80 {offsets = [0, 160], sizes = [16, 32], strides = [1, 1]} : vector<32x192xf32> to vector<16x32xf32>
    %87 = vector.extract_strided_slice %80 {offsets = [16, 0], sizes = [16, 32], strides = [1, 1]} : vector<32x192xf32> to vector<16x32xf32>
    %88 = vector.extract_strided_slice %80 {offsets = [16, 64], sizes = [16, 32], strides = [1, 1]} : vector<32x192xf32> to vector<16x32xf32>
    %89 = vector.extract_strided_slice %80 {offsets = [16, 128], sizes = [16, 32], strides = [1, 1]} : vector<32x192xf32> to vector<16x32xf32>
    %90 = vector.extract_strided_slice %80 {offsets = [16, 32], sizes = [16, 32], strides = [1, 1]} : vector<32x192xf32> to vector<16x32xf32>
    %91 = vector.extract_strided_slice %80 {offsets = [16, 96], sizes = [16, 32], strides = [1, 1]} : vector<32x192xf32> to vector<16x32xf32>
    %92 = vector.extract_strided_slice %80 {offsets = [16, 160], sizes = [16, 32], strides = [1, 1]} : vector<32x192xf32> to vector<16x32xf32>
    %93 = tpu.concatenate %81, %84, %87, %90 in 0 : vector<16x32xf32>, vector<16x32xf32>, vector<16x32xf32>, vector<16x32xf32> -> vector<64x32xf32>
    %94 = tpu.concatenate %82, %85, %88, %91 in 0 : vector<16x32xf32>, vector<16x32xf32>, vector<16x32xf32>, vector<16x32xf32> -> vector<64x32xf32>
    %95 = tpu.concatenate %83, %86, %89, %92 in 0 : vector<16x32xf32>, vector<16x32xf32>, vector<16x32xf32>, vector<16x32xf32> -> vector<64x32xf32>
    %96 = vector.shape_cast %93 : vector<64x32xf32> to vector<4x16x32xf32>
    %97 = vector.shape_cast %94 : vector<64x32xf32> to vector<4x16x32xf32>
    %98 = vector.shape_cast %95 : vector<64x32xf32> to vector<4x16x32xf32>
    "tpu.trace_start"() <{level = 10 : i32, message = "bqd,bkd->bqk"}> : () -> ()
    %cst_34 = arith.constant dense<0.000000e+00> : vector<4x16x16xf32>
    %99 = tpu.matmul %96, %97, %cst_34 {dimension_numbers = #tpu.dot_dimension_numbers<[2], [2], [1], [1], [0, 0, 0, 1, 1, 1], [0], [0]>} : vector<4x16x32xf32>, vector<4x16x32xf32>, vector<4x16x16xf32> -> vector<4x16x16xf32>
    "tpu.trace_stop"() : () -> ()
    %c0_35 = arith.constant 0 : index
    %c0_36 = arith.constant 0 : index
    %100 = vector.load %arg4[%c0_35, %c0_36] : memref<96x512xf32, #tpu.memory_space<vmem>>, vector<32x512xf32>
    %cst_37 = arith.constant dense<0.000000e+00> : vector<64x512xf32>
    %101 = tpu.matmul %93, %100, %cst_37 {dimension_numbers = #tpu.dot_dimension_numbers<[1], [0], [0], [1], [0, 0, 1, 1], [], []>} : vector<64x32xf32>, vector<32x512xf32>, vector<64x512xf32> -> vector<64x512xf32>
    %c32 = arith.constant 32 : index
    %c0_38 = arith.constant 0 : index
    %102 = vector.load %arg4[%c32, %c0_38] : memref<96x512xf32, #tpu.memory_space<vmem>>, vector<64x512xf32>
    %103 = arith.mulf %101, %102 : vector<64x512xf32>
    %cst_39 = arith.constant dense<0.000000e+00> : vector<64x16xf32>
    %104 = tpu.matmul %103, %72, %cst_39 {dimension_numbers = #tpu.dot_dimension_numbers<[1], [0], [0], [1], [0, 0, 1, 1], [], []>} : vector<64x512xf32>, vector<512x16xf32>, vector<64x16xf32> -> vector<64x16xf32>
    %105 = vector.shape_cast %104 : vector<64x16xf32> to vector<4x16x16xf32>
    %106 = arith.addf %99, %105 : vector<4x16x16xf32>
    %107 = arith.addf %106, %36 : vector<4x16x16xf32>
    %cst_40 = arith.constant dense<0xFF800000> : vector<4x16xf32>
    %108 = vector.multi_reduction <maximumf>, %107, %cst_40 [2] : vector<4x16x16xf32> to vector<4x16xf32>
    %109 = vector.shape_cast %108 : vector<4x16xf32> to vector<4x16x1xf32>
    %110 = vector.broadcast %109 : vector<4x16x1xf32> to vector<4x16x16xf32>
    %111 = arith.subf %107, %110 : vector<4x16x16xf32>
    %112 = math.exp %111 : vector<4x16x16xf32>
    %cst_41 = arith.constant dense<0.000000e+00> : vector<4x16xf32>
    %113 = vector.multi_reduction <add>, %112, %cst_41 [2] : vector<4x16x16xf32> to vector<4x16xf32>
    %114 = vector.shape_cast %113 : vector<4x16xf32> to vector<4x16x1xf32>
    %115 = tpu.reciprocal %114 {approx = true} : vector<4x16x1xf32> -> vector<4x16x1xf32>
    %116 = vector.broadcast %115 : vector<4x16x1xf32> to vector<4x16x16xf32>
    %117 = arith.mulf %112, %116 : vector<4x16x16xf32>
    "tpu.trace_start"() <{level = 10 : i32, message = "bqk,bkd->bqd"}> : () -> ()
    %cst_42 = arith.constant dense<0.000000e+00> : vector<4x16x32xf32>
    %118 = tpu.matmul %117, %98, %cst_42 {dimension_numbers = #tpu.dot_dimension_numbers<[2], [1], [1], [2], [0, 0, 0, 1, 1, 2], [0], [0]>} : vector<4x16x16xf32>, vector<4x16x32xf32>, vector<4x16x32xf32> -> vector<4x16x32xf32>
    "tpu.trace_stop"() : () -> ()
    %119 = vector.shape_cast %117 : vector<4x16x16xf32> to vector<64x16xf32>
    %c0_43 = arith.constant 0 : index
    %c0_44 = arith.constant 0 : index
    %120 = vector.load %arg5[%c0_43, %c0_44] : memref<80x256xf32, #tpu.memory_space<vmem>>, vector<16x256xf32>
    %cst_45 = arith.constant dense<0.000000e+00> : vector<64x256xf32>
    %121 = tpu.matmul %119, %120, %cst_45 {dimension_numbers = #tpu.dot_dimension_numbers<[1], [0], [0], [1], [0, 0, 1, 1], [], []>} : vector<64x16xf32>, vector<16x256xf32>, vector<64x256xf32> -> vector<64x256xf32>
    %c16 = arith.constant 16 : index
    %c0_46 = arith.constant 0 : index
    %122 = vector.load %arg5[%c16, %c0_46] : memref<80x256xf32, #tpu.memory_space<vmem>>, vector<64x256xf32>
    %123 = arith.mulf %121, %122 : vector<64x256xf32>
    %124 = vector.shape_cast %118 : vector<4x16x32xf32> to vector<64x32xf32>
    %cst_47 = arith.constant dense<0.000000e+00> : vector<64x32xf32>
    %125 = tpu.matmul %123, %73, %cst_47 {dimension_numbers = #tpu.dot_dimension_numbers<[1], [0], [0], [1], [0, 0, 1, 1], [], []>} : vector<64x256xf32>, vector<256x32xf32>, vector<64x32xf32> -> vector<64x32xf32>
    %126 = arith.addf %124, %125 : vector<64x32xf32>
    %127 = vector.extract_strided_slice %126 {offsets = [0, 0], sizes = [16, 32], strides = [1, 1]} : vector<64x32xf32> to vector<16x32xf32>
    %128 = vector.extract_strided_slice %126 {offsets = [16, 0], sizes = [16, 32], strides = [1, 1]} : vector<64x32xf32> to vector<16x32xf32>
    %129 = tpu.concatenate %127, %128 in 1 : vector<16x32xf32>, vector<16x32xf32> -> vector<16x64xf32>
    %130 = vector.extract_strided_slice %126 {offsets = [32, 0], sizes = [16, 32], strides = [1, 1]} : vector<64x32xf32> to vector<16x32xf32>
    %131 = vector.extract_strided_slice %126 {offsets = [48, 0], sizes = [16, 32], strides = [1, 1]} : vector<64x32xf32> to vector<16x32xf32>
    %132 = tpu.concatenate %130, %131 in 1 : vector<16x32xf32>, vector<16x32xf32> -> vector<16x64xf32>
    %133 = tpu.concatenate %129, %132 in 0 : vector<16x64xf32>, vector<16x64xf32> -> vector<32x64xf32>
    %cst_48 = arith.constant dense<0.000000e+00> : vector<32x64xf32>
    %134 = tpu.matmul %133, %63, %cst_48 {dimension_numbers = #tpu.dot_dimension_numbers<[1], [0], [0], [1], [0, 0, 1, 1], [], []>} : vector<32x64xf32>, vector<64x64xf32>, vector<32x64xf32> -> vector<32x64xf32>
    %135 = vector.broadcast %65 : vector<1x64xf32> to vector<32x64xf32>
    %136 = arith.addf %134, %135 : vector<32x64xf32>
    %137 = arith.addf %77, %136 : vector<32x64xf32>
    %cst_49 = arith.constant dense<0.000000e+00> : vector<32xf32>
    %138 = vector.multi_reduction <add>, %137, %cst_49 [1] : vector<32x64xf32> to vector<32xf32>
    %139 = vector.shape_cast %138 : vector<32xf32> to vector<32x1xf32>
    %cst_50 = arith.constant 6.400000e+01 : f32
    %140 = vector.broadcast %cst_50 : f32 to vector<32x1xf32>
    %141 = arith.divf %139, %140 : vector<32x1xf32>
    %142 = vector.broadcast %141 : vector<32x1xf32> to vector<32x64xf32>
    %143 = arith.subf %137, %142 : vector<32x64xf32>
    %144 = arith.mulf %143, %143 : vector<32x64xf32>
    %cst_51 = arith.constant dense<0.000000e+00> : vector<32xf32>
    %145 = vector.multi_reduction <add>, %144, %cst_51 [1] : vector<32x64xf32> to vector<32xf32>
    %146 = vector.shape_cast %145 : vector<32xf32> to vector<32x1xf32>
    %cst_52 = arith.constant 6.400000e+01 : f32
    %147 = vector.broadcast %cst_52 : f32 to vector<32x1xf32>
    %148 = arith.divf %146, %147 : vector<32x1xf32>
    %149 = vector.broadcast %141 : vector<32x1xf32> to vector<32x64xf32>
    %150 = arith.subf %137, %149 : vector<32x64xf32>
    %cst_53 = arith.constant 9.99999974E-6 : f32
    %151 = vector.broadcast %cst_53 : f32 to vector<32x1xf32>
    %152 = arith.addf %148, %151 : vector<32x1xf32>
    %153 = math.rsqrt %152 : vector<32x1xf32>
    %154 = vector.broadcast %153 : vector<32x1xf32> to vector<32x64xf32>
    %155 = arith.mulf %150, %154 : vector<32x64xf32>
    %156 = vector.broadcast %66 : vector<1x64xf32> to vector<32x64xf32>
    %157 = arith.mulf %155, %156 : vector<32x64xf32>
    %158 = vector.broadcast %67 : vector<1x64xf32> to vector<32x64xf32>
    %159 = arith.addf %157, %158 : vector<32x64xf32>
    %160 = vector.broadcast %34 : vector<32x1xf32> to vector<32x64xf32>
    %161 = arith.mulf %159, %160 : vector<32x64xf32>
    %c1_i32_54 = arith.constant 1 : i32
    %162 = tpu.dynamic_rotate %161 by %c1_i32_54 dim 0 : vector<32x64xf32>, i32 -> vector<32x64xf32>
    %163 = vector.broadcast %41 : vector<32x1xf32> to vector<32x64xf32>
    %164 = arith.mulf %162, %163 : vector<32x64xf32>
    %c31_i32 = arith.constant 31 : i32
    %165 = tpu.dynamic_rotate %161 by %c31_i32 dim 0 : vector<32x64xf32>, i32 -> vector<32x64xf32>
    %166 = vector.broadcast %45 : vector<32x1xf32> to vector<32x64xf32>
    %167 = arith.mulf %165, %166 : vector<32x64xf32>
    %168 = tpu.concatenate %164, %161, %167 in 1 : vector<32x64xf32>, vector<32x64xf32>, vector<32x64xf32> -> vector<32x192xf32>
    %cst_55 = arith.constant dense<0.000000e+00> : vector<32x128xf32>
    %169 = tpu.matmul %168, %74, %cst_55 {dimension_numbers = #tpu.dot_dimension_numbers<[1], [0], [0], [1], [0, 0, 1, 1], [], []>} : vector<32x192xf32>, vector<192x128xf32>, vector<32x128xf32> -> vector<32x128xf32>
    %170 = vector.broadcast %68 : vector<1x128xf32> to vector<32x128xf32>
    %171 = arith.addf %169, %170 : vector<32x128xf32>
    %cst_56 = arith.constant 0.000000e+00 : f32
    %172 = vector.broadcast %cst_56 : f32 to vector<32x128xf32>
    %173 = arith.maximumf %171, %172 : vector<32x128xf32>
    %174 = vector.broadcast %34 : vector<32x1xf32> to vector<32x128xf32>
    %175 = arith.mulf %173, %174 : vector<32x128xf32>
    %c1_i32_57 = arith.constant 1 : i32
    %176 = tpu.dynamic_rotate %175 by %c1_i32_57 dim 0 : vector<32x128xf32>, i32 -> vector<32x128xf32>
    %177 = vector.broadcast %41 : vector<32x1xf32> to vector<32x128xf32>
    %178 = arith.mulf %176, %177 : vector<32x128xf32>
    %c31_i32_58 = arith.constant 31 : i32
    %179 = tpu.dynamic_rotate %175 by %c31_i32_58 dim 0 : vector<32x128xf32>, i32 -> vector<32x128xf32>
    %180 = vector.broadcast %45 : vector<32x1xf32> to vector<32x128xf32>
    %181 = arith.mulf %179, %180 : vector<32x128xf32>
    %182 = tpu.concatenate %178, %175, %181 in 1 : vector<32x128xf32>, vector<32x128xf32>, vector<32x128xf32> -> vector<32x384xf32>
    %cst_59 = arith.constant dense<0.000000e+00> : vector<32x64xf32>
    %183 = tpu.matmul %182, %75, %cst_59 {dimension_numbers = #tpu.dot_dimension_numbers<[1], [0], [0], [1], [0, 0, 1, 1], [], []>} : vector<32x384xf32>, vector<384x64xf32>, vector<32x64xf32> -> vector<32x64xf32>
    %184 = vector.broadcast %69 : vector<1x64xf32> to vector<32x64xf32>
    %185 = arith.addf %183, %184 : vector<32x64xf32>
    %186 = vector.broadcast %34 : vector<32x1xf32> to vector<32x64xf32>
    %187 = arith.mulf %185, %186 : vector<32x64xf32>
    %188 = arith.addf %159, %187 : vector<32x64xf32>
    %cst_60 = arith.constant dense<0.000000e+00> : vector<32xf32>
    %189 = vector.multi_reduction <add>, %188, %cst_60 [1] : vector<32x64xf32> to vector<32xf32>
    %190 = vector.shape_cast %189 : vector<32xf32> to vector<32x1xf32>
    %cst_61 = arith.constant 6.400000e+01 : f32
    %191 = vector.broadcast %cst_61 : f32 to vector<32x1xf32>
    %192 = arith.divf %190, %191 : vector<32x1xf32>
    %193 = vector.broadcast %192 : vector<32x1xf32> to vector<32x64xf32>
    %194 = arith.subf %188, %193 : vector<32x64xf32>
    %195 = arith.mulf %194, %194 : vector<32x64xf32>
    %cst_62 = arith.constant dense<0.000000e+00> : vector<32xf32>
    %196 = vector.multi_reduction <add>, %195, %cst_62 [1] : vector<32x64xf32> to vector<32xf32>
    %197 = vector.shape_cast %196 : vector<32xf32> to vector<32x1xf32>
    %cst_63 = arith.constant 6.400000e+01 : f32
    %198 = vector.broadcast %cst_63 : f32 to vector<32x1xf32>
    %199 = arith.divf %197, %198 : vector<32x1xf32>
    %200 = vector.broadcast %192 : vector<32x1xf32> to vector<32x64xf32>
    %201 = arith.subf %188, %200 : vector<32x64xf32>
    %cst_64 = arith.constant 9.99999974E-6 : f32
    %202 = vector.broadcast %cst_64 : f32 to vector<32x1xf32>
    %203 = arith.addf %199, %202 : vector<32x1xf32>
    %204 = math.rsqrt %203 : vector<32x1xf32>
    %205 = vector.broadcast %204 : vector<32x1xf32> to vector<32x64xf32>
    %206 = arith.mulf %201, %205 : vector<32x64xf32>
    %207 = vector.broadcast %70 : vector<1x64xf32> to vector<32x64xf32>
    %208 = arith.mulf %206, %207 : vector<32x64xf32>
    %209 = vector.broadcast %71 : vector<1x64xf32> to vector<32x64xf32>
    %210 = arith.addf %208, %209 : vector<32x64xf32>
    %c64 = arith.constant 64 : index
    %c0_65 = arith.constant 0 : index
    %211 = vector.load %arg6[%c64, %c0_65] : memref<192x256xf32, #tpu.memory_space<vmem>>, vector<64x256xf32>
    %212 = vector.extract_strided_slice %211 {offsets = [0, 0], sizes = [64, 192], strides = [1, 1]} : vector<64x256xf32> to vector<64x192xf32>
    %213 = vector.extract_strided_slice %211 {offsets = [0, 192], sizes = [64, 64], strides = [1, 1]} : vector<64x256xf32> to vector<64x64xf32>
    %c10 = arith.constant 10 : index
    %c0_66 = arith.constant 0 : index
    %214 = vector.load %arg11[%c10, %c0_66] : memref<18x192xf32, #tpu.memory_space<vmem>>, vector<1x192xf32>
    %c11 = arith.constant 11 : index
    %c0_67 = arith.constant 0 : index
    %215 = vector.load %arg11[%c11, %c0_67] : memref<18x192xf32, #tpu.memory_space<vmem>>, vector<1x64xf32>
    %c12 = arith.constant 12 : index
    %c0_68 = arith.constant 0 : index
    %216 = vector.load %arg11[%c12, %c0_68] : memref<18x192xf32, #tpu.memory_space<vmem>>, vector<1x64xf32>
    %c13 = arith.constant 13 : index
    %c0_69 = arith.constant 0 : index
    %217 = vector.load %arg11[%c13, %c0_69] : memref<18x192xf32, #tpu.memory_space<vmem>>, vector<1x64xf32>
    %c14 = arith.constant 14 : index
    %c0_70 = arith.constant 0 : index
    %218 = vector.load %arg11[%c14, %c0_70] : memref<18x192xf32, #tpu.memory_space<vmem>>, vector<1x128xf32>
    %c15 = arith.constant 15 : index
    %c0_71 = arith.constant 0 : index
    %219 = vector.load %arg11[%c15, %c0_71] : memref<18x192xf32, #tpu.memory_space<vmem>>, vector<1x64xf32>
    %c16_72 = arith.constant 16 : index
    %c0_73 = arith.constant 0 : index
    %220 = vector.load %arg11[%c16_72, %c0_73] : memref<18x192xf32, #tpu.memory_space<vmem>>, vector<1x64xf32>
    %c17 = arith.constant 17 : index
    %c0_74 = arith.constant 0 : index
    %221 = vector.load %arg11[%c17, %c0_74] : memref<18x192xf32, #tpu.memory_space<vmem>>, vector<1x64xf32>
    %c512 = arith.constant 512 : index
    %c0_75 = arith.constant 0 : index
    %222 = vector.load %arg7[%c512, %c0_75] : memref<1024x16xf32, #tpu.memory_space<vmem>>, vector<512x16xf32>
    %c256 = arith.constant 256 : index
    %c0_76 = arith.constant 0 : index
    %223 = vector.load %arg8[%c256, %c0_76] : memref<512x32xf32, #tpu.memory_space<vmem>>, vector<256x32xf32>
    %c192 = arith.constant 192 : index
    %c0_77 = arith.constant 0 : index
    %224 = vector.load %arg9[%c192, %c0_77] : memref<384x128xf32, #tpu.memory_space<vmem>>, vector<192x128xf32>
    %c384 = arith.constant 384 : index
    %c0_78 = arith.constant 0 : index
    %225 = vector.load %arg10[%c384, %c0_78] : memref<768x64xf32, #tpu.memory_space<vmem>>, vector<384x64xf32>
    %226 = vector.broadcast %34 : vector<32x1xf32> to vector<32x64xf32>
    %227 = arith.mulf %210, %226 : vector<32x64xf32>
    %cst_79 = arith.constant dense<0.000000e+00> : vector<32x192xf32>
    %228 = tpu.matmul %227, %212, %cst_79 {dimension_numbers = #tpu.dot_dimension_numbers<[1], [0], [0], [1], [0, 0, 1, 1], [], []>} : vector<32x64xf32>, vector<64x192xf32>, vector<32x192xf32> -> vector<32x192xf32>
    %229 = vector.broadcast %214 : vector<1x192xf32> to vector<32x192xf32>
    %230 = arith.addf %228, %229 : vector<32x192xf32>
    %231 = vector.extract_strided_slice %230 {offsets = [0, 0], sizes = [16, 32], strides = [1, 1]} : vector<32x192xf32> to vector<16x32xf32>
    %232 = vector.extract_strided_slice %230 {offsets = [0, 64], sizes = [16, 32], strides = [1, 1]} : vector<32x192xf32> to vector<16x32xf32>
    %233 = vector.extract_strided_slice %230 {offsets = [0, 128], sizes = [16, 32], strides = [1, 1]} : vector<32x192xf32> to vector<16x32xf32>
    %234 = vector.extract_strided_slice %230 {offsets = [0, 32], sizes = [16, 32], strides = [1, 1]} : vector<32x192xf32> to vector<16x32xf32>
    %235 = vector.extract_strided_slice %230 {offsets = [0, 96], sizes = [16, 32], strides = [1, 1]} : vector<32x192xf32> to vector<16x32xf32>
    %236 = vector.extract_strided_slice %230 {offsets = [0, 160], sizes = [16, 32], strides = [1, 1]} : vector<32x192xf32> to vector<16x32xf32>
    %237 = vector.extract_strided_slice %230 {offsets = [16, 0], sizes = [16, 32], strides = [1, 1]} : vector<32x192xf32> to vector<16x32xf32>
    %238 = vector.extract_strided_slice %230 {offsets = [16, 64], sizes = [16, 32], strides = [1, 1]} : vector<32x192xf32> to vector<16x32xf32>
    %239 = vector.extract_strided_slice %230 {offsets = [16, 128], sizes = [16, 32], strides = [1, 1]} : vector<32x192xf32> to vector<16x32xf32>
    %240 = vector.extract_strided_slice %230 {offsets = [16, 32], sizes = [16, 32], strides = [1, 1]} : vector<32x192xf32> to vector<16x32xf32>
    %241 = vector.extract_strided_slice %230 {offsets = [16, 96], sizes = [16, 32], strides = [1, 1]} : vector<32x192xf32> to vector<16x32xf32>
    %242 = vector.extract_strided_slice %230 {offsets = [16, 160], sizes = [16, 32], strides = [1, 1]} : vector<32x192xf32> to vector<16x32xf32>
    %243 = tpu.concatenate %231, %234, %237, %240 in 0 : vector<16x32xf32>, vector<16x32xf32>, vector<16x32xf32>, vector<16x32xf32> -> vector<64x32xf32>
    %244 = tpu.concatenate %232, %235, %238, %241 in 0 : vector<16x32xf32>, vector<16x32xf32>, vector<16x32xf32>, vector<16x32xf32> -> vector<64x32xf32>
    %245 = tpu.concatenate %233, %236, %239, %242 in 0 : vector<16x32xf32>, vector<16x32xf32>, vector<16x32xf32>, vector<16x32xf32> -> vector<64x32xf32>
    %246 = vector.shape_cast %243 : vector<64x32xf32> to vector<4x16x32xf32>
    %247 = vector.shape_cast %244 : vector<64x32xf32> to vector<4x16x32xf32>
    %248 = vector.shape_cast %245 : vector<64x32xf32> to vector<4x16x32xf32>
    "tpu.trace_start"() <{level = 10 : i32, message = "bqd,bkd->bqk"}> : () -> ()
    %cst_80 = arith.constant dense<0.000000e+00> : vector<4x16x16xf32>
    %249 = tpu.matmul %246, %247, %cst_80 {dimension_numbers = #tpu.dot_dimension_numbers<[2], [2], [1], [1], [0, 0, 0, 1, 1, 1], [0], [0]>} : vector<4x16x32xf32>, vector<4x16x32xf32>, vector<4x16x16xf32> -> vector<4x16x16xf32>
    "tpu.trace_stop"() : () -> ()
    %c0_81 = arith.constant 0 : index
    %c0_82 = arith.constant 0 : index
    %250 = vector.load %arg4[%c0_81, %c0_82] : memref<96x512xf32, #tpu.memory_space<vmem>>, vector<32x512xf32>
    %cst_83 = arith.constant dense<0.000000e+00> : vector<64x512xf32>
    %251 = tpu.matmul %243, %250, %cst_83 {dimension_numbers = #tpu.dot_dimension_numbers<[1], [0], [0], [1], [0, 0, 1, 1], [], []>} : vector<64x32xf32>, vector<32x512xf32>, vector<64x512xf32> -> vector<64x512xf32>
    %c32_84 = arith.constant 32 : index
    %c0_85 = arith.constant 0 : index
    %252 = vector.load %arg4[%c32_84, %c0_85] : memref<96x512xf32, #tpu.memory_space<vmem>>, vector<64x512xf32>
    %253 = arith.mulf %251, %252 : vector<64x512xf32>
    %cst_86 = arith.constant dense<0.000000e+00> : vector<64x16xf32>
    %254 = tpu.matmul %253, %222, %cst_86 {dimension_numbers = #tpu.dot_dimension_numbers<[1], [0], [0], [1], [0, 0, 1, 1], [], []>} : vector<64x512xf32>, vector<512x16xf32>, vector<64x16xf32> -> vector<64x16xf32>
    %255 = vector.shape_cast %254 : vector<64x16xf32> to vector<4x16x16xf32>
    %256 = arith.addf %249, %255 : vector<4x16x16xf32>
    %257 = arith.addf %256, %36 : vector<4x16x16xf32>
    %cst_87 = arith.constant dense<0xFF800000> : vector<4x16xf32>
    %258 = vector.multi_reduction <maximumf>, %257, %cst_87 [2] : vector<4x16x16xf32> to vector<4x16xf32>
    %259 = vector.shape_cast %258 : vector<4x16xf32> to vector<4x16x1xf32>
    %260 = vector.broadcast %259 : vector<4x16x1xf32> to vector<4x16x16xf32>
    %261 = arith.subf %257, %260 : vector<4x16x16xf32>
    %262 = math.exp %261 : vector<4x16x16xf32>
    %cst_88 = arith.constant dense<0.000000e+00> : vector<4x16xf32>
    %263 = vector.multi_reduction <add>, %262, %cst_88 [2] : vector<4x16x16xf32> to vector<4x16xf32>
    %264 = vector.shape_cast %263 : vector<4x16xf32> to vector<4x16x1xf32>
    %265 = tpu.reciprocal %264 {approx = true} : vector<4x16x1xf32> -> vector<4x16x1xf32>
    %266 = vector.broadcast %265 : vector<4x16x1xf32> to vector<4x16x16xf32>
    %267 = arith.mulf %262, %266 : vector<4x16x16xf32>
    "tpu.trace_start"() <{level = 10 : i32, message = "bqk,bkd->bqd"}> : () -> ()
    %cst_89 = arith.constant dense<0.000000e+00> : vector<4x16x32xf32>
    %268 = tpu.matmul %267, %248, %cst_89 {dimension_numbers = #tpu.dot_dimension_numbers<[2], [1], [1], [2], [0, 0, 0, 1, 1, 2], [0], [0]>} : vector<4x16x16xf32>, vector<4x16x32xf32>, vector<4x16x32xf32> -> vector<4x16x32xf32>
    "tpu.trace_stop"() : () -> ()
    %269 = vector.shape_cast %267 : vector<4x16x16xf32> to vector<64x16xf32>
    %c0_90 = arith.constant 0 : index
    %c0_91 = arith.constant 0 : index
    %270 = vector.load %arg5[%c0_90, %c0_91] : memref<80x256xf32, #tpu.memory_space<vmem>>, vector<16x256xf32>
    %cst_92 = arith.constant dense<0.000000e+00> : vector<64x256xf32>
    %271 = tpu.matmul %269, %270, %cst_92 {dimension_numbers = #tpu.dot_dimension_numbers<[1], [0], [0], [1], [0, 0, 1, 1], [], []>} : vector<64x16xf32>, vector<16x256xf32>, vector<64x256xf32> -> vector<64x256xf32>
    %c16_93 = arith.constant 16 : index
    %c0_94 = arith.constant 0 : index
    %272 = vector.load %arg5[%c16_93, %c0_94] : memref<80x256xf32, #tpu.memory_space<vmem>>, vector<64x256xf32>
    %273 = arith.mulf %271, %272 : vector<64x256xf32>
    %274 = vector.shape_cast %268 : vector<4x16x32xf32> to vector<64x32xf32>
    %cst_95 = arith.constant dense<0.000000e+00> : vector<64x32xf32>
    %275 = tpu.matmul %273, %223, %cst_95 {dimension_numbers = #tpu.dot_dimension_numbers<[1], [0], [0], [1], [0, 0, 1, 1], [], []>} : vector<64x256xf32>, vector<256x32xf32>, vector<64x32xf32> -> vector<64x32xf32>
    %276 = arith.addf %274, %275 : vector<64x32xf32>
    %277 = vector.extract_strided_slice %276 {offsets = [0, 0], sizes = [16, 32], strides = [1, 1]} : vector<64x32xf32> to vector<16x32xf32>
    %278 = vector.extract_strided_slice %276 {offsets = [16, 0], sizes = [16, 32], strides = [1, 1]} : vector<64x32xf32> to vector<16x32xf32>
    %279 = tpu.concatenate %277, %278 in 1 : vector<16x32xf32>, vector<16x32xf32> -> vector<16x64xf32>
    %280 = vector.extract_strided_slice %276 {offsets = [32, 0], sizes = [16, 32], strides = [1, 1]} : vector<64x32xf32> to vector<16x32xf32>
    %281 = vector.extract_strided_slice %276 {offsets = [48, 0], sizes = [16, 32], strides = [1, 1]} : vector<64x32xf32> to vector<16x32xf32>
    %282 = tpu.concatenate %280, %281 in 1 : vector<16x32xf32>, vector<16x32xf32> -> vector<16x64xf32>
    %283 = tpu.concatenate %279, %282 in 0 : vector<16x64xf32>, vector<16x64xf32> -> vector<32x64xf32>
    %cst_96 = arith.constant dense<0.000000e+00> : vector<32x64xf32>
    %284 = tpu.matmul %283, %213, %cst_96 {dimension_numbers = #tpu.dot_dimension_numbers<[1], [0], [0], [1], [0, 0, 1, 1], [], []>} : vector<32x64xf32>, vector<64x64xf32>, vector<32x64xf32> -> vector<32x64xf32>
    %285 = vector.broadcast %215 : vector<1x64xf32> to vector<32x64xf32>
    %286 = arith.addf %284, %285 : vector<32x64xf32>
    %287 = arith.addf %227, %286 : vector<32x64xf32>
    %cst_97 = arith.constant dense<0.000000e+00> : vector<32xf32>
    %288 = vector.multi_reduction <add>, %287, %cst_97 [1] : vector<32x64xf32> to vector<32xf32>
    %289 = vector.shape_cast %288 : vector<32xf32> to vector<32x1xf32>
    %cst_98 = arith.constant 6.400000e+01 : f32
    %290 = vector.broadcast %cst_98 : f32 to vector<32x1xf32>
    %291 = arith.divf %289, %290 : vector<32x1xf32>
    %292 = vector.broadcast %291 : vector<32x1xf32> to vector<32x64xf32>
    %293 = arith.subf %287, %292 : vector<32x64xf32>
    %294 = arith.mulf %293, %293 : vector<32x64xf32>
    %cst_99 = arith.constant dense<0.000000e+00> : vector<32xf32>
    %295 = vector.multi_reduction <add>, %294, %cst_99 [1] : vector<32x64xf32> to vector<32xf32>
    %296 = vector.shape_cast %295 : vector<32xf32> to vector<32x1xf32>
    %cst_100 = arith.constant 6.400000e+01 : f32
    %297 = vector.broadcast %cst_100 : f32 to vector<32x1xf32>
    %298 = arith.divf %296, %297 : vector<32x1xf32>
    %299 = vector.broadcast %291 : vector<32x1xf32> to vector<32x64xf32>
    %300 = arith.subf %287, %299 : vector<32x64xf32>
    %cst_101 = arith.constant 9.99999974E-6 : f32
    %301 = vector.broadcast %cst_101 : f32 to vector<32x1xf32>
    %302 = arith.addf %298, %301 : vector<32x1xf32>
    %303 = math.rsqrt %302 : vector<32x1xf32>
    %304 = vector.broadcast %303 : vector<32x1xf32> to vector<32x64xf32>
    %305 = arith.mulf %300, %304 : vector<32x64xf32>
    %306 = vector.broadcast %216 : vector<1x64xf32> to vector<32x64xf32>
    %307 = arith.mulf %305, %306 : vector<32x64xf32>
    %308 = vector.broadcast %217 : vector<1x64xf32> to vector<32x64xf32>
    %309 = arith.addf %307, %308 : vector<32x64xf32>
    %310 = vector.broadcast %34 : vector<32x1xf32> to vector<32x64xf32>
    %311 = arith.mulf %309, %310 : vector<32x64xf32>
    %c1_i32_102 = arith.constant 1 : i32
    %312 = tpu.dynamic_rotate %311 by %c1_i32_102 dim 0 : vector<32x64xf32>, i32 -> vector<32x64xf32>
    %313 = vector.broadcast %41 : vector<32x1xf32> to vector<32x64xf32>
    %314 = arith.mulf %312, %313 : vector<32x64xf32>
    %c31_i32_103 = arith.constant 31 : i32
    %315 = tpu.dynamic_rotate %311 by %c31_i32_103 dim 0 : vector<32x64xf32>, i32 -> vector<32x64xf32>
    %316 = vector.broadcast %45 : vector<32x1xf32> to vector<32x64xf32>
    %317 = arith.mulf %315, %316 : vector<32x64xf32>
    %318 = tpu.concatenate %314, %311, %317 in 1 : vector<32x64xf32>, vector<32x64xf32>, vector<32x64xf32> -> vector<32x192xf32>
    %cst_104 = arith.constant dense<0.000000e+00> : vector<32x128xf32>
    %319 = tpu.matmul %318, %224, %cst_104 {dimension_numbers = #tpu.dot_dimension_numbers<[1], [0], [0], [1], [0, 0, 1, 1], [], []>} : vector<32x192xf32>, vector<192x128xf32>, vector<32x128xf32> -> vector<32x128xf32>
    %320 = vector.broadcast %218 : vector<1x128xf32> to vector<32x128xf32>
    %321 = arith.addf %319, %320 : vector<32x128xf32>
    %cst_105 = arith.constant 0.000000e+00 : f32
    %322 = vector.broadcast %cst_105 : f32 to vector<32x128xf32>
    %323 = arith.maximumf %321, %322 : vector<32x128xf32>
    %324 = vector.broadcast %34 : vector<32x1xf32> to vector<32x128xf32>
    %325 = arith.mulf %323, %324 : vector<32x128xf32>
    %c1_i32_106 = arith.constant 1 : i32
    %326 = tpu.dynamic_rotate %325 by %c1_i32_106 dim 0 : vector<32x128xf32>, i32 -> vector<32x128xf32>
    %327 = vector.broadcast %41 : vector<32x1xf32> to vector<32x128xf32>
    %328 = arith.mulf %326, %327 : vector<32x128xf32>
    %c31_i32_107 = arith.constant 31 : i32
    %329 = tpu.dynamic_rotate %325 by %c31_i32_107 dim 0 : vector<32x128xf32>, i32 -> vector<32x128xf32>
    %330 = vector.broadcast %45 : vector<32x1xf32> to vector<32x128xf32>
    %331 = arith.mulf %329, %330 : vector<32x128xf32>
    %332 = tpu.concatenate %328, %325, %331 in 1 : vector<32x128xf32>, vector<32x128xf32>, vector<32x128xf32> -> vector<32x384xf32>
    %cst_108 = arith.constant dense<0.000000e+00> : vector<32x64xf32>
    %333 = tpu.matmul %332, %225, %cst_108 {dimension_numbers = #tpu.dot_dimension_numbers<[1], [0], [0], [1], [0, 0, 1, 1], [], []>} : vector<32x384xf32>, vector<384x64xf32>, vector<32x64xf32> -> vector<32x64xf32>
    %334 = vector.broadcast %219 : vector<1x64xf32> to vector<32x64xf32>
    %335 = arith.addf %333, %334 : vector<32x64xf32>
    %336 = vector.broadcast %34 : vector<32x1xf32> to vector<32x64xf32>
    %337 = arith.mulf %335, %336 : vector<32x64xf32>
    %338 = arith.addf %309, %337 : vector<32x64xf32>
    %cst_109 = arith.constant dense<0.000000e+00> : vector<32xf32>
    %339 = vector.multi_reduction <add>, %338, %cst_109 [1] : vector<32x64xf32> to vector<32xf32>
    %340 = vector.shape_cast %339 : vector<32xf32> to vector<32x1xf32>
    %cst_110 = arith.constant 6.400000e+01 : f32
    %341 = vector.broadcast %cst_110 : f32 to vector<32x1xf32>
    %342 = arith.divf %340, %341 : vector<32x1xf32>
    %343 = vector.broadcast %342 : vector<32x1xf32> to vector<32x64xf32>
    %344 = arith.subf %338, %343 : vector<32x64xf32>
    %345 = arith.mulf %344, %344 : vector<32x64xf32>
    %cst_111 = arith.constant dense<0.000000e+00> : vector<32xf32>
    %346 = vector.multi_reduction <add>, %345, %cst_111 [1] : vector<32x64xf32> to vector<32xf32>
    %347 = vector.shape_cast %346 : vector<32xf32> to vector<32x1xf32>
    %cst_112 = arith.constant 6.400000e+01 : f32
    %348 = vector.broadcast %cst_112 : f32 to vector<32x1xf32>
    %349 = arith.divf %347, %348 : vector<32x1xf32>
    %350 = vector.broadcast %342 : vector<32x1xf32> to vector<32x64xf32>
    %351 = arith.subf %338, %350 : vector<32x64xf32>
    %cst_113 = arith.constant 9.99999974E-6 : f32
    %352 = vector.broadcast %cst_113 : f32 to vector<32x1xf32>
    %353 = arith.addf %349, %352 : vector<32x1xf32>
    %354 = math.rsqrt %353 : vector<32x1xf32>
    %355 = vector.broadcast %354 : vector<32x1xf32> to vector<32x64xf32>
    %356 = arith.mulf %351, %355 : vector<32x64xf32>
    %357 = vector.broadcast %220 : vector<1x64xf32> to vector<32x64xf32>
    %358 = arith.mulf %356, %357 : vector<32x64xf32>
    %359 = vector.broadcast %221 : vector<1x64xf32> to vector<32x64xf32>
    %360 = arith.addf %358, %359 : vector<32x64xf32>
    %361 = vector.broadcast %34 : vector<32x1xf32> to vector<32x64xf32>
    %362 = arith.mulf %360, %361 : vector<32x64xf32>
    %c128 = arith.constant 128 : index
    %c0_114 = arith.constant 0 : index
    %363 = vector.load %arg6[%c128, %c0_114] : memref<192x256xf32, #tpu.memory_space<vmem>>, vector<64x8xf32>
    %c1_115 = arith.constant 1 : index
    %c0_116 = arith.constant 0 : index
    %364 = vector.load %arg11[%c1_115, %c0_116] : memref<18x192xf32, #tpu.memory_space<vmem>>, vector<1x8xf32>
    %cst_117 = arith.constant dense<0.000000e+00> : vector<32x8xf32>
    %365 = tpu.matmul %362, %363, %cst_117 {dimension_numbers = #tpu.dot_dimension_numbers<[1], [0], [0], [1], [0, 0, 1, 1], [], []>} : vector<32x64xf32>, vector<64x8xf32>, vector<32x8xf32> -> vector<32x8xf32>
    %366 = vector.broadcast %364 : vector<1x8xf32> to vector<32x8xf32>
    %367 = arith.addf %365, %366 : vector<32x8xf32>
    %368 = vector.broadcast %34 : vector<32x1xf32> to vector<32x8xf32>
    %369 = arith.mulf %367, %368 : vector<32x8xf32>
    %c0_118 = arith.constant 0 : index
    %c0_119 = arith.constant 0 : index
    %370 = vector.load %arg12[%c0_118, %c0_119] : memref<32x8xf32, #tpu.memory_space<vmem>>, vector<32x8xf32>
    tpu.vector_store %arg12[%c0_118, %c0_119], %369 {strides = array<i32>} : memref<32x8xf32, #tpu.memory_space<vmem>>, vector<32x8xf32>,
    return
  }
}

</mosaic_0001>

<llo_original>
// kernel: tpu_custom_call.1
$region0: #{tpu_custom_call.1}
  #allocation0 [shape = 'u32[]', space=smem, size = 0x4, offset = 0x4, fixed_abs, tag = 'smem constant byte address 0x4 - core index']
  #allocation1 [shape = 'u32[144,128]{1,0:T(1,128)}', space=vmem, size = 0x12000, scoped, tag = 'internal scratch']
  %s0 = inlined_call_operand.vmem [shape: s32[2], index: 0, kind: input, shape index: {}]
  %s1 = inlined_call_operand.vmem [shape: bf16[32,768], index: 1, kind: input, shape index: {}]
  %s2 = inlined_call_operand.vmem [shape: bf16[768,64], index: 2, kind: input, shape index: {}]
  %s3 = inlined_call_operand.vmem [shape: f32[32,64], index: 3, kind: input, shape index: {}]
  %s4 = inlined_call_operand.vmem [shape: f32[96,512], index: 4, kind: input, shape index: {}]
  %s5 = inlined_call_operand.vmem [shape: f32[80,256], index: 5, kind: input, shape index: {}]
  %s6 = inlined_call_operand.vmem [shape: f32[192,256], index: 6, kind: input, shape index: {}]
  %s7 = inlined_call_operand.vmem [shape: f32[1024,16], index: 7, kind: input, shape index: {}]
  %s8 = inlined_call_operand.vmem [shape: f32[512,32], index: 8, kind: input, shape index: {}]
  %s9 = inlined_call_operand.vmem [shape: f32[384,128], index: 9, kind: input, shape index: {}]
  %s10 = inlined_call_operand.vmem [shape: f32[768,64], index: 10, kind: input, shape index: {}]
  %s11 = inlined_call_operand.vmem [shape: f32[18,192], index: 11, kind: input, shape index: {}]
  %s12 = inlined_call_operand.vmem [shape: f32[32,8], index: 12, kind: output, shape index: {}]
  %s13 = sld [smem:[#allocation0]]
  $region62: #{tpu_custom_call.1} parent=0
    _
  %s15 = ssub.s32 1, %s13
  %s16 = scalar_select 0, %s15, %s13
  $region1: #{tpu_custom_call.1} parent=0
    #allocation2 [shape = 'u8[512]{0}', space=smem, size = 0x200, scoped, tag = 'input window, operand 0, single buffered']
    #allocation3 [shape = 's32[1]{0}', space=sflag, size = 0x4, scoped, tag = 'scoped memory for tpu_custom_call.1']
    %17 = vsyncpa [#allocation3], 0
    // Predicated region
    $region2: #{tpu_custom_call.1} parent=1 // pred_check
      _
    $region3: #{tpu_custom_call.1} parent=1 // pred_check_branch
      %19 = sbr.rel (0) target = $region5
    $region4: #{tpu_custom_call.1} parent=1 // pred_region
      %s21 = ssub.s32 16, 16
      %22 = vsyncadd [#allocation3], %s21
      %s24 = sshll.u32 %s0, 4
      %s25 = int_to_ptr.vmem [resolvable:$true] %s24
      %27 = dma.vmem_to_smem %s25, 16, [#allocation2], [#allocation3]
    $region5: #{tpu_custom_call.1} parent=1 // pred_fallthru
      _
    // Predicated region
    $region6: #{tpu_custom_call.1} parent=1 // pred_check
      _
    $region7: #{tpu_custom_call.1} parent=1 // pred_check_branch
      %29 = sbr.rel (0) target = $region9
    $region8: #{tpu_custom_call.1} parent=1 // pred_region
      _
    $region9: #{tpu_custom_call.1} parent=1 // pred_fallthru
      _
    // Predicated region
    $region10: #{tpu_custom_call.1} parent=1 // pred_check
      _
    $region11: #{tpu_custom_call.1} parent=1 // pred_check_branch
      %31 = sbr.rel (0) target = $region13
    $region12: #{tpu_custom_call.1} parent=1 // pred_region
      _
    $region13: #{tpu_custom_call.1} parent=1 // pred_fallthru
      _
    // Predicated region
    $region14: #{tpu_custom_call.1} parent=1 // pred_check
      _
    $region15: #{tpu_custom_call.1} parent=1 // pred_check_branch
      %33 = sbr.rel (0) target = $region17
    $region16: #{tpu_custom_call.1} parent=1 // pred_region
      _
    $region17: #{tpu_custom_call.1} parent=1 // pred_fallthru
      _
    // Predicated region
    $region18: #{tpu_custom_call.1} parent=1 // pred_check
      _
    $region19: #{tpu_custom_call.1} parent=1 // pred_check_branch
      %35 = sbr.rel (0) target = $region21
    $region20: #{tpu_custom_call.1} parent=1 // pred_region
      _
    $region21: #{tpu_custom_call.1} parent=1 // pred_fallthru
      _
    // Predicated region
    $region22: #{tpu_custom_call.1} parent=1 // pred_check
      _
    $region23: #{tpu_custom_call.1} parent=1 // pred_check_branch
      %37 = sbr.rel (0) target = $region25
    $region24: #{tpu_custom_call.1} parent=1 // pred_region
      _
    $region25: #{tpu_custom_call.1} parent=1 // pred_fallthru
      _
    // Predicated region
    $region26: #{tpu_custom_call.1} parent=1 // pred_check
      _
    $region27: #{tpu_custom_call.1} parent=1 // pred_check_branch
      %39 = sbr.rel (0) target = $region29
    $region28: #{tpu_custom_call.1} parent=1 // pred_region
      _
    $region29: #{tpu_custom_call.1} parent=1 // pred_fallthru
      _
    // Predicated region
    $region30: #{tpu_custom_call.1} parent=1 // pred_check
      _
    $region31: #{tpu_custom_call.1} parent=1 // pred_check_branch
      %41 = sbr.rel (0) target = $region33
    $region32: #{tpu_custom_call.1} parent=1 // pred_region
      _
    $region33: #{tpu_custom_call.1} parent=1 // pred_fallthru
      _
    // Predicated region
    $region34: #{tpu_custom_call.1} parent=1 // pred_check
      _
    $region35: #{tpu_custom_call.1} parent=1 // pred_check_branch
      %43 = sbr.rel (0) target = $region37
    $region36: #{tpu_custom_call.1} parent=1 // pred_region
      _
    $region37: #{tpu_custom_call.1} parent=1 // pred_fallthru
      _
    // Predicated region
    $region38: #{tpu_custom_call.1} parent=1 // pred_check
      _
    $region39: #{tpu_custom_call.1} parent=1 // pred_check_branch
      %45 = sbr.rel (0) target = $region41
    $region40: #{tpu_custom_call.1} parent=1 // pred_region
      _
    $region41: #{tpu_custom_call.1} parent=1 // pred_fallthru
      _
    // Predicated region
    $region42: #{tpu_custom_call.1} parent=1 // pred_check
      _
    $region43: #{tpu_custom_call.1} parent=1 // pred_check_branch
      %47 = sbr.rel (0) target = $region45
    $region44: #{tpu_custom_call.1} parent=1 // pred_region
      _
    $region45: #{tpu_custom_call.1} parent=1 // pred_fallthru
      _
    // Predicated region
    $region46: #{tpu_custom_call.1} parent=1 // pred_check
      _
    $region47: #{tpu_custom_call.1} parent=1 // pred_check_branch
      %49 = sbr.rel (0) target = $region49
    $region48: #{tpu_custom_call.1} parent=1 // pred_region
      _
    $region49: #{tpu_custom_call.1} parent=1 // pred_fallthru
      _
    // Predicated region
    $region50: #{tpu_custom_call.1} parent=1 // pred_check
      _
    $region51: #{tpu_custom_call.1} parent=1 // pred_check_branch
      %51 = sbr.rel (0) target = $region53
    $region52: #{tpu_custom_call.1} parent=1 // pred_region
      %52 = dma.done [#allocation3], 16
    $region53: #{tpu_custom_call.1} parent=1 // pred_fallthru
      _
    %53 = sfence
    %v55 = vlaneseq
    %v56 = vshrl.u32 %v55, 7
    %v57 = vadd.s32 %v56, 8
    %v58 = vlaneseq
    %v59 = vand.u32 %v58, 127
    %s60 = sld [smem:[#allocation2]]
    %v61 = vstv %s60
    %vm62 = vcmp.lt.s32.totalorder %v56, %v61
    %vm63 = vcmp.lt.s32.totalorder %v57, %v61
    %v64 = vsel %vm62, 1, 0
    %v65 = vsel %vm63, 1, 0
    %v66 = vcvt.s32.f32 %v64
    %v67 = vcvt.s32.f32 %v65
    %vm68 = vcmp.lt.s32.totalorder %v59, %v61
    %v69 = vsel %vm68, 1, 0
    %v70 = vcvt.s32.f32 %v69
    %v71 = vmul.f32 %v66, %v70
    %v72 = vmul.f32 %v67, %v70
    %v73 = vsub.f32 1.0, %v71
    %v74 = vsub.f32 1.0, %v72
    %v75 = vmul.f32 %v73, -10000.0
    %v76 = vmul.f32 %v74, -10000.0
    %s77 = sld [smem:[#allocation2 + $0x1]]
    %v78 = vstv %s77
    %vm79 = vcmp.lt.s32.totalorder %v56, %v78
    %vm80 = vcmp.lt.s32.totalorder %v57, %v78
    %v81 = vsel %vm79, 1, 0
    %v82 = vsel %vm80, 1, 0
    %v83 = vcvt.s32.f32 %v81
    %v84 = vcvt.s32.f32 %v82
    %vm85 = vcmp.lt.s32.totalorder %v59, %v78
    %v86 = vsel %vm85, 1, 0
    %v87 = vcvt.s32.f32 %v86
    %v88 = vmul.f32 %v83, %v87
    %v89 = vmul.f32 %v84, %v87
    %v90 = vsub.f32 1.0, %v88
    %v91 = vsub.f32 1.0, %v89
    %v92 = vmul.f32 %v90, -10000.0
    %v93 = vmul.f32 %v91, -10000.0
    %vm94 = vcmp.ge.s32.totalorder %v56, 1
    %vm95 = vcmp.ge.s32.totalorder %v57, 1
    %v96 = vsel %vm94, 1, 0
    %v97 = vsel %vm95, 1, 0
    %v98 = vcvt.s32.f32 %v96
    %v99 = vcvt.s32.f32 %v97
    %vm100 = vcmp.lt.s32.totalorder %v56, 15
    %vm101 = vcmp.lt.s32.totalorder %v57, 15
    %v102 = vsel %vm100, 1, 0
    %v103 = vsel %vm101, 1, 0
    %v104 = vcvt.s32.f32 %v102
    %v105 = vcvt.s32.f32 %v103
    %v106 = vld [vmem:[%s1] sm:$0xff]
    %v107 = vld [vmem:[%s1 + $0x8] sm:$0xff]
    %v108 = vld [vmem:[%s1 + $0x10] sm:$0xff]
    %v109 = vld [vmem:[%s1 + $0x18] sm:$0xff]
    %v110 = vld [vmem:[%s1 + $0x20] sm:$0xff]
    %v111 = vld [vmem:[%s1 + $0x28] sm:$0xff]
    %v112 = vld [vmem:[%s1 + $0x30] sm:$0xff]
    %v113 = vld [vmem:[%s1 + $0x38] sm:$0xff]
    %v114 = vld [vmem:[%s1 + $0x40] sm:$0xff]
    %v115 = vld [vmem:[%s1 + $0x48] sm:$0xff]
    %v116 = vld [vmem:[%s1 + $0x50] sm:$0xff]
    %v117 = vld [vmem:[%s1 + $0x58] sm:$0xff]
    %v118 = vld [vmem:[%s2] sm:$0xf]
    %v119 = vld [vmem:[%s2 + $0x4] sm:$0xf]
    %v120 = vld [vmem:[%s2 + $0x8] sm:$0xf]
    %v121 = vld [vmem:[%s2 + $0xc] sm:$0xf]
    %v122 = vld [vmem:[%s2 + $0x10] sm:$0xf]
    %v123 = vld [vmem:[%s2 + $0x14] sm:$0xf]
    %v124 = vld [vmem:[%s2 + $0x18] sm:$0xf]
    %v125 = vld [vmem:[%s2 + $0x1c] sm:$0xf]
    %v126 = vld [vmem:[%s2 + $0x20] sm:$0xf]
    %v127 = vld [vmem:[%s2 + $0x24] sm:$0xf]
    %v128 = vld [vmem:[%s2 + $0x28] sm:$0xf]
    %v129 = vld [vmem:[%s2 + $0x2c] sm:$0xf]
    %v130 = vld [vmem:[%s2 + $0x30] sm:$0xf]
    %v131 = vld [vmem:[%s2 + $0x34] sm:$0xf]
    %v132 = vld [vmem:[%s2 + $0x38] sm:$0xf]
    %v133 = vld [vmem:[%s2 + $0x3c] sm:$0xf]
    %v134 = vld [vmem:[%s2 + $0x40] sm:$0xf]
    %v135 = vld [vmem:[%s2 + $0x44] sm:$0xf]
    %v136 = vld [vmem:[%s2 + $0x48] sm:$0xf]
    %v137 = vld [vmem:[%s2 + $0x4c] sm:$0xf]
    %v138 = vld [vmem:[%s2 + $0x50] sm:$0xf]
    %v139 = vld [vmem:[%s2 + $0x54] sm:$0xf]
    %v140 = vld [vmem:[%s2 + $0x58] sm:$0xf]
    %v141 = vld [vmem:[%s2 + $0x5c] sm:$0xf]
    %v142 = vld [vmem:[%s2 + $0x60] sm:$0xf]
    %v143 = vld [vmem:[%s2 + $0x64] sm:$0xf]
    %v144 = vld [vmem:[%s2 + $0x68] sm:$0xf]
    %v145 = vld [vmem:[%s2 + $0x6c] sm:$0xf]
    %v146 = vld [vmem:[%s2 + $0x70] sm:$0xf]
    %v147 = vld [vmem:[%s2 + $0x74] sm:$0xf]
    %v148 = vld [vmem:[%s2 + $0x78] sm:$0xf]
    %v149 = vld [vmem:[%s2 + $0x7c] sm:$0xf]
    %v150 = vld [vmem:[%s2 + $0x80] sm:$0xf]
    %v151 = vld [vmem:[%s2 + $0x84] sm:$0xf]
    %v152 = vld [vmem:[%s2 + $0x88] sm:$0xf]
    %v153 = vld [vmem:[%s2 + $0x8c] sm:$0xf]
    %v154 = vld [vmem:[%s2 + $0x90] sm:$0xf]
    %v155 = vld [vmem:[%s2 + $0x94] sm:$0xf]
    %v156 = vld [vmem:[%s2 + $0x98] sm:$0xf]
    %v157 = vld [vmem:[%s2 + $0x9c] sm:$0xf]
    %v158 = vld [vmem:[%s2 + $0xa0] sm:$0xf]
    %v159 = vld [vmem:[%s2 + $0xa4] sm:$0xf]
    %v160 = vld [vmem:[%s2 + $0xa8] sm:$0xf]
    %v161 = vld [vmem:[%s2 + $0xac] sm:$0xf]
    %v162 = vld [vmem:[%s2 + $0xb0] sm:$0xf]
    %v163 = vld [vmem:[%s2 + $0xb4] sm:$0xf]
    %v164 = vld [vmem:[%s2 + $0xb8] sm:$0xf]
    %v165 = vld [vmem:[%s2 + $0xbc] sm:$0xf]
    %v166 = vld [vmem:[%s2 + $0xc0] sm:$0xf]
    %v167 = vld [vmem:[%s2 + $0xc4] sm:$0xf]
    %v168 = vld [vmem:[%s2 + $0xc8] sm:$0xf]
    %v169 = vld [vmem:[%s2 + $0xcc] sm:$0xf]
    %v170 = vld [vmem:[%s2 + $0xd0] sm:$0xf]
    %v171 = vld [vmem:[%s2 + $0xd4] sm:$0xf]
    %v172 = vld [vmem:[%s2 + $0xd8] sm:$0xf]
    %v173 = vld [vmem:[%s2 + $0xdc] sm:$0xf]
    %v174 = vld [vmem:[%s2 + $0xe0] sm:$0xf]
    %v175 = vld [vmem:[%s2 + $0xe4] sm:$0xf]
    %v176 = vld [vmem:[%s2 + $0xe8] sm:$0xf]
    %v177 = vld [vmem:[%s2 + $0xec] sm:$0xf]
    %v178 = vld [vmem:[%s2 + $0xf0] sm:$0xf]
    %v179 = vld [vmem:[%s2 + $0xf4] sm:$0xf]
    %v180 = vld [vmem:[%s2 + $0xf8] sm:$0xf]
    %v181 = vld [vmem:[%s2 + $0xfc] sm:$0xf]
    %v182 = vld [vmem:[%s2 + $0x100] sm:$0xf]
    %v183 = vld [vmem:[%s2 + $0x104] sm:$0xf]
    %v184 = vld [vmem:[%s2 + $0x108] sm:$0xf]
    %v185 = vld [vmem:[%s2 + $0x10c] sm:$0xf]
    %v186 = vld [vmem:[%s2 + $0x110] sm:$0xf]
    %v187 = vld [vmem:[%s2 + $0x114] sm:$0xf]
    %v188 = vld [vmem:[%s2 + $0x118] sm:$0xf]
    %v189 = vld [vmem:[%s2 + $0x11c] sm:$0xf]
    %v190 = vld [vmem:[%s2 + $0x120] sm:$0xf]
    %v191 = vld [vmem:[%s2 + $0x124] sm:$0xf]
    %v192 = vld [vmem:[%s2 + $0x128] sm:$0xf]
    %v193 = vld [vmem:[%s2 + $0x12c] sm:$0xf]
    %v194 = vld [vmem:[%s2 + $0x130] sm:$0xf]
    %v195 = vld [vmem:[%s2 + $0x134] sm:$0xf]
    %v196 = vld [vmem:[%s2 + $0x138] sm:$0xf]
    %v197 = vld [vmem:[%s2 + $0x13c] sm:$0xf]
    %v198 = vld [vmem:[%s2 + $0x140] sm:$0xf]
    %v199 = vld [vmem:[%s2 + $0x144] sm:$0xf]
    %v200 = vld [vmem:[%s2 + $0x148] sm:$0xf]
    %v201 = vld [vmem:[%s2 + $0x14c] sm:$0xf]
    %v202 = vld [vmem:[%s2 + $0x150] sm:$0xf]
    %v203 = vld [vmem:[%s2 + $0x154] sm:$0xf]
    %v204 = vld [vmem:[%s2 + $0x158] sm:$0xf]
    %v205 = vld [vmem:[%s2 + $0x15c] sm:$0xf]
    %v206 = vld [vmem:[%s2 + $0x160] sm:$0xf]
    %v207 = vld [vmem:[%s2 + $0x164] sm:$0xf]
    %v208 = vld [vmem:[%s2 + $0x168] sm:$0xf]
    %v209 = vld [vmem:[%s2 + $0x16c] sm:$0xf]
    %v210 = vld [vmem:[%s2 + $0x170] sm:$0xf]
    %v211 = vld [vmem:[%s2 + $0x174] sm:$0xf]
    %v212 = vld [vmem:[%s2 + $0x178] sm:$0xf]
    %v213 = vld [vmem:[%s2 + $0x17c] sm:$0xf]
    %v214 = vld [vmem:[%s11] ss:$0 sm:$0xff]
    %v227 = vunpack.c.l.b16 %v106
    %v228 = vunpack.c.h.b16 %v106
    %v229 = vunpack.c.l.b16 %v107
    %v230 = vunpack.c.h.b16 %v107
    %v231 = vunpack.c.l.b16 %v108
    %v232 = vunpack.c.h.b16 %v108
    %v233 = vunpack.c.l.b16 %v109
    %v234 = vunpack.c.h.b16 %v109
    %v235 = vunpack.c.l.b16 %v110
    %v236 = vunpack.c.h.b16 %v110
    %v237 = vunpack.c.l.b16 %v111
    %v238 = vunpack.c.h.b16 %v111
    %v239 = vunpack.c.l.b16 %v112
    %v240 = vunpack.c.h.b16 %v112
    %v241 = vunpack.c.l.b16 %v113
    %v242 = vunpack.c.h.b16 %v113
    %v243 = vunpack.c.l.b16 %v114
    %v244 = vunpack.c.h.b16 %v114
    %v245 = vunpack.c.l.b16 %v115
    %v246 = vunpack.c.h.b16 %v115
    %v247 = vunpack.c.l.b16 %v116
    %v248 = vunpack.c.h.b16 %v116
    %v249 = vunpack.c.l.b16 %v117
    %v250 = vunpack.c.h.b16 %v117
    %v251 = vpack.c.b16 %v233, %v227
    %v252 = vpack.c.b16 %v234, %v228
    %v253 = vpack.c.b16 %v235, %v229
    %v254 = vpack.c.b16 %v236, %v230
    %v255 = vpack.c.b16 %v237, %v231
    %v256 = vpack.c.b16 %v238, %v232
    %v257 = vpack.c.b16 %v245, %v239
    %v258 = vpack.c.b16 %v246, %v240
    %v259 = vpack.c.b16 %v247, %v241
    %v260 = vpack.c.b16 %v248, %v242
    %v261 = vpack.c.b16 %v249, %v243
    %v262 = vpack.c.b16 %v250, %v244
    %v371 = vunpack.c.l.b16 %v118
    %v372 = vunpack.c.l.b16 %v119
    %v373 = vunpack.c.l.b16 %v120
    %v374 = vunpack.c.l.b16 %v121
    %v375 = vunpack.c.l.b16 %v122
    %v376 = vunpack.c.l.b16 %v123
    %v377 = vunpack.c.l.b16 %v124
    %v378 = vunpack.c.l.b16 %v125
    %v379 = vunpack.c.l.b16 %v126
    %v380 = vunpack.c.l.b16 %v127
    %v381 = vunpack.c.l.b16 %v128
    %v382 = vunpack.c.l.b16 %v129
    %v383 = vunpack.c.l.b16 %v130
    %v384 = vunpack.c.l.b16 %v131
    %v385 = vunpack.c.l.b16 %v132
    %v386 = vunpack.c.l.b16 %v133
    %v387 = vunpack.c.l.b16 %v134
    %v388 = vunpack.c.l.b16 %v135
    %v389 = vunpack.c.l.b16 %v136
    %v390 = vunpack.c.l.b16 %v137
    %v391 = vunpack.c.l.b16 %v138
    %v392 = vunpack.c.l.b16 %v139
    %v393 = vunpack.c.l.b16 %v140
    %v394 = vunpack.c.l.b16 %v141
    %v395 = vunpack.c.l.b16 %v142
    %v396 = vunpack.c.l.b16 %v143
    %v397 = vunpack.c.l.b16 %v144
    %v398 = vunpack.c.l.b16 %v145
    %v399 = vunpack.c.l.b16 %v146
    %v400 = vunpack.c.l.b16 %v147
    %v401 = vunpack.c.l.b16 %v148
    %v402 = vunpack.c.l.b16 %v149
    %v403 = vunpack.c.l.b16 %v150
    %v404 = vunpack.c.l.b16 %v151
    %v405 = vunpack.c.l.b16 %v152
    %v406 = vunpack.c.l.b16 %v153
    %v407 = vunpack.c.l.b16 %v154
    %v408 = vunpack.c.l.b16 %v155
    %v409 = vunpack.c.l.b16 %v156
    %v410 = vunpack.c.l.b16 %v157
    %v411 = vunpack.c.l.b16 %v158
    %v412 = vunpack.c.l.b16 %v159
    %v413 = vunpack.c.l.b16 %v160
    %v414 = vunpack.c.l.b16 %v161
    %v415 = vunpack.c.l.b16 %v162
    %v416 = vunpack.c.l.b16 %v163
    %v417 = vunpack.c.l.b16 %v164
    %v418 = vunpack.c.l.b16 %v165
    %v419 = vunpack.c.l.b16 %v166
    %v420 = vunpack.c.l.b16 %v167
    %v421 = vunpack.c.l.b16 %v168
    %v422 = vunpack.c.l.b16 %v169
    %v423 = vunpack.c.l.b16 %v170
    %v424 = vunpack.c.l.b16 %v171
    %v425 = vunpack.c.l.b16 %v172
    %v426 = vunpack.c.l.b16 %v173
    %v427 = vunpack.c.l.b16 %v174
    %v428 = vunpack.c.l.b16 %v175
    %v429 = vunpack.c.l.b16 %v176
    %v430 = vunpack.c.l.b16 %v177
    %v431 = vunpack.c.l.b16 %v178
    %v432 = vunpack.c.l.b16 %v179
    %v433 = vunpack.c.l.b16 %v180
    %v434 = vunpack.c.l.b16 %v181
    %v435 = vunpack.c.l.b16 %v182
    %v436 = vunpack.c.l.b16 %v183
    %v437 = vunpack.c.l.b16 %v184
    %v438 = vunpack.c.l.b16 %v185
    %v439 = vunpack.c.l.b16 %v186
    %v440 = vunpack.c.l.b16 %v187
    %v441 = vunpack.c.l.b16 %v188
    %v442 = vunpack.c.l.b16 %v189
    %v443 = vunpack.c.l.b16 %v190
    %v444 = vunpack.c.l.b16 %v191
    %v445 = vunpack.c.l.b16 %v192
    %v446 = vunpack.c.l.b16 %v193
    %v447 = vunpack.c.l.b16 %v194
    %v448 = vunpack.c.l.b16 %v195
    %v449 = vunpack.c.l.b16 %v196
    %v450 = vunpack.c.l.b16 %v197
    %v451 = vunpack.c.l.b16 %v198
    %v452 = vunpack.c.l.b16 %v199
    %v453 = vunpack.c.l.b16 %v200
    %v454 = vunpack.c.l.b16 %v201
    %v455 = vunpack.c.l.b16 %v202
    %v456 = vunpack.c.l.b16 %v203
    %v457 = vunpack.c.l.b16 %v204
    %v458 = vunpack.c.l.b16 %v205
    %v459 = vunpack.c.l.b16 %v206
    %v460 = vunpack.c.l.b16 %v207
    %v461 = vunpack.c.l.b16 %v208
    %v462 = vunpack.c.l.b16 %v209
    %v463 = vunpack.c.l.b16 %v210
    %v464 = vunpack.c.l.b16 %v211
    %v465 = vunpack.c.l.b16 %v212
    %v466 = vunpack.c.l.b16 %v213
    %v467 = vpack.c.b16 %v372, %v371
    %v468 = vpack.c.b16 %v374, %v373
    %v469 = vpack.c.b16 %v376, %v375
    %v470 = vpack.c.b16 %v378, %v377
    %v471 = vpack.c.b16 %v380, %v379
    %v472 = vpack.c.b16 %v382, %v381
    %v473 = vpack.c.b16 %v384, %v383
    %v474 = vpack.c.b16 %v386, %v385
    %v475 = vpack.c.b16 %v388, %v387
    %v476 = vpack.c.b16 %v390, %v389
    %v477 = vpack.c.b16 %v392, %v391
    %v478 = vpack.c.b16 %v394, %v393
    %v479 = vpack.c.b16 %v396, %v395
    %v480 = vpack.c.b16 %v398, %v397
    %v481 = vpack.c.b16 %v400, %v399
    %v482 = vpack.c.b16 %v402, %v401
    %v483 = vpack.c.b16 %v404, %v403
    %v484 = vpack.c.b16 %v406, %v405
    %v485 = vpack.c.b16 %v408, %v407
    %v486 = vpack.c.b16 %v410, %v409
    %v487 = vpack.c.b16 %v412, %v411
    %v488 = vpack.c.b16 %v414, %v413
    %v489 = vpack.c.b16 %v416, %v415
    %v490 = vpack.c.b16 %v418, %v417
    %v491 = vpack.c.b16 %v420, %v419
    %v492 = vpack.c.b16 %v422, %v421
    %v493 = vpack.c.b16 %v424, %v423
    %v494 = vpack.c.b16 %v426, %v425
    %v495 = vpack.c.b16 %v428, %v427
    %v496 = vpack.c.b16 %v430, %v429
    %v497 = vpack.c.b16 %v432, %v431
    %v498 = vpack.c.b16 %v434, %v433
    %v499 = vpack.c.b16 %v436, %v435
    %v500 = vpack.c.b16 %v438, %v437
    %v501 = vpack.c.b16 %v440, %v439
    %v502 = vpack.c.b16 %v442, %v441
    %v503 = vpack.c.b16 %v444, %v443
    %v504 = vpack.c.b16 %v446, %v445
    %v505 = vpack.c.b16 %v448, %v447
    %v506 = vpack.c.b16 %v450, %v449
    %v507 = vpack.c.b16 %v452, %v451
    %v508 = vpack.c.b16 %v454, %v453
    %v509 = vpack.c.b16 %v456, %v455
    %v510 = vpack.c.b16 %v458, %v457
    %v511 = vpack.c.b16 %v460, %v459
    %v512 = vpack.c.b16 %v462, %v461
    %v513 = vpack.c.b16 %v464, %v463
    %v514 = vpack.c.b16 %v466, %v465
    %563 = vmatprep.subr.bf16.mxu0 0
    %564 = vmatpush1.bf16.msra.mxu0 %v474
    %565 = vmatprep.subr.bf16.mxu0 0
    %566 = vmatpush1.bf16.msra.mxu0 %v473
    %567 = vmatprep.subr.bf16.mxu0 0
    %568 = vmatpush1.bf16.msra.mxu0 %v472
    %569 = vmatprep.subr.bf16.mxu0 0
    %570 = vmatpush1.bf16.msra.mxu0 %v471
    %571 = vmatprep.subr.bf16.mxu0 0
    %572 = vmatpush1.bf16.msra.mxu0 %v470
    %573 = vmatprep.subr.bf16.mxu0 0
    %574 = vmatpush1.bf16.msra.mxu0 %v469
    %575 = vmatprep.subr.bf16.mxu0 0
    %576 = vmatpush1.bf16.msra.mxu0 %v468
    %577 = vmatprep.subr.bf16.mxu0 0
    %578 = vmatpush1.bf16.msra.mxu0 %v467
    %579 = vmatprep.subr.bf16.mxu0 0
    %580 = vmatpush2.bf16.msra.mxu0 %v482
    %581 = vmatprep.subr.bf16.mxu0 0
    %582 = vmatpush2.bf16.msra.mxu0 %v481
    %583 = vmatprep.subr.bf16.mxu0 0
    %584 = vmatpush2.bf16.msra.mxu0 %v480
    %585 = vmatprep.subr.bf16.mxu0 0
    %586 = vmatpush2.bf16.msra.mxu0 %v479
    %587 = vmatprep.subr.bf16.mxu0 0
    %588 = vmatpush2.bf16.msra.mxu0 %v478
    %589 = vmatprep.subr.bf16.mxu0 0
    %590 = vmatpush2.bf16.msra.mxu0 %v477
    %591 = vmatprep.subr.bf16.mxu0 0
    %592 = vmatpush2.bf16.msra.mxu0 %v476
    %593 = vmatprep.subr.bf16.mxu0 0
    %594 = vmatpush2.bf16.msra.mxu0 %v475
    %595 = vmatprep.mubr.bf16.mxu0 %v252
    %596 = vmatmul.mubr.bf16.gmra.mxu0 %v251
    %v597 = vpop.f32.mrf.mxu0
    %v598 = vadd.f32 %v214, %v597
    %v599 = vpop.f32.mrf.mxu0
    %v600 = vpop.f32.mrf.mxu0
    %v601 = vadd.f32 %v214, %v600
    %v602 = vpop.f32.mrf.mxu0
    %603 = vmatprep.mubr.bf16.mxu0 %v258
    %604 = vmatmul.mubr.bf16.gmra.mxu0 %v257
    %v605 = vpop.f32.mrf.mxu0
    %v606 = vadd.f32 %v214, %v605
    %v607 = vpop.f32.mrf.mxu0
    %v608 = vpop.f32.mrf.mxu0
    %v609 = vadd.f32 %v214, %v608
    %v610 = vpop.f32.mrf.mxu0
    %611 = vdwg.mxu0
    %612 = vmatprep.subr.bf16.mxu0 0
    %613 = vmatpush1.bf16.msra.mxu0 %v490
    %614 = vmatprep.subr.bf16.mxu0 0
    %615 = vmatpush1.bf16.msra.mxu0 %v489
    %616 = vmatprep.subr.bf16.mxu0 0
    %617 = vmatpush1.bf16.msra.mxu0 %v488
    %618 = vmatprep.subr.bf16.mxu0 0
    %619 = vmatpush1.bf16.msra.mxu0 %v487
    %620 = vmatprep.subr.bf16.mxu0 0
    %621 = vmatpush1.bf16.msra.mxu0 %v486
    %622 = vmatprep.subr.bf16.mxu0 0
    %623 = vmatpush1.bf16.msra.mxu0 %v485
    %624 = vmatprep.subr.bf16.mxu0 0
    %625 = vmatpush1.bf16.msra.mxu0 %v484
    %626 = vmatprep.subr.bf16.mxu0 0
    %627 = vmatpush1.bf16.msra.mxu0 %v483
    %628 = vmatprep.subr.bf16.mxu0 0
    %629 = vmatpush2.bf16.msra.mxu0 %v498
    %630 = vmatprep.subr.bf16.mxu0 0
    %631 = vmatpush2.bf16.msra.mxu0 %v497
    %632 = vmatprep.subr.bf16.mxu0 0
    %633 = vmatpush2.bf16.msra.mxu0 %v496
    %634 = vmatprep.subr.bf16.mxu0 0
    %635 = vmatpush2.bf16.msra.mxu0 %v495
    %636 = vmatprep.subr.bf16.mxu0 0
    %637 = vmatpush2.bf16.msra.mxu0 %v494
    %638 = vmatprep.subr.bf16.mxu0 0
    %639 = vmatpush2.bf16.msra.mxu0 %v493
    %640 = vmatprep.subr.bf16.mxu0 0
    %641 = vmatpush2.bf16.msra.mxu0 %v492
    %642 = vmatprep.subr.bf16.mxu0 0
    %643 = vmatpush2.bf16.msra.mxu0 %v491
    %644 = vmatprep.mubr.bf16.mxu0 %v254
    %645 = vmatmul.mubr.bf16.gmra.mxu0 %v253
    %v646 = vpop.f32.mrf.mxu0
    %v647 = vadd.f32 %v598, %v646
    %v648 = vpop.f32.mrf.mxu0
    %v649 = vpop.f32.mrf.mxu0
    %v650 = vadd.f32 %v601, %v649
    %v651 = vpop.f32.mrf.mxu0
    %652 = vmatprep.mubr.bf16.mxu0 %v260
    %653 = vmatmul.mubr.bf16.gmra.mxu0 %v259
    %v654 = vpop.f32.mrf.mxu0
    %v655 = vadd.f32 %v606, %v654
    %v656 = vpop.f32.mrf.mxu0
    %v657 = vpop.f32.mrf.mxu0
    %v658 = vadd.f32 %v609, %v657
    %v659 = vpop.f32.mrf.mxu0
    %660 = vdwg.mxu0
    %661 = vmatprep.subr.bf16.mxu0 0
    %662 = vmatpush1.bf16.msra.mxu0 %v506
    %663 = vmatprep.subr.bf16.mxu0 0
    %664 = vmatpush1.bf16.msra.mxu0 %v505
    %665 = vmatprep.subr.bf16.mxu0 0
    %666 = vmatpush1.bf16.msra.mxu0 %v504
    %667 = vmatprep.subr.bf16.mxu0 0
    %668 = vmatpush1.bf16.msra.mxu0 %v503
    %669 = vmatprep.subr.bf16.mxu0 0
    %670 = vmatpush1.bf16.msra.mxu0 %v502
    %671 = vmatprep.subr.bf16.mxu0 0
    %672 = vmatpush1.bf16.msra.mxu0 %v501
    %673 = vmatprep.subr.bf16.mxu0 0
    %674 = vmatpush1.bf16.msra.mxu0 %v500
    %675 = vmatprep.subr.bf16.mxu0 0
    %676 = vmatpush1.bf16.msra.mxu0 %v499
    %677 = vmatprep.subr.bf16.mxu0 0
    %678 = vmatpush2.bf16.msra.mxu0 %v514
    %679 = vmatprep.subr.bf16.mxu0 0
    %680 = vmatpush2.bf16.msra.mxu0 %v513
    %681 = vmatprep.subr.bf16.mxu0 0
    %682 = vmatpush2.bf16.msra.mxu0 %v512
    %683 = vmatprep.subr.bf16.mxu0 0
    %684 = vmatpush2.bf16.msra.mxu0 %v511
    %685 = vmatprep.subr.bf16.mxu0 0
    %686 = vmatpush2.bf16.msra.mxu0 %v510
    %687 = vmatprep.subr.bf16.mxu0 0
    %688 = vmatpush2.bf16.msra.mxu0 %v509
    %689 = vmatprep.subr.bf16.mxu0 0
    %690 = vmatpush2.bf16.msra.mxu0 %v508
    %691 = vmatprep.subr.bf16.mxu0 0
    %692 = vmatpush2.bf16.msra.mxu0 %v507
    %693 = vmatprep.mubr.bf16.mxu0 %v256
    %694 = vmatmul.mubr.bf16.gmra.mxu0 %v255
    %v695 = vpop.f32.mrf.mxu0
    %v696 = vadd.f32 %v647, %v695
    %v697 = vpop.f32.mrf.mxu0
    %v698 = vpop.f32.mrf.mxu0
    %v699 = vadd.f32 %v650, %v698
    %v700 = vpop.f32.mrf.mxu0
    %701 = vmatprep.mubr.bf16.mxu0 %v262
    %702 = vmatmul.mubr.bf16.gmra.mxu0 %v261
    %v703 = vpop.f32.mrf.mxu0
    %v704 = vadd.f32 %v655, %v703
    %v705 = vpop.f32.mrf.mxu0
    %v706 = vpop.f32.mrf.mxu0
    %v707 = vadd.f32 %v658, %v706
    %v708 = vpop.f32.mrf.mxu0
    %709 = vdwg.mxu0
    %v710 = vld [vmem:[%s3] sm:$0xff]
    %v711 = vld [vmem:[%s3 + $0x8] sm:$0xff]
    %v712 = vld [vmem:[%s3 + $0x10] sm:$0xff]
    %v713 = vld [vmem:[%s3 + $0x18] sm:$0xff]
    %v714 = vadd.f32 %v696, %v710
    %v715 = vadd.f32 %v699, %v711
    %v716 = vadd.f32 %v704, %v712
    %v717 = vadd.f32 %v707, %v713
    %v718 = vmul.f32 %v714, 8.0
    %v719 = vmul.f32 %v715, 8.0
    %v720 = vmul.f32 %v716, 8.0
    %v721 = vmul.f32 %v717, 8.0
    %vm722 = vcmp.gt.f32.partialorder %v718, 0.0
    %vm723 = vcmp.gt.f32.partialorder %v719, 0.0
    %vm724 = vcmp.gt.f32.partialorder %v720, 0.0
    %vm725 = vcmp.gt.f32.partialorder %v721, 0.0
    %v726 = vmul.f32 %v718, 0.1
    %v727 = vmul.f32 %v719, 0.1
    %v728 = vmul.f32 %v720, 0.1
    %v729 = vmul.f32 %v721, 0.1
    %v730 = vsel %vm722, %v718, %v726
    %v731 = vsel %vm723, %v719, %v727
    %v732 = vsel %vm724, %v720, %v728
    %v733 = vsel %vm725, %v721, %v729
    %v734 = vld [vmem:[%s6] sm:$0xff]
    %v735 = vld [vmem:[%s6 + $0x8] sm:$0xff]
    %v736 = vld [vmem:[%s6 + $0x10] sm:$0xff]
    %v737 = vld [vmem:[%s6 + $0x18] sm:$0xff]
    %v738 = vld [vmem:[%s6 + $0x20] sm:$0xff]
    %v739 = vld [vmem:[%s6 + $0x28] sm:$0xff]
    %v740 = vld [vmem:[%s6 + $0x30] sm:$0xff]
    %v741 = vld [vmem:[%s6 + $0x38] sm:$0xff]
    %v742 = vld [vmem:[%s6 + $0x40] sm:$0xff]
    %v743 = vld [vmem:[%s6 + $0x48] sm:$0xff]
    %v744 = vld [vmem:[%s6 + $0x50] sm:$0xff]
    %v745 = vld [vmem:[%s6 + $0x58] sm:$0xff]
    %v746 = vld [vmem:[%s6 + $0x60] sm:$0xff]
    %v747 = vld [vmem:[%s6 + $0x68] sm:$0xff]
    %v748 = vld [vmem:[%s6 + $0x70] sm:$0xff]
    %v749 = vld [vmem:[%s6 + $0x78] sm:$0xff]
    %s750 = scalar_lea.vmem %s11, 2
    %v751 = vld [vmem:[%s750] ss:$8 sm:$0x3]
    %v752 = vld [vmem:[%s11 + $0x3] ss:$0 sm:$0xff]
    %v753 = vld [vmem:[%s11 + $0x4] ss:$0 sm:$0xff]
    %v754 = vld [vmem:[%s11 + $0x5] ss:$0 sm:$0xff]
    %v755 = vld [vmem:[%s11 + $0x6] ss:$0 sm:$0xff]
    %v756 = vld [vmem:[%s11 + $0x7] ss:$0 sm:$0xff]
    %v757 = vld [vmem:[%s11 + $0x10] ss:$0 sm:$0xff]
    %v758 = vld [vmem:[%s11 + $0x11] ss:$0 sm:$0xff]
    %v759 = vld [vmem:[%s7] sm:$0xff]
    %v760 = vld [vmem:[%s7 + $0x8] sm:$0xff]
    %v761 = vld [vmem:[%s7 + $0x10] sm:$0xff]
    %v762 = vld [vmem:[%s7 + $0x18] sm:$0xff]
    %v763 = vld [vmem:[%s7 + $0x20] sm:$0xff]
    %v764 = vld [vmem:[%s7 + $0x28] sm:$0xff]
    %v765 = vld [vmem:[%s7 + $0x30] sm:$0xff]
    %v766 = vld [vmem:[%s7 + $0x38] sm:$0xff]
    %v767 = vld [vmem:[%s7 + $0x40] sm:$0xff]
    %v768 = vld [vmem:[%s7 + $0x48] sm:$0xff]
    %v769 = vld [vmem:[%s7 + $0x50] sm:$0xff]
    %v770 = vld [vmem:[%s7 + $0x58] sm:$0xff]
    %v771 = vld [vmem:[%s7 + $0x60] sm:$0xff]
    %v772 = vld [vmem:[%s7 + $0x68] sm:$0xff]
    %v773 = vld [vmem:[%s7 + $0x70] sm:$0xff]
    %v774 = vld [vmem:[%s7 + $0x78] sm:$0xff]
    %v775 = vld [vmem:[%s7 + $0x80] sm:$0xff]
    %v776 = vld [vmem:[%s7 + $0x88] sm:$0xff]
    %v777 = vld [vmem:[%s7 + $0x90] sm:$0xff]
    %v778 = vld [vmem:[%s7 + $0x98] sm:$0xff]
    %v779 = vld [vmem:[%s7 + $0xa0] sm:$0xff]
    %v780 = vld [vmem:[%s7 + $0xa8] sm:$0xff]
    %v781 = vld [vmem:[%s7 + $0xb0] sm:$0xff]
    %v782 = vld [vmem:[%s7 + $0xb8] sm:$0xff]
    %v783 = vld [vmem:[%s7 + $0xc0] sm:$0xff]
    %v784 = vld [vmem:[%s7 + $0xc8] sm:$0xff]
    %v785 = vld [vmem:[%s7 + $0xd0] sm:$0xff]
    %v786 = vld [vmem:[%s7 + $0xd8] sm:$0xff]
    %v787 = vld [vmem:[%s7 + $0xe0] sm:$0xff]
    %v788 = vld [vmem:[%s7 + $0xe8] sm:$0xff]
    %v789 = vld [vmem:[%s7 + $0xf0] sm:$0xff]
    %v790 = vld [vmem:[%s7 + $0xf8] sm:$0xff]
    %v791 = vld [vmem:[%s7 + $0x100] sm:$0xff]
    %v792 = vld [vmem:[%s7 + $0x108] sm:$0xff]
    %v793 = vld [vmem:[%s7 + $0x110] sm:$0xff]
    %v794 = vld [vmem:[%s7 + $0x118] sm:$0xff]
    %v795 = vld [vmem:[%s7 + $0x120] sm:$0xff]
    %v796 = vld [vmem:[%s7 + $0x128] sm:$0xff]
    %v797 = vld [vmem:[%s7 + $0x130] sm:$0xff]
    %v798 = vld [vmem:[%s7 + $0x138] sm:$0xff]
    %v799 = vld [vmem:[%s7 + $0x140] sm:$0xff]
    %v800 = vld [vmem:[%s7 + $0x148] sm:$0xff]
    %v801 = vld [vmem:[%s7 + $0x150] sm:$0xff]
    %v802 = vld [vmem:[%s7 + $0x158] sm:$0xff]
    %v803 = vld [vmem:[%s7 + $0x160] sm:$0xff]
    %v804 = vld [vmem:[%s7 + $0x168] sm:$0xff]
    %v805 = vld [vmem:[%s7 + $0x170] sm:$0xff]
    %v806 = vld [vmem:[%s7 + $0x178] sm:$0xff]
    %v807 = vld [vmem:[%s7 + $0x180] sm:$0xff]
    %v808 = vld [vmem:[%s7 + $0x188] sm:$0xff]
    %v809 = vld [vmem:[%s7 + $0x190] sm:$0xff]
    %v810 = vld [vmem:[%s7 + $0x198] sm:$0xff]
    %v811 = vld [vmem:[%s7 + $0x1a0] sm:$0xff]
    %v812 = vld [vmem:[%s7 + $0x1a8] sm:$0xff]
    %v813 = vld [vmem:[%s7 + $0x1b0] sm:$0xff]
    %v814 = vld [vmem:[%s7 + $0x1b8] sm:$0xff]
    %v815 = vld [vmem:[%s7 + $0x1c0] sm:$0xff]
    %v816 = vld [vmem:[%s7 + $0x1c8] sm:$0xff]
    %v817 = vld [vmem:[%s7 + $0x1d0] sm:$0xff]
    %v818 = vld [vmem:[%s7 + $0x1d8] sm:$0xff]
    %v819 = vld [vmem:[%s7 + $0x1e0] sm:$0xff]
    %v820 = vld [vmem:[%s7 + $0x1e8] sm:$0xff]
    %v821 = vld [vmem:[%s7 + $0x1f0] sm:$0xff]
    %v822 = vld [vmem:[%s7 + $0x1f8] sm:$0xff]
    %v823 = vld [vmem:[%s8] sm:$0xff]
    %v824 = vld [vmem:[%s8 + $0x8] sm:$0xff]
    %v825 = vld [vmem:[%s8 + $0x10] sm:$0xff]
    %v826 = vld [vmem:[%s8 + $0x18] sm:$0xff]
    %v827 = vld [vmem:[%s8 + $0x20] sm:$0xff]
    %v828 = vld [vmem:[%s8 + $0x28] sm:$0xff]
    %v829 = vld [vmem:[%s8 + $0x30] sm:$0xff]
    %v830 = vld [vmem:[%s8 + $0x38] sm:$0xff]
    %v831 = vld [vmem:[%s8 + $0x40] sm:$0xff]
    %v832 = vld [vmem:[%s8 + $0x48] sm:$0xff]
    %v833 = vld [vmem:[%s8 + $0x50] sm:$0xff]
    %v834 = vld [vmem:[%s8 + $0x58] sm:$0xff]
    %v835 = vld [vmem:[%s8 + $0x60] sm:$0xff]
    %v836 = vld [vmem:[%s8 + $0x68] sm:$0xff]
    %v837 = vld [vmem:[%s8 + $0x70] sm:$0xff]
    %v838 = vld [vmem:[%s8 + $0x78] sm:$0xff]
    %v839 = vld [vmem:[%s8 + $0x80] sm:$0xff]
    %v840 = vld [vmem:[%s8 + $0x88] sm:$0xff]
    %v841 = vld [vmem:[%s8 + $0x90] sm:$0xff]
    %v842 = vld [vmem:[%s8 + $0x98] sm:$0xff]
    %v843 = vld [vmem:[%s8 + $0xa0] sm:$0xff]
    %v844 = vld [vmem:[%s8 + $0xa8] sm:$0xff]
    %v845 = vld [vmem:[%s8 + $0xb0] sm:$0xff]
    %v846 = vld [vmem:[%s8 + $0xb8] sm:$0xff]
    %v847 = vld [vmem:[%s8 + $0xc0] sm:$0xff]
    %v848 = vld [vmem:[%s8 + $0xc8] sm:$0xff]
    %v849 = vld [vmem:[%s8 + $0xd0] sm:$0xff]
    %v850 = vld [vmem:[%s8 + $0xd8] sm:$0xff]
    %v851 = vld [vmem:[%s8 + $0xe0] sm:$0xff]
    %v852 = vld [vmem:[%s8 + $0xe8] sm:$0xff]
    %v853 = vld [vmem:[%s8 + $0xf0] sm:$0xff]
    %v854 = vld [vmem:[%s8 + $0xf8] sm:$0xff]
    %v855 = vld [vmem:[%s9] sm:$0xff]
    %v856 = vld [vmem:[%s9 + $0x8] sm:$0xff]
    %v857 = vld [vmem:[%s9 + $0x10] sm:$0xff]
    %v858 = vld [vmem:[%s9 + $0x18] sm:$0xff]
    %v859 = vld [vmem:[%s9 + $0x20] sm:$0xff]
    %v860 = vld [vmem:[%s9 + $0x28] sm:$0xff]
    %v861 = vld [vmem:[%s9 + $0x30] sm:$0xff]
    %v862 = vld [vmem:[%s9 + $0x38] sm:$0xff]
    %v863 = vld [vmem:[%s9 + $0x40] sm:$0xff]
    %v864 = vld [vmem:[%s9 + $0x48] sm:$0xff]
    %v865 = vld [vmem:[%s9 + $0x50] sm:$0xff]
    %v866 = vld [vmem:[%s9 + $0x58] sm:$0xff]
    %v867 = vld [vmem:[%s9 + $0x60] sm:$0xff]
    %v868 = vld [vmem:[%s9 + $0x68] sm:$0xff]
    %v869 = vld [vmem:[%s9 + $0x70] sm:$0xff]
    %v870 = vld [vmem:[%s9 + $0x78] sm:$0xff]
    %v871 = vld [vmem:[%s9 + $0x80] sm:$0xff]
    %v872 = vld [vmem:[%s9 + $0x88] sm:$0xff]
    %v873 = vld [vmem:[%s9 + $0x90] sm:$0xff]
    %v874 = vld [vmem:[%s9 + $0x98] sm:$0xff]
    %v875 = vld [vmem:[%s9 + $0xa0] sm:$0xff]
    %v876 = vld [vmem:[%s9 + $0xa8] sm:$0xff]
    %v877 = vld [vmem:[%s9 + $0xb0] sm:$0xff]
    %v878 = vld [vmem:[%s9 + $0xb8] sm:$0xff]
    %v879 = vld [vmem:[%s10] sm:$0xff]
    %v880 = vld [vmem:[%s10 + $0x8] sm:$0xff]
    %v881 = vld [vmem:[%s10 + $0x10] sm:$0xff]
    %v882 = vld [vmem:[%s10 + $0x18] sm:$0xff]
    %v883 = vld [vmem:[%s10 + $0x20] sm:$0xff]
    %v884 = vld [vmem:[%s10 + $0x28] sm:$0xff]
    %v885 = vld [vmem:[%s10 + $0x30] sm:$0xff]
    %v886 = vld [vmem:[%s10 + $0x38] sm:$0xff]
    %v887 = vld [vmem:[%s10 + $0x40] sm:$0xff]
    %v888 = vld [vmem:[%s10 + $0x48] sm:$0xff]
    %v889 = vld [vmem:[%s10 + $0x50] sm:$0xff]
    %v890 = vld [vmem:[%s10 + $0x58] sm:$0xff]
    %v891 = vld [vmem:[%s10 + $0x60] sm:$0xff]
    %v892 = vld [vmem:[%s10 + $0x68] sm:$0xff]
    %v893 = vld [vmem:[%s10 + $0x70] sm:$0xff]
    %v894 = vld [vmem:[%s10 + $0x78] sm:$0xff]
    %v895 = vld [vmem:[%s10 + $0x80] sm:$0xff]
    %v896 = vld [vmem:[%s10 + $0x88] sm:$0xff]
    %v897 = vld [vmem:[%s10 + $0x90] sm:$0xff]
    %v898 = vld [vmem:[%s10 + $0x98] sm:$0xff]
    %v899 = vld [vmem:[%s10 + $0xa0] sm:$0xff]
    %v900 = vld [vmem:[%s10 + $0xa8] sm:$0xff]
    %v901 = vld [vmem:[%s10 + $0xb0] sm:$0xff]
    %v902 = vld [vmem:[%s10 + $0xb8] sm:$0xff]
    %v903 = vld [vmem:[%s10 + $0xc0] sm:$0xff]
    %v904 = vld [vmem:[%s10 + $0xc8] sm:$0xff]
    %v905 = vld [vmem:[%s10 + $0xd0] sm:$0xff]
    %v906 = vld [vmem:[%s10 + $0xd8] sm:$0xff]
    %v907 = vld [vmem:[%s10 + $0xe0] sm:$0xff]
    %v908 = vld [vmem:[%s10 + $0xe8] sm:$0xff]
    %v909 = vld [vmem:[%s10 + $0xf0] sm:$0xff]
    %v910 = vld [vmem:[%s10 + $0xf8] sm:$0xff]
    %v911 = vld [vmem:[%s10 + $0x100] sm:$0xff]
    %v912 = vld [vmem:[%s10 + $0x108] sm:$0xff]
    %v913 = vld [vmem:[%s10 + $0x110] sm:$0xff]
    %v914 = vld [vmem:[%s10 + $0x118] sm:$0xff]
    %v915 = vld [vmem:[%s10 + $0x120] sm:$0xff]
    %v916 = vld [vmem:[%s10 + $0x128] sm:$0xff]
    %v917 = vld [vmem:[%s10 + $0x130] sm:$0xff]
    %v918 = vld [vmem:[%s10 + $0x138] sm:$0xff]
    %v919 = vld [vmem:[%s10 + $0x140] sm:$0xff]
    %v920 = vld [vmem:[%s10 + $0x148] sm:$0xff]
    %v921 = vld [vmem:[%s10 + $0x150] sm:$0xff]
    %v922 = vld [vmem:[%s10 + $0x158] sm:$0xff]
    %v923 = vld [vmem:[%s10 + $0x160] sm:$0xff]
    %v924 = vld [vmem:[%s10 + $0x168] sm:$0xff]
    %v925 = vld [vmem:[%s10 + $0x170] sm:$0xff]
    %v926 = vld [vmem:[%s10 + $0x178] sm:$0xff]
    %928 = vset.pattern.permute.xlu0 0
    %929 = vperm.xlu0 %928, %v66
    %v930 = vpop.permute.xlu0 %929
    %933 = vset.pattern.permute.xlu0 0
    %934 = vperm.xlu0 %933, %v67
    %v935 = vpop.permute.xlu0 %934
    %938 = vset.pattern.permute.xlu0 0
    %939 = vperm.xlu0 %938, %v83
    %v940 = vpop.permute.xlu0 %939
    %943 = vset.pattern.permute.xlu0 0
    %944 = vperm.xlu0 %943, %v84
    %v945 = vpop.permute.xlu0 %944
    %v947 = vmul.f32 %v730, %v930
    %v948 = vmul.f32 %v731, %v935
    %v949 = vmul.f32 %v732, %v940
    %v950 = vmul.f32 %v733, %v945
    %v952 = vlaneseq
    %v953 = vshrl.u32 %v952, 7
    %v954 = vsub.s32 0, %v953
    %v955 = vrot.slane %v751, %v954
    %v956 = vlaneseq
    %v957 = vshrl.u32 %v956, 7
    %v958 = vsub.s32 1, %v957
    %v959 = vrot.slane %v751, %v958
    %vm962 = vcmask 523264
    %v964 = vsel %vm962, %v947, 0
    %v967 = vsel %vm962, %v948, 0
    %v970 = vsel %vm962, %v949, 0
    %v973 = vsel %vm962, %v950, 0
    %975 = vmatprep.subr.mxu0 0.0
    %976 = vmatpush1.msra.mxu0 0.0
    %977 = vmatprep.subr.mxu0 0.0
    %978 = vmatpush1.msra.mxu0 0.0
    %979 = vmatprep.subr.mxu0 0.0
    %980 = vmatpush1.msra.mxu0 0.0
    %981 = vmatprep.subr.mxu0 0.0
    %982 = vmatpush1.msra.mxu0 0.0
    %983 = vmatprep.subr.mxu0 0.0
    %984 = vmatpush1.msra.mxu0 0.0
    %985 = vmatprep.subr.mxu0 0.0
    %986 = vmatpush1.msra.mxu0 0.0
    %987 = vmatprep.subr.mxu0 0.0
    %988 = vmatpush1.msra.mxu0 0.0
    %989 = vmatprep.subr.mxu0 0.0
    %990 = vmatpush1.msra.mxu0 0.0
    %991 = vmatprep.subr.mxu0 %v749
    %992 = vmatpush1.msra.mxu0 %v748
    %993 = vmatprep.subr.mxu0 %v747
    %994 = vmatpush1.msra.mxu0 %v746
    %995 = vmatprep.subr.mxu0 %v745
    %996 = vmatpush1.msra.mxu0 %v744
    %997 = vmatprep.subr.mxu0 %v743
    %998 = vmatpush1.msra.mxu0 %v742
    %999 = vmatprep.subr.mxu0 %v741
    %1000 = vmatpush1.msra.mxu0 %v740
    %1001 = vmatprep.subr.mxu0 %v739
    %1002 = vmatpush1.msra.mxu0 %v738
    %1003 = vmatprep.subr.mxu0 %v737
    %1004 = vmatpush1.msra.mxu0 %v736
    %1005 = vmatprep.subr.mxu0 %v735
    %1006 = vmatpush1.msra.mxu0 %v734
    %1007 = vmatprep.subr.mxu0 0.0
    %1008 = vmatpush2.msra.mxu0 0.0
    %1009 = vmatprep.subr.mxu0 0.0
    %1010 = vmatpush2.msra.mxu0 0.0
    %1011 = vmatprep.subr.mxu0 0.0
    %1012 = vmatpush2.msra.mxu0 0.0
    %1013 = vmatprep.subr.mxu0 0.0
    %1014 = vmatpush2.msra.mxu0 0.0
    %1015 = vmatprep.subr.mxu0 0.0
    %1016 = vmatpush2.msra.mxu0 0.0
    %1017 = vmatprep.subr.mxu0 0.0
    %1018 = vmatpush2.msra.mxu0 0.0
    %1019 = vmatprep.subr.mxu0 0.0
    %1020 = vmatpush2.msra.mxu0 0.0
    %1021 = vmatprep.subr.mxu0 0.0
    %1022 = vmatpush2.msra.mxu0 0.0
    %1023 = vmatprep.subr.mxu0 0.0
    %1024 = vmatpush2.msra.mxu0 0.0
    %1025 = vmatprep.subr.mxu0 0.0
    %1026 = vmatpush2.msra.mxu0 0.0
    %1027 = vmatprep.subr.mxu0 0.0
    %1028 = vmatpush2.msra.mxu0 0.0
    %1029 = vmatprep.subr.mxu0 0.0
    %1030 = vmatpush2.msra.mxu0 0.0
    %1031 = vmatprep.subr.mxu0 0.0
    %1032 = vmatpush2.msra.mxu0 0.0
    %1033 = vmatprep.subr.mxu0 0.0
    %1034 = vmatpush2.msra.mxu0 0.0
    %1035 = vmatprep.subr.mxu0 0.0
    %1036 = vmatpush2.msra.mxu0 0.0
    %1037 = vmatprep.subr.mxu0 0.0
    %1038 = vmatpush2.msra.mxu0 0.0
    %1039 = vmatprep.mubr.f32.mxu0 0.0
    %1040 = vmatmul.mubr.f32.gmra.mxu0 %v964
    %v1041 = vpop.f32.mrf.mxu0
    %v1042 = vadd.f32 %v955, %v1041
    %v1043 = vpop.f32.mrf.mxu0
    %v1044 = vadd.f32 %v959, %v1043
    %1045 = vmatprep.mubr.f32.mxu0 0.0
    %1046 = vmatmul.mubr.f32.gmra.mxu0 %v967
    %v1047 = vpop.f32.mrf.mxu0
    %v1048 = vadd.f32 %v955, %v1047
    %v1049 = vpop.f32.mrf.mxu0
    %v1050 = vadd.f32 %v959, %v1049
    %1051 = vmatprep.mubr.f32.mxu0 0.0
    %1052 = vmatmul.mubr.f32.gmra.mxu0 %v970
    %v1053 = vpop.f32.mrf.mxu0
    %v1054 = vadd.f32 %v955, %v1053
    %v1055 = vpop.f32.mrf.mxu0
    %v1056 = vadd.f32 %v959, %v1055
    %1057 = vmatprep.mubr.f32.mxu0 0.0
    %1058 = vmatmul.mubr.f32.gmra.mxu0 %v973
    %v1059 = vpop.f32.mrf.mxu0
    %v1060 = vadd.f32 %v955, %v1059
    %v1061 = vpop.f32.mrf.mxu0
    %v1062 = vadd.f32 %v959, %v1061
    %1063 = vdwg.mxu0
    %1066 = vrot.lane.b32.xlu0 %v1042, 96
    %v1067 = vpop.permute.xlu0 %1066
    %1068 = vrot.lane.b32.xlu0 %v1048, 96
    %v1069 = vpop.permute.xlu0 %1068
    %1072 = vrot.lane.b32.xlu0 %v1054, 96
    %v1073 = vpop.permute.xlu0 %1072
    %1074 = vrot.lane.b32.xlu0 %v1060, 96
    %v1075 = vpop.permute.xlu0 %1074
    %1078 = vrot.lane.b32.xlu0 %v1044, 96
    %v1079 = vpop.permute.xlu0 %1078
    %1080 = vrot.lane.b32.xlu0 %v1050, 96
    %v1081 = vpop.permute.xlu0 %1080
    %1086 = vrot.lane.b32.xlu0 %v1056, 96
    %v1087 = vpop.permute.xlu0 %1086
    %1088 = vrot.lane.b32.xlu0 %v1062, 96
    %v1089 = vpop.permute.xlu0 %1088
    %v1092 = vld [vmem:[%s4] sm:$0xff]
    %v1093 = vld [vmem:[%s4 + $0x8] sm:$0xff]
    %v1094 = vld [vmem:[%s4 + $0x10] sm:$0xff]
    %v1095 = vld [vmem:[%s4 + $0x18] sm:$0xff]
    %v1096 = vld [vmem:[%s4 + $0x20] sm:$0xff]
    %v1097 = vld [vmem:[%s4 + $0x28] sm:$0xff]
    %v1098 = vld [vmem:[%s4 + $0x30] sm:$0xff]
    %v1099 = vld [vmem:[%s4 + $0x38] sm:$0xff]
    %v1100 = vld [vmem:[%s4 + $0x40] sm:$0xff]
    %v1101 = vld [vmem:[%s4 + $0x48] sm:$0xff]
    %v1102 = vld [vmem:[%s4 + $0x50] sm:$0xff]
    %v1103 = vld [vmem:[%s4 + $0x58] sm:$0xff]
    %v1104 = vld [vmem:[%s4 + $0x60] sm:$0xff]
    %v1105 = vld [vmem:[%s4 + $0x68] sm:$0xff]
    %v1106 = vld [vmem:[%s4 + $0x70] sm:$0xff]
    %v1107 = vld [vmem:[%s4 + $0x78] sm:$0xff]
    %vm1108 = vcmask 261120
    %v1109 = vsel %vm1108, %v1042, 0
    %v1111 = vsel %vm1108, %v1048, 0
    %v1113 = vsel %vm1108, %v1067, 0
    %v1115 = vsel %vm1108, %v1069, 0
    %v1117 = vsel %vm1108, %v1054, 0
    %v1119 = vsel %vm1108, %v1060, 0
    %v1121 = vsel %vm1108, %v1073, 0
    %v1123 = vsel %vm1108, %v1075, 0
    %1125 = vmatprep.subr.mxu0 0.0
    %1126 = vmatpush1.msra.mxu0 0.0
    %1127 = vmatprep.subr.mxu0 0.0
    %1128 = vmatpush1.msra.mxu0 0.0
    %1129 = vmatprep.subr.mxu0 0.0
    %1130 = vmatpush1.msra.mxu0 0.0
    %1131 = vmatprep.subr.mxu0 0.0
    %1132 = vmatpush1.msra.mxu0 0.0
    %1133 = vmatprep.subr.mxu0 0.0
    %1134 = vmatpush1.msra.mxu0 0.0
    %1135 = vmatprep.subr.mxu0 0.0
    %1136 = vmatpush1.msra.mxu0 0.0
    %1137 = vmatprep.subr.mxu0 0.0
    %1138 = vmatpush1.msra.mxu0 0.0
    %1139 = vmatprep.subr.mxu0 0.0
    %1140 = vmatpush1.msra.mxu0 0.0
    %1141 = vmatprep.subr.mxu0 0.0
    %1142 = vmatpush1.msra.mxu0 0.0
    %1143 = vmatprep.subr.mxu0 0.0
    %1144 = vmatpush1.msra.mxu0 0.0
    %1145 = vmatprep.subr.mxu0 0.0
    %1146 = vmatpush1.msra.mxu0 0.0
    %1147 = vmatprep.subr.mxu0 0.0
    %1148 = vmatpush1.msra.mxu0 0.0
    %1149 = vmatprep.subr.mxu0 %v1105
    %1150 = vmatpush1.msra.mxu0 %v1104
    %1151 = vmatprep.subr.mxu0 %v1101
    %1152 = vmatpush1.msra.mxu0 %v1100
    %1153 = vmatprep.subr.mxu0 %v1097
    %1154 = vmatpush1.msra.mxu0 %v1096
    %1155 = vmatprep.subr.mxu0 %v1093
    %1156 = vmatpush1.msra.mxu0 %v1092
    %1157 = vmatprep.subr.mxu0 0.0
    %1158 = vmatpush2.msra.mxu0 0.0
    %1159 = vmatprep.subr.mxu0 0.0
    %1160 = vmatpush2.msra.mxu0 0.0
    %1161 = vmatprep.subr.mxu0 0.0
    %1162 = vmatpush2.msra.mxu0 0.0
    %1163 = vmatprep.subr.mxu0 0.0
    %1164 = vmatpush2.msra.mxu0 0.0
    %1165 = vmatprep.subr.mxu0 0.0
    %1166 = vmatpush2.msra.mxu0 0.0
    %1167 = vmatprep.subr.mxu0 0.0
    %1168 = vmatpush2.msra.mxu0 0.0
    %1169 = vmatprep.subr.mxu0 0.0
    %1170 = vmatpush2.msra.mxu0 0.0
    %1171 = vmatprep.subr.mxu0 0.0
    %1172 = vmatpush2.msra.mxu0 0.0
    %1173 = vmatprep.subr.mxu0 0.0
    %1174 = vmatpush2.msra.mxu0 0.0
    %1175 = vmatprep.subr.mxu0 0.0
    %1176 = vmatpush2.msra.mxu0 0.0
    %1177 = vmatprep.subr.mxu0 0.0
    %1178 = vmatpush2.msra.mxu0 0.0
    %1179 = vmatprep.subr.mxu0 0.0
    %1180 = vmatpush2.msra.mxu0 0.0
    %1181 = vmatprep.subr.mxu0 0.0
    %1182 = vmatpush2.msra.mxu0 0.0
    %1183 = vmatprep.subr.mxu0 0.0
    %1184 = vmatpush2.msra.mxu0 0.0
    %1185 = vmatprep.subr.mxu0 0.0
    %1186 = vmatpush2.msra.mxu0 0.0
    %1187 = vmatprep.subr.mxu0 0.0
    %1188 = vmatpush2.msra.mxu0 0.0
    %1189 = vmatprep.mubr.f32.mxu0 0.0
    %1190 = vmatmul.mubr.f32.gmra.mxu0 %v1109
    %v1191 = vpop.f32.mrf.mxu0
    %v1192 = vadd.f32 0.0, %v1191
    %v1193 = vpop.f32.mrf.mxu0
    %v1194 = vadd.f32 0.0, %v1193
    %1195 = vmatprep.mubr.f32.mxu0 0.0
    %1196 = vmatmul.mubr.f32.gmra.mxu0 %v1111
    %v1197 = vpop.f32.mrf.mxu0
    %v1198 = vadd.f32 0.0, %v1197
    %v1199 = vpop.f32.mrf.mxu0
    %v1200 = vadd.f32 0.0, %v1199
    %1201 = vmatprep.mubr.f32.mxu0 0.0
    %1202 = vmatmul.mubr.f32.gmra.mxu0 %v1113
    %v1203 = vpop.f32.mrf.mxu0
    %v1204 = vadd.f32 0.0, %v1203
    %v1205 = vpop.f32.mrf.mxu0
    %v1206 = vadd.f32 0.0, %v1205
    %1207 = vmatprep.mubr.f32.mxu0 0.0
    %1208 = vmatmul.mubr.f32.gmra.mxu0 %v1115
    %v1209 = vpop.f32.mrf.mxu0
    %v1210 = vadd.f32 0.0, %v1209
    %v1211 = vpop.f32.mrf.mxu0
    %v1212 = vadd.f32 0.0, %v1211
    %1213 = vmatprep.mubr.f32.mxu0 0.0
    %1214 = vmatmul.mubr.f32.gmra.mxu0 %v1117
    %v1215 = vpop.f32.mrf.mxu0
    %v1216 = vadd.f32 0.0, %v1215
    %v1217 = vpop.f32.mrf.mxu0
    %v1218 = vadd.f32 0.0, %v1217
    %1219 = vmatprep.mubr.f32.mxu0 0.0
    %1220 = vmatmul.mubr.f32.gmra.mxu0 %v1119
    %v1221 = vpop.f32.mrf.mxu0
    %v1222 = vadd.f32 0.0, %v1221
    %v1223 = vpop.f32.mrf.mxu0
    %v1224 = vadd.f32 0.0, %v1223
    %1225 = vmatprep.mubr.f32.mxu0 0.0
    %1226 = vmatmul.mubr.f32.gmra.mxu0 %v1121
    %v1227 = vpop.f32.mrf.mxu0
    %v1228 = vadd.f32 0.0, %v1227
    %v1229 = vpop.f32.mrf.mxu0
    %v1230 = vadd.f32 0.0, %v1229
    %1231 = vmatprep.mubr.f32.mxu0 0.0
    %1232 = vmatmul.mubr.f32.gmra.mxu0 %v1123
    %v1233 = vpop.f32.mrf.mxu0
    %v1234 = vadd.f32 0.0, %v1233
    %v1235 = vpop.f32.mrf.mxu0
    %v1236 = vadd.f32 0.0, %v1235
    %1237 = vdwg.mxu0
    %1238 = vmatprep.subr.mxu0 0.0
    %1239 = vmatpush1.msra.mxu0 0.0
    %1240 = vmatprep.subr.mxu0 0.0
    %1241 = vmatpush1.msra.mxu0 0.0
    %1242 = vmatprep.subr.mxu0 0.0
    %1243 = vmatpush1.msra.mxu0 0.0
    %1244 = vmatprep.subr.mxu0 0.0
    %1245 = vmatpush1.msra.mxu0 0.0
    %1246 = vmatprep.subr.mxu0 0.0
    %1247 = vmatpush1.msra.mxu0 0.0
    %1248 = vmatprep.subr.mxu0 0.0
    %1249 = vmatpush1.msra.mxu0 0.0
    %1250 = vmatprep.subr.mxu0 0.0
    %1251 = vmatpush1.msra.mxu0 0.0
    %1252 = vmatprep.subr.mxu0 0.0
    %1253 = vmatpush1.msra.mxu0 0.0
    %1254 = vmatprep.subr.mxu0 0.0
    %1255 = vmatpush1.msra.mxu0 0.0
    %1256 = vmatprep.subr.mxu0 0.0
    %1257 = vmatpush1.msra.mxu0 0.0
    %1258 = vmatprep.subr.mxu0 0.0
    %1259 = vmatpush1.msra.mxu0 0.0
    %1260 = vmatprep.subr.mxu0 0.0
    %1261 = vmatpush1.msra.mxu0 0.0
    %1262 = vmatprep.subr.mxu0 %v1107
    %1263 = vmatpush1.msra.mxu0 %v1106
    %1264 = vmatprep.subr.mxu0 %v1103
    %1265 = vmatpush1.msra.mxu0 %v1102
    %1266 = vmatprep.subr.mxu0 %v1099
    %1267 = vmatpush1.msra.mxu0 %v1098
    %1268 = vmatprep.subr.mxu0 %v1095
    %1269 = vmatpush1.msra.mxu0 %v1094
    %1270 = vmatprep.subr.mxu0 0.0
    %1271 = vmatpush2.msra.mxu0 0.0
    %1272 = vmatprep.subr.mxu0 0.0
    %1273 = vmatpush2.msra.mxu0 0.0
    %1274 = vmatprep.subr.mxu0 0.0
    %1275 = vmatpush2.msra.mxu0 0.0
    %1276 = vmatprep.subr.mxu0 0.0
    %1277 = vmatpush2.msra.mxu0 0.0
    %1278 = vmatprep.subr.mxu0 0.0
    %1279 = vmatpush2.msra.mxu0 0.0
    %1280 = vmatprep.subr.mxu0 0.0
    %1281 = vmatpush2.msra.mxu0 0.0
    %1282 = vmatprep.subr.mxu0 0.0
    %1283 = vmatpush2.msra.mxu0 0.0
    %1284 = vmatprep.subr.mxu0 0.0
    %1285 = vmatpush2.msra.mxu0 0.0
    %1286 = vmatprep.subr.mxu0 0.0
    %1287 = vmatpush2.msra.mxu0 0.0
    %1288 = vmatprep.subr.mxu0 0.0
    %1289 = vmatpush2.msra.mxu0 0.0
    %1290 = vmatprep.subr.mxu0 0.0
    %1291 = vmatpush2.msra.mxu0 0.0
    %1292 = vmatprep.subr.mxu0 0.0
    %1293 = vmatpush2.msra.mxu0 0.0
    %1294 = vmatprep.subr.mxu0 0.0
    %1295 = vmatpush2.msra.mxu0 0.0
    %1296 = vmatprep.subr.mxu0 0.0
    %1297 = vmatpush2.msra.mxu0 0.0
    %1298 = vmatprep.subr.mxu0 0.0
    %1299 = vmatpush2.msra.mxu0 0.0
    %1300 = vmatprep.subr.mxu0 0.0
    %1301 = vmatpush2.msra.mxu0 0.0
    %1302 = vmatprep.mubr.f32.mxu0 0.0
    %1303 = vmatmul.mubr.f32.gmra.mxu0 %v1109
    %v1304 = vpop.f32.mrf.mxu0
    %v1305 = vadd.f32 0.0, %v1304
    %v1306 = vpop.f32.mrf.mxu0
    %v1307 = vadd.f32 0.0, %v1306
    %1308 = vmatprep.mubr.f32.mxu0 0.0
    %1309 = vmatmul.mubr.f32.gmra.mxu0 %v1111
    %v1310 = vpop.f32.mrf.mxu0
    %v1311 = vadd.f32 0.0, %v1310
    %v1312 = vpop.f32.mrf.mxu0
    %v1313 = vadd.f32 0.0, %v1312
    %1314 = vmatprep.mubr.f32.mxu0 0.0
    %1315 = vmatmul.mubr.f32.gmra.mxu0 %v1113
    %v1316 = vpop.f32.mrf.mxu0
    %v1317 = vadd.f32 0.0, %v1316
    %v1318 = vpop.f32.mrf.mxu0
    %v1319 = vadd.f32 0.0, %v1318
    %1320 = vmatprep.mubr.f32.mxu0 0.0
    %1321 = vmatmul.mubr.f32.gmra.mxu0 %v1115
    %v1322 = vpop.f32.mrf.mxu0
    %v1323 = vadd.f32 0.0, %v1322
    %v1324 = vpop.f32.mrf.mxu0
    %v1325 = vadd.f32 0.0, %v1324
    %1326 = vmatprep.mubr.f32.mxu0 0.0
    %1327 = vmatmul.mubr.f32.gmra.mxu0 %v1117
    %v1328 = vpop.f32.mrf.mxu0
    %v1329 = vadd.f32 0.0, %v1328
    %v1330 = vpop.f32.mrf.mxu0
    %v1331 = vadd.f32 0.0, %v1330
    %1332 = vmatprep.mubr.f32.mxu0 0.0
    %1333 = vmatmul.mubr.f32.gmra.mxu0 %v1119
    %v1334 = vpop.f32.mrf.mxu0
    %v1335 = vadd.f32 0.0, %v1334
    %v1336 = vpop.f32.mrf.mxu0
    %v1337 = vadd.f32 0.0, %v1336
    %1338 = vmatprep.mubr.f32.mxu0 0.0
    %1339 = vmatmul.mubr.f32.gmra.mxu0 %v1121
    %v1340 = vpop.f32.mrf.mxu0
    %v1341 = vadd.f32 0.0, %v1340
    %v1342 = vpop.f32.mrf.mxu0
    %v1343 = vadd.f32 0.0, %v1342
    %1344 = vmatprep.mubr.f32.mxu0 0.0
    %1345 = vmatmul.mubr.f32.gmra.mxu0 %v1123
    %v1346 = vpop.f32.mrf.mxu0
    %v1347 = vadd.f32 0.0, %v1346
    %v1348 = vpop.f32.mrf.mxu0
    %v1349 = vadd.f32 0.0, %v1348
    %1350 = vdwg.mxu0
    %v1351 = vld [vmem:[%s4 + $0x80] sm:$0xff]
    %v1352 = vld [vmem:[%s4 + $0x88] sm:$0xff]
    %v1353 = vld [vmem:[%s4 + $0x90] sm:$0xff]
    %v1354 = vld [vmem:[%s4 + $0x98] sm:$0xff]
    %v1355 = vld [vmem:[%s4 + $0xa0] sm:$0xff]
    %v1356 = vld [vmem:[%s4 + $0xa8] sm:$0xff]
    %v1357 = vld [vmem:[%s4 + $0xb0] sm:$0xff]
    %v1358 = vld [vmem:[%s4 + $0xb8] sm:$0xff]
    %v1359 = vld [vmem:[%s4 + $0xc0] sm:$0xff]
    %v1360 = vld [vmem:[%s4 + $0xc8] sm:$0xff]
    %v1361 = vld [vmem:[%s4 + $0xd0] sm:$0xff]
    %v1362 = vld [vmem:[%s4 + $0xd8] sm:$0xff]
    %v1363 = vld [vmem:[%s4 + $0xe0] sm:$0xff]
    %v1364 = vld [vmem:[%s4 + $0xe8] sm:$0xff]
    %v1365 = vld [vmem:[%s4 + $0xf0] sm:$0xff]
    %v1366 = vld [vmem:[%s4 + $0xf8] sm:$0xff]
    %v1367 = vld [vmem:[%s4 + $0x100] sm:$0xff]
    %v1368 = vld [vmem:[%s4 + $0x108] sm:$0xff]
    %v1369 = vld [vmem:[%s4 + $0x110] sm:$0xff]
    %v1370 = vld [vmem:[%s4 + $0x118] sm:$0xff]
    %v1371 = vld [vmem:[%s4 + $0x120] sm:$0xff]
    %v1372 = vld [vmem:[%s4 + $0x128] sm:$0xff]
    %v1373 = vld [vmem:[%s4 + $0x130] sm:$0xff]
    %v1374 = vld [vmem:[%s4 + $0x138] sm:$0xff]
    %v1375 = vld [vmem:[%s4 + $0x140] sm:$0xff]
    %v1376 = vld [vmem:[%s4 + $0x148] sm:$0xff]
    %v1377 = vld [vmem:[%s4 + $0x150] sm:$0xff]
    %v1378 = vld [vmem:[%s4 + $0x158] sm:$0xff]
    %v1379 = vld [vmem:[%s4 + $0x160] sm:$0xff]
    %v1380 = vld [vmem:[%s4 + $0x168] sm:$0xff]
    %v1381 = vld [vmem:[%s4 + $0x170] sm:$0xff]
    %v1382 = vld [vmem:[%s4 + $0x178] sm:$0xff]
    %v1383 = vmul.f32 %v1192, %v1351
    %v1384 = vmul.f32 %v1194, %v1352
    %v1385 = vmul.f32 %v1305, %v1353
    %v1386 = vmul.f32 %v1307, %v1354
    %v1387 = vmul.f32 %v1198, %v1355
    %v1388 = vmul.f32 %v1200, %v1356
    %v1389 = vmul.f32 %v1311, %v1357
    %v1390 = vmul.f32 %v1313, %v1358
    %v1391 = vmul.f32 %v1204, %v1359
    %v1392 = vmul.f32 %v1206, %v1360
    %v1393 = vmul.f32 %v1317, %v1361
    %v1394 = vmul.f32 %v1319, %v1362
    %v1395 = vmul.f32 %v1210, %v1363
    %v1396 = vmul.f32 %v1212, %v1364
    %v1397 = vmul.f32 %v1323, %v1365
    %v1398 = vmul.f32 %v1325, %v1366
    %v1399 = vmul.f32 %v1216, %v1367
    %v1400 = vmul.f32 %v1218, %v1368
    %v1401 = vmul.f32 %v1329, %v1369
    %v1402 = vmul.f32 %v1331, %v1370
    %v1403 = vmul.f32 %v1222, %v1371
    %v1404 = vmul.f32 %v1224, %v1372
    %v1405 = vmul.f32 %v1335, %v1373
    %v1406 = vmul.f32 %v1337, %v1374
    %v1407 = vmul.f32 %v1228, %v1375
    %v1408 = vmul.f32 %v1230, %v1376
    %v1409 = vmul.f32 %v1341, %v1377
    %v1410 = vmul.f32 %v1343, %v1378
    %v1411 = vmul.f32 %v1234, %v1379
    %v1412 = vmul.f32 %v1236, %v1380
    %v1413 = vmul.f32 %v1347, %v1381
    %v1414 = vmul.f32 %v1349, %v1382
    %1415 = vmatprep.subr.mxu0 0.0
    %1416 = vmatpush1.msra.mxu0 %v774
    %1417 = vmatprep.subr.mxu0 0.0
    %1418 = vmatpush1.msra.mxu0 %v773
    %1419 = vmatprep.subr.mxu0 0.0
    %1420 = vmatpush1.msra.mxu0 %v772
    %1421 = vmatprep.subr.mxu0 0.0
    %1422 = vmatpush1.msra.mxu0 %v771
    %1423 = vmatprep.subr.mxu0 0.0
    %1424 = vmatpush1.msra.mxu0 %v770
    %1425 = vmatprep.subr.mxu0 0.0
    %1426 = vmatpush1.msra.mxu0 %v769
    %1427 = vmatprep.subr.mxu0 0.0
    %1428 = vmatpush1.msra.mxu0 %v768
    %1429 = vmatprep.subr.mxu0 0.0
    %1430 = vmatpush1.msra.mxu0 %v767
    %1431 = vmatprep.subr.mxu0 0.0
    %1432 = vmatpush1.msra.mxu0 %v766
    %1433 = vmatprep.subr.mxu0 0.0
    %1434 = vmatpush1.msra.mxu0 %v765
    %1435 = vmatprep.subr.mxu0 0.0
    %1436 = vmatpush1.msra.mxu0 %v764
    %1437 = vmatprep.subr.mxu0 0.0
    %1438 = vmatpush1.msra.mxu0 %v763
    %1439 = vmatprep.subr.mxu0 0.0
    %1440 = vmatpush1.msra.mxu0 %v762
    %1441 = vmatprep.subr.mxu0 0.0
    %1442 = vmatpush1.msra.mxu0 %v761
    %1443 = vmatprep.subr.mxu0 0.0
    %1444 = vmatpush1.msra.mxu0 %v760
    %1445 = vmatprep.subr.mxu0 0.0
    %1446 = vmatpush1.msra.mxu0 %v759
    %1447 = vmatprep.subr.mxu0 0.0
    %1448 = vmatpush2.msra.mxu0 %v790
    %1449 = vmatprep.subr.mxu0 0.0
    %1450 = vmatpush2.msra.mxu0 %v789
    %1451 = vmatprep.subr.mxu0 0.0
    %1452 = vmatpush2.msra.mxu0 %v788
    %1453 = vmatprep.subr.mxu0 0.0
    %1454 = vmatpush2.msra.mxu0 %v787
    %1455 = vmatprep.subr.mxu0 0.0
    %1456 = vmatpush2.msra.mxu0 %v786
    %1457 = vmatprep.subr.mxu0 0.0
    %1458 = vmatpush2.msra.mxu0 %v785
    %1459 = vmatprep.subr.mxu0 0.0
    %1460 = vmatpush2.msra.mxu0 %v784
    %1461 = vmatprep.subr.mxu0 0.0
    %1462 = vmatpush2.msra.mxu0 %v783
    %1463 = vmatprep.subr.mxu0 0.0
    %1464 = vmatpush2.msra.mxu0 %v782
    %1465 = vmatprep.subr.mxu0 0.0
    %1466 = vmatpush2.msra.mxu0 %v781
    %1467 = vmatprep.subr.mxu0 0.0
    %1468 = vmatpush2.msra.mxu0 %v780
    %1469 = vmatprep.subr.mxu0 0.0
    %1470 = vmatpush2.msra.mxu0 %v779
    %1471 = vmatprep.subr.mxu0 0.0
    %1472 = vmatpush2.msra.mxu0 %v778
    %1473 = vmatprep.subr.mxu0 0.0
    %1474 = vmatpush2.msra.mxu0 %v777
    %1475 = vmatprep.subr.mxu0 0.0
    %1476 = vmatpush2.msra.mxu0 %v776
    %1477 = vmatprep.subr.mxu0 0.0
    %1478 = vmatpush2.msra.mxu0 %v775
    %1479 = vmatprep.mubr.f32.mxu0 %v1384
    %1480 = vmatmul.mubr.f32.gmra.mxu0 %v1383
    %v1481 = vpop.f32.mrf.mxu0
    %v1482 = vadd.f32 0.0, %v1481
    %v1483 = vpop.f32.mrf.mxu0
    %1484 = vmatprep.mubr.f32.mxu0 %v1388
    %1485 = vmatmul.mubr.f32.gmra.mxu0 %v1387
    %v1486 = vpop.f32.mrf.mxu0
    %v1487 = vadd.f32 0.0, %v1486
    %v1488 = vpop.f32.mrf.mxu0
    %1489 = vmatprep.mubr.f32.mxu0 %v1392
    %1490 = vmatmul.mubr.f32.gmra.mxu0 %v1391
    %v1491 = vpop.f32.mrf.mxu0
    %v1492 = vadd.f32 0.0, %v1491
    %v1493 = vpop.f32.mrf.mxu0
    %1494 = vmatprep.mubr.f32.mxu0 %v1396
    %1495 = vmatmul.mubr.f32.gmra.mxu0 %v1395
    %v1496 = vpop.f32.mrf.mxu0
    %v1497 = vadd.f32 0.0, %v1496
    %v1498 = vpop.f32.mrf.mxu0
    %1499 = vmatprep.mubr.f32.mxu0 %v1400
    %1500 = vmatmul.mubr.f32.gmra.mxu0 %v1399
    %v1501 = vpop.f32.mrf.mxu0
    %v1502 = vadd.f32 0.0, %v1501
    %v1503 = vpop.f32.mrf.mxu0
    %1504 = vmatprep.mubr.f32.mxu0 %v1404
    %1505 = vmatmul.mubr.f32.gmra.mxu0 %v1403
    %v1506 = vpop.f32.mrf.mxu0
    %v1507 = vadd.f32 0.0, %v1506
    %v1508 = vpop.f32.mrf.mxu0
    %1509 = vmatprep.mubr.f32.mxu0 %v1408
    %1510 = vmatmul.mubr.f32.gmra.mxu0 %v1407
    %v1511 = vpop.f32.mrf.mxu0
    %v1512 = vadd.f32 0.0, %v1511
    %v1513 = vpop.f32.mrf.mxu0
    %1514 = vmatprep.mubr.f32.mxu0 %v1412
    %1515 = vmatmul.mubr.f32.gmra.mxu0 %v1411
    %v1516 = vpop.f32.mrf.mxu0
    %v1517 = vadd.f32 0.0, %v1516
    %v1518 = vpop.f32.mrf.mxu0
    %1519 = vdwg.mxu0
    %1520 = vmatprep.subr.mxu0 0.0
    %1521 = vmatpush1.msra.mxu0 %v806
    %1522 = vmatprep.subr.mxu0 0.0
    %1523 = vmatpush1.msra.mxu0 %v805
    %1524 = vmatprep.subr.mxu0 0.0
    %1525 = vmatpush1.msra.mxu0 %v804
    %1526 = vmatprep.subr.mxu0 0.0
    %1527 = vmatpush1.msra.mxu0 %v803
    %1528 = vmatprep.subr.mxu0 0.0
    %1529 = vmatpush1.msra.mxu0 %v802
    %1530 = vmatprep.subr.mxu0 0.0
    %1531 = vmatpush1.msra.mxu0 %v801
    %1532 = vmatprep.subr.mxu0 0.0
    %1533 = vmatpush1.msra.mxu0 %v800
    %1534 = vmatprep.subr.mxu0 0.0
    %1535 = vmatpush1.msra.mxu0 %v799
    %1536 = vmatprep.subr.mxu0 0.0
    %1537 = vmatpush1.msra.mxu0 %v798
    %1538 = vmatprep.subr.mxu0 0.0
    %1539 = vmatpush1.msra.mxu0 %v797
    %1540 = vmatprep.subr.mxu0 0.0
    %1541 = vmatpush1.msra.mxu0 %v796
    %1542 = vmatprep.subr.mxu0 0.0
    %1543 = vmatpush1.msra.mxu0 %v795
    %1544 = vmatprep.subr.mxu0 0.0
    %1545 = vmatpush1.msra.mxu0 %v794
    %1546 = vmatprep.subr.mxu0 0.0
    %1547 = vmatpush1.msra.mxu0 %v793
    %1548 = vmatprep.subr.mxu0 0.0
    %1549 = vmatpush1.msra.mxu0 %v792
    %1550 = vmatprep.subr.mxu0 0.0
    %1551 = vmatpush1.msra.mxu0 %v791
    %1552 = vmatprep.subr.mxu0 0.0
    %1553 = vmatpush2.msra.mxu0 %v822
    %1554 = vmatprep.subr.mxu0 0.0
    %1555 = vmatpush2.msra.mxu0 %v821
    %1556 = vmatprep.subr.mxu0 0.0
    %1557 = vmatpush2.msra.mxu0 %v820
    %1558 = vmatprep.subr.mxu0 0.0
    %1559 = vmatpush2.msra.mxu0 %v819
    %1560 = vmatprep.subr.mxu0 0.0
    %1561 = vmatpush2.msra.mxu0 %v818
    %1562 = vmatprep.subr.mxu0 0.0
    %1563 = vmatpush2.msra.mxu0 %v817
    %1564 = vmatprep.subr.mxu0 0.0
    %1565 = vmatpush2.msra.mxu0 %v816
    %1566 = vmatprep.subr.mxu0 0.0
    %1567 = vmatpush2.msra.mxu0 %v815
    %1568 = vmatprep.subr.mxu0 0.0
    %1569 = vmatpush2.msra.mxu0 %v814
    %1570 = vmatprep.subr.mxu0 0.0
    %1571 = vmatpush2.msra.mxu0 %v813
    %1572 = vmatprep.subr.mxu0 0.0
    %1573 = vmatpush2.msra.mxu0 %v812
    %1574 = vmatprep.subr.mxu0 0.0
    %1575 = vmatpush2.msra.mxu0 %v811
    %1576 = vmatprep.subr.mxu0 0.0
    %1577 = vmatpush2.msra.mxu0 %v810
    %1578 = vmatprep.subr.mxu0 0.0
    %1579 = vmatpush2.msra.mxu0 %v809
    %1580 = vmatprep.subr.mxu0 0.0
    %1581 = vmatpush2.msra.mxu0 %v808
    %1582 = vmatprep.subr.mxu0 0.0
    %1583 = vmatpush2.msra.mxu0 %v807
    %1584 = vmatprep.mubr.f32.mxu0 %v1386
    %1585 = vmatmul.mubr.f32.gmra.mxu0 %v1385
    %v1586 = vpop.f32.mrf.mxu0
    %v1587 = vadd.f32 %v1482, %v1586
    %v1588 = vpop.f32.mrf.mxu0
    %1589 = vmatprep.mubr.f32.mxu0 %v1390
    %1590 = vmatmul.mubr.f32.gmra.mxu0 %v1389
    %v1591 = vpop.f32.mrf.mxu0
    %v1592 = vadd.f32 %v1487, %v1591
    %v1593 = vpop.f32.mrf.mxu0
    %1594 = vmatprep.mubr.f32.mxu0 %v1394
    %1595 = vmatmul.mubr.f32.gmra.mxu0 %v1393
    %v1596 = vpop.f32.mrf.mxu0
    %v1597 = vadd.f32 %v1492, %v1596
    %v1598 = vpop.f32.mrf.mxu0
    %1599 = vmatprep.mubr.f32.mxu0 %v1398
    %1600 = vmatmul.mubr.f32.gmra.mxu0 %v1397
    %v1601 = vpop.f32.mrf.mxu0
    %v1602 = vadd.f32 %v1497, %v1601
    %v1603 = vpop.f32.mrf.mxu0
    %1604 = vmatprep.mubr.f32.mxu0 %v1402
    %1605 = vmatmul.mubr.f32.gmra.mxu0 %v1401
    %v1606 = vpop.f32.mrf.mxu0
    %v1607 = vadd.f32 %v1502, %v1606
    %v1608 = vpop.f32.mrf.mxu0
    %1609 = vmatprep.mubr.f32.mxu0 %v1406
    %1610 = vmatmul.mubr.f32.gmra.mxu0 %v1405
    %v1611 = vpop.f32.mrf.mxu0
    %v1612 = vadd.f32 %v1507, %v1611
    %v1613 = vpop.f32.mrf.mxu0
    %1614 = vmatprep.mubr.f32.mxu0 %v1410
    %1615 = vmatmul.mubr.f32.gmra.mxu0 %v1409
    %v1616 = vpop.f32.mrf.mxu0
    %v1617 = vadd.f32 %v1512, %v1616
    %v1618 = vpop.f32.mrf.mxu0
    %1619 = vmatprep.mubr.f32.mxu0 %v1414
    %1620 = vmatmul.mubr.f32.gmra.mxu0 %v1413
    %v1621 = vpop.f32.mrf.mxu0
    %v1622 = vadd.f32 %v1517, %v1621
    %v1623 = vpop.f32.mrf.mxu0
    %1624 = vdwg.mxu0
    %1625 = vrot.lane.b32.xlu0 %v1042, 64
    %v1626 = vpop.permute.xlu0 %1625
    %1627 = vrot.lane.b32.xlu0 %v1048, 64
    %v1628 = vpop.permute.xlu0 %1627
    %v1629 = vsel %vm1108, %v1626, 0
    %v1631 = vsel %vm1108, %v1628, 0
    %1633 = vmatprep.subr.mxu0 0.0
    %1634 = vmatpush1.xpose.msra.mxu0 0.0
    %1635 = vmatprep.subr.mxu0 0.0
    %1636 = vmatpush1.xpose.msra.mxu0 0.0
    %1637 = vmatprep.subr.mxu0 0.0
    %1638 = vmatpush1.xpose.msra.mxu0 0.0
    %1639 = vmatprep.subr.mxu0 0.0
    %1640 = vmatpush1.xpose.msra.mxu0 0.0
    %1641 = vmatprep.subr.mxu0 0.0
    %1642 = vmatpush1.xpose.msra.mxu0 0.0
    %1643 = vmatprep.subr.mxu0 0.0
    %1644 = vmatpush1.xpose.msra.mxu0 0.0
    %1645 = vmatprep.subr.mxu0 0.0
    %1646 = vmatpush1.xpose.msra.mxu0 0.0
    %1647 = vmatprep.subr.mxu0 0.0
    %1648 = vmatpush1.xpose.msra.mxu0 0.0
    %1649 = vmatprep.subr.mxu0 0.0
    %1650 = vmatpush1.xpose.msra.mxu0 0.0
    %1651 = vmatprep.subr.mxu0 0.0
    %1652 = vmatpush1.xpose.msra.mxu0 0.0
    %1653 = vmatprep.subr.mxu0 0.0
    %1654 = vmatpush1.xpose.msra.mxu0 0.0
    %1655 = vmatprep.subr.mxu0 0.0
    %1656 = vmatpush1.xpose.msra.mxu0 0.0
    %1657 = vmatprep.subr.mxu0 0.0
    %1658 = vmatpush1.xpose.msra.mxu0 0.0
    %1659 = vmatprep.subr.mxu0 0.0
    %1660 = vmatpush1.xpose.msra.mxu0 0.0
    %1661 = vmatprep.subr.mxu0 0.0
    %1662 = vmatpush1.xpose.msra.mxu0 %v1631
    %1663 = vmatprep.subr.mxu0 0.0
    %1664 = vmatpush1.xpose.msra.mxu0 %v1629
    %1665 = vmatprep.subr.mxu0 0.0
    %1666 = vmatpush2.xpose.msra.mxu0 0.0
    %1667 = vmatprep.subr.mxu0 0.0
    %1668 = vmatpush2.xpose.msra.mxu0 0.0
    %1669 = vmatprep.subr.mxu0 0.0
    %1670 = vmatpush2.xpose.msra.mxu0 0.0
    %1671 = vmatprep.subr.mxu0 0.0
    %1672 = vmatpush2.xpose.msra.mxu0 0.0
    %1673 = vmatprep.subr.mxu0 0.0
    %1674 = vmatpush2.xpose.msra.mxu0 0.0
    %1675 = vmatprep.subr.mxu0 0.0
    %1676 = vmatpush2.xpose.msra.mxu0 0.0
    %1677 = vmatprep.subr.mxu0 0.0
    %1678 = vmatpush2.xpose.msra.mxu0 0.0
    %1679 = vmatprep.subr.mxu0 0.0
    %1680 = vmatpush2.xpose.msra.mxu0 0.0
    %1681 = vmatprep.subr.mxu0 0.0
    %1682 = vmatpush2.xpose.msra.mxu0 0.0
    %1683 = vmatprep.subr.mxu0 0.0
    %1684 = vmatpush2.xpose.msra.mxu0 0.0
    %1685 = vmatprep.subr.mxu0 0.0
    %1686 = vmatpush2.xpose.msra.mxu0 0.0
    %1687 = vmatprep.subr.mxu0 0.0
    %1688 = vmatpush2.xpose.msra.mxu0 0.0
    %1689 = vmatprep.subr.mxu0 0.0
    %1690 = vmatpush2.xpose.msra.mxu0 0.0
    %1691 = vmatprep.subr.mxu0 0.0
    %1692 = vmatpush2.xpose.msra.mxu0 0.0
    %1693 = vmatprep.subr.mxu0 0.0
    %1694 = vmatpush2.xpose.msra.mxu0 0.0
    %1695 = vmatprep.subr.mxu0 0.0
    %1696 = vmatpush2.xpose.msra.mxu0 0.0
    %1697 = vmatprep.mubr.f32.mxu0 0.0
    %1698 = vmatmul.mubr.f32.gmra.mxu0 %v1109
    %v1699 = vpop.f32.mrf.mxu0
    %v1700 = vadd.f32 %v1587, %v1699
    %v1701 = vpop.f32.mrf.mxu0
    %1702 = vmatprep.mubr.f32.mxu0 0.0
    %1703 = vmatmul.mubr.f32.gmra.mxu0 %v1111
    %v1704 = vpop.f32.mrf.mxu0
    %v1705 = vadd.f32 %v1592, %v1704
    %v1706 = vpop.f32.mrf.mxu0
    %1707 = vdwg.mxu0
    %1708 = vrot.lane.b32.xlu0 %v1067, 64
    %v1709 = vpop.permute.xlu0 %1708
    %1710 = vrot.lane.b32.xlu0 %v1069, 64
    %v1711 = vpop.permute.xlu0 %1710
    %v1712 = vsel %vm1108, %v1709, 0
    %v1714 = vsel %vm1108, %v1711, 0
    %1716 = vmatprep.subr.mxu0 0.0
    %1717 = vmatpush1.xpose.msra.mxu0 0.0
    %1718 = vmatprep.subr.mxu0 0.0
    %1719 = vmatpush1.xpose.msra.mxu0 0.0
    %1720 = vmatprep.subr.mxu0 0.0
    %1721 = vmatpush1.xpose.msra.mxu0 0.0
    %1722 = vmatprep.subr.mxu0 0.0
    %1723 = vmatpush1.xpose.msra.mxu0 0.0
    %1724 = vmatprep.subr.mxu0 0.0
    %1725 = vmatpush1.xpose.msra.mxu0 0.0
    %1726 = vmatprep.subr.mxu0 0.0
    %1727 = vmatpush1.xpose.msra.mxu0 0.0
    %1728 = vmatprep.subr.mxu0 0.0
    %1729 = vmatpush1.xpose.msra.mxu0 0.0
    %1730 = vmatprep.subr.mxu0 0.0
    %1731 = vmatpush1.xpose.msra.mxu0 0.0
    %1732 = vmatprep.subr.mxu0 0.0
    %1733 = vmatpush1.xpose.msra.mxu0 0.0
    %1734 = vmatprep.subr.mxu0 0.0
    %1735 = vmatpush1.xpose.msra.mxu0 0.0
    %1736 = vmatprep.subr.mxu0 0.0
    %1737 = vmatpush1.xpose.msra.mxu0 0.0
    %1738 = vmatprep.subr.mxu0 0.0
    %1739 = vmatpush1.xpose.msra.mxu0 0.0
    %1740 = vmatprep.subr.mxu0 0.0
    %1741 = vmatpush1.xpose.msra.mxu0 0.0
    %1742 = vmatprep.subr.mxu0 0.0
    %1743 = vmatpush1.xpose.msra.mxu0 0.0
    %1744 = vmatprep.subr.mxu0 0.0
    %1745 = vmatpush1.xpose.msra.mxu0 %v1714
    %1746 = vmatprep.subr.mxu0 0.0
    %1747 = vmatpush1.xpose.msra.mxu0 %v1712
    %1748 = vmatprep.subr.mxu0 0.0
    %1749 = vmatpush2.xpose.msra.mxu0 0.0
    %1750 = vmatprep.subr.mxu0 0.0
    %1751 = vmatpush2.xpose.msra.mxu0 0.0
    %1752 = vmatprep.subr.mxu0 0.0
    %1753 = vmatpush2.xpose.msra.mxu0 0.0
    %1754 = vmatprep.subr.mxu0 0.0
    %1755 = vmatpush2.xpose.msra.mxu0 0.0
    %1756 = vmatprep.subr.mxu0 0.0
    %1757 = vmatpush2.xpose.msra.mxu0 0.0
    %1758 = vmatprep.subr.mxu0 0.0
    %1759 = vmatpush2.xpose.msra.mxu0 0.0
    %1760 = vmatprep.subr.mxu0 0.0
    %1761 = vmatpush2.xpose.msra.mxu0 0.0
    %1762 = vmatprep.subr.mxu0 0.0
    %1763 = vmatpush2.xpose.msra.mxu0 0.0
    %1764 = vmatprep.subr.mxu0 0.0
    %1765 = vmatpush2.xpose.msra.mxu0 0.0
    %1766 = vmatprep.subr.mxu0 0.0
    %1767 = vmatpush2.xpose.msra.mxu0 0.0
    %1768 = vmatprep.subr.mxu0 0.0
    %1769 = vmatpush2.xpose.msra.mxu0 0.0
    %1770 = vmatprep.subr.mxu0 0.0
    %1771 = vmatpush2.xpose.msra.mxu0 0.0
    %1772 = vmatprep.subr.mxu0 0.0
    %1773 = vmatpush2.xpose.msra.mxu0 0.0
    %1774 = vmatprep.subr.mxu0 0.0
    %1775 = vmatpush2.xpose.msra.mxu0 0.0
    %1776 = vmatprep.subr.mxu0 0.0
    %1777 = vmatpush2.xpose.msra.mxu0 0.0
    %1778 = vmatprep.subr.mxu0 0.0
    %1779 = vmatpush2.xpose.msra.mxu0 0.0
    %1780 = vmatprep.mubr.f32.mxu0 0.0
    %1781 = vmatmul.mubr.f32.gmra.mxu0 %v1113
    %v1782 = vpop.f32.mrf.mxu0
    %v1783 = vadd.f32 %v1597, %v1782
    %v1784 = vpop.f32.mrf.mxu0
    %1785 = vmatprep.mubr.f32.mxu0 0.0
    %1786 = vmatmul.mubr.f32.gmra.mxu0 %v1115
    %v1787 = vpop.f32.mrf.mxu0
    %v1788 = vadd.f32 %v1602, %v1787
    %v1789 = vpop.f32.mrf.mxu0
    %1790 = vdwg.mxu0
    %1791 = vrot.lane.b32.xlu0 %v1054, 64
    %v1792 = vpop.permute.xlu0 %1791
    %1793 = vrot.lane.b32.xlu0 %v1060, 64
    %v1794 = vpop.permute.xlu0 %1793
    %v1795 = vsel %vm1108, %v1792, 0
    %v1797 = vsel %vm1108, %v1794, 0
    %1799 = vmatprep.subr.mxu0 0.0
    %1800 = vmatpush1.xpose.msra.mxu0 0.0
    %1801 = vmatprep.subr.mxu0 0.0
    %1802 = vmatpush1.xpose.msra.mxu0 0.0
    %1803 = vmatprep.subr.mxu0 0.0
    %1804 = vmatpush1.xpose.msra.mxu0 0.0
    %1805 = vmatprep.subr.mxu0 0.0
    %1806 = vmatpush1.xpose.msra.mxu0 0.0
    %1807 = vmatprep.subr.mxu0 0.0
    %1808 = vmatpush1.xpose.msra.mxu0 0.0
    %1809 = vmatprep.subr.mxu0 0.0
    %1810 = vmatpush1.xpose.msra.mxu0 0.0
    %1811 = vmatprep.subr.mxu0 0.0
    %1812 = vmatpush1.xpose.msra.mxu0 0.0
    %1813 = vmatprep.subr.mxu0 0.0
    %1814 = vmatpush1.xpose.msra.mxu0 0.0
    %1815 = vmatprep.subr.mxu0 0.0
    %1816 = vmatpush1.xpose.msra.mxu0 0.0
    %1817 = vmatprep.subr.mxu0 0.0
    %1818 = vmatpush1.xpose.msra.mxu0 0.0
    %1819 = vmatprep.subr.mxu0 0.0
    %1820 = vmatpush1.xpose.msra.mxu0 0.0
    %1821 = vmatprep.subr.mxu0 0.0
    %1822 = vmatpush1.xpose.msra.mxu0 0.0
    %1823 = vmatprep.subr.mxu0 0.0
    %1824 = vmatpush1.xpose.msra.mxu0 0.0
    %1825 = vmatprep.subr.mxu0 0.0
    %1826 = vmatpush1.xpose.msra.mxu0 0.0
    %1827 = vmatprep.subr.mxu0 0.0
    %1828 = vmatpush1.xpose.msra.mxu0 %v1797
    %1829 = vmatprep.subr.mxu0 0.0
    %1830 = vmatpush1.xpose.msra.mxu0 %v1795
    %1831 = vmatprep.subr.mxu0 0.0
    %1832 = vmatpush2.xpose.msra.mxu0 0.0
    %1833 = vmatprep.subr.mxu0 0.0
    %1834 = vmatpush2.xpose.msra.mxu0 0.0
    %1835 = vmatprep.subr.mxu0 0.0
    %1836 = vmatpush2.xpose.msra.mxu0 0.0
    %1837 = vmatprep.subr.mxu0 0.0
    %1838 = vmatpush2.xpose.msra.mxu0 0.0
    %1839 = vmatprep.subr.mxu0 0.0
    %1840 = vmatpush2.xpose.msra.mxu0 0.0
    %1841 = vmatprep.subr.mxu0 0.0
    %1842 = vmatpush2.xpose.msra.mxu0 0.0
    %1843 = vmatprep.subr.mxu0 0.0
    %1844 = vmatpush2.xpose.msra.mxu0 0.0
    %1845 = vmatprep.subr.mxu0 0.0
    %1846 = vmatpush2.xpose.msra.mxu0 0.0
    %1847 = vmatprep.subr.mxu0 0.0
    %1848 = vmatpush2.xpose.msra.mxu0 0.0
    %1849 = vmatprep.subr.mxu0 0.0
    %1850 = vmatpush2.xpose.msra.mxu0 0.0
    %1851 = vmatprep.subr.mxu0 0.0
    %1852 = vmatpush2.xpose.msra.mxu0 0.0
    %1853 = vmatprep.subr.mxu0 0.0
    %1854 = vmatpush2.xpose.msra.mxu0 0.0
    %1855 = vmatprep.subr.mxu0 0.0
    %1856 = vmatpush2.xpose.msra.mxu0 0.0
    %1857 = vmatprep.subr.mxu0 0.0
    %1858 = vmatpush2.xpose.msra.mxu0 0.0
    %1859 = vmatprep.subr.mxu0 0.0
    %1860 = vmatpush2.xpose.msra.mxu0 0.0
    %1861 = vmatprep.subr.mxu0 0.0
    %1862 = vmatpush2.xpose.msra.mxu0 0.0
    %1863 = vmatprep.mubr.f32.mxu0 0.0
    %1864 = vmatmul.mubr.f32.gmra.mxu0 %v1117
    %v1865 = vpop.f32.mrf.mxu0
    %v1866 = vadd.f32 %v1607, %v1865
    %v1867 = vpop.f32.mrf.mxu0
    %1868 = vmatprep.mubr.f32.mxu0 0.0
    %1869 = vmatmul.mubr.f32.gmra.mxu0 %v1119
    %v1870 = vpop.f32.mrf.mxu0
    %v1871 = vadd.f32 %v1612, %v1870
    %v1872 = vpop.f32.mrf.mxu0
    %1873 = vdwg.mxu0
    %1874 = vrot.lane.b32.xlu0 %v1073, 64
    %v1875 = vpop.permute.xlu0 %1874
    %1876 = vrot.lane.b32.xlu0 %v1075, 64
    %v1877 = vpop.permute.xlu0 %1876
    %v1878 = vsel %vm1108, %v1875, 0
    %v1880 = vsel %vm1108, %v1877, 0
    %1882 = vmatprep.subr.mxu0 0.0
    %1883 = vmatpush1.xpose.msra.mxu0 0.0
    %1884 = vmatprep.subr.mxu0 0.0
    %1885 = vmatpush1.xpose.msra.mxu0 0.0
    %1886 = vmatprep.subr.mxu0 0.0
    %1887 = vmatpush1.xpose.msra.mxu0 0.0
    %1888 = vmatprep.subr.mxu0 0.0
    %1889 = vmatpush1.xpose.msra.mxu0 0.0
    %1890 = vmatprep.subr.mxu0 0.0
    %1891 = vmatpush1.xpose.msra.mxu0 0.0
    %1892 = vmatprep.subr.mxu0 0.0
    %1893 = vmatpush1.xpose.msra.mxu0 0.0
    %1894 = vmatprep.subr.mxu0 0.0
    %1895 = vmatpush1.xpose.msra.mxu0 0.0
    %1896 = vmatprep.subr.mxu0 0.0
    %1897 = vmatpush1.xpose.msra.mxu0 0.0
    %1898 = vmatprep.subr.mxu0 0.0
    %1899 = vmatpush1.xpose.msra.mxu0 0.0
    %1900 = vmatprep.subr.mxu0 0.0
    %1901 = vmatpush1.xpose.msra.mxu0 0.0
    %1902 = vmatprep.subr.mxu0 0.0
    %1903 = vmatpush1.xpose.msra.mxu0 0.0
    %1904 = vmatprep.subr.mxu0 0.0
    %1905 = vmatpush1.xpose.msra.mxu0 0.0
    %1906 = vmatprep.subr.mxu0 0.0
    %1907 = vmatpush1.xpose.msra.mxu0 0.0
    %1908 = vmatprep.subr.mxu0 0.0
    %1909 = vmatpush1.xpose.msra.mxu0 0.0
    %1910 = vmatprep.subr.mxu0 0.0
    %1911 = vmatpush1.xpose.msra.mxu0 %v1880
    %1912 = vmatprep.subr.mxu0 0.0
    %1913 = vmatpush1.xpose.msra.mxu0 %v1878
    %1914 = vmatprep.subr.mxu0 0.0
    %1915 = vmatpush2.xpose.msra.mxu0 0.0
    %1916 = vmatprep.subr.mxu0 0.0
    %1917 = vmatpush2.xpose.msra.mxu0 0.0
    %1918 = vmatprep.subr.mxu0 0.0
    %1919 = vmatpush2.xpose.msra.mxu0 0.0
    %1920 = vmatprep.subr.mxu0 0.0
    %1921 = vmatpush2.xpose.msra.mxu0 0.0
    %1922 = vmatprep.subr.mxu0 0.0
    %1923 = vmatpush2.xpose.msra.mxu0 0.0
    %1924 = vmatprep.subr.mxu0 0.0
    %1925 = vmatpush2.xpose.msra.mxu0 0.0
    %1926 = vmatprep.subr.mxu0 0.0
    %1927 = vmatpush2.xpose.msra.mxu0 0.0
    %1928 = vmatprep.subr.mxu0 0.0
    %1929 = vmatpush2.xpose.msra.mxu0 0.0
    %1930 = vmatprep.subr.mxu0 0.0
    %1931 = vmatpush2.xpose.msra.mxu0 0.0
    %1932 = vmatprep.subr.mxu0 0.0
    %1933 = vmatpush2.xpose.msra.mxu0 0.0
    %1934 = vmatprep.subr.mxu0 0.0
    %1935 = vmatpush2.xpose.msra.mxu0 0.0
    %1936 = vmatprep.subr.mxu0 0.0
    %1937 = vmatpush2.xpose.msra.mxu0 0.0
    %1938 = vmatprep.subr.mxu0 0.0
    %1939 = vmatpush2.xpose.msra.mxu0 0.0
    %1940 = vmatprep.subr.mxu0 0.0
    %1941 = vmatpush2.xpose.msra.mxu0 0.0
    %1942 = vmatprep.subr.mxu0 0.0
    %1943 = vmatpush2.xpose.msra.mxu0 0.0
    %1944 = vmatprep.subr.mxu0 0.0
    %1945 = vmatpush2.xpose.msra.mxu0 0.0
    %1946 = vmatprep.mubr.f32.mxu0 0.0
    %1947 = vmatmul.mubr.f32.gmra.mxu0 %v1121
    %v1948 = vpop.f32.mrf.mxu0
    %v1949 = vadd.f32 %v1617, %v1948
    %v1950 = vpop.f32.mrf.mxu0
    %1951 = vmatprep.mubr.f32.mxu0 0.0
    %1952 = vmatmul.mubr.f32.gmra.mxu0 %v1123
    %v1953 = vpop.f32.mrf.mxu0
    %v1954 = vadd.f32 %v1622, %v1953
    %v1955 = vpop.f32.mrf.mxu0
    %1956 = vdwg.mxu0
    %v1957 = vadd.f32 %v1700, %v75
    %v1958 = vadd.f32 %v1705, %v76
    %v1959 = vadd.f32 %v1783, %v75
    %v1960 = vadd.f32 %v1788, %v76
    %v1961 = vadd.f32 %v1866, %v92
    %v1962 = vadd.f32 %v1871, %v93
    %v1963 = vadd.f32 %v1949, %v92
    %v1964 = vadd.f32 %v1954, %v93
    %vm1965 = vcmask 130048
    %v1966 = vsel %vm1965, %v1957, -inf
    %1967 = vmax.xlane.f32.xlu0 %v1966
    %v1968 = vpop.xlane.xlu0 %1967
    %v1969 = vsel %vm1965, %v1958, -inf
    %1970 = vmax.xlane.f32.xlu0 %v1969
    %v1971 = vpop.xlane.xlu0 %1970
    %v1972 = vsel %vm1965, %v1959, -inf
    %1973 = vmax.xlane.f32.xlu0 %v1972
    %v1974 = vpop.xlane.xlu0 %1973
    %v1975 = vsel %vm1965, %v1960, -inf
    %1976 = vmax.xlane.f32.xlu0 %v1975
    %v1977 = vpop.xlane.xlu0 %1976
    %v1978 = vsel %vm1965, %v1961, -inf
    %1979 = vmax.xlane.f32.xlu0 %v1978
    %v1980 = vpop.xlane.xlu0 %1979
    %v1981 = vsel %vm1965, %v1962, -inf
    %1982 = vmax.xlane.f32.xlu0 %v1981
    %v1983 = vpop.xlane.xlu0 %1982
    %v1984 = vsel %vm1965, %v1963, -inf
    %1985 = vmax.xlane.f32.xlu0 %v1984
    %v1986 = vpop.xlane.xlu0 %1985
    %v1987 = vsel %vm1965, %v1964, -inf
    %1988 = vmax.xlane.f32.xlu0 %v1987
    %v1989 = vpop.xlane.xlu0 %1988
    %v1990 = vsub.f32 %v1957, %v1968
    %v1991 = vsub.f32 %v1958, %v1971
    %v1992 = vsub.f32 %v1959, %v1974
    %v1993 = vsub.f32 %v1960, %v1977
    %v1994 = vsub.f32 %v1961, %v1980
    %v1995 = vsub.f32 %v1962, %v1983
    %v1996 = vsub.f32 %v1963, %v1986
    %v1997 = vsub.f32 %v1964, %v1989
    %v1998 = vmul.f32 %v1990, 1.442695
    %v1999 = vpow.pop %v1998
    %v2000 = vmul.f32 %v1991, 1.442695
    %v2001 = vpow.pop %v2000
    %v2002 = vmul.f32 %v1992, 1.442695
    %v2003 = vpow.pop %v2002
    %v2004 = vmul.f32 %v1993, 1.442695
    %v2005 = vpow.pop %v2004
    %v2006 = vmul.f32 %v1994, 1.442695
    %v2007 = vpow.pop %v2006
    %v2008 = vmul.f32 %v1995, 1.442695
    %v2009 = vpow.pop %v2008
    %v2010 = vmul.f32 %v1996, 1.442695
    %v2011 = vpow.pop %v2010
    %v2012 = vmul.f32 %v1997, 1.442695
    %v2013 = vpow.pop %v2012
    %v2014 = vsel %vm1965, %v1999, 0.0
    %2015 = vadd.xlane.f32.xlu0 %v2014
    %v2016 = vpop.xlane.xlu0 %2015
    %v2017 = vsel %vm1965, %v2001, 0.0
    %2018 = vadd.xlane.f32.xlu0 %v2017
    %v2019 = vpop.xlane.xlu0 %2018
    %v2020 = vsel %vm1965, %v2003, 0.0
    %2021 = vadd.xlane.f32.xlu0 %v2020
    %v2022 = vpop.xlane.xlu0 %2021
    %v2023 = vsel %vm1965, %v2005, 0.0
    %2024 = vadd.xlane.f32.xlu0 %v2023
    %v2025 = vpop.xlane.xlu0 %2024
    %v2026 = vsel %vm1965, %v2007, 0.0
    %2027 = vadd.xlane.f32.xlu0 %v2026
    %v2028 = vpop.xlane.xlu0 %2027
    %v2029 = vsel %vm1965, %v2009, 0.0
    %2030 = vadd.xlane.f32.xlu0 %v2029
    %v2031 = vpop.xlane.xlu0 %2030
    %v2032 = vsel %vm1965, %v2011, 0.0
    %2033 = vadd.xlane.f32.xlu0 %v2032
    %v2034 = vpop.xlane.xlu0 %2033
    %v2035 = vsel %vm1965, %v2013, 0.0
    %2036 = vadd.xlane.f32.xlu0 %v2035
    %v2037 = vpop.xlane.xlu0 %2036
    %v2038 = vrcp.pop %v2016
    %v2039 = vrcp.pop %v2019
    %v2040 = vrcp.pop %v2022
    %v2041 = vrcp.pop %v2025
    %v2042 = vrcp.pop %v2028
    %v2043 = vrcp.pop %v2031
    %v2044 = vrcp.pop %v2034
    %v2045 = vrcp.pop %v2037
    %v2046 = vmul.f32 %v1999, %v2038
    %v2047 = vmul.f32 %v2001, %v2039
    %v2048 = vmul.f32 %v2003, %v2040
    %v2049 = vmul.f32 %v2005, %v2041
    %v2050 = vmul.f32 %v2007, %v2042
    %v2051 = vmul.f32 %v2009, %v2043
    %v2052 = vmul.f32 %v2011, %v2044
    %v2053 = vmul.f32 %v2013, %v2045
    %v2055 = vsel %vm1965, %v2046, 0
    %v2058 = vsel %vm1965, %v2047, 0
    %2060 = vmatprep.subr.mxu0 0.0
    %2061 = vmatpush1.msra.mxu0 0.0
    %2062 = vmatprep.subr.mxu0 0.0
    %2063 = vmatpush1.msra.mxu0 0.0
    %2064 = vmatprep.subr.mxu0 0.0
    %2065 = vmatpush1.msra.mxu0 0.0
    %2066 = vmatprep.subr.mxu0 0.0
    %2067 = vmatpush1.msra.mxu0 0.0
    %2068 = vmatprep.subr.mxu0 0.0
    %2069 = vmatpush1.msra.mxu0 0.0
    %2070 = vmatprep.subr.mxu0 0.0
    %2071 = vmatpush1.msra.mxu0 0.0
    %2072 = vmatprep.subr.mxu0 0.0
    %2073 = vmatpush1.msra.mxu0 0.0
    %2074 = vmatprep.subr.mxu0 0.0
    %2075 = vmatpush1.msra.mxu0 0.0
    %2076 = vmatprep.subr.mxu0 0.0
    %2077 = vmatpush1.msra.mxu0 0.0
    %2078 = vmatprep.subr.mxu0 0.0
    %2079 = vmatpush1.msra.mxu0 0.0
    %2080 = vmatprep.subr.mxu0 0.0
    %2081 = vmatpush1.msra.mxu0 0.0
    %2082 = vmatprep.subr.mxu0 0.0
    %2083 = vmatpush1.msra.mxu0 0.0
    %2084 = vmatprep.subr.mxu0 0.0
    %2085 = vmatpush1.msra.mxu0 0.0
    %2086 = vmatprep.subr.mxu0 0.0
    %2087 = vmatpush1.msra.mxu0 0.0
    %2088 = vmatprep.subr.mxu0 0.0
    %2089 = vmatpush1.msra.mxu0 %v1050
    %2090 = vmatprep.subr.mxu0 0.0
    %2091 = vmatpush1.msra.mxu0 %v1044
    %2092 = vmatprep.subr.mxu0 0.0
    %2093 = vmatpush2.msra.mxu0 0.0
    %2094 = vmatprep.subr.mxu0 0.0
    %2095 = vmatpush2.msra.mxu0 0.0
    %2096 = vmatprep.subr.mxu0 0.0
    %2097 = vmatpush2.msra.mxu0 0.0
    %2098 = vmatprep.subr.mxu0 0.0
    %2099 = vmatpush2.msra.mxu0 0.0
    %2100 = vmatprep.subr.mxu0 0.0
    %2101 = vmatpush2.msra.mxu0 0.0
    %2102 = vmatprep.subr.mxu0 0.0
    %2103 = vmatpush2.msra.mxu0 0.0
    %2104 = vmatprep.subr.mxu0 0.0
    %2105 = vmatpush2.msra.mxu0 0.0
    %2106 = vmatprep.subr.mxu0 0.0
    %2107 = vmatpush2.msra.mxu0 0.0
    %2108 = vmatprep.subr.mxu0 0.0
    %2109 = vmatpush2.msra.mxu0 0.0
    %2110 = vmatprep.subr.mxu0 0.0
    %2111 = vmatpush2.msra.mxu0 0.0
    %2112 = vmatprep.subr.mxu0 0.0
    %2113 = vmatpush2.msra.mxu0 0.0
    %2114 = vmatprep.subr.mxu0 0.0
    %2115 = vmatpush2.msra.mxu0 0.0
    %2116 = vmatprep.subr.mxu0 0.0
    %2117 = vmatpush2.msra.mxu0 0.0
    %2118 = vmatprep.subr.mxu0 0.0
    %2119 = vmatpush2.msra.mxu0 0.0
    %2120 = vmatprep.subr.mxu0 0.0
    %2121 = vmatpush2.msra.mxu0 0.0
    %2122 = vmatprep.subr.mxu0 0.0
    %2123 = vmatpush2.msra.mxu0 0.0
    %2124 = vmatprep.mubr.f32.mxu0 0.0
    %2125 = vmatmul.mubr.f32.gmra.mxu0 %v2055
    %v2126 = vpop.f32.mrf.mxu0
    %v2127 = vadd.f32 0.0, %v2126
    %v2128 = vpop.f32.mrf.mxu0
    %2129 = vmatprep.mubr.f32.mxu0 0.0
    %2130 = vmatmul.mubr.f32.gmra.mxu0 %v2058
    %v2131 = vpop.f32.mrf.mxu0
    %v2132 = vadd.f32 0.0, %v2131
    %v2133 = vpop.f32.mrf.mxu0
    %2134 = vdwg.mxu0
    %v2136 = vsel %vm1965, %v2048, 0
    %v2139 = vsel %vm1965, %v2049, 0
    %2141 = vmatprep.subr.mxu0 0.0
    %2142 = vmatpush1.msra.mxu0 0.0
    %2143 = vmatprep.subr.mxu0 0.0
    %2144 = vmatpush1.msra.mxu0 0.0
    %2145 = vmatprep.subr.mxu0 0.0
    %2146 = vmatpush1.msra.mxu0 0.0
    %2147 = vmatprep.subr.mxu0 0.0
    %2148 = vmatpush1.msra.mxu0 0.0
    %2149 = vmatprep.subr.mxu0 0.0
    %2150 = vmatpush1.msra.mxu0 0.0
    %2151 = vmatprep.subr.mxu0 0.0
    %2152 = vmatpush1.msra.mxu0 0.0
    %2153 = vmatprep.subr.mxu0 0.0
    %2154 = vmatpush1.msra.mxu0 0.0
    %2155 = vmatprep.subr.mxu0 0.0
    %2156 = vmatpush1.msra.mxu0 0.0
    %2157 = vmatprep.subr.mxu0 0.0
    %2158 = vmatpush1.msra.mxu0 0.0
    %2159 = vmatprep.subr.mxu0 0.0
    %2160 = vmatpush1.msra.mxu0 0.0
    %2161 = vmatprep.subr.mxu0 0.0
    %2162 = vmatpush1.msra.mxu0 0.0
    %2163 = vmatprep.subr.mxu0 0.0
    %2164 = vmatpush1.msra.mxu0 0.0
    %2165 = vmatprep.subr.mxu0 0.0
    %2166 = vmatpush1.msra.mxu0 0.0
    %2167 = vmatprep.subr.mxu0 0.0
    %2168 = vmatpush1.msra.mxu0 0.0
    %2169 = vmatprep.subr.mxu0 0.0
    %2170 = vmatpush1.msra.mxu0 %v1081
    %2171 = vmatprep.subr.mxu0 0.0
    %2172 = vmatpush1.msra.mxu0 %v1079
    %2173 = vmatprep.subr.mxu0 0.0
    %2174 = vmatpush2.msra.mxu0 0.0
    %2175 = vmatprep.subr.mxu0 0.0
    %2176 = vmatpush2.msra.mxu0 0.0
    %2177 = vmatprep.subr.mxu0 0.0
    %2178 = vmatpush2.msra.mxu0 0.0
    %2179 = vmatprep.subr.mxu0 0.0
    %2180 = vmatpush2.msra.mxu0 0.0
    %2181 = vmatprep.subr.mxu0 0.0
    %2182 = vmatpush2.msra.mxu0 0.0
    %2183 = vmatprep.subr.mxu0 0.0
    %2184 = vmatpush2.msra.mxu0 0.0
    %2185 = vmatprep.subr.mxu0 0.0
    %2186 = vmatpush2.msra.mxu0 0.0
    %2187 = vmatprep.subr.mxu0 0.0
    %2188 = vmatpush2.msra.mxu0 0.0
    %2189 = vmatprep.subr.mxu0 0.0
    %2190 = vmatpush2.msra.mxu0 0.0
    %2191 = vmatprep.subr.mxu0 0.0
    %2192 = vmatpush2.msra.mxu0 0.0
    %2193 = vmatprep.subr.mxu0 0.0
    %2194 = vmatpush2.msra.mxu0 0.0
    %2195 = vmatprep.subr.mxu0 0.0
    %2196 = vmatpush2.msra.mxu0 0.0
    %2197 = vmatprep.subr.mxu0 0.0
    %2198 = vmatpush2.msra.mxu0 0.0
    %2199 = vmatprep.subr.mxu0 0.0
    %2200 = vmatpush2.msra.mxu0 0.0
    %2201 = vmatprep.subr.mxu0 0.0
    %2202 = vmatpush2.msra.mxu0 0.0
    %2203 = vmatprep.subr.mxu0 0.0
    %2204 = vmatpush2.msra.mxu0 0.0
    %2205 = vmatprep.mubr.f32.mxu0 0.0
    %2206 = vmatmul.mubr.f32.gmra.mxu0 %v2136
    %v2207 = vpop.f32.mrf.mxu0
    %v2208 = vadd.f32 0.0, %v2207
    %v2209 = vpop.f32.mrf.mxu0
    %2210 = vmatprep.mubr.f32.mxu0 0.0
    %2211 = vmatmul.mubr.f32.gmra.mxu0 %v2139
    %v2212 = vpop.f32.mrf.mxu0
    %v2213 = vadd.f32 0.0, %v2212
    %v2214 = vpop.f32.mrf.mxu0
    %2215 = vdwg.mxu0
    %v2217 = vsel %vm1965, %v2050, 0
    %v2220 = vsel %vm1965, %v2051, 0
    %2222 = vmatprep.subr.mxu0 0.0
    %2223 = vmatpush1.msra.mxu0 0.0
    %2224 = vmatprep.subr.mxu0 0.0
    %2225 = vmatpush1.msra.mxu0 0.0
    %2226 = vmatprep.subr.mxu0 0.0
    %2227 = vmatpush1.msra.mxu0 0.0
    %2228 = vmatprep.subr.mxu0 0.0
    %2229 = vmatpush1.msra.mxu0 0.0
    %2230 = vmatprep.subr.mxu0 0.0
    %2231 = vmatpush1.msra.mxu0 0.0
    %2232 = vmatprep.subr.mxu0 0.0
    %2233 = vmatpush1.msra.mxu0 0.0
    %2234 = vmatprep.subr.mxu0 0.0
    %2235 = vmatpush1.msra.mxu0 0.0
    %2236 = vmatprep.subr.mxu0 0.0
    %2237 = vmatpush1.msra.mxu0 0.0
    %2238 = vmatprep.subr.mxu0 0.0
    %2239 = vmatpush1.msra.mxu0 0.0
    %2240 = vmatprep.subr.mxu0 0.0
    %2241 = vmatpush1.msra.mxu0 0.0
    %2242 = vmatprep.subr.mxu0 0.0
    %2243 = vmatpush1.msra.mxu0 0.0
    %2244 = vmatprep.subr.mxu0 0.0
    %2245 = vmatpush1.msra.mxu0 0.0
    %2246 = vmatprep.subr.mxu0 0.0
    %2247 = vmatpush1.msra.mxu0 0.0
    %2248 = vmatprep.subr.mxu0 0.0
    %2249 = vmatpush1.msra.mxu0 0.0
    %2250 = vmatprep.subr.mxu0 0.0
    %2251 = vmatpush1.msra.mxu0 %v1062
    %2252 = vmatprep.subr.mxu0 0.0
    %2253 = vmatpush1.msra.mxu0 %v1056
    %2254 = vmatprep.subr.mxu0 0.0
    %2255 = vmatpush2.msra.mxu0 0.0
    %2256 = vmatprep.subr.mxu0 0.0
    %2257 = vmatpush2.msra.mxu0 0.0
    %2258 = vmatprep.subr.mxu0 0.0
    %2259 = vmatpush2.msra.mxu0 0.0
    %2260 = vmatprep.subr.mxu0 0.0
    %2261 = vmatpush2.msra.mxu0 0.0
    %2262 = vmatprep.subr.mxu0 0.0
    %2263 = vmatpush2.msra.mxu0 0.0
    %2264 = vmatprep.subr.mxu0 0.0
    %2265 = vmatpush2.msra.mxu0 0.0
    %2266 = vmatprep.subr.mxu0 0.0
    %2267 = vmatpush2.msra.mxu0 0.0
    %2268 = vmatprep.subr.mxu0 0.0
    %2269 = vmatpush2.msra.mxu0 0.0
    %2270 = vmatprep.subr.mxu0 0.0
    %2271 = vmatpush2.msra.mxu0 0.0
    %2272 = vmatprep.subr.mxu0 0.0
    %2273 = vmatpush2.msra.mxu0 0.0
    %2274 = vmatprep.subr.mxu0 0.0
    %2275 = vmatpush2.msra.mxu0 0.0
    %2276 = vmatprep.subr.mxu0 0.0
    %2277 = vmatpush2.msra.mxu0 0.0
    %2278 = vmatprep.subr.mxu0 0.0
    %2279 = vmatpush2.msra.mxu0 0.0
    %2280 = vmatprep.subr.mxu0 0.0
    %2281 = vmatpush2.msra.mxu0 0.0
    %2282 = vmatprep.subr.mxu0 0.0
    %2283 = vmatpush2.msra.mxu0 0.0
    %2284 = vmatprep.subr.mxu0 0.0
    %2285 = vmatpush2.msra.mxu0 0.0
    %2286 = vmatprep.mubr.f32.mxu0 0.0
    %2287 = vmatmul.mubr.f32.gmra.mxu0 %v2217
    %v2288 = vpop.f32.mrf.mxu0
    %v2289 = vadd.f32 0.0, %v2288
    %v2290 = vpop.f32.mrf.mxu0
    %2291 = vmatprep.mubr.f32.mxu0 0.0
    %2292 = vmatmul.mubr.f32.gmra.mxu0 %v2220
    %v2293 = vpop.f32.mrf.mxu0
    %v2294 = vadd.f32 0.0, %v2293
    %v2295 = vpop.f32.mrf.mxu0
    %2296 = vdwg.mxu0
    %v2298 = vsel %vm1965, %v2052, 0
    %v2301 = vsel %vm1965, %v2053, 0
    %2303 = vmatprep.subr.mxu0 0.0
    %2304 = vmatpush1.msra.mxu0 0.0
    %2305 = vmatprep.subr.mxu0 0.0
    %2306 = vmatpush1.msra.mxu0 0.0
    %2307 = vmatprep.subr.mxu0 0.0
    %2308 = vmatpush1.msra.mxu0 0.0
    %2309 = vmatprep.subr.mxu0 0.0
    %2310 = vmatpush1.msra.mxu0 0.0
    %2311 = vmatprep.subr.mxu0 0.0
    %2312 = vmatpush1.msra.mxu0 0.0
    %2313 = vmatprep.subr.mxu0 0.0
    %2314 = vmatpush1.msra.mxu0 0.0
    %2315 = vmatprep.subr.mxu0 0.0
    %2316 = vmatpush1.msra.mxu0 0.0
    %2317 = vmatprep.subr.mxu0 0.0
    %2318 = vmatpush1.msra.mxu0 0.0
    %2319 = vmatprep.subr.mxu0 0.0
    %2320 = vmatpush1.msra.mxu0 0.0
    %2321 = vmatprep.subr.mxu0 0.0
    %2322 = vmatpush1.msra.mxu0 0.0
    %2323 = vmatprep.subr.mxu0 0.0
    %2324 = vmatpush1.msra.mxu0 0.0
    %2325 = vmatprep.subr.mxu0 0.0
    %2326 = vmatpush1.msra.mxu0 0.0
    %2327 = vmatprep.subr.mxu0 0.0
    %2328 = vmatpush1.msra.mxu0 0.0
    %2329 = vmatprep.subr.mxu0 0.0
    %2330 = vmatpush1.msra.mxu0 0.0
    %2331 = vmatprep.subr.mxu0 0.0
    %2332 = vmatpush1.msra.mxu0 %v1089
    %2333 = vmatprep.subr.mxu0 0.0
    %2334 = vmatpush1.msra.mxu0 %v1087
    %2335 = vmatprep.subr.mxu0 0.0
    %2336 = vmatpush2.msra.mxu0 0.0
    %2337 = vmatprep.subr.mxu0 0.0
    %2338 = vmatpush2.msra.mxu0 0.0
    %2339 = vmatprep.subr.mxu0 0.0
    %2340 = vmatpush2.msra.mxu0 0.0
    %2341 = vmatprep.subr.mxu0 0.0
    %2342 = vmatpush2.msra.mxu0 0.0
    %2343 = vmatprep.subr.mxu0 0.0
    %2344 = vmatpush2.msra.mxu0 0.0
    %2345 = vmatprep.subr.mxu0 0.0
    %2346 = vmatpush2.msra.mxu0 0.0
    %2347 = vmatprep.subr.mxu0 0.0
    %2348 = vmatpush2.msra.mxu0 0.0
    %2349 = vmatprep.subr.mxu0 0.0
    %2350 = vmatpush2.msra.mxu0 0.0
    %2351 = vmatprep.subr.mxu0 0.0
    %2352 = vmatpush2.msra.mxu0 0.0
    %2353 = vmatprep.subr.mxu0 0.0
    %2354 = vmatpush2.msra.mxu0 0.0
    %2355 = vmatprep.subr.mxu0 0.0
    %2356 = vmatpush2.msra.mxu0 0.0
    %2357 = vmatprep.subr.mxu0 0.0
    %2358 = vmatpush2.msra.mxu0 0.0
    %2359 = vmatprep.subr.mxu0 0.0
    %2360 = vmatpush2.msra.mxu0 0.0
    %2361 = vmatprep.subr.mxu0 0.0
    %2362 = vmatpush2.msra.mxu0 0.0
    %2363 = vmatprep.subr.mxu0 0.0
    %2364 = vmatpush2.msra.mxu0 0.0
    %2365 = vmatprep.subr.mxu0 0.0
    %2366 = vmatpush2.msra.mxu0 0.0
    %2367 = vmatprep.mubr.f32.mxu0 0.0
    %2368 = vmatmul.mubr.f32.gmra.mxu0 %v2298
    %v2369 = vpop.f32.mrf.mxu0
    %v2370 = vadd.f32 0.0, %v2369
    %v2371 = vpop.f32.mrf.mxu0
    %2372 = vmatprep.mubr.f32.mxu0 0.0
    %2373 = vmatmul.mubr.f32.gmra.mxu0 %v2301
    %v2374 = vpop.f32.mrf.mxu0
    %v2375 = vadd.f32 0.0, %v2374
    %v2376 = vpop.f32.mrf.mxu0
    %2377 = vdwg.mxu0
    %v2378 = vld [vmem:[%s5] sm:$0xff]
    %v2379 = vld [vmem:[%s5 + $0x8] sm:$0xff]
    %v2380 = vld [vmem:[%s5 + $0x10] sm:$0xff]
    %v2381 = vld [vmem:[%s5 + $0x18] sm:$0xff]
    %2382 = vmatprep.subr.mxu0 0.0
    %2383 = vmatpush1.msra.mxu0 0.0
    %2384 = vmatprep.subr.mxu0 0.0
    %2385 = vmatpush1.msra.mxu0 0.0
    %2386 = vmatprep.subr.mxu0 0.0
    %2387 = vmatpush1.msra.mxu0 0.0
    %2388 = vmatprep.subr.mxu0 0.0
    %2389 = vmatpush1.msra.mxu0 0.0
    %2390 = vmatprep.subr.mxu0 0.0
    %2391 = vmatpush1.msra.mxu0 0.0
    %2392 = vmatprep.subr.mxu0 0.0
    %2393 = vmatpush1.msra.mxu0 0.0
    %2394 = vmatprep.subr.mxu0 0.0
    %2395 = vmatpush1.msra.mxu0 0.0
    %2396 = vmatprep.subr.mxu0 0.0
    %2397 = vmatpush1.msra.mxu0 0.0
    %2398 = vmatprep.subr.mxu0 0.0
    %2399 = vmatpush1.msra.mxu0 0.0
    %2400 = vmatprep.subr.mxu0 0.0
    %2401 = vmatpush1.msra.mxu0 0.0
    %2402 = vmatprep.subr.mxu0 0.0
    %2403 = vmatpush1.msra.mxu0 0.0
    %2404 = vmatprep.subr.mxu0 0.0
    %2405 = vmatpush1.msra.mxu0 0.0
    %2406 = vmatprep.subr.mxu0 0.0
    %2407 = vmatpush1.msra.mxu0 0.0
    %2408 = vmatprep.subr.mxu0 0.0
    %2409 = vmatpush1.msra.mxu0 0.0
    %2410 = vmatprep.subr.mxu0 %v2381
    %2411 = vmatpush1.msra.mxu0 %v2380
    %2412 = vmatprep.subr.mxu0 %v2379
    %2413 = vmatpush1.msra.mxu0 %v2378
    %2414 = vmatprep.subr.mxu0 0.0
    %2415 = vmatpush2.msra.mxu0 0.0
    %2416 = vmatprep.subr.mxu0 0.0
    %2417 = vmatpush2.msra.mxu0 0.0
    %2418 = vmatprep.subr.mxu0 0.0
    %2419 = vmatpush2.msra.mxu0 0.0
    %2420 = vmatprep.subr.mxu0 0.0
    %2421 = vmatpush2.msra.mxu0 0.0
    %2422 = vmatprep.subr.mxu0 0.0
    %2423 = vmatpush2.msra.mxu0 0.0
    %2424 = vmatprep.subr.mxu0 0.0
    %2425 = vmatpush2.msra.mxu0 0.0
    %2426 = vmatprep.subr.mxu0 0.0
    %2427 = vmatpush2.msra.mxu0 0.0
    %2428 = vmatprep.subr.mxu0 0.0
    %2429 = vmatpush2.msra.mxu0 0.0
    %2430 = vmatprep.subr.mxu0 0.0
    %2431 = vmatpush2.msra.mxu0 0.0
    %2432 = vmatprep.subr.mxu0 0.0
    %2433 = vmatpush2.msra.mxu0 0.0
    %2434 = vmatprep.subr.mxu0 0.0
    %2435 = vmatpush2.msra.mxu0 0.0
    %2436 = vmatprep.subr.mxu0 0.0
    %2437 = vmatpush2.msra.mxu0 0.0
    %2438 = vmatprep.subr.mxu0 0.0
    %2439 = vmatpush2.msra.mxu0 0.0
    %2440 = vmatprep.subr.mxu0 0.0
    %2441 = vmatpush2.msra.mxu0 0.0
    %2442 = vmatprep.subr.mxu0 0.0
    %2443 = vmatpush2.msra.mxu0 0.0
    %2444 = vmatprep.subr.mxu0 0.0
    %2445 = vmatpush2.msra.mxu0 0.0
    %2446 = vmatprep.mubr.f32.mxu0 0.0
    %2447 = vmatmul.mubr.f32.gmra.mxu0 %v2055
    %v2448 = vpop.f32.mrf.mxu0
    %v2449 = vadd.f32 0.0, %v2448
    %v2450 = vpop.f32.mrf.mxu0
    %v2451 = vadd.f32 0.0, %v2450
    %2452 = vmatprep.mubr.f32.mxu0 0.0
    %2453 = vmatmul.mubr.f32.gmra.mxu0 %v2058
    %v2454 = vpop.f32.mrf.mxu0
    %v2455 = vadd.f32 0.0, %v2454
    %v2456 = vpop.f32.mrf.mxu0
    %v2457 = vadd.f32 0.0, %v2456
    %2458 = vmatprep.mubr.f32.mxu0 0.0
    %2459 = vmatmul.mubr.f32.gmra.mxu0 %v2136
    %v2460 = vpop.f32.mrf.mxu0
    %v2461 = vadd.f32 0.0, %v2460
    %v2462 = vpop.f32.mrf.mxu0
    %v2463 = vadd.f32 0.0, %v2462
    %2464 = vmatprep.mubr.f32.mxu0 0.0
    %2465 = vmatmul.mubr.f32.gmra.mxu0 %v2139
    %v2466 = vpop.f32.mrf.mxu0
    %v2467 = vadd.f32 0.0, %v2466
    %v2468 = vpop.f32.mrf.mxu0
    %v2469 = vadd.f32 0.0, %v2468
    %2470 = vmatprep.mubr.f32.mxu0 0.0
    %2471 = vmatmul.mubr.f32.gmra.mxu0 %v2217
    %v2472 = vpop.f32.mrf.mxu0
    %v2473 = vadd.f32 0.0, %v2472
    %v2474 = vpop.f32.mrf.mxu0
    %v2475 = vadd.f32 0.0, %v2474
    %2476 = vmatprep.mubr.f32.mxu0 0.0
    %2477 = vmatmul.mubr.f32.gmra.mxu0 %v2220
    %v2478 = vpop.f32.mrf.mxu0
    %v2479 = vadd.f32 0.0, %v2478
    %v2480 = vpop.f32.mrf.mxu0
    %v2481 = vadd.f32 0.0, %v2480
    %2482 = vmatprep.mubr.f32.mxu0 0.0
    %2483 = vmatmul.mubr.f32.gmra.mxu0 %v2298
    %v2484 = vpop.f32.mrf.mxu0
    %v2485 = vadd.f32 0.0, %v2484
    %v2486 = vpop.f32.mrf.mxu0
    %v2487 = vadd.f32 0.0, %v2486
    %2488 = vmatprep.mubr.f32.mxu0 0.0
    %2489 = vmatmul.mubr.f32.gmra.mxu0 %v2301
    %v2490 = vpop.f32.mrf.mxu0
    %v2491 = vadd.f32 0.0, %v2490
    %v2492 = vpop.f32.mrf.mxu0
    %v2493 = vadd.f32 0.0, %v2492
    %2494 = vdwg.mxu0
    %v2495 = vld [vmem:[%s5 + $0x20] sm:$0xff]
    %v2496 = vld [vmem:[%s5 + $0x28] sm:$0xff]
    %v2497 = vld [vmem:[%s5 + $0x30] sm:$0xff]
    %v2498 = vld [vmem:[%s5 + $0x38] sm:$0xff]
    %v2499 = vld [vmem:[%s5 + $0x40] sm:$0xff]
    %v2500 = vld [vmem:[%s5 + $0x48] sm:$0xff]
    %v2501 = vld [vmem:[%s5 + $0x50] sm:$0xff]
    %v2502 = vld [vmem:[%s5 + $0x58] sm:$0xff]
    %v2503 = vld [vmem:[%s5 + $0x60] sm:$0xff]
    %v2504 = vld [vmem:[%s5 + $0x68] sm:$0xff]
    %v2505 = vld [vmem:[%s5 + $0x70] sm:$0xff]
    %v2506 = vld [vmem:[%s5 + $0x78] sm:$0xff]
    %v2507 = vld [vmem:[%s5 + $0x80] sm:$0xff]
    %v2508 = vld [vmem:[%s5 + $0x88] sm:$0xff]
    %v2509 = vld [vmem:[%s5 + $0x90] sm:$0xff]
    %v2510 = vld [vmem:[%s5 + $0x98] sm:$0xff]
    %v2511 = vmul.f32 %v2449, %v2495
    %v2512 = vmul.f32 %v2451, %v2496
    %v2513 = vmul.f32 %v2455, %v2497
    %v2514 = vmul.f32 %v2457, %v2498
    %v2515 = vmul.f32 %v2461, %v2499
    %v2516 = vmul.f32 %v2463, %v2500
    %v2517 = vmul.f32 %v2467, %v2501
    %v2518 = vmul.f32 %v2469, %v2502
    %v2519 = vmul.f32 %v2473, %v2503
    %v2520 = vmul.f32 %v2475, %v2504
    %v2521 = vmul.f32 %v2479, %v2505
    %v2522 = vmul.f32 %v2481, %v2506
    %v2523 = vmul.f32 %v2485, %v2507
    %v2524 = vmul.f32 %v2487, %v2508
    %v2525 = vmul.f32 %v2491, %v2509
    %v2526 = vmul.f32 %v2493, %v2510
    %2527 = vmatprep.subr.mxu0 0.0
    %2528 = vmatpush1.msra.mxu0 %v838
    %2529 = vmatprep.subr.mxu0 0.0
    %2530 = vmatpush1.msra.mxu0 %v837
    %2531 = vmatprep.subr.mxu0 0.0
    %2532 = vmatpush1.msra.mxu0 %v836
    %2533 = vmatprep.subr.mxu0 0.0
    %2534 = vmatpush1.msra.mxu0 %v835
    %2535 = vmatprep.subr.mxu0 0.0
    %2536 = vmatpush1.msra.mxu0 %v834
    %2537 = vmatprep.subr.mxu0 0.0
    %2538 = vmatpush1.msra.mxu0 %v833
    %2539 = vmatprep.subr.mxu0 0.0
    %2540 = vmatpush1.msra.mxu0 %v832
    %2541 = vmatprep.subr.mxu0 0.0
    %2542 = vmatpush1.msra.mxu0 %v831
    %2543 = vmatprep.subr.mxu0 0.0
    %2544 = vmatpush1.msra.mxu0 %v830
    %2545 = vmatprep.subr.mxu0 0.0
    %2546 = vmatpush1.msra.mxu0 %v829
    %2547 = vmatprep.subr.mxu0 0.0
    %2548 = vmatpush1.msra.mxu0 %v828
    %2549 = vmatprep.subr.mxu0 0.0
    %2550 = vmatpush1.msra.mxu0 %v827
    %2551 = vmatprep.subr.mxu0 0.0
    %2552 = vmatpush1.msra.mxu0 %v826
    %2553 = vmatprep.subr.mxu0 0.0
    %2554 = vmatpush1.msra.mxu0 %v825
    %2555 = vmatprep.subr.mxu0 0.0
    %2556 = vmatpush1.msra.mxu0 %v824
    %2557 = vmatprep.subr.mxu0 0.0
    %2558 = vmatpush1.msra.mxu0 %v823
    %2559 = vmatprep.subr.mxu0 0.0
    %2560 = vmatpush2.msra.mxu0 %v854
    %2561 = vmatprep.subr.mxu0 0.0
    %2562 = vmatpush2.msra.mxu0 %v853
    %2563 = vmatprep.subr.mxu0 0.0
    %2564 = vmatpush2.msra.mxu0 %v852
    %2565 = vmatprep.subr.mxu0 0.0
    %2566 = vmatpush2.msra.mxu0 %v851
    %2567 = vmatprep.subr.mxu0 0.0
    %2568 = vmatpush2.msra.mxu0 %v850
    %2569 = vmatprep.subr.mxu0 0.0
    %2570 = vmatpush2.msra.mxu0 %v849
    %2571 = vmatprep.subr.mxu0 0.0
    %2572 = vmatpush2.msra.mxu0 %v848
    %2573 = vmatprep.subr.mxu0 0.0
    %2574 = vmatpush2.msra.mxu0 %v847
    %2575 = vmatprep.subr.mxu0 0.0
    %2576 = vmatpush2.msra.mxu0 %v846
    %2577 = vmatprep.subr.mxu0 0.0
    %2578 = vmatpush2.msra.mxu0 %v845
    %2579 = vmatprep.subr.mxu0 0.0
    %2580 = vmatpush2.msra.mxu0 %v844
    %2581 = vmatprep.subr.mxu0 0.0
    %2582 = vmatpush2.msra.mxu0 %v843
    %2583 = vmatprep.subr.mxu0 0.0
    %2584 = vmatpush2.msra.mxu0 %v842
    %2585 = vmatprep.subr.mxu0 0.0
    %2586 = vmatpush2.msra.mxu0 %v841
    %2587 = vmatprep.subr.mxu0 0.0
    %2588 = vmatpush2.msra.mxu0 %v840
    %2589 = vmatprep.subr.mxu0 0.0
    %2590 = vmatpush2.msra.mxu0 %v839
    %2591 = vmatprep.mubr.f32.mxu0 %v2512
    %2592 = vmatmul.mubr.f32.gmra.mxu0 %v2511
    %v2593 = vpop.f32.mrf.mxu0
    %v2594 = vadd.f32 0.0, %v2593
    %v2595 = vpop.f32.mrf.mxu0
    %2596 = vmatprep.mubr.f32.mxu0 %v2514
    %2597 = vmatmul.mubr.f32.gmra.mxu0 %v2513
    %v2598 = vpop.f32.mrf.mxu0
    %v2599 = vadd.f32 0.0, %v2598
    %v2600 = vpop.f32.mrf.mxu0
    %2601 = vmatprep.mubr.f32.mxu0 %v2516
    %2602 = vmatmul.mubr.f32.gmra.mxu0 %v2515
    %v2603 = vpop.f32.mrf.mxu0
    %v2604 = vadd.f32 0.0, %v2603
    %v2605 = vpop.f32.mrf.mxu0
    %2606 = vmatprep.mubr.f32.mxu0 %v2518
    %2607 = vmatmul.mubr.f32.gmra.mxu0 %v2517
    %v2608 = vpop.f32.mrf.mxu0
    %v2609 = vadd.f32 0.0, %v2608
    %v2610 = vpop.f32.mrf.mxu0
    %2611 = vmatprep.mubr.f32.mxu0 %v2520
    %2612 = vmatmul.mubr.f32.gmra.mxu0 %v2519
    %v2613 = vpop.f32.mrf.mxu0
    %v2614 = vadd.f32 0.0, %v2613
    %v2615 = vpop.f32.mrf.mxu0
    %2616 = vmatprep.mubr.f32.mxu0 %v2522
    %2617 = vmatmul.mubr.f32.gmra.mxu0 %v2521
    %v2618 = vpop.f32.mrf.mxu0
    %v2619 = vadd.f32 0.0, %v2618
    %v2620 = vpop.f32.mrf.mxu0
    %2621 = vmatprep.mubr.f32.mxu0 %v2524
    %2622 = vmatmul.mubr.f32.gmra.mxu0 %v2523
    %v2623 = vpop.f32.mrf.mxu0
    %v2624 = vadd.f32 0.0, %v2623
    %v2625 = vpop.f32.mrf.mxu0
    %2626 = vmatprep.mubr.f32.mxu0 %v2526
    %2627 = vmatmul.mubr.f32.gmra.mxu0 %v2525
    %v2628 = vpop.f32.mrf.mxu0
    %v2629 = vadd.f32 0.0, %v2628
    %v2630 = vpop.f32.mrf.mxu0
    %2631 = vdwg.mxu0
    %v2632 = vadd.f32 %v2127, %v2594
    %v2633 = vadd.f32 %v2132, %v2599
    %v2634 = vadd.f32 %v2208, %v2604
    %v2635 = vadd.f32 %v2213, %v2609
    %v2636 = vadd.f32 %v2289, %v2614
    %v2637 = vadd.f32 %v2294, %v2619
    %v2638 = vadd.f32 %v2370, %v2624
    %v2639 = vadd.f32 %v2375, %v2629
    %2642 = vrot.lane.b32.xlu0 %v2634, 32
    %v2643 = vpop.permute.xlu0 %2642
    %2644 = vrot.lane.b32.xlu0 %v2635, 32
    %v2645 = vpop.permute.xlu0 %2644
    %v2648 = vsel %vm1108, %v2632, %v2643
    %v2649 = vsel %vm1108, %v2633, %v2645
    %2652 = vrot.lane.b32.xlu0 %v2638, 32
    %v2653 = vpop.permute.xlu0 %2652
    %2654 = vrot.lane.b32.xlu0 %v2639, 32
    %v2655 = vpop.permute.xlu0 %2654
    %v2658 = vsel %vm1108, %v2636, %v2653
    %v2659 = vsel %vm1108, %v2637, %v2655
    %2668 = vrot.lane.b32.xlu0 %v735, 64
    %v2669 = vpop.permute.xlu0 %2668
    %2670 = vrot.lane.b32.xlu0 %v737, 64
    %v2671 = vpop.permute.xlu0 %2670
    %2672 = vrot.lane.b32.xlu0 %v739, 64
    %v2673 = vpop.permute.xlu0 %2672
    %2674 = vrot.lane.b32.xlu0 %v741, 64
    %v2675 = vpop.permute.xlu0 %2674
    %2676 = vrot.lane.b32.xlu0 %v743, 64
    %v2677 = vpop.permute.xlu0 %2676
    %2678 = vrot.lane.b32.xlu0 %v745, 64
    %v2679 = vpop.permute.xlu0 %2678
    %2680 = vrot.lane.b32.xlu0 %v747, 64
    %v2681 = vpop.permute.xlu0 %2680
    %2682 = vrot.lane.b32.xlu0 %v749, 64
    %v2683 = vpop.permute.xlu0 %2682
    %v2693 = vsel %vm962, %v2648, 0
    %v2696 = vsel %vm962, %v2649, 0
    %v2699 = vsel %vm962, %v2658, 0
    %v2702 = vsel %vm962, %v2659, 0
    %2704 = vmatprep.subr.mxu0 0.0
    %2705 = vmatpush1.msra.mxu0 0.0
    %2706 = vmatprep.subr.mxu0 0.0
    %2707 = vmatpush1.msra.mxu0 0.0
    %2708 = vmatprep.subr.mxu0 0.0
    %2709 = vmatpush1.msra.mxu0 0.0
    %2710 = vmatprep.subr.mxu0 0.0
    %2711 = vmatpush1.msra.mxu0 0.0
    %2712 = vmatprep.subr.mxu0 0.0
    %2713 = vmatpush1.msra.mxu0 0.0
    %2714 = vmatprep.subr.mxu0 0.0
    %2715 = vmatpush1.msra.mxu0 0.0
    %2716 = vmatprep.subr.mxu0 0.0
    %2717 = vmatpush1.msra.mxu0 0.0
    %2718 = vmatprep.subr.mxu0 0.0
    %2719 = vmatpush1.msra.mxu0 0.0
    %2720 = vmatprep.subr.mxu0 0.0
    %2721 = vmatpush1.msra.mxu0 %v2683
    %2722 = vmatprep.subr.mxu0 0.0
    %2723 = vmatpush1.msra.mxu0 %v2681
    %2724 = vmatprep.subr.mxu0 0.0
    %2725 = vmatpush1.msra.mxu0 %v2679
    %2726 = vmatprep.subr.mxu0 0.0
    %2727 = vmatpush1.msra.mxu0 %v2677
    %2728 = vmatprep.subr.mxu0 0.0
    %2729 = vmatpush1.msra.mxu0 %v2675
    %2730 = vmatprep.subr.mxu0 0.0
    %2731 = vmatpush1.msra.mxu0 %v2673
    %2732 = vmatprep.subr.mxu0 0.0
    %2733 = vmatpush1.msra.mxu0 %v2671
    %2734 = vmatprep.subr.mxu0 0.0
    %2735 = vmatpush1.msra.mxu0 %v2669
    %2736 = vmatprep.subr.mxu0 0.0
    %2737 = vmatpush2.msra.mxu0 0.0
    %2738 = vmatprep.subr.mxu0 0.0
    %2739 = vmatpush2.msra.mxu0 0.0
    %2740 = vmatprep.subr.mxu0 0.0
    %2741 = vmatpush2.msra.mxu0 0.0
    %2742 = vmatprep.subr.mxu0 0.0
    %2743 = vmatpush2.msra.mxu0 0.0
    %2744 = vmatprep.subr.mxu0 0.0
    %2745 = vmatpush2.msra.mxu0 0.0
    %2746 = vmatprep.subr.mxu0 0.0
    %2747 = vmatpush2.msra.mxu0 0.0
    %2748 = vmatprep.subr.mxu0 0.0
    %2749 = vmatpush2.msra.mxu0 0.0
    %2750 = vmatprep.subr.mxu0 0.0
    %2751 = vmatpush2.msra.mxu0 0.0
    %2752 = vmatprep.subr.mxu0 0.0
    %2753 = vmatpush2.msra.mxu0 0.0
    %2754 = vmatprep.subr.mxu0 0.0
    %2755 = vmatpush2.msra.mxu0 0.0
    %2756 = vmatprep.subr.mxu0 0.0
    %2757 = vmatpush2.msra.mxu0 0.0
    %2758 = vmatprep.subr.mxu0 0.0
    %2759 = vmatpush2.msra.mxu0 0.0
    %2760 = vmatprep.subr.mxu0 0.0
    %2761 = vmatpush2.msra.mxu0 0.0
    %2762 = vmatprep.subr.mxu0 0.0
    %2763 = vmatpush2.msra.mxu0 0.0
    %2764 = vmatprep.subr.mxu0 0.0
    %2765 = vmatpush2.msra.mxu0 0.0
    %2766 = vmatprep.subr.mxu0 0.0
    %2767 = vmatpush2.msra.mxu0 0.0
    %2768 = vmatprep.mubr.f32.mxu0 0.0
    %2769 = vmatmul.mubr.f32.gmra.mxu0 %v2693
    %v2770 = vpop.f32.mrf.mxu0
    %v2771 = vadd.f32 %v752, %v2770
    %v2772 = vpop.f32.mrf.mxu0
    %2773 = vmatprep.mubr.f32.mxu0 0.0
    %2774 = vmatmul.mubr.f32.gmra.mxu0 %v2696
    %v2775 = vpop.f32.mrf.mxu0
    %v2776 = vadd.f32 %v752, %v2775
    %v2777 = vpop.f32.mrf.mxu0
    %2778 = vmatprep.mubr.f32.mxu0 0.0
    %2779 = vmatmul.mubr.f32.gmra.mxu0 %v2699
    %v2780 = vpop.f32.mrf.mxu0
    %v2781 = vadd.f32 %v752, %v2780
    %v2782 = vpop.f32.mrf.mxu0
    %2783 = vmatprep.mubr.f32.mxu0 0.0
    %2784 = vmatmul.mubr.f32.gmra.mxu0 %v2702
    %v2785 = vpop.f32.mrf.mxu0
    %v2786 = vadd.f32 %v752, %v2785
    %v2787 = vpop.f32.mrf.mxu0
    %2788 = vdwg.mxu0
    %v2789 = vadd.f32 %v947, %v2771
    %v2790 = vadd.f32 %v948, %v2776
    %v2791 = vadd.f32 %v949, %v2781
    %v2792 = vadd.f32 %v950, %v2786
    %v2793 = vsel %vm962, %v2789, 0.0
    %2794 = vadd.xlane.f32.xlu0 %v2793
    %v2795 = vpop.xlane.xlu0 %2794
    %v2796 = vsel %vm962, %v2790, 0.0
    %2797 = vadd.xlane.f32.xlu0 %v2796
    %v2798 = vpop.xlane.xlu0 %2797
    %v2799 = vsel %vm962, %v2791, 0.0
    %2800 = vadd.xlane.f32.xlu0 %v2799
    %v2801 = vpop.xlane.xlu0 %2800
    %v2802 = vsel %vm962, %v2792, 0.0
    %2803 = vadd.xlane.f32.xlu0 %v2802
    %v2804 = vpop.xlane.xlu0 %2803
    %v2805 = vrcp.pop 64.0
    %v2806 = vmul.f32 %v2795, %v2805
    %v2807 = vmul.f32 %v2798, %v2805
    %v2808 = vmul.f32 %v2801, %v2805
    %v2809 = vmul.f32 %v2804, %v2805
    %v2810 = vsub.f32 %v2789, %v2806
    %v2811 = vsub.f32 %v2790, %v2807
    %v2812 = vsub.f32 %v2791, %v2808
    %v2813 = vsub.f32 %v2792, %v2809
    %v2814 = vmul.f32 %v2810, %v2810
    %v2815 = vmul.f32 %v2811, %v2811
    %v2816 = vmul.f32 %v2812, %v2812
    %v2817 = vmul.f32 %v2813, %v2813
    %v2818 = vsel %vm962, %v2814, 0.0
    %2819 = vadd.xlane.f32.xlu0 %v2818
    %v2820 = vpop.xlane.xlu0 %2819
    %v2821 = vsel %vm962, %v2815, 0.0
    %2822 = vadd.xlane.f32.xlu0 %v2821
    %v2823 = vpop.xlane.xlu0 %2822
    %v2824 = vsel %vm962, %v2816, 0.0
    %2825 = vadd.xlane.f32.xlu0 %v2824
    %v2826 = vpop.xlane.xlu0 %2825
    %v2827 = vsel %vm962, %v2817, 0.0
    %2828 = vadd.xlane.f32.xlu0 %v2827
    %v2829 = vpop.xlane.xlu0 %2828
    %v2830 = vmul.f32 %v2820, %v2805
    %v2831 = vmul.f32 %v2823, %v2805
    %v2832 = vmul.f32 %v2826, %v2805
    %v2833 = vmul.f32 %v2829, %v2805
    %v2834 = vadd.f32 %v2830, 1e-05
    %v2835 = vadd.f32 %v2831, 1e-05
    %v2836 = vadd.f32 %v2832, 1e-05
    %v2837 = vadd.f32 %v2833, 1e-05
    %v2838 = vrsqrt.pop %v2834
    %v2839 = vrsqrt.pop %v2835
    %v2840 = vrsqrt.pop %v2836
    %v2841 = vrsqrt.pop %v2837
    %v2842 = vmul.f32 %v2810, %v2838
    %v2843 = vmul.f32 %v2811, %v2839
    %v2844 = vmul.f32 %v2812, %v2840
    %v2845 = vmul.f32 %v2813, %v2841
    %v2846 = vmul.f32 %v2842, %v753
    %v2847 = vmul.f32 %v2843, %v753
    %v2848 = vmul.f32 %v2844, %v753
    %v2849 = vmul.f32 %v2845, %v753
    %v2850 = vadd.f32 %v2846, %v754
    %v2851 = vadd.f32 %v2847, %v754
    %v2852 = vadd.f32 %v2848, %v754
    %v2853 = vadd.f32 %v2849, %v754
    %v2854 = vmul.f32 %v2850, %v930
    %v2855 = vmul.f32 %v2851, %v935
    %v2856 = vmul.f32 %v2852, %v940
    %v2857 = vmul.f32 %v2853, %v945
    %v2858 = vrot.slane %v2854, 7
    %v2859 = vrot.slane %v2855, 7
    %v2860 = vrot.slane %v2856, 7
    %v2861 = vrot.slane %v2857, 7
    %vm2862 = vcmp.lt.s32.totalorder %v56, 1
    %v2863 = vsel %vm2862, %v2860, %v2861
    %v2864 = vsel %vm2862, %v2859, %v2860
    %v2865 = vsel %vm2862, %v2858, %v2859
    %v2866 = vsel %vm2862, %v2861, %v2858
    %2868 = vset.pattern.permute.xlu0 0
    %2869 = vperm.xlu0 %2868, %v98
    %v2870 = vpop.permute.xlu0 %2869
    %2873 = vset.pattern.permute.xlu0 0
    %2874 = vperm.xlu0 %2873, %v99
    %v2875 = vpop.permute.xlu0 %2874
    %v2877 = vmul.f32 %v2866, %v2870
    %v2878 = vmul.f32 %v2865, %v2875
    %v2879 = vmul.f32 %v2864, %v2870
    %v2880 = vmul.f32 %v2863, %v2875
    %v2881 = vrot.slane %v2854, 1
    %v2882 = vrot.slane %v2855, 1
    %v2883 = vrot.slane %v2856, 1
    %v2884 = vrot.slane %v2857, 1
    %vm2885 = vcmp.lt.s32.totalorder %v56, 7
    %v2886 = vsel %vm2885, %v2883, %v2884
    %v2887 = vsel %vm2885, %v2882, %v2883
    %v2888 = vsel %vm2885, %v2881, %v2882
    %v2889 = vsel %vm2885, %v2884, %v2881
    %2891 = vset.pattern.permute.xlu0 0
    %2892 = vperm.xlu0 %2891, %v104
    %v2893 = vpop.permute.xlu0 %2892
    %2896 = vset.pattern.permute.xlu0 0
    %2897 = vperm.xlu0 %2896, %v105
    %v2898 = vpop.permute.xlu0 %2897
    %v2900 = vmul.f32 %v2888, %v2893
    %v2901 = vmul.f32 %v2887, %v2898
    %v2902 = vmul.f32 %v2886, %v2893
    %v2903 = vmul.f32 %v2889, %v2898
    %2908 = vrot.lane.b32.xlu0 %v2854, 64
    %v2909 = vpop.permute.xlu0 %2908
    %2910 = vrot.lane.b32.xlu0 %v2855, 64
    %v2911 = vpop.permute.xlu0 %2910
    %2912 = vrot.lane.b32.xlu0 %v2856, 64
    %v2913 = vpop.permute.xlu0 %2912
    %2914 = vrot.lane.b32.xlu0 %v2857, 64
    %v2915 = vpop.permute.xlu0 %2914
    %v2920 = vsel %vm962, %v2877, %v2909
    %v2921 = vsel %vm962, %v2878, %v2911
    %v2922 = vsel %vm962, %v2879, %v2913
    %v2923 = vsel %vm962, %v2880, %v2915
    %v2925 = vsel %vm962, %v2900, 0
    %v2928 = vsel %vm962, %v2901, 0
    %v2931 = vsel %vm962, %v2902, 0
    %v2934 = vsel %vm962, %v2903, 0
    %2936 = vmatprep.subr.mxu0 0.0
    %2937 = vmatpush1.msra.mxu0 %v870
    %2938 = vmatprep.subr.mxu0 0.0
    %2939 = vmatpush1.msra.mxu0 %v869
    %2940 = vmatprep.subr.mxu0 0.0
    %2941 = vmatpush1.msra.mxu0 %v868
    %2942 = vmatprep.subr.mxu0 0.0
    %2943 = vmatpush1.msra.mxu0 %v867
    %2944 = vmatprep.subr.mxu0 0.0
    %2945 = vmatpush1.msra.mxu0 %v866
    %2946 = vmatprep.subr.mxu0 0.0
    %2947 = vmatpush1.msra.mxu0 %v865
    %2948 = vmatprep.subr.mxu0 0.0
    %2949 = vmatpush1.msra.mxu0 %v864
    %2950 = vmatprep.subr.mxu0 0.0
    %2951 = vmatpush1.msra.mxu0 %v863
    %2952 = vmatprep.subr.mxu0 0.0
    %2953 = vmatpush1.msra.mxu0 %v862
    %2954 = vmatprep.subr.mxu0 0.0
    %2955 = vmatpush1.msra.mxu0 %v861
    %2956 = vmatprep.subr.mxu0 0.0
    %2957 = vmatpush1.msra.mxu0 %v860
    %2958 = vmatprep.subr.mxu0 0.0
    %2959 = vmatpush1.msra.mxu0 %v859
    %2960 = vmatprep.subr.mxu0 0.0
    %2961 = vmatpush1.msra.mxu0 %v858
    %2962 = vmatprep.subr.mxu0 0.0
    %2963 = vmatpush1.msra.mxu0 %v857
    %2964 = vmatprep.subr.mxu0 0.0
    %2965 = vmatpush1.msra.mxu0 %v856
    %2966 = vmatprep.subr.mxu0 0.0
    %2967 = vmatpush1.msra.mxu0 %v855
    %2968 = vmatprep.subr.mxu0 0.0
    %2969 = vmatpush2.msra.mxu0 0.0
    %2970 = vmatprep.subr.mxu0 0.0
    %2971 = vmatpush2.msra.mxu0 0.0
    %2972 = vmatprep.subr.mxu0 0.0
    %2973 = vmatpush2.msra.mxu0 0.0
    %2974 = vmatprep.subr.mxu0 0.0
    %2975 = vmatpush2.msra.mxu0 0.0
    %2976 = vmatprep.subr.mxu0 0.0
    %2977 = vmatpush2.msra.mxu0 0.0
    %2978 = vmatprep.subr.mxu0 0.0
    %2979 = vmatpush2.msra.mxu0 0.0
    %2980 = vmatprep.subr.mxu0 0.0
    %2981 = vmatpush2.msra.mxu0 0.0
    %2982 = vmatprep.subr.mxu0 0.0
    %2983 = vmatpush2.msra.mxu0 0.0
    %2984 = vmatprep.subr.mxu0 0.0
    %2985 = vmatpush2.msra.mxu0 %v878
    %2986 = vmatprep.subr.mxu0 0.0
    %2987 = vmatpush2.msra.mxu0 %v877
    %2988 = vmatprep.subr.mxu0 0.0
    %2989 = vmatpush2.msra.mxu0 %v876
    %2990 = vmatprep.subr.mxu0 0.0
    %2991 = vmatpush2.msra.mxu0 %v875
    %2992 = vmatprep.subr.mxu0 0.0
    %2993 = vmatpush2.msra.mxu0 %v874
    %2994 = vmatprep.subr.mxu0 0.0
    %2995 = vmatpush2.msra.mxu0 %v873
    %2996 = vmatprep.subr.mxu0 0.0
    %2997 = vmatpush2.msra.mxu0 %v872
    %2998 = vmatprep.subr.mxu0 0.0
    %2999 = vmatpush2.msra.mxu0 %v871
    %3000 = vmatprep.mubr.f32.mxu0 %v2925
    %3001 = vmatmul.mubr.f32.gmra.mxu0 %v2920
    %v3002 = vpop.f32.mrf.mxu0
    %v3003 = vadd.f32 %v755, %v3002
    %v3004 = vpop.f32.mrf.mxu0
    %3005 = vmatprep.mubr.f32.mxu0 %v2928
    %3006 = vmatmul.mubr.f32.gmra.mxu0 %v2921
    %v3007 = vpop.f32.mrf.mxu0
    %v3008 = vadd.f32 %v755, %v3007
    %v3009 = vpop.f32.mrf.mxu0
    %3010 = vmatprep.mubr.f32.mxu0 %v2931
    %3011 = vmatmul.mubr.f32.gmra.mxu0 %v2922
    %v3012 = vpop.f32.mrf.mxu0
    %v3013 = vadd.f32 %v755, %v3012
    %v3014 = vpop.f32.mrf.mxu0
    %3015 = vmatprep.mubr.f32.mxu0 %v2934
    %3016 = vmatmul.mubr.f32.gmra.mxu0 %v2923
    %v3017 = vpop.f32.mrf.mxu0
    %v3018 = vadd.f32 %v755, %v3017
    %v3019 = vpop.f32.mrf.mxu0
    %3020 = vdwg.mxu0
    %v3021 = vmax.f32 %v3003, 0.0
    %v3022 = vmax.f32 %v3008, 0.0
    %v3023 = vmax.f32 %v3013, 0.0
    %v3024 = vmax.f32 %v3018, 0.0
    %v3025 = vmul.f32 %v3021, %v930
    %v3026 = vmul.f32 %v3022, %v935
    %v3027 = vmul.f32 %v3023, %v940
    %v3028 = vmul.f32 %v3024, %v945
    %v3029 = vrot.slane %v3025, 7
    %v3030 = vrot.slane %v3026, 7
    %v3031 = vrot.slane %v3027, 7
    %v3032 = vrot.slane %v3028, 7
    %v3033 = vsel %vm2862, %v3031, %v3032
    %v3034 = vsel %vm2862, %v3030, %v3031
    %v3035 = vsel %vm2862, %v3029, %v3030
    %v3036 = vsel %vm2862, %v3032, %v3029
    %v3037 = vmul.f32 %v3036, %v2870
    %v3038 = vmul.f32 %v3035, %v2875
    %v3039 = vmul.f32 %v3034, %v2870
    %v3040 = vmul.f32 %v3033, %v2875
    %v3041 = vrot.slane %v3025, 1
    %v3042 = vrot.slane %v3026, 1
    %v3043 = vrot.slane %v3027, 1
    %v3044 = vrot.slane %v3028, 1
    %v3045 = vsel %vm2885, %v3043, %v3044
    %v3046 = vsel %vm2885, %v3042, %v3043
    %v3047 = vsel %vm2885, %v3041, %v3042
    %v3048 = vsel %vm2885, %v3044, %v3041
    %v3049 = vmul.f32 %v3047, %v2893
    %v3050 = vmul.f32 %v3046, %v2898
    %v3051 = vmul.f32 %v3045, %v2893
    %v3052 = vmul.f32 %v3048, %v2898
    %3053 = vmatprep.subr.mxu0 0.0
    %3054 = vmatpush1.msra.mxu0 %v894
    %3055 = vmatprep.subr.mxu0 0.0
    %3056 = vmatpush1.msra.mxu0 %v893
    %3057 = vmatprep.subr.mxu0 0.0
    %3058 = vmatpush1.msra.mxu0 %v892
    %3059 = vmatprep.subr.mxu0 0.0
    %3060 = vmatpush1.msra.mxu0 %v891
    %3061 = vmatprep.subr.mxu0 0.0
    %3062 = vmatpush1.msra.mxu0 %v890
    %3063 = vmatprep.subr.mxu0 0.0
    %3064 = vmatpush1.msra.mxu0 %v889
    %3065 = vmatprep.subr.mxu0 0.0
    %3066 = vmatpush1.msra.mxu0 %v888
    %3067 = vmatprep.subr.mxu0 0.0
    %3068 = vmatpush1.msra.mxu0 %v887
    %3069 = vmatprep.subr.mxu0 0.0
    %3070 = vmatpush1.msra.mxu0 %v886
    %3071 = vmatprep.subr.mxu0 0.0
    %3072 = vmatpush1.msra.mxu0 %v885
    %3073 = vmatprep.subr.mxu0 0.0
    %3074 = vmatpush1.msra.mxu0 %v884
    %3075 = vmatprep.subr.mxu0 0.0
    %3076 = vmatpush1.msra.mxu0 %v883
    %3077 = vmatprep.subr.mxu0 0.0
    %3078 = vmatpush1.msra.mxu0 %v882
    %3079 = vmatprep.subr.mxu0 0.0
    %3080 = vmatpush1.msra.mxu0 %v881
    %3081 = vmatprep.subr.mxu0 0.0
    %3082 = vmatpush1.msra.mxu0 %v880
    %3083 = vmatprep.subr.mxu0 0.0
    %3084 = vmatpush1.msra.mxu0 %v879
    %3085 = vmatprep.subr.mxu0 0.0
    %3086 = vmatpush2.msra.mxu0 %v910
    %3087 = vmatprep.subr.mxu0 0.0
    %3088 = vmatpush2.msra.mxu0 %v909
    %3089 = vmatprep.subr.mxu0 0.0
    %3090 = vmatpush2.msra.mxu0 %v908
    %3091 = vmatprep.subr.mxu0 0.0
    %3092 = vmatpush2.msra.mxu0 %v907
    %3093 = vmatprep.subr.mxu0 0.0
    %3094 = vmatpush2.msra.mxu0 %v906
    %3095 = vmatprep.subr.mxu0 0.0
    %3096 = vmatpush2.msra.mxu0 %v905
    %3097 = vmatprep.subr.mxu0 0.0
    %3098 = vmatpush2.msra.mxu0 %v904
    %3099 = vmatprep.subr.mxu0 0.0
    %3100 = vmatpush2.msra.mxu0 %v903
    %3101 = vmatprep.subr.mxu0 0.0
    %3102 = vmatpush2.msra.mxu0 %v902
    %3103 = vmatprep.subr.mxu0 0.0
    %3104 = vmatpush2.msra.mxu0 %v901
    %3105 = vmatprep.subr.mxu0 0.0
    %3106 = vmatpush2.msra.mxu0 %v900
    %3107 = vmatprep.subr.mxu0 0.0
    %3108 = vmatpush2.msra.mxu0 %v899
    %3109 = vmatprep.subr.mxu0 0.0
    %3110 = vmatpush2.msra.mxu0 %v898
    %3111 = vmatprep.subr.mxu0 0.0
    %3112 = vmatpush2.msra.mxu0 %v897
    %3113 = vmatprep.subr.mxu0 0.0
    %3114 = vmatpush2.msra.mxu0 %v896
    %3115 = vmatprep.subr.mxu0 0.0
    %3116 = vmatpush2.msra.mxu0 %v895
    %3117 = vmatprep.mubr.f32.mxu0 %v3025
    %3118 = vmatmul.mubr.f32.gmra.mxu0 %v3037
    %v3119 = vpop.f32.mrf.mxu0
    %v3120 = vadd.f32 %v756, %v3119
    %v3121 = vpop.f32.mrf.mxu0
    %3122 = vmatprep.mubr.f32.mxu0 %v3026
    %3123 = vmatmul.mubr.f32.gmra.mxu0 %v3038
    %v3124 = vpop.f32.mrf.mxu0
    %v3125 = vadd.f32 %v756, %v3124
    %v3126 = vpop.f32.mrf.mxu0
    %3127 = vmatprep.mubr.f32.mxu0 %v3027
    %3128 = vmatmul.mubr.f32.gmra.mxu0 %v3039
    %v3129 = vpop.f32.mrf.mxu0
    %v3130 = vadd.f32 %v756, %v3129
    %v3131 = vpop.f32.mrf.mxu0
    %3132 = vmatprep.mubr.f32.mxu0 %v3028
    %3133 = vmatmul.mubr.f32.gmra.mxu0 %v3040
    %v3134 = vpop.f32.mrf.mxu0
    %v3135 = vadd.f32 %v756, %v3134
    %v3136 = vpop.f32.mrf.mxu0
    %3137 = vdwg.mxu0
    %3138 = vmatprep.subr.mxu0 0.0
    %3139 = vmatpush1.msra.mxu0 %v926
    %3140 = vmatprep.subr.mxu0 0.0
    %3141 = vmatpush1.msra.mxu0 %v925
    %3142 = vmatprep.subr.mxu0 0.0
    %3143 = vmatpush1.msra.mxu0 %v924
    %3144 = vmatprep.subr.mxu0 0.0
    %3145 = vmatpush1.msra.mxu0 %v923
    %3146 = vmatprep.subr.mxu0 0.0
    %3147 = vmatpush1.msra.mxu0 %v922
    %3148 = vmatprep.subr.mxu0 0.0
    %3149 = vmatpush1.msra.mxu0 %v921
    %3150 = vmatprep.subr.mxu0 0.0
    %3151 = vmatpush1.msra.mxu0 %v920
    %3152 = vmatprep.subr.mxu0 0.0
    %3153 = vmatpush1.msra.mxu0 %v919
    %3154 = vmatprep.subr.mxu0 0.0
    %3155 = vmatpush1.msra.mxu0 %v918
    %3156 = vmatprep.subr.mxu0 0.0
    %3157 = vmatpush1.msra.mxu0 %v917
    %3158 = vmatprep.subr.mxu0 0.0
    %3159 = vmatpush1.msra.mxu0 %v916
    %3160 = vmatprep.subr.mxu0 0.0
    %3161 = vmatpush1.msra.mxu0 %v915
    %3162 = vmatprep.subr.mxu0 0.0
    %3163 = vmatpush1.msra.mxu0 %v914
    %3164 = vmatprep.subr.mxu0 0.0
    %3165 = vmatpush1.msra.mxu0 %v913
    %3166 = vmatprep.subr.mxu0 0.0
    %3167 = vmatpush1.msra.mxu0 %v912
    %3168 = vmatprep.subr.mxu0 0.0
    %3169 = vmatpush1.msra.mxu0 %v911
    %3170 = vmatprep.subr.mxu0 0.0
    %3171 = vmatpush2.msra.mxu0 0.0
    %3172 = vmatprep.subr.mxu0 0.0
    %3173 = vmatpush2.msra.mxu0 0.0
    %3174 = vmatprep.subr.mxu0 0.0
    %3175 = vmatpush2.msra.mxu0 0.0
    %3176 = vmatprep.subr.mxu0 0.0
    %3177 = vmatpush2.msra.mxu0 0.0
    %3178 = vmatprep.subr.mxu0 0.0
    %3179 = vmatpush2.msra.mxu0 0.0
    %3180 = vmatprep.subr.mxu0 0.0
    %3181 = vmatpush2.msra.mxu0 0.0
    %3182 = vmatprep.subr.mxu0 0.0
    %3183 = vmatpush2.msra.mxu0 0.0
    %3184 = vmatprep.subr.mxu0 0.0
    %3185 = vmatpush2.msra.mxu0 0.0
    %3186 = vmatprep.subr.mxu0 0.0
    %3187 = vmatpush2.msra.mxu0 0.0
    %3188 = vmatprep.subr.mxu0 0.0
    %3189 = vmatpush2.msra.mxu0 0.0
    %3190 = vmatprep.subr.mxu0 0.0
    %3191 = vmatpush2.msra.mxu0 0.0
    %3192 = vmatprep.subr.mxu0 0.0
    %3193 = vmatpush2.msra.mxu0 0.0
    %3194 = vmatprep.subr.mxu0 0.0
    %3195 = vmatpush2.msra.mxu0 0.0
    %3196 = vmatprep.subr.mxu0 0.0
    %3197 = vmatpush2.msra.mxu0 0.0
    %3198 = vmatprep.subr.mxu0 0.0
    %3199 = vmatpush2.msra.mxu0 0.0
    %3200 = vmatprep.subr.mxu0 0.0
    %3201 = vmatpush2.msra.mxu0 0.0
    %3202 = vmatprep.mubr.f32.mxu0 0.0
    %3203 = vmatmul.mubr.f32.gmra.mxu0 %v3049
    %v3204 = vpop.f32.mrf.mxu0
    %v3205 = vadd.f32 %v3120, %v3204
    %v3206 = vpop.f32.mrf.mxu0
    %3207 = vmatprep.mubr.f32.mxu0 0.0
    %3208 = vmatmul.mubr.f32.gmra.mxu0 %v3050
    %v3209 = vpop.f32.mrf.mxu0
    %v3210 = vadd.f32 %v3125, %v3209
    %v3211 = vpop.f32.mrf.mxu0
    %3212 = vmatprep.mubr.f32.mxu0 0.0
    %3213 = vmatmul.mubr.f32.gmra.mxu0 %v3051
    %v3214 = vpop.f32.mrf.mxu0
    %v3215 = vadd.f32 %v3130, %v3214
    %v3216 = vpop.f32.mrf.mxu0
    %3217 = vmatprep.mubr.f32.mxu0 0.0
    %3218 = vmatmul.mubr.f32.gmra.mxu0 %v3052
    %v3219 = vpop.f32.mrf.mxu0
    %v3220 = vadd.f32 %v3135, %v3219
    %v3221 = vpop.f32.mrf.mxu0
    %3222 = vdwg.mxu0
    %v3223 = vmul.f32 %v3205, %v930
    %v3224 = vmul.f32 %v3210, %v935
    %v3225 = vmul.f32 %v3215, %v940
    %v3226 = vmul.f32 %v3220, %v945
    %v3227 = vadd.f32 %v2850, %v3223
    %v3228 = vadd.f32 %v2851, %v3224
    %v3229 = vadd.f32 %v2852, %v3225
    %v3230 = vadd.f32 %v2853, %v3226
    %v3231 = vsel %vm962, %v3227, 0.0
    %3232 = vadd.xlane.f32.xlu0 %v3231
    %v3233 = vpop.xlane.xlu0 %3232
    %v3234 = vsel %vm962, %v3228, 0.0
    %3235 = vadd.xlane.f32.xlu0 %v3234
    %v3236 = vpop.xlane.xlu0 %3235
    %v3237 = vsel %vm962, %v3229, 0.0
    %3238 = vadd.xlane.f32.xlu0 %v3237
    %v3239 = vpop.xlane.xlu0 %3238
    %v3240 = vsel %vm962, %v3230, 0.0
    %3241 = vadd.xlane.f32.xlu0 %v3240
    %v3242 = vpop.xlane.xlu0 %3241
    %v3243 = vmul.f32 %v3233, %v2805
    %v3244 = vmul.f32 %v3236, %v2805
    %v3245 = vmul.f32 %v3239, %v2805
    %v3246 = vmul.f32 %v3242, %v2805
    %v3247 = vsub.f32 %v3227, %v3243
    %v3248 = vsub.f32 %v3228, %v3244
    %v3249 = vsub.f32 %v3229, %v3245
    %v3250 = vsub.f32 %v3230, %v3246
    %v3251 = vmul.f32 %v3247, %v3247
    %v3252 = vmul.f32 %v3248, %v3248
    %v3253 = vmul.f32 %v3249, %v3249
    %v3254 = vmul.f32 %v3250, %v3250
    %v3255 = vsel %vm962, %v3251, 0.0
    %3256 = vadd.xlane.f32.xlu0 %v3255
    %v3257 = vpop.xlane.xlu0 %3256
    %v3258 = vsel %vm962, %v3252, 0.0
    %3259 = vadd.xlane.f32.xlu0 %v3258
    %v3260 = vpop.xlane.xlu0 %3259
    %v3261 = vsel %vm962, %v3253, 0.0
    %3262 = vadd.xlane.f32.xlu0 %v3261
    %v3263 = vpop.xlane.xlu0 %3262
    %v3264 = vsel %vm962, %v3254, 0.0
    %3265 = vadd.xlane.f32.xlu0 %v3264
    %v3266 = vpop.xlane.xlu0 %3265
    %v3267 = vmul.f32 %v3257, %v2805
    %v3268 = vmul.f32 %v3260, %v2805
    %v3269 = vmul.f32 %v3263, %v2805
    %v3270 = vmul.f32 %v3266, %v2805
    %v3271 = vadd.f32 %v3267, 1e-05
    %v3272 = vadd.f32 %v3268, 1e-05
    %v3273 = vadd.f32 %v3269, 1e-05
    %v3274 = vadd.f32 %v3270, 1e-05
    %v3275 = vrsqrt.pop %v3271
    %v3276 = vrsqrt.pop %v3272
    %v3277 = vrsqrt.pop %v3273
    %v3278 = vrsqrt.pop %v3274
    %v3279 = vmul.f32 %v3247, %v3275
    %v3280 = vmul.f32 %v3248, %v3276
    %v3281 = vmul.f32 %v3249, %v3277
    %v3282 = vmul.f32 %v3250, %v3278
    %v3283 = vmul.f32 %v3279, %v757
    %v3284 = vmul.f32 %v3280, %v757
    %v3285 = vmul.f32 %v3281, %v757
    %v3286 = vmul.f32 %v3282, %v757
    %v3287 = vadd.f32 %v3283, %v758
    %v3288 = vadd.f32 %v3284, %v758
    %v3289 = vadd.f32 %v3285, %v758
    %v3290 = vadd.f32 %v3286, %v758
    %v3291 = vld [vmem:[%s6 + $0x80] sm:$0xff]
    %v3292 = vld [vmem:[%s6 + $0x88] sm:$0xff]
    %v3293 = vld [vmem:[%s6 + $0x90] sm:$0xff]
    %v3294 = vld [vmem:[%s6 + $0x98] sm:$0xff]
    %v3295 = vld [vmem:[%s6 + $0xa0] sm:$0xff]
    %v3296 = vld [vmem:[%s6 + $0xa8] sm:$0xff]
    %v3297 = vld [vmem:[%s6 + $0xb0] sm:$0xff]
    %v3298 = vld [vmem:[%s6 + $0xb8] sm:$0xff]
    %v3299 = vld [vmem:[%s6 + $0xc0] sm:$0xff]
    %v3300 = vld [vmem:[%s6 + $0xc8] sm:$0xff]
    %v3301 = vld [vmem:[%s6 + $0xd0] sm:$0xff]
    %v3302 = vld [vmem:[%s6 + $0xd8] sm:$0xff]
    %v3303 = vld [vmem:[%s6 + $0xe0] sm:$0xff]
    %v3304 = vld [vmem:[%s6 + $0xe8] sm:$0xff]
    %v3305 = vld [vmem:[%s6 + $0xf0] sm:$0xff]
    %v3306 = vld [vmem:[%s6 + $0xf8] sm:$0xff]
    %s3307 = scalar_lea.vmem %s11, 18
    %v3308 = vld [vmem:[%s3307] ss:$8 sm:$0x3]
    %v3309 = vld [vmem:[%s11 + $0x13] ss:$0 sm:$0xff]
    %v3310 = vld [vmem:[%s11 + $0x14] ss:$0 sm:$0xff]
    %v3311 = vld [vmem:[%s11 + $0x15] ss:$0 sm:$0xff]
    %v3312 = vld [vmem:[%s11 + $0x16] ss:$0 sm:$0xff]
    %v3313 = vld [vmem:[%s11 + $0x17] ss:$0 sm:$0xff]
    %v3314 = vld [vmem:[%s11 + $0x20] ss:$0 sm:$0xff]
    %v3315 = vld [vmem:[%s11 + $0x21] ss:$0 sm:$0xff]
    %v3316 = vld [vmem:[%s7 + $0x200] sm:$0xff]
    %v3317 = vld [vmem:[%s7 + $0x208] sm:$0xff]
    %v3318 = vld [vmem:[%s7 + $0x210] sm:$0xff]
    %v3319 = vld [vmem:[%s7 + $0x218] sm:$0xff]
    %v3320 = vld [vmem:[%s7 + $0x220] sm:$0xff]
    %v3321 = vld [vmem:[%s7 + $0x228] sm:$0xff]
    %v3322 = vld [vmem:[%s7 + $0x230] sm:$0xff]
    %v3323 = vld [vmem:[%s7 + $0x238] sm:$0xff]
    %v3324 = vld [vmem:[%s7 + $0x240] sm:$0xff]
    %v3325 = vld [vmem:[%s7 + $0x248] sm:$0xff]
    %v3326 = vld [vmem:[%s7 + $0x250] sm:$0xff]
    %v3327 = vld [vmem:[%s7 + $0x258] sm:$0xff]
    %v3328 = vld [vmem:[%s7 + $0x260] sm:$0xff]
    %v3329 = vld [vmem:[%s7 + $0x268] sm:$0xff]
    %v3330 = vld [vmem:[%s7 + $0x270] sm:$0xff]
    %v3331 = vld [vmem:[%s7 + $0x278] sm:$0xff]
    %v3332 = vld [vmem:[%s7 + $0x280] sm:$0xff]
    %v3333 = vld [vmem:[%s7 + $0x288] sm:$0xff]
    %v3334 = vld [vmem:[%s7 + $0x290] sm:$0xff]
    %v3335 = vld [vmem:[%s7 + $0x298] sm:$0xff]
    %v3336 = vld [vmem:[%s7 + $0x2a0] sm:$0xff]
    %v3337 = vld [vmem:[%s7 + $0x2a8] sm:$0xff]
    %v3338 = vld [vmem:[%s7 + $0x2b0] sm:$0xff]
    %v3339 = vld [vmem:[%s7 + $0x2b8] sm:$0xff]
    %v3340 = vld [vmem:[%s7 + $0x2c0] sm:$0xff]
    %v3341 = vld [vmem:[%s7 + $0x2c8] sm:$0xff]
    %v3342 = vld [vmem:[%s7 + $0x2d0] sm:$0xff]
    %v3343 = vld [vmem:[%s7 + $0x2d8] sm:$0xff]
    %v3344 = vld [vmem:[%s7 + $0x2e0] sm:$0xff]
    %v3345 = vld [vmem:[%s7 + $0x2e8] sm:$0xff]
    %v3346 = vld [vmem:[%s7 + $0x2f0] sm:$0xff]
    %v3347 = vld [vmem:[%s7 + $0x2f8] sm:$0xff]
    %v3348 = vld [vmem:[%s7 + $0x300] sm:$0xff]
    %v3349 = vld [vmem:[%s7 + $0x308] sm:$0xff]
    %v3350 = vld [vmem:[%s7 + $0x310] sm:$0xff]
    %v3351 = vld [vmem:[%s7 + $0x318] sm:$0xff]
    %v3352 = vld [vmem:[%s7 + $0x320] sm:$0xff]
    %v3353 = vld [vmem:[%s7 + $0x328] sm:$0xff]
    %v3354 = vld [vmem:[%s7 + $0x330] sm:$0xff]
    %v3355 = vld [vmem:[%s7 + $0x338] sm:$0xff]
    %v3356 = vld [vmem:[%s7 + $0x340] sm:$0xff]
    %v3357 = vld [vmem:[%s7 + $0x348] sm:$0xff]
    %v3358 = vld [vmem:[%s7 + $0x350] sm:$0xff]
    %v3359 = vld [vmem:[%s7 + $0x358] sm:$0xff]
    %v3360 = vld [vmem:[%s7 + $0x360] sm:$0xff]
    %v3361 = vld [vmem:[%s7 + $0x368] sm:$0xff]
    %v3362 = vld [vmem:[%s7 + $0x370] sm:$0xff]
    %v3363 = vld [vmem:[%s7 + $0x378] sm:$0xff]
    %v3364 = vld [vmem:[%s7 + $0x380] sm:$0xff]
    %v3365 = vld [vmem:[%s7 + $0x388] sm:$0xff]
    %v3366 = vld [vmem:[%s7 + $0x390] sm:$0xff]
    %v3367 = vld [vmem:[%s7 + $0x398] sm:$0xff]
    %v3368 = vld [vmem:[%s7 + $0x3a0] sm:$0xff]
    %v3369 = vld [vmem:[%s7 + $0x3a8] sm:$0xff]
    %v3370 = vld [vmem:[%s7 + $0x3b0] sm:$0xff]
    %v3371 = vld [vmem:[%s7 + $0x3b8] sm:$0xff]
    %v3372 = vld [vmem:[%s7 + $0x3c0] sm:$0xff]
    %v3373 = vld [vmem:[%s7 + $0x3c8] sm:$0xff]
    %v3374 = vld [vmem:[%s7 + $0x3d0] sm:$0xff]
    %v3375 = vld [vmem:[%s7 + $0x3d8] sm:$0xff]
    %v3376 = vld [vmem:[%s7 + $0x3e0] sm:$0xff]
    %v3377 = vld [vmem:[%s7 + $0x3e8] sm:$0xff]
    %v3378 = vld [vmem:[%s7 + $0x3f0] sm:$0xff]
    %v3379 = vld [vmem:[%s7 + $0x3f8] sm:$0xff]
    %v3380 = vld [vmem:[%s8 + $0x100] sm:$0xff]
    %v3381 = vld [vmem:[%s8 + $0x108] sm:$0xff]
    %v3382 = vld [vmem:[%s8 + $0x110] sm:$0xff]
    %v3383 = vld [vmem:[%s8 + $0x118] sm:$0xff]
    %v3384 = vld [vmem:[%s8 + $0x120] sm:$0xff]
    %v3385 = vld [vmem:[%s8 + $0x128] sm:$0xff]
    %v3386 = vld [vmem:[%s8 + $0x130] sm:$0xff]
    %v3387 = vld [vmem:[%s8 + $0x138] sm:$0xff]
    %v3388 = vld [vmem:[%s8 + $0x140] sm:$0xff]
    %v3389 = vld [vmem:[%s8 + $0x148] sm:$0xff]
    %v3390 = vld [vmem:[%s8 + $0x150] sm:$0xff]
    %v3391 = vld [vmem:[%s8 + $0x158] sm:$0xff]
    %v3392 = vld [vmem:[%s8 + $0x160] sm:$0xff]
    %v3393 = vld [vmem:[%s8 + $0x168] sm:$0xff]
    %v3394 = vld [vmem:[%s8 + $0x170] sm:$0xff]
    %v3395 = vld [vmem:[%s8 + $0x178] sm:$0xff]
    %v3396 = vld [vmem:[%s8 + $0x180] sm:$0xff]
    %v3397 = vld [vmem:[%s8 + $0x188] sm:$0xff]
    %v3398 = vld [vmem:[%s8 + $0x190] sm:$0xff]
    %v3399 = vld [vmem:[%s8 + $0x198] sm:$0xff]
    %v3400 = vld [vmem:[%s8 + $0x1a0] sm:$0xff]
    %v3401 = vld [vmem:[%s8 + $0x1a8] sm:$0xff]
    %v3402 = vld [vmem:[%s8 + $0x1b0] sm:$0xff]
    %v3403 = vld [vmem:[%s8 + $0x1b8] sm:$0xff]
    %v3404 = vld [vmem:[%s8 + $0x1c0] sm:$0xff]
    %v3405 = vld [vmem:[%s8 + $0x1c8] sm:$0xff]
    %v3406 = vld [vmem:[%s8 + $0x1d0] sm:$0xff]
    %v3407 = vld [vmem:[%s8 + $0x1d8] sm:$0xff]
    %v3408 = vld [vmem:[%s8 + $0x1e0] sm:$0xff]
    %v3409 = vld [vmem:[%s8 + $0x1e8] sm:$0xff]
    %v3410 = vld [vmem:[%s8 + $0x1f0] sm:$0xff]
    %v3411 = vld [vmem:[%s8 + $0x1f8] sm:$0xff]
    %v3412 = vld [vmem:[%s9 + $0xc0] sm:$0xff]
    %v3413 = vld [vmem:[%s9 + $0xc8] sm:$0xff]
    %v3414 = vld [vmem:[%s9 + $0xd0] sm:$0xff]
    %v3415 = vld [vmem:[%s9 + $0xd8] sm:$0xff]
    %v3416 = vld [vmem:[%s9 + $0xe0] sm:$0xff]
    %v3417 = vld [vmem:[%s9 + $0xe8] sm:$0xff]
    %v3418 = vld [vmem:[%s9 + $0xf0] sm:$0xff]
    %v3419 = vld [vmem:[%s9 + $0xf8] sm:$0xff]
    %v3420 = vld [vmem:[%s9 + $0x100] sm:$0xff]
    %v3421 = vld [vmem:[%s9 + $0x108] sm:$0xff]
    %v3422 = vld [vmem:[%s9 + $0x110] sm:$0xff]
    %v3423 = vld [vmem:[%s9 + $0x118] sm:$0xff]
    %v3424 = vld [vmem:[%s9 + $0x120] sm:$0xff]
    %v3425 = vld [vmem:[%s9 + $0x128] sm:$0xff]
    %v3426 = vld [vmem:[%s9 + $0x130] sm:$0xff]
    %v3427 = vld [vmem:[%s9 + $0x138] sm:$0xff]
    %v3428 = vld [vmem:[%s9 + $0x140] sm:$0xff]
    %v3429 = vld [vmem:[%s9 + $0x148] sm:$0xff]
    %v3430 = vld [vmem:[%s9 + $0x150] sm:$0xff]
    %v3431 = vld [vmem:[%s9 + $0x158] sm:$0xff]
    %v3432 = vld [vmem:[%s9 + $0x160] sm:$0xff]
    %v3433 = vld [vmem:[%s9 + $0x168] sm:$0xff]
    %v3434 = vld [vmem:[%s9 + $0x170] sm:$0xff]
    %v3435 = vld [vmem:[%s9 + $0x178] sm:$0xff]
    %v3436 = vld [vmem:[%s10 + $0x180] sm:$0xff]
    %v3437 = vld [vmem:[%s10 + $0x188] sm:$0xff]
    %v3438 = vld [vmem:[%s10 + $0x190] sm:$0xff]
    %v3439 = vld [vmem:[%s10 + $0x198] sm:$0xff]
    %v3440 = vld [vmem:[%s10 + $0x1a0] sm:$0xff]
    %v3441 = vld [vmem:[%s10 + $0x1a8] sm:$0xff]
    %v3442 = vld [vmem:[%s10 + $0x1b0] sm:$0xff]
    %v3443 = vld [vmem:[%s10 + $0x1b8] sm:$0xff]
    %v3444 = vld [vmem:[%s10 + $0x1c0] sm:$0xff]
    %v3445 = vld [vmem:[%s10 + $0x1c8] sm:$0xff]
    %v3446 = vld [vmem:[%s10 + $0x1d0] sm:$0xff]
    %v3447 = vld [vmem:[%s10 + $0x1d8] sm:$0xff]
    %v3448 = vld [vmem:[%s10 + $0x1e0] sm:$0xff]
    %v3449 = vld [vmem:[%s10 + $0x1e8] sm:$0xff]
    %v3450 = vld [vmem:[%s10 + $0x1f0] sm:$0xff]
    %v3451 = vld [vmem:[%s10 + $0x1f8] sm:$0xff]
    %v3452 = vld [vmem:[%s10 + $0x200] sm:$0xff]
    %v3453 = vld [vmem:[%s10 + $0x208] sm:$0xff]
    %v3454 = vld [vmem:[%s10 + $0x210] sm:$0xff]
    %v3455 = vld [vmem:[%s10 + $0x218] sm:$0xff]
    %v3456 = vld [vmem:[%s10 + $0x220] sm:$0xff]
    %v3457 = vld [vmem:[%s10 + $0x228] sm:$0xff]
    %v3458 = vld [vmem:[%s10 + $0x230] sm:$0xff]
    %v3459 = vld [vmem:[%s10 + $0x238] sm:$0xff]
    %v3460 = vld [vmem:[%s10 + $0x240] sm:$0xff]
    %v3461 = vld [vmem:[%s10 + $0x248] sm:$0xff]
    %v3462 = vld [vmem:[%s10 + $0x250] sm:$0xff]
    %v3463 = vld [vmem:[%s10 + $0x258] sm:$0xff]
    %v3464 = vld [vmem:[%s10 + $0x260] sm:$0xff]
    %v3465 = vld [vmem:[%s10 + $0x268] sm:$0xff]
    %v3466 = vld [vmem:[%s10 + $0x270] sm:$0xff]
    %v3467 = vld [vmem:[%s10 + $0x278] sm:$0xff]
    %v3468 = vld [vmem:[%s10 + $0x280] sm:$0xff]
    %v3469 = vld [vmem:[%s10 + $0x288] sm:$0xff]
    %v3470 = vld [vmem:[%s10 + $0x290] sm:$0xff]
    %v3471 = vld [vmem:[%s10 + $0x298] sm:$0xff]
    %v3472 = vld [vmem:[%s10 + $0x2a0] sm:$0xff]
    %v3473 = vld [vmem:[%s10 + $0x2a8] sm:$0xff]
    %v3474 = vld [vmem:[%s10 + $0x2b0] sm:$0xff]
    %v3475 = vld [vmem:[%s10 + $0x2b8] sm:$0xff]
    %v3476 = vld [vmem:[%s10 + $0x2c0] sm:$0xff]
    %v3477 = vld [vmem:[%s10 + $0x2c8] sm:$0xff]
    %v3478 = vld [vmem:[%s10 + $0x2d0] sm:$0xff]
    %v3479 = vld [vmem:[%s10 + $0x2d8] sm:$0xff]
    %v3480 = vld [vmem:[%s10 + $0x2e0] sm:$0xff]
    %v3481 = vld [vmem:[%s10 + $0x2e8] sm:$0xff]
    %v3482 = vld [vmem:[%s10 + $0x2f0] sm:$0xff]
    %v3483 = vld [vmem:[%s10 + $0x2f8] sm:$0xff]
    %v3484 = vmul.f32 %v3287, %v930
    %v3485 = vmul.f32 %v3288, %v935
    %v3486 = vmul.f32 %v3289, %v940
    %v3487 = vmul.f32 %v3290, %v945
    %v3489 = vlaneseq
    %v3490 = vshrl.u32 %v3489, 7
    %v3491 = vsub.s32 0, %v3490
    %v3492 = vrot.slane %v3308, %v3491
    %v3493 = vlaneseq
    %v3494 = vshrl.u32 %v3493, 7
    %v3495 = vsub.s32 1, %v3494
    %v3496 = vrot.slane %v3308, %v3495
    %v3500 = vsel %vm962, %v3484, 0
    %v3503 = vsel %vm962, %v3485, 0
    %v3506 = vsel %vm962, %v3486, 0
    %v3509 = vsel %vm962, %v3487, 0
    %3511 = vmatprep.subr.mxu0 0.0
    %3512 = vmatpush1.msra.mxu0 0.0
    %3513 = vmatprep.subr.mxu0 0.0
    %3514 = vmatpush1.msra.mxu0 0.0
    %3515 = vmatprep.subr.mxu0 0.0
    %3516 = vmatpush1.msra.mxu0 0.0
    %3517 = vmatprep.subr.mxu0 0.0
    %3518 = vmatpush1.msra.mxu0 0.0
    %3519 = vmatprep.subr.mxu0 0.0
    %3520 = vmatpush1.msra.mxu0 0.0
    %3521 = vmatprep.subr.mxu0 0.0
    %3522 = vmatpush1.msra.mxu0 0.0
    %3523 = vmatprep.subr.mxu0 0.0
    %3524 = vmatpush1.msra.mxu0 0.0
    %3525 = vmatprep.subr.mxu0 0.0
    %3526 = vmatpush1.msra.mxu0 0.0
    %3527 = vmatprep.subr.mxu0 %v3306
    %3528 = vmatpush1.msra.mxu0 %v3305
    %3529 = vmatprep.subr.mxu0 %v3304
    %3530 = vmatpush1.msra.mxu0 %v3303
    %3531 = vmatprep.subr.mxu0 %v3302
    %3532 = vmatpush1.msra.mxu0 %v3301
    %3533 = vmatprep.subr.mxu0 %v3300
    %3534 = vmatpush1.msra.mxu0 %v3299
    %3535 = vmatprep.subr.mxu0 %v3298
    %3536 = vmatpush1.msra.mxu0 %v3297
    %3537 = vmatprep.subr.mxu0 %v3296
    %3538 = vmatpush1.msra.mxu0 %v3295
    %3539 = vmatprep.subr.mxu0 %v3294
    %3540 = vmatpush1.msra.mxu0 %v3293
    %3541 = vmatprep.subr.mxu0 %v3292
    %3542 = vmatpush1.msra.mxu0 %v3291
    %3543 = vmatprep.subr.mxu0 0.0
    %3544 = vmatpush2.msra.mxu0 0.0
    %3545 = vmatprep.subr.mxu0 0.0
    %3546 = vmatpush2.msra.mxu0 0.0
    %3547 = vmatprep.subr.mxu0 0.0
    %3548 = vmatpush2.msra.mxu0 0.0
    %3549 = vmatprep.subr.mxu0 0.0
    %3550 = vmatpush2.msra.mxu0 0.0
    %3551 = vmatprep.subr.mxu0 0.0
    %3552 = vmatpush2.msra.mxu0 0.0
    %3553 = vmatprep.subr.mxu0 0.0
    %3554 = vmatpush2.msra.mxu0 0.0
    %3555 = vmatprep.subr.mxu0 0.0
    %3556 = vmatpush2.msra.mxu0 0.0
    %3557 = vmatprep.subr.mxu0 0.0
    %3558 = vmatpush2.msra.mxu0 0.0
    %3559 = vmatprep.subr.mxu0 0.0
    %3560 = vmatpush2.msra.mxu0 0.0
    %3561 = vmatprep.subr.mxu0 0.0
    %3562 = vmatpush2.msra.mxu0 0.0
    %3563 = vmatprep.subr.mxu0 0.0
    %3564 = vmatpush2.msra.mxu0 0.0
    %3565 = vmatprep.subr.mxu0 0.0
    %3566 = vmatpush2.msra.mxu0 0.0
    %3567 = vmatprep.subr.mxu0 0.0
    %3568 = vmatpush2.msra.mxu0 0.0
    %3569 = vmatprep.subr.mxu0 0.0
    %3570 = vmatpush2.msra.mxu0 0.0
    %3571 = vmatprep.subr.mxu0 0.0
    %3572 = vmatpush2.msra.mxu0 0.0
    %3573 = vmatprep.subr.mxu0 0.0
    %3574 = vmatpush2.msra.mxu0 0.0
    %3575 = vmatprep.mubr.f32.mxu0 0.0
    %3576 = vmatmul.mubr.f32.gmra.mxu0 %v3500
    %v3577 = vpop.f32.mrf.mxu0
    %v3578 = vadd.f32 %v3492, %v3577
    %v3579 = vpop.f32.mrf.mxu0
    %v3580 = vadd.f32 %v3496, %v3579
    %3581 = vmatprep.mubr.f32.mxu0 0.0
    %3582 = vmatmul.mubr.f32.gmra.mxu0 %v3503
    %v3583 = vpop.f32.mrf.mxu0
    %v3584 = vadd.f32 %v3492, %v3583
    %v3585 = vpop.f32.mrf.mxu0
    %v3586 = vadd.f32 %v3496, %v3585
    %3587 = vmatprep.mubr.f32.mxu0 0.0
    %3588 = vmatmul.mubr.f32.gmra.mxu0 %v3506
    %v3589 = vpop.f32.mrf.mxu0
    %v3590 = vadd.f32 %v3492, %v3589
    %v3591 = vpop.f32.mrf.mxu0
    %v3592 = vadd.f32 %v3496, %v3591
    %3593 = vmatprep.mubr.f32.mxu0 0.0
    %3594 = vmatmul.mubr.f32.gmra.mxu0 %v3509
    %v3595 = vpop.f32.mrf.mxu0
    %v3596 = vadd.f32 %v3492, %v3595
    %v3597 = vpop.f32.mrf.mxu0
    %v3598 = vadd.f32 %v3496, %v3597
    %3599 = vdwg.mxu0
    %3602 = vrot.lane.b32.xlu0 %v3578, 96
    %v3603 = vpop.permute.xlu0 %3602
    %3604 = vrot.lane.b32.xlu0 %v3584, 96
    %v3605 = vpop.permute.xlu0 %3604
    %3608 = vrot.lane.b32.xlu0 %v3590, 96
    %v3609 = vpop.permute.xlu0 %3608
    %3610 = vrot.lane.b32.xlu0 %v3596, 96
    %v3611 = vpop.permute.xlu0 %3610
    %3614 = vrot.lane.b32.xlu0 %v3580, 96
    %v3615 = vpop.permute.xlu0 %3614
    %3616 = vrot.lane.b32.xlu0 %v3586, 96
    %v3617 = vpop.permute.xlu0 %3616
    %3622 = vrot.lane.b32.xlu0 %v3592, 96
    %v3623 = vpop.permute.xlu0 %3622
    %3624 = vrot.lane.b32.xlu0 %v3598, 96
    %v3625 = vpop.permute.xlu0 %3624
    %v3628 = vld [vmem:[%s4] sm:$0xff]
    %v3629 = vld [vmem:[%s4 + $0x8] sm:$0xff]
    %v3630 = vld [vmem:[%s4 + $0x10] sm:$0xff]
    %v3631 = vld [vmem:[%s4 + $0x18] sm:$0xff]
    %v3632 = vld [vmem:[%s4 + $0x20] sm:$0xff]
    %v3633 = vld [vmem:[%s4 + $0x28] sm:$0xff]
    %v3634 = vld [vmem:[%s4 + $0x30] sm:$0xff]
    %v3635 = vld [vmem:[%s4 + $0x38] sm:$0xff]
    %v3636 = vld [vmem:[%s4 + $0x40] sm:$0xff]
    %v3637 = vld [vmem:[%s4 + $0x48] sm:$0xff]
    %v3638 = vld [vmem:[%s4 + $0x50] sm:$0xff]
    %v3639 = vld [vmem:[%s4 + $0x58] sm:$0xff]
    %v3640 = vld [vmem:[%s4 + $0x60] sm:$0xff]
    %v3641 = vld [vmem:[%s4 + $0x68] sm:$0xff]
    %v3642 = vld [vmem:[%s4 + $0x70] sm:$0xff]
    %v3643 = vld [vmem:[%s4 + $0x78] sm:$0xff]
    %v3644 = vsel %vm1108, %v3578, 0
    %v3646 = vsel %vm1108, %v3584, 0
    %v3648 = vsel %vm1108, %v3603, 0
    %v3650 = vsel %vm1108, %v3605, 0
    %v3652 = vsel %vm1108, %v3590, 0
    %v3654 = vsel %vm1108, %v3596, 0
    %v3656 = vsel %vm1108, %v3609, 0
    %v3658 = vsel %vm1108, %v3611, 0
    %3660 = vmatprep.subr.mxu0 0.0
    %3661 = vmatpush1.msra.mxu0 0.0
    %3662 = vmatprep.subr.mxu0 0.0
    %3663 = vmatpush1.msra.mxu0 0.0
    %3664 = vmatprep.subr.mxu0 0.0
    %3665 = vmatpush1.msra.mxu0 0.0
    %3666 = vmatprep.subr.mxu0 0.0
    %3667 = vmatpush1.msra.mxu0 0.0
    %3668 = vmatprep.subr.mxu0 0.0
    %3669 = vmatpush1.msra.mxu0 0.0
    %3670 = vmatprep.subr.mxu0 0.0
    %3671 = vmatpush1.msra.mxu0 0.0
    %3672 = vmatprep.subr.mxu0 0.0
    %3673 = vmatpush1.msra.mxu0 0.0
    %3674 = vmatprep.subr.mxu0 0.0
    %3675 = vmatpush1.msra.mxu0 0.0
    %3676 = vmatprep.subr.mxu0 0.0
    %3677 = vmatpush1.msra.mxu0 0.0
    %3678 = vmatprep.subr.mxu0 0.0
    %3679 = vmatpush1.msra.mxu0 0.0
    %3680 = vmatprep.subr.mxu0 0.0
    %3681 = vmatpush1.msra.mxu0 0.0
    %3682 = vmatprep.subr.mxu0 0.0
    %3683 = vmatpush1.msra.mxu0 0.0
    %3684 = vmatprep.subr.mxu0 %v3641
    %3685 = vmatpush1.msra.mxu0 %v3640
    %3686 = vmatprep.subr.mxu0 %v3637
    %3687 = vmatpush1.msra.mxu0 %v3636
    %3688 = vmatprep.subr.mxu0 %v3633
    %3689 = vmatpush1.msra.mxu0 %v3632
    %3690 = vmatprep.subr.mxu0 %v3629
    %3691 = vmatpush1.msra.mxu0 %v3628
    %3692 = vmatprep.subr.mxu0 0.0
    %3693 = vmatpush2.msra.mxu0 0.0
    %3694 = vmatprep.subr.mxu0 0.0
    %3695 = vmatpush2.msra.mxu0 0.0
    %3696 = vmatprep.subr.mxu0 0.0
    %3697 = vmatpush2.msra.mxu0 0.0
    %3698 = vmatprep.subr.mxu0 0.0
    %3699 = vmatpush2.msra.mxu0 0.0
    %3700 = vmatprep.subr.mxu0 0.0
    %3701 = vmatpush2.msra.mxu0 0.0
    %3702 = vmatprep.subr.mxu0 0.0
    %3703 = vmatpush2.msra.mxu0 0.0
    %3704 = vmatprep.subr.mxu0 0.0
    %3705 = vmatpush2.msra.mxu0 0.0
    %3706 = vmatprep.subr.mxu0 0.0
    %3707 = vmatpush2.msra.mxu0 0.0
    %3708 = vmatprep.subr.mxu0 0.0
    %3709 = vmatpush2.msra.mxu0 0.0
    %3710 = vmatprep.subr.mxu0 0.0
    %3711 = vmatpush2.msra.mxu0 0.0
    %3712 = vmatprep.subr.mxu0 0.0
    %3713 = vmatpush2.msra.mxu0 0.0
    %3714 = vmatprep.subr.mxu0 0.0
    %3715 = vmatpush2.msra.mxu0 0.0
    %3716 = vmatprep.subr.mxu0 0.0
    %3717 = vmatpush2.msra.mxu0 0.0
    %3718 = vmatprep.subr.mxu0 0.0
    %3719 = vmatpush2.msra.mxu0 0.0
    %3720 = vmatprep.subr.mxu0 0.0
    %3721 = vmatpush2.msra.mxu0 0.0
    %3722 = vmatprep.subr.mxu0 0.0
    %3723 = vmatpush2.msra.mxu0 0.0
    %3724 = vmatprep.mubr.f32.mxu0 0.0
    %3725 = vmatmul.mubr.f32.gmra.mxu0 %v3644
    %v3726 = vpop.f32.mrf.mxu0
    %v3727 = vadd.f32 0.0, %v3726
    %v3728 = vpop.f32.mrf.mxu0
    %v3729 = vadd.f32 0.0, %v3728
    %3730 = vmatprep.mubr.f32.mxu0 0.0
    %3731 = vmatmul.mubr.f32.gmra.mxu0 %v3646
    %v3732 = vpop.f32.mrf.mxu0
    %v3733 = vadd.f32 0.0, %v3732
    %v3734 = vpop.f32.mrf.mxu0
    %v3735 = vadd.f32 0.0, %v3734
    %3736 = vmatprep.mubr.f32.mxu0 0.0
    %3737 = vmatmul.mubr.f32.gmra.mxu0 %v3648
    %v3738 = vpop.f32.mrf.mxu0
    %v3739 = vadd.f32 0.0, %v3738
    %v3740 = vpop.f32.mrf.mxu0
    %v3741 = vadd.f32 0.0, %v3740
    %3742 = vmatprep.mubr.f32.mxu0 0.0
    %3743 = vmatmul.mubr.f32.gmra.mxu0 %v3650
    %v3744 = vpop.f32.mrf.mxu0
    %v3745 = vadd.f32 0.0, %v3744
    %v3746 = vpop.f32.mrf.mxu0
    %v3747 = vadd.f32 0.0, %v3746
    %3748 = vmatprep.mubr.f32.mxu0 0.0
    %3749 = vmatmul.mubr.f32.gmra.mxu0 %v3652
    %v3750 = vpop.f32.mrf.mxu0
    %v3751 = vadd.f32 0.0, %v3750
    %v3752 = vpop.f32.mrf.mxu0
    %v3753 = vadd.f32 0.0, %v3752
    %3754 = vmatprep.mubr.f32.mxu0 0.0
    %3755 = vmatmul.mubr.f32.gmra.mxu0 %v3654
    %v3756 = vpop.f32.mrf.mxu0
    %v3757 = vadd.f32 0.0, %v3756
    %v3758 = vpop.f32.mrf.mxu0
    %v3759 = vadd.f32 0.0, %v3758
    %3760 = vmatprep.mubr.f32.mxu0 0.0
    %3761 = vmatmul.mubr.f32.gmra.mxu0 %v3656
    %v3762 = vpop.f32.mrf.mxu0
    %v3763 = vadd.f32 0.0, %v3762
    %v3764 = vpop.f32.mrf.mxu0
    %v3765 = vadd.f32 0.0, %v3764
    %3766 = vmatprep.mubr.f32.mxu0 0.0
    %3767 = vmatmul.mubr.f32.gmra.mxu0 %v3658
    %v3768 = vpop.f32.mrf.mxu0
    %v3769 = vadd.f32 0.0, %v3768
    %v3770 = vpop.f32.mrf.mxu0
    %v3771 = vadd.f32 0.0, %v3770
    %3772 = vdwg.mxu0
    %3773 = vmatprep.subr.mxu0 0.0
    %3774 = vmatpush1.msra.mxu0 0.0
    %3775 = vmatprep.subr.mxu0 0.0
    %3776 = vmatpush1.msra.mxu0 0.0
    %3777 = vmatprep.subr.mxu0 0.0
    %3778 = vmatpush1.msra.mxu0 0.0
    %3779 = vmatprep.subr.mxu0 0.0
    %3780 = vmatpush1.msra.mxu0 0.0
    %3781 = vmatprep.subr.mxu0 0.0
    %3782 = vmatpush1.msra.mxu0 0.0
    %3783 = vmatprep.subr.mxu0 0.0
    %3784 = vmatpush1.msra.mxu0 0.0
    %3785 = vmatprep.subr.mxu0 0.0
    %3786 = vmatpush1.msra.mxu0 0.0
    %3787 = vmatprep.subr.mxu0 0.0
    %3788 = vmatpush1.msra.mxu0 0.0
    %3789 = vmatprep.subr.mxu0 0.0
    %3790 = vmatpush1.msra.mxu0 0.0
    %3791 = vmatprep.subr.mxu0 0.0
    %3792 = vmatpush1.msra.mxu0 0.0
    %3793 = vmatprep.subr.mxu0 0.0
    %3794 = vmatpush1.msra.mxu0 0.0
    %3795 = vmatprep.subr.mxu0 0.0
    %3796 = vmatpush1.msra.mxu0 0.0
    %3797 = vmatprep.subr.mxu0 %v3643
    %3798 = vmatpush1.msra.mxu0 %v3642
    %3799 = vmatprep.subr.mxu0 %v3639
    %3800 = vmatpush1.msra.mxu0 %v3638
    %3801 = vmatprep.subr.mxu0 %v3635
    %3802 = vmatpush1.msra.mxu0 %v3634
    %3803 = vmatprep.subr.mxu0 %v3631
    %3804 = vmatpush1.msra.mxu0 %v3630
    %3805 = vmatprep.subr.mxu0 0.0
    %3806 = vmatpush2.msra.mxu0 0.0
    %3807 = vmatprep.subr.mxu0 0.0
    %3808 = vmatpush2.msra.mxu0 0.0
    %3809 = vmatprep.subr.mxu0 0.0
    %3810 = vmatpush2.msra.mxu0 0.0
    %3811 = vmatprep.subr.mxu0 0.0
    %3812 = vmatpush2.msra.mxu0 0.0
    %3813 = vmatprep.subr.mxu0 0.0
    %3814 = vmatpush2.msra.mxu0 0.0
    %3815 = vmatprep.subr.mxu0 0.0
    %3816 = vmatpush2.msra.mxu0 0.0
    %3817 = vmatprep.subr.mxu0 0.0
    %3818 = vmatpush2.msra.mxu0 0.0
    %3819 = vmatprep.subr.mxu0 0.0
    %3820 = vmatpush2.msra.mxu0 0.0
    %3821 = vmatprep.subr.mxu0 0.0
    %3822 = vmatpush2.msra.mxu0 0.0
    %3823 = vmatprep.subr.mxu0 0.0
    %3824 = vmatpush2.msra.mxu0 0.0
    %3825 = vmatprep.subr.mxu0 0.0
    %3826 = vmatpush2.msra.mxu0 0.0
    %3827 = vmatprep.subr.mxu0 0.0
    %3828 = vmatpush2.msra.mxu0 0.0
    %3829 = vmatprep.subr.mxu0 0.0
    %3830 = vmatpush2.msra.mxu0 0.0
    %3831 = vmatprep.subr.mxu0 0.0
    %3832 = vmatpush2.msra.mxu0 0.0
    %3833 = vmatprep.subr.mxu0 0.0
    %3834 = vmatpush2.msra.mxu0 0.0
    %3835 = vmatprep.subr.mxu0 0.0
    %3836 = vmatpush2.msra.mxu0 0.0
    %3837 = vmatprep.mubr.f32.mxu0 0.0
    %3838 = vmatmul.mubr.f32.gmra.mxu0 %v3644
    %v3839 = vpop.f32.mrf.mxu0
    %v3840 = vadd.f32 0.0, %v3839
    %v3841 = vpop.f32.mrf.mxu0
    %v3842 = vadd.f32 0.0, %v3841
    %3843 = vmatprep.mubr.f32.mxu0 0.0
    %3844 = vmatmul.mubr.f32.gmra.mxu0 %v3646
    %v3845 = vpop.f32.mrf.mxu0
    %v3846 = vadd.f32 0.0, %v3845
    %v3847 = vpop.f32.mrf.mxu0
    %v3848 = vadd.f32 0.0, %v3847
    %3849 = vmatprep.mubr.f32.mxu0 0.0
    %3850 = vmatmul.mubr.f32.gmra.mxu0 %v3648
    %v3851 = vpop.f32.mrf.mxu0
    %v3852 = vadd.f32 0.0, %v3851
    %v3853 = vpop.f32.mrf.mxu0
    %v3854 = vadd.f32 0.0, %v3853
    %3855 = vmatprep.mubr.f32.mxu0 0.0
    %3856 = vmatmul.mubr.f32.gmra.mxu0 %v3650
    %v3857 = vpop.f32.mrf.mxu0
    %v3858 = vadd.f32 0.0, %v3857
    %v3859 = vpop.f32.mrf.mxu0
    %v3860 = vadd.f32 0.0, %v3859
    %3861 = vmatprep.mubr.f32.mxu0 0.0
    %3862 = vmatmul.mubr.f32.gmra.mxu0 %v3652
    %v3863 = vpop.f32.mrf.mxu0
    %v3864 = vadd.f32 0.0, %v3863
    %v3865 = vpop.f32.mrf.mxu0
    %v3866 = vadd.f32 0.0, %v3865
    %3867 = vmatprep.mubr.f32.mxu0 0.0
    %3868 = vmatmul.mubr.f32.gmra.mxu0 %v3654
    %v3869 = vpop.f32.mrf.mxu0
    %v3870 = vadd.f32 0.0, %v3869
    %v3871 = vpop.f32.mrf.mxu0
    %v3872 = vadd.f32 0.0, %v3871
    %3873 = vmatprep.mubr.f32.mxu0 0.0
    %3874 = vmatmul.mubr.f32.gmra.mxu0 %v3656
    %v3875 = vpop.f32.mrf.mxu0
    %v3876 = vadd.f32 0.0, %v3875
    %v3877 = vpop.f32.mrf.mxu0
    %v3878 = vadd.f32 0.0, %v3877
    %3879 = vmatprep.mubr.f32.mxu0 0.0
    %3880 = vmatmul.mubr.f32.gmra.mxu0 %v3658
    %v3881 = vpop.f32.mrf.mxu0
    %v3882 = vadd.f32 0.0, %v3881
    %v3883 = vpop.f32.mrf.mxu0
    %v3884 = vadd.f32 0.0, %v3883
    %3885 = vdwg.mxu0
    %v3886 = vld [vmem:[%s4 + $0x80] sm:$0xff]
    %v3887 = vld [vmem:[%s4 + $0x88] sm:$0xff]
    %v3888 = vld [vmem:[%s4 + $0x90] sm:$0xff]
    %v3889 = vld [vmem:[%s4 + $0x98] sm:$0xff]
    %v3890 = vld [vmem:[%s4 + $0xa0] sm:$0xff]
    %v3891 = vld [vmem:[%s4 + $0xa8] sm:$0xff]
    %v3892 = vld [vmem:[%s4 + $0xb0] sm:$0xff]
    %v3893 = vld [vmem:[%s4 + $0xb8] sm:$0xff]
    %v3894 = vld [vmem:[%s4 + $0xc0] sm:$0xff]
    %v3895 = vld [vmem:[%s4 + $0xc8] sm:$0xff]
    %v3896 = vld [vmem:[%s4 + $0xd0] sm:$0xff]
    %v3897 = vld [vmem:[%s4 + $0xd8] sm:$0xff]
    %v3898 = vld [vmem:[%s4 + $0xe0] sm:$0xff]
    %v3899 = vld [vmem:[%s4 + $0xe8] sm:$0xff]
    %v3900 = vld [vmem:[%s4 + $0xf0] sm:$0xff]
    %v3901 = vld [vmem:[%s4 + $0xf8] sm:$0xff]
    %v3902 = vld [vmem:[%s4 + $0x100] sm:$0xff]
    %v3903 = vld [vmem:[%s4 + $0x108] sm:$0xff]
    %v3904 = vld [vmem:[%s4 + $0x110] sm:$0xff]
    %v3905 = vld [vmem:[%s4 + $0x118] sm:$0xff]
    %v3906 = vld [vmem:[%s4 + $0x120] sm:$0xff]
    %v3907 = vld [vmem:[%s4 + $0x128] sm:$0xff]
    %v3908 = vld [vmem:[%s4 + $0x130] sm:$0xff]
    %v3909 = vld [vmem:[%s4 + $0x138] sm:$0xff]
    %v3910 = vld [vmem:[%s4 + $0x140] sm:$0xff]
    %v3911 = vld [vmem:[%s4 + $0x148] sm:$0xff]
    %v3912 = vld [vmem:[%s4 + $0x150] sm:$0xff]
    %v3913 = vld [vmem:[%s4 + $0x158] sm:$0xff]
    %v3914 = vld [vmem:[%s4 + $0x160] sm:$0xff]
    %v3915 = vld [vmem:[%s4 + $0x168] sm:$0xff]
    %v3916 = vld [vmem:[%s4 + $0x170] sm:$0xff]
    %v3917 = vld [vmem:[%s4 + $0x178] sm:$0xff]
    %v3918 = vmul.f32 %v3727, %v3886
    %v3919 = vmul.f32 %v3729, %v3887
    %v3920 = vmul.f32 %v3840, %v3888
    %v3921 = vmul.f32 %v3842, %v3889
    %v3922 = vmul.f32 %v3733, %v3890
    %v3923 = vmul.f32 %v3735, %v3891
    %v3924 = vmul.f32 %v3846, %v3892
    %v3925 = vmul.f32 %v3848, %v3893
    %v3926 = vmul.f32 %v3739, %v3894
    %v3927 = vmul.f32 %v3741, %v3895
    %v3928 = vmul.f32 %v3852, %v3896
    %v3929 = vmul.f32 %v3854, %v3897
    %v3930 = vmul.f32 %v3745, %v3898
    %v3931 = vmul.f32 %v3747, %v3899
    %v3932 = vmul.f32 %v3858, %v3900
    %v3933 = vmul.f32 %v3860, %v3901
    %v3934 = vmul.f32 %v3751, %v3902
    %v3935 = vmul.f32 %v3753, %v3903
    %v3936 = vmul.f32 %v3864, %v3904
    %v3937 = vmul.f32 %v3866, %v3905
    %v3938 = vmul.f32 %v3757, %v3906
    %v3939 = vmul.f32 %v3759, %v3907
    %v3940 = vmul.f32 %v3870, %v3908
    %v3941 = vmul.f32 %v3872, %v3909
    %v3942 = vmul.f32 %v3763, %v3910
    %v3943 = vmul.f32 %v3765, %v3911
    %v3944 = vmul.f32 %v3876, %v3912
    %v3945 = vmul.f32 %v3878, %v3913
    %v3946 = vmul.f32 %v3769, %v3914
    %v3947 = vmul.f32 %v3771, %v3915
    %v3948 = vmul.f32 %v3882, %v3916
    %v3949 = vmul.f32 %v3884, %v3917
    %3950 = vmatprep.subr.mxu0 0.0
    %3951 = vmatpush1.msra.mxu0 %v3331
    %3952 = vmatprep.subr.mxu0 0.0
    %3953 = vmatpush1.msra.mxu0 %v3330
    %3954 = vmatprep.subr.mxu0 0.0
    %3955 = vmatpush1.msra.mxu0 %v3329
    %3956 = vmatprep.subr.mxu0 0.0
    %3957 = vmatpush1.msra.mxu0 %v3328
    %3958 = vmatprep.subr.mxu0 0.0
    %3959 = vmatpush1.msra.mxu0 %v3327
    %3960 = vmatprep.subr.mxu0 0.0
    %3961 = vmatpush1.msra.mxu0 %v3326
    %3962 = vmatprep.subr.mxu0 0.0
    %3963 = vmatpush1.msra.mxu0 %v3325
    %3964 = vmatprep.subr.mxu0 0.0
    %3965 = vmatpush1.msra.mxu0 %v3324
    %3966 = vmatprep.subr.mxu0 0.0
    %3967 = vmatpush1.msra.mxu0 %v3323
    %3968 = vmatprep.subr.mxu0 0.0
    %3969 = vmatpush1.msra.mxu0 %v3322
    %3970 = vmatprep.subr.mxu0 0.0
    %3971 = vmatpush1.msra.mxu0 %v3321
    %3972 = vmatprep.subr.mxu0 0.0
    %3973 = vmatpush1.msra.mxu0 %v3320
    %3974 = vmatprep.subr.mxu0 0.0
    %3975 = vmatpush1.msra.mxu0 %v3319
    %3976 = vmatprep.subr.mxu0 0.0
    %3977 = vmatpush1.msra.mxu0 %v3318
    %3978 = vmatprep.subr.mxu0 0.0
    %3979 = vmatpush1.msra.mxu0 %v3317
    %3980 = vmatprep.subr.mxu0 0.0
    %3981 = vmatpush1.msra.mxu0 %v3316
    %3982 = vmatprep.subr.mxu0 0.0
    %3983 = vmatpush2.msra.mxu0 %v3347
    %3984 = vmatprep.subr.mxu0 0.0
    %3985 = vmatpush2.msra.mxu0 %v3346
    %3986 = vmatprep.subr.mxu0 0.0
    %3987 = vmatpush2.msra.mxu0 %v3345
    %3988 = vmatprep.subr.mxu0 0.0
    %3989 = vmatpush2.msra.mxu0 %v3344
    %3990 = vmatprep.subr.mxu0 0.0
    %3991 = vmatpush2.msra.mxu0 %v3343
    %3992 = vmatprep.subr.mxu0 0.0
    %3993 = vmatpush2.msra.mxu0 %v3342
    %3994 = vmatprep.subr.mxu0 0.0
    %3995 = vmatpush2.msra.mxu0 %v3341
    %3996 = vmatprep.subr.mxu0 0.0
    %3997 = vmatpush2.msra.mxu0 %v3340
    %3998 = vmatprep.subr.mxu0 0.0
    %3999 = vmatpush2.msra.mxu0 %v3339
    %4000 = vmatprep.subr.mxu0 0.0
    %4001 = vmatpush2.msra.mxu0 %v3338
    %4002 = vmatprep.subr.mxu0 0.0
    %4003 = vmatpush2.msra.mxu0 %v3337
    %4004 = vmatprep.subr.mxu0 0.0
    %4005 = vmatpush2.msra.mxu0 %v3336
    %4006 = vmatprep.subr.mxu0 0.0
    %4007 = vmatpush2.msra.mxu0 %v3335
    %4008 = vmatprep.subr.mxu0 0.0
    %4009 = vmatpush2.msra.mxu0 %v3334
    %4010 = vmatprep.subr.mxu0 0.0
    %4011 = vmatpush2.msra.mxu0 %v3333
    %4012 = vmatprep.subr.mxu0 0.0
    %4013 = vmatpush2.msra.mxu0 %v3332
    %4014 = vmatprep.mubr.f32.mxu0 %v3919
    %4015 = vmatmul.mubr.f32.gmra.mxu0 %v3918
    %v4016 = vpop.f32.mrf.mxu0
    %v4017 = vadd.f32 0.0, %v4016
    %v4018 = vpop.f32.mrf.mxu0
    %4019 = vmatprep.mubr.f32.mxu0 %v3923
    %4020 = vmatmul.mubr.f32.gmra.mxu0 %v3922
    %v4021 = vpop.f32.mrf.mxu0
    %v4022 = vadd.f32 0.0, %v4021
    %v4023 = vpop.f32.mrf.mxu0
    %4024 = vmatprep.mubr.f32.mxu0 %v3927
    %4025 = vmatmul.mubr.f32.gmra.mxu0 %v3926
    %v4026 = vpop.f32.mrf.mxu0
    %v4027 = vadd.f32 0.0, %v4026
    %v4028 = vpop.f32.mrf.mxu0
    %4029 = vmatprep.mubr.f32.mxu0 %v3931
    %4030 = vmatmul.mubr.f32.gmra.mxu0 %v3930
    %v4031 = vpop.f32.mrf.mxu0
    %v4032 = vadd.f32 0.0, %v4031
    %v4033 = vpop.f32.mrf.mxu0
    %4034 = vmatprep.mubr.f32.mxu0 %v3935
    %4035 = vmatmul.mubr.f32.gmra.mxu0 %v3934
    %v4036 = vpop.f32.mrf.mxu0
    %v4037 = vadd.f32 0.0, %v4036
    %v4038 = vpop.f32.mrf.mxu0
    %4039 = vmatprep.mubr.f32.mxu0 %v3939
    %4040 = vmatmul.mubr.f32.gmra.mxu0 %v3938
    %v4041 = vpop.f32.mrf.mxu0
    %v4042 = vadd.f32 0.0, %v4041
    %v4043 = vpop.f32.mrf.mxu0
    %4044 = vmatprep.mubr.f32.mxu0 %v3943
    %4045 = vmatmul.mubr.f32.gmra.mxu0 %v3942
    %v4046 = vpop.f32.mrf.mxu0
    %v4047 = vadd.f32 0.0, %v4046
    %v4048 = vpop.f32.mrf.mxu0
    %4049 = vmatprep.mubr.f32.mxu0 %v3947
    %4050 = vmatmul.mubr.f32.gmra.mxu0 %v3946
    %v4051 = vpop.f32.mrf.mxu0
    %v4052 = vadd.f32 0.0, %v4051
    %v4053 = vpop.f32.mrf.mxu0
    %4054 = vdwg.mxu0
    %4055 = vmatprep.subr.mxu0 0.0
    %4056 = vmatpush1.msra.mxu0 %v3363
    %4057 = vmatprep.subr.mxu0 0.0
    %4058 = vmatpush1.msra.mxu0 %v3362
    %4059 = vmatprep.subr.mxu0 0.0
    %4060 = vmatpush1.msra.mxu0 %v3361
    %4061 = vmatprep.subr.mxu0 0.0
    %4062 = vmatpush1.msra.mxu0 %v3360
    %4063 = vmatprep.subr.mxu0 0.0
    %4064 = vmatpush1.msra.mxu0 %v3359
    %4065 = vmatprep.subr.mxu0 0.0
    %4066 = vmatpush1.msra.mxu0 %v3358
    %4067 = vmatprep.subr.mxu0 0.0
    %4068 = vmatpush1.msra.mxu0 %v3357
    %4069 = vmatprep.subr.mxu0 0.0
    %4070 = vmatpush1.msra.mxu0 %v3356
    %4071 = vmatprep.subr.mxu0 0.0
    %4072 = vmatpush1.msra.mxu0 %v3355
    %4073 = vmatprep.subr.mxu0 0.0
    %4074 = vmatpush1.msra.mxu0 %v3354
    %4075 = vmatprep.subr.mxu0 0.0
    %4076 = vmatpush1.msra.mxu0 %v3353
    %4077 = vmatprep.subr.mxu0 0.0
    %4078 = vmatpush1.msra.mxu0 %v3352
    %4079 = vmatprep.subr.mxu0 0.0
    %4080 = vmatpush1.msra.mxu0 %v3351
    %4081 = vmatprep.subr.mxu0 0.0
    %4082 = vmatpush1.msra.mxu0 %v3350
    %4083 = vmatprep.subr.mxu0 0.0
    %4084 = vmatpush1.msra.mxu0 %v3349
    %4085 = vmatprep.subr.mxu0 0.0
    %4086 = vmatpush1.msra.mxu0 %v3348
    %4087 = vmatprep.subr.mxu0 0.0
    %4088 = vmatpush2.msra.mxu0 %v3379
    %4089 = vmatprep.subr.mxu0 0.0
    %4090 = vmatpush2.msra.mxu0 %v3378
    %4091 = vmatprep.subr.mxu0 0.0
    %4092 = vmatpush2.msra.mxu0 %v3377
    %4093 = vmatprep.subr.mxu0 0.0
    %4094 = vmatpush2.msra.mxu0 %v3376
    %4095 = vmatprep.subr.mxu0 0.0
    %4096 = vmatpush2.msra.mxu0 %v3375
    %4097 = vmatprep.subr.mxu0 0.0
    %4098 = vmatpush2.msra.mxu0 %v3374
    %4099 = vmatprep.subr.mxu0 0.0
    %4100 = vmatpush2.msra.mxu0 %v3373
    %4101 = vmatprep.subr.mxu0 0.0
    %4102 = vmatpush2.msra.mxu0 %v3372
    %4103 = vmatprep.subr.mxu0 0.0
    %4104 = vmatpush2.msra.mxu0 %v3371
    %4105 = vmatprep.subr.mxu0 0.0
    %4106 = vmatpush2.msra.mxu0 %v3370
    %4107 = vmatprep.subr.mxu0 0.0
    %4108 = vmatpush2.msra.mxu0 %v3369
    %4109 = vmatprep.subr.mxu0 0.0
    %4110 = vmatpush2.msra.mxu0 %v3368
    %4111 = vmatprep.subr.mxu0 0.0
    %4112 = vmatpush2.msra.mxu0 %v3367
    %4113 = vmatprep.subr.mxu0 0.0
    %4114 = vmatpush2.msra.mxu0 %v3366
    %4115 = vmatprep.subr.mxu0 0.0
    %4116 = vmatpush2.msra.mxu0 %v3365
    %4117 = vmatprep.subr.mxu0 0.0
    %4118 = vmatpush2.msra.mxu0 %v3364
    %4119 = vmatprep.mubr.f32.mxu0 %v3921
    %4120 = vmatmul.mubr.f32.gmra.mxu0 %v3920
    %v4121 = vpop.f32.mrf.mxu0
    %v4122 = vadd.f32 %v4017, %v4121
    %v4123 = vpop.f32.mrf.mxu0
    %4124 = vmatprep.mubr.f32.mxu0 %v3925
    %4125 = vmatmul.mubr.f32.gmra.mxu0 %v3924
    %v4126 = vpop.f32.mrf.mxu0
    %v4127 = vadd.f32 %v4022, %v4126
    %v4128 = vpop.f32.mrf.mxu0
    %4129 = vmatprep.mubr.f32.mxu0 %v3929
    %4130 = vmatmul.mubr.f32.gmra.mxu0 %v3928
    %v4131 = vpop.f32.mrf.mxu0
    %v4132 = vadd.f32 %v4027, %v4131
    %v4133 = vpop.f32.mrf.mxu0
    %4134 = vmatprep.mubr.f32.mxu0 %v3933
    %4135 = vmatmul.mubr.f32.gmra.mxu0 %v3932
    %v4136 = vpop.f32.mrf.mxu0
    %v4137 = vadd.f32 %v4032, %v4136
    %v4138 = vpop.f32.mrf.mxu0
    %4139 = vmatprep.mubr.f32.mxu0 %v3937
    %4140 = vmatmul.mubr.f32.gmra.mxu0 %v3936
    %v4141 = vpop.f32.mrf.mxu0
    %v4142 = vadd.f32 %v4037, %v4141
    %v4143 = vpop.f32.mrf.mxu0
    %4144 = vmatprep.mubr.f32.mxu0 %v3941
    %4145 = vmatmul.mubr.f32.gmra.mxu0 %v3940
    %v4146 = vpop.f32.mrf.mxu0
    %v4147 = vadd.f32 %v4042, %v4146
    %v4148 = vpop.f32.mrf.mxu0
    %4149 = vmatprep.mubr.f32.mxu0 %v3945
    %4150 = vmatmul.mubr.f32.gmra.mxu0 %v3944
    %v4151 = vpop.f32.mrf.mxu0
    %v4152 = vadd.f32 %v4047, %v4151
    %v4153 = vpop.f32.mrf.mxu0
    %4154 = vmatprep.mubr.f32.mxu0 %v3949
    %4155 = vmatmul.mubr.f32.gmra.mxu0 %v3948
    %v4156 = vpop.f32.mrf.mxu0
    %v4157 = vadd.f32 %v4052, %v4156
    %v4158 = vpop.f32.mrf.mxu0
    %4159 = vdwg.mxu0
    %4160 = vrot.lane.b32.xlu0 %v3578, 64
    %v4161 = vpop.permute.xlu0 %4160
    %4162 = vrot.lane.b32.xlu0 %v3584, 64
    %v4163 = vpop.permute.xlu0 %4162
    %v4164 = vsel %vm1108, %v4161, 0
    %v4166 = vsel %vm1108, %v4163, 0
    %4168 = vmatprep.subr.mxu0 0.0
    %4169 = vmatpush1.xpose.msra.mxu0 0.0
    %4170 = vmatprep.subr.mxu0 0.0
    %4171 = vmatpush1.xpose.msra.mxu0 0.0
    %4172 = vmatprep.subr.mxu0 0.0
    %4173 = vmatpush1.xpose.msra.mxu0 0.0
    %4174 = vmatprep.subr.mxu0 0.0
    %4175 = vmatpush1.xpose.msra.mxu0 0.0
    %4176 = vmatprep.subr.mxu0 0.0
    %4177 = vmatpush1.xpose.msra.mxu0 0.0
    %4178 = vmatprep.subr.mxu0 0.0
    %4179 = vmatpush1.xpose.msra.mxu0 0.0
    %4180 = vmatprep.subr.mxu0 0.0
    %4181 = vmatpush1.xpose.msra.mxu0 0.0
    %4182 = vmatprep.subr.mxu0 0.0
    %4183 = vmatpush1.xpose.msra.mxu0 0.0
    %4184 = vmatprep.subr.mxu0 0.0
    %4185 = vmatpush1.xpose.msra.mxu0 0.0
    %4186 = vmatprep.subr.mxu0 0.0
    %4187 = vmatpush1.xpose.msra.mxu0 0.0
    %4188 = vmatprep.subr.mxu0 0.0
    %4189 = vmatpush1.xpose.msra.mxu0 0.0
    %4190 = vmatprep.subr.mxu0 0.0
    %4191 = vmatpush1.xpose.msra.mxu0 0.0
    %4192 = vmatprep.subr.mxu0 0.0
    %4193 = vmatpush1.xpose.msra.mxu0 0.0
    %4194 = vmatprep.subr.mxu0 0.0
    %4195 = vmatpush1.xpose.msra.mxu0 0.0
    %4196 = vmatprep.subr.mxu0 0.0
    %4197 = vmatpush1.xpose.msra.mxu0 %v4166
    %4198 = vmatprep.subr.mxu0 0.0
    %4199 = vmatpush1.xpose.msra.mxu0 %v4164
    %4200 = vmatprep.subr.mxu0 0.0
    %4201 = vmatpush2.xpose.msra.mxu0 0.0
    %4202 = vmatprep.subr.mxu0 0.0
    %4203 = vmatpush2.xpose.msra.mxu0 0.0
    %4204 = vmatprep.subr.mxu0 0.0
    %4205 = vmatpush2.xpose.msra.mxu0 0.0
    %4206 = vmatprep.subr.mxu0 0.0
    %4207 = vmatpush2.xpose.msra.mxu0 0.0
    %4208 = vmatprep.subr.mxu0 0.0
    %4209 = vmatpush2.xpose.msra.mxu0 0.0
    %4210 = vmatprep.subr.mxu0 0.0
    %4211 = vmatpush2.xpose.msra.mxu0 0.0
    %4212 = vmatprep.subr.mxu0 0.0
    %4213 = vmatpush2.xpose.msra.mxu0 0.0
    %4214 = vmatprep.subr.mxu0 0.0
    %4215 = vmatpush2.xpose.msra.mxu0 0.0
    %4216 = vmatprep.subr.mxu0 0.0
    %4217 = vmatpush2.xpose.msra.mxu0 0.0
    %4218 = vmatprep.subr.mxu0 0.0
    %4219 = vmatpush2.xpose.msra.mxu0 0.0
    %4220 = vmatprep.subr.mxu0 0.0
    %4221 = vmatpush2.xpose.msra.mxu0 0.0
    %4222 = vmatprep.subr.mxu0 0.0
    %4223 = vmatpush2.xpose.msra.mxu0 0.0
    %4224 = vmatprep.subr.mxu0 0.0
    %4225 = vmatpush2.xpose.msra.mxu0 0.0
    %4226 = vmatprep.subr.mxu0 0.0
    %4227 = vmatpush2.xpose.msra.mxu0 0.0
    %4228 = vmatprep.subr.mxu0 0.0
    %4229 = vmatpush2.xpose.msra.mxu0 0.0
    %4230 = vmatprep.subr.mxu0 0.0
    %4231 = vmatpush2.xpose.msra.mxu0 0.0
    %4232 = vmatprep.mubr.f32.mxu0 0.0
    %4233 = vmatmul.mubr.f32.gmra.mxu0 %v3644
    %v4234 = vpop.f32.mrf.mxu0
    %v4235 = vadd.f32 %v4122, %v4234
    %v4236 = vpop.f32.mrf.mxu0
    %4237 = vmatprep.mubr.f32.mxu0 0.0
    %4238 = vmatmul.mubr.f32.gmra.mxu0 %v3646
    %v4239 = vpop.f32.mrf.mxu0
    %v4240 = vadd.f32 %v4127, %v4239
    %v4241 = vpop.f32.mrf.mxu0
    %4242 = vdwg.mxu0
    %4243 = vrot.lane.b32.xlu0 %v3603, 64
    %v4244 = vpop.permute.xlu0 %4243
    %4245 = vrot.lane.b32.xlu0 %v3605, 64
    %v4246 = vpop.permute.xlu0 %4245
    %v4247 = vsel %vm1108, %v4244, 0
    %v4249 = vsel %vm1108, %v4246, 0
    %4251 = vmatprep.subr.mxu0 0.0
    %4252 = vmatpush1.xpose.msra.mxu0 0.0
    %4253 = vmatprep.subr.mxu0 0.0
    %4254 = vmatpush1.xpose.msra.mxu0 0.0
    %4255 = vmatprep.subr.mxu0 0.0
    %4256 = vmatpush1.xpose.msra.mxu0 0.0
    %4257 = vmatprep.subr.mxu0 0.0
    %4258 = vmatpush1.xpose.msra.mxu0 0.0
    %4259 = vmatprep.subr.mxu0 0.0
    %4260 = vmatpush1.xpose.msra.mxu0 0.0
    %4261 = vmatprep.subr.mxu0 0.0
    %4262 = vmatpush1.xpose.msra.mxu0 0.0
    %4263 = vmatprep.subr.mxu0 0.0
    %4264 = vmatpush1.xpose.msra.mxu0 0.0
    %4265 = vmatprep.subr.mxu0 0.0
    %4266 = vmatpush1.xpose.msra.mxu0 0.0
    %4267 = vmatprep.subr.mxu0 0.0
    %4268 = vmatpush1.xpose.msra.mxu0 0.0
    %4269 = vmatprep.subr.mxu0 0.0
    %4270 = vmatpush1.xpose.msra.mxu0 0.0
    %4271 = vmatprep.subr.mxu0 0.0
    %4272 = vmatpush1.xpose.msra.mxu0 0.0
    %4273 = vmatprep.subr.mxu0 0.0
    %4274 = vmatpush1.xpose.msra.mxu0 0.0
    %4275 = vmatprep.subr.mxu0 0.0
    %4276 = vmatpush1.xpose.msra.mxu0 0.0
    %4277 = vmatprep.subr.mxu0 0.0
    %4278 = vmatpush1.xpose.msra.mxu0 0.0
    %4279 = vmatprep.subr.mxu0 0.0
    %4280 = vmatpush1.xpose.msra.mxu0 %v4249
    %4281 = vmatprep.subr.mxu0 0.0
    %4282 = vmatpush1.xpose.msra.mxu0 %v4247
    %4283 = vmatprep.subr.mxu0 0.0
    %4284 = vmatpush2.xpose.msra.mxu0 0.0
    %4285 = vmatprep.subr.mxu0 0.0
    %4286 = vmatpush2.xpose.msra.mxu0 0.0
    %4287 = vmatprep.subr.mxu0 0.0
    %4288 = vmatpush2.xpose.msra.mxu0 0.0
    %4289 = vmatprep.subr.mxu0 0.0
    %4290 = vmatpush2.xpose.msra.mxu0 0.0
    %4291 = vmatprep.subr.mxu0 0.0
    %4292 = vmatpush2.xpose.msra.mxu0 0.0
    %4293 = vmatprep.subr.mxu0 0.0
    %4294 = vmatpush2.xpose.msra.mxu0 0.0
    %4295 = vmatprep.subr.mxu0 0.0
    %4296 = vmatpush2.xpose.msra.mxu0 0.0
    %4297 = vmatprep.subr.mxu0 0.0
    %4298 = vmatpush2.xpose.msra.mxu0 0.0
    %4299 = vmatprep.subr.mxu0 0.0
    %4300 = vmatpush2.xpose.msra.mxu0 0.0
    %4301 = vmatprep.subr.mxu0 0.0
    %4302 = vmatpush2.xpose.msra.mxu0 0.0
    %4303 = vmatprep.subr.mxu0 0.0
    %4304 = vmatpush2.xpose.msra.mxu0 0.0
    %4305 = vmatprep.subr.mxu0 0.0
    %4306 = vmatpush2.xpose.msra.mxu0 0.0
    %4307 = vmatprep.subr.mxu0 0.0
    %4308 = vmatpush2.xpose.msra.mxu0 0.0
    %4309 = vmatprep.subr.mxu0 0.0
    %4310 = vmatpush2.xpose.msra.mxu0 0.0
    %4311 = vmatprep.subr.mxu0 0.0
    %4312 = vmatpush2.xpose.msra.mxu0 0.0
    %4313 = vmatprep.subr.mxu0 0.0
    %4314 = vmatpush2.xpose.msra.mxu0 0.0
    %4315 = vmatprep.mubr.f32.mxu0 0.0
    %4316 = vmatmul.mubr.f32.gmra.mxu0 %v3648
    %v4317 = vpop.f32.mrf.mxu0
    %v4318 = vadd.f32 %v4132, %v4317
    %v4319 = vpop.f32.mrf.mxu0
    %4320 = vmatprep.mubr.f32.mxu0 0.0
    %4321 = vmatmul.mubr.f32.gmra.mxu0 %v3650
    %v4322 = vpop.f32.mrf.mxu0
    %v4323 = vadd.f32 %v4137, %v4322
    %v4324 = vpop.f32.mrf.mxu0
    %4325 = vdwg.mxu0
    %4326 = vrot.lane.b32.xlu0 %v3590, 64
    %v4327 = vpop.permute.xlu0 %4326
    %4328 = vrot.lane.b32.xlu0 %v3596, 64
    %v4329 = vpop.permute.xlu0 %4328
    %v4330 = vsel %vm1108, %v4327, 0
    %v4332 = vsel %vm1108, %v4329, 0
    %4334 = vmatprep.subr.mxu0 0.0
    %4335 = vmatpush1.xpose.msra.mxu0 0.0
    %4336 = vmatprep.subr.mxu0 0.0
    %4337 = vmatpush1.xpose.msra.mxu0 0.0
    %4338 = vmatprep.subr.mxu0 0.0
    %4339 = vmatpush1.xpose.msra.mxu0 0.0
    %4340 = vmatprep.subr.mxu0 0.0
    %4341 = vmatpush1.xpose.msra.mxu0 0.0
    %4342 = vmatprep.subr.mxu0 0.0
    %4343 = vmatpush1.xpose.msra.mxu0 0.0
    %4344 = vmatprep.subr.mxu0 0.0
    %4345 = vmatpush1.xpose.msra.mxu0 0.0
    %4346 = vmatprep.subr.mxu0 0.0
    %4347 = vmatpush1.xpose.msra.mxu0 0.0
    %4348 = vmatprep.subr.mxu0 0.0
    %4349 = vmatpush1.xpose.msra.mxu0 0.0
    %4350 = vmatprep.subr.mxu0 0.0
    %4351 = vmatpush1.xpose.msra.mxu0 0.0
    %4352 = vmatprep.subr.mxu0 0.0
    %4353 = vmatpush1.xpose.msra.mxu0 0.0
    %4354 = vmatprep.subr.mxu0 0.0
    %4355 = vmatpush1.xpose.msra.mxu0 0.0
    %4356 = vmatprep.subr.mxu0 0.0
    %4357 = vmatpush1.xpose.msra.mxu0 0.0
    %4358 = vmatprep.subr.mxu0 0.0
    %4359 = vmatpush1.xpose.msra.mxu0 0.0
    %4360 = vmatprep.subr.mxu0 0.0
    %4361 = vmatpush1.xpose.msra.mxu0 0.0
    %4362 = vmatprep.subr.mxu0 0.0
    %4363 = vmatpush1.xpose.msra.mxu0 %v4332
    %4364 = vmatprep.subr.mxu0 0.0
    %4365 = vmatpush1.xpose.msra.mxu0 %v4330
    %4366 = vmatprep.subr.mxu0 0.0
    %4367 = vmatpush2.xpose.msra.mxu0 0.0
    %4368 = vmatprep.subr.mxu0 0.0
    %4369 = vmatpush2.xpose.msra.mxu0 0.0
    %4370 = vmatprep.subr.mxu0 0.0
    %4371 = vmatpush2.xpose.msra.mxu0 0.0
    %4372 = vmatprep.subr.mxu0 0.0
    %4373 = vmatpush2.xpose.msra.mxu0 0.0
    %4374 = vmatprep.subr.mxu0 0.0
    %4375 = vmatpush2.xpose.msra.mxu0 0.0
    %4376 = vmatprep.subr.mxu0 0.0
    %4377 = vmatpush2.xpose.msra.mxu0 0.0
    %4378 = vmatprep.subr.mxu0 0.0
    %4379 = vmatpush2.xpose.msra.mxu0 0.0
    %4380 = vmatprep.subr.mxu0 0.0
    %4381 = vmatpush2.xpose.msra.mxu0 0.0
    %4382 = vmatprep.subr.mxu0 0.0
    %4383 = vmatpush2.xpose.msra.mxu0 0.0
    %4384 = vmatprep.subr.mxu0 0.0
    %4385 = vmatpush2.xpose.msra.mxu0 0.0
    %4386 = vmatprep.subr.mxu0 0.0
    %4387 = vmatpush2.xpose.msra.mxu0 0.0
    %4388 = vmatprep.subr.mxu0 0.0
    %4389 = vmatpush2.xpose.msra.mxu0 0.0
    %4390 = vmatprep.subr.mxu0 0.0
    %4391 = vmatpush2.xpose.msra.mxu0 0.0
    %4392 = vmatprep.subr.mxu0 0.0
    %4393 = vmatpush2.xpose.msra.mxu0 0.0
    %4394 = vmatprep.subr.mxu0 0.0
    %4395 = vmatpush2.xpose.msra.mxu0 0.0
    %4396 = vmatprep.subr.mxu0 0.0
    %4397 = vmatpush2.xpose.msra.mxu0 0.0
    %4398 = vmatprep.mubr.f32.mxu0 0.0
    %4399 = vmatmul.mubr.f32.gmra.mxu0 %v3652
    %v4400 = vpop.f32.mrf.mxu0
    %v4401 = vadd.f32 %v4142, %v4400
    %v4402 = vpop.f32.mrf.mxu0
    %4403 = vmatprep.mubr.f32.mxu0 0.0
    %4404 = vmatmul.mubr.f32.gmra.mxu0 %v3654
    %v4405 = vpop.f32.mrf.mxu0
    %v4406 = vadd.f32 %v4147, %v4405
    %v4407 = vpop.f32.mrf.mxu0
    %4408 = vdwg.mxu0
    %4409 = vrot.lane.b32.xlu0 %v3609, 64
    %v4410 = vpop.permute.xlu0 %4409
    %4411 = vrot.lane.b32.xlu0 %v3611, 64
    %v4412 = vpop.permute.xlu0 %4411
    %v4413 = vsel %vm1108, %v4410, 0
    %v4415 = vsel %vm1108, %v4412, 0
    %4417 = vmatprep.subr.mxu0 0.0
    %4418 = vmatpush1.xpose.msra.mxu0 0.0
    %4419 = vmatprep.subr.mxu0 0.0
    %4420 = vmatpush1.xpose.msra.mxu0 0.0
    %4421 = vmatprep.subr.mxu0 0.0
    %4422 = vmatpush1.xpose.msra.mxu0 0.0
    %4423 = vmatprep.subr.mxu0 0.0
    %4424 = vmatpush1.xpose.msra.mxu0 0.0
    %4425 = vmatprep.subr.mxu0 0.0
    %4426 = vmatpush1.xpose.msra.mxu0 0.0
    %4427 = vmatprep.subr.mxu0 0.0
    %4428 = vmatpush1.xpose.msra.mxu0 0.0
    %4429 = vmatprep.subr.mxu0 0.0
    %4430 = vmatpush1.xpose.msra.mxu0 0.0
    %4431 = vmatprep.subr.mxu0 0.0
    %4432 = vmatpush1.xpose.msra.mxu0 0.0
    %4433 = vmatprep.subr.mxu0 0.0
    %4434 = vmatpush1.xpose.msra.mxu0 0.0
    %4435 = vmatprep.subr.mxu0 0.0
    %4436 = vmatpush1.xpose.msra.mxu0 0.0
    %4437 = vmatprep.subr.mxu0 0.0
    %4438 = vmatpush1.xpose.msra.mxu0 0.0
    %4439 = vmatprep.subr.mxu0 0.0
    %4440 = vmatpush1.xpose.msra.mxu0 0.0
    %4441 = vmatprep.subr.mxu0 0.0
    %4442 = vmatpush1.xpose.msra.mxu0 0.0
    %4443 = vmatprep.subr.mxu0 0.0
    %4444 = vmatpush1.xpose.msra.mxu0 0.0
    %4445 = vmatprep.subr.mxu0 0.0
    %4446 = vmatpush1.xpose.msra.mxu0 %v4415
    %4447 = vmatprep.subr.mxu0 0.0
    %4448 = vmatpush1.xpose.msra.mxu0 %v4413
    %4449 = vmatprep.subr.mxu0 0.0
    %4450 = vmatpush2.xpose.msra.mxu0 0.0
    %4451 = vmatprep.subr.mxu0 0.0
    %4452 = vmatpush2.xpose.msra.mxu0 0.0
    %4453 = vmatprep.subr.mxu0 0.0
    %4454 = vmatpush2.xpose.msra.mxu0 0.0
    %4455 = vmatprep.subr.mxu0 0.0
    %4456 = vmatpush2.xpose.msra.mxu0 0.0
    %4457 = vmatprep.subr.mxu0 0.0
    %4458 = vmatpush2.xpose.msra.mxu0 0.0
    %4459 = vmatprep.subr.mxu0 0.0
    %4460 = vmatpush2.xpose.msra.mxu0 0.0
    %4461 = vmatprep.subr.mxu0 0.0
    %4462 = vmatpush2.xpose.msra.mxu0 0.0
    %4463 = vmatprep.subr.mxu0 0.0
    %4464 = vmatpush2.xpose.msra.mxu0 0.0
    %4465 = vmatprep.subr.mxu0 0.0
    %4466 = vmatpush2.xpose.msra.mxu0 0.0
    %4467 = vmatprep.subr.mxu0 0.0
    %4468 = vmatpush2.xpose.msra.mxu0 0.0
    %4469 = vmatprep.subr.mxu0 0.0
    %4470 = vmatpush2.xpose.msra.mxu0 0.0
    %4471 = vmatprep.subr.mxu0 0.0
    %4472 = vmatpush2.xpose.msra.mxu0 0.0
    %4473 = vmatprep.subr.mxu0 0.0
    %4474 = vmatpush2.xpose.msra.mxu0 0.0
    %4475 = vmatprep.subr.mxu0 0.0
    %4476 = vmatpush2.xpose.msra.mxu0 0.0
    %4477 = vmatprep.subr.mxu0 0.0
    %4478 = vmatpush2.xpose.msra.mxu0 0.0
    %4479 = vmatprep.subr.mxu0 0.0
    %4480 = vmatpush2.xpose.msra.mxu0 0.0
    %4481 = vmatprep.mubr.f32.mxu0 0.0
    %4482 = vmatmul.mubr.f32.gmra.mxu0 %v3656
    %v4483 = vpop.f32.mrf.mxu0
    %v4484 = vadd.f32 %v4152, %v4483
    %v4485 = vpop.f32.mrf.mxu0
    %4486 = vmatprep.mubr.f32.mxu0 0.0
    %4487 = vmatmul.mubr.f32.gmra.mxu0 %v3658
    %v4488 = vpop.f32.mrf.mxu0
    %v4489 = vadd.f32 %v4157, %v4488
    %v4490 = vpop.f32.mrf.mxu0
    %4491 = vdwg.mxu0
    %v4492 = vadd.f32 %v4235, %v75
    %v4493 = vadd.f32 %v4240, %v76
    %v4494 = vadd.f32 %v4318, %v75
    %v4495 = vadd.f32 %v4323, %v76
    %v4496 = vadd.f32 %v4401, %v92
    %v4497 = vadd.f32 %v4406, %v93
    %v4498 = vadd.f32 %v4484, %v92
    %v4499 = vadd.f32 %v4489, %v93
    %v4500 = vsel %vm1965, %v4492, -inf
    %4501 = vmax.xlane.f32.xlu0 %v4500
    %v4502 = vpop.xlane.xlu0 %4501
    %v4503 = vsel %vm1965, %v4493, -inf
    %4504 = vmax.xlane.f32.xlu0 %v4503
    %v4505 = vpop.xlane.xlu0 %4504
    %v4506 = vsel %vm1965, %v4494, -inf
    %4507 = vmax.xlane.f32.xlu0 %v4506
    %v4508 = vpop.xlane.xlu0 %4507
    %v4509 = vsel %vm1965, %v4495, -inf
    %4510 = vmax.xlane.f32.xlu0 %v4509
    %v4511 = vpop.xlane.xlu0 %4510
    %v4512 = vsel %vm1965, %v4496, -inf
    %4513 = vmax.xlane.f32.xlu0 %v4512
    %v4514 = vpop.xlane.xlu0 %4513
    %v4515 = vsel %vm1965, %v4497, -inf
    %4516 = vmax.xlane.f32.xlu0 %v4515
    %v4517 = vpop.xlane.xlu0 %4516
    %v4518 = vsel %vm1965, %v4498, -inf
    %4519 = vmax.xlane.f32.xlu0 %v4518
    %v4520 = vpop.xlane.xlu0 %4519
    %v4521 = vsel %vm1965, %v4499, -inf
    %4522 = vmax.xlane.f32.xlu0 %v4521
    %v4523 = vpop.xlane.xlu0 %4522
    %v4524 = vsub.f32 %v4492, %v4502
    %v4525 = vsub.f32 %v4493, %v4505
    %v4526 = vsub.f32 %v4494, %v4508
    %v4527 = vsub.f32 %v4495, %v4511
    %v4528 = vsub.f32 %v4496, %v4514
    %v4529 = vsub.f32 %v4497, %v4517
    %v4530 = vsub.f32 %v4498, %v4520
    %v4531 = vsub.f32 %v4499, %v4523
    %v4532 = vmul.f32 %v4524, 1.442695
    %v4533 = vpow.pop %v4532
    %v4534 = vmul.f32 %v4525, 1.442695
    %v4535 = vpow.pop %v4534
    %v4536 = vmul.f32 %v4526, 1.442695
    %v4537 = vpow.pop %v4536
    %v4538 = vmul.f32 %v4527, 1.442695
    %v4539 = vpow.pop %v4538
    %v4540 = vmul.f32 %v4528, 1.442695
    %v4541 = vpow.pop %v4540
    %v4542 = vmul.f32 %v4529, 1.442695
    %v4543 = vpow.pop %v4542
    %v4544 = vmul.f32 %v4530, 1.442695
    %v4545 = vpow.pop %v4544
    %v4546 = vmul.f32 %v4531, 1.442695
    %v4547 = vpow.pop %v4546
    %v4548 = vsel %vm1965, %v4533, 0.0
    %4549 = vadd.xlane.f32.xlu0 %v4548
    %v4550 = vpop.xlane.xlu0 %4549
    %v4551 = vsel %vm1965, %v4535, 0.0
    %4552 = vadd.xlane.f32.xlu0 %v4551
    %v4553 = vpop.xlane.xlu0 %4552
    %v4554 = vsel %vm1965, %v4537, 0.0
    %4555 = vadd.xlane.f32.xlu0 %v4554
    %v4556 = vpop.xlane.xlu0 %4555
    %v4557 = vsel %vm1965, %v4539, 0.0
    %4558 = vadd.xlane.f32.xlu0 %v4557
    %v4559 = vpop.xlane.xlu0 %4558
    %v4560 = vsel %vm1965, %v4541, 0.0
    %4561 = vadd.xlane.f32.xlu0 %v4560
    %v4562 = vpop.xlane.xlu0 %4561
    %v4563 = vsel %vm1965, %v4543, 0.0
    %4564 = vadd.xlane.f32.xlu0 %v4563
    %v4565 = vpop.xlane.xlu0 %4564
    %v4566 = vsel %vm1965, %v4545, 0.0
    %4567 = vadd.xlane.f32.xlu0 %v4566
    %v4568 = vpop.xlane.xlu0 %4567
    %v4569 = vsel %vm1965, %v4547, 0.0
    %4570 = vadd.xlane.f32.xlu0 %v4569
    %v4571 = vpop.xlane.xlu0 %4570
    %v4572 = vrcp.pop %v4550
    %v4573 = vrcp.pop %v4553
    %v4574 = vrcp.pop %v4556
    %v4575 = vrcp.pop %v4559
    %v4576 = vrcp.pop %v4562
    %v4577 = vrcp.pop %v4565
    %v4578 = vrcp.pop %v4568
    %v4579 = vrcp.pop %v4571
    %v4580 = vmul.f32 %v4533, %v4572
    %v4581 = vmul.f32 %v4535, %v4573
    %v4582 = vmul.f32 %v4537, %v4574
    %v4583 = vmul.f32 %v4539, %v4575
    %v4584 = vmul.f32 %v4541, %v4576
    %v4585 = vmul.f32 %v4543, %v4577
    %v4586 = vmul.f32 %v4545, %v4578
    %v4587 = vmul.f32 %v4547, %v4579
    %v4589 = vsel %vm1965, %v4580, 0
    %v4592 = vsel %vm1965, %v4581, 0
    %4594 = vmatprep.subr.mxu0 0.0
    %4595 = vmatpush1.msra.mxu0 0.0
    %4596 = vmatprep.subr.mxu0 0.0
    %4597 = vmatpush1.msra.mxu0 0.0
    %4598 = vmatprep.subr.mxu0 0.0
    %4599 = vmatpush1.msra.mxu0 0.0
    %4600 = vmatprep.subr.mxu0 0.0
    %4601 = vmatpush1.msra.mxu0 0.0
    %4602 = vmatprep.subr.mxu0 0.0
    %4603 = vmatpush1.msra.mxu0 0.0
    %4604 = vmatprep.subr.mxu0 0.0
    %4605 = vmatpush1.msra.mxu0 0.0
    %4606 = vmatprep.subr.mxu0 0.0
    %4607 = vmatpush1.msra.mxu0 0.0
    %4608 = vmatprep.subr.mxu0 0.0
    %4609 = vmatpush1.msra.mxu0 0.0
    %4610 = vmatprep.subr.mxu0 0.0
    %4611 = vmatpush1.msra.mxu0 0.0
    %4612 = vmatprep.subr.mxu0 0.0
    %4613 = vmatpush1.msra.mxu0 0.0
    %4614 = vmatprep.subr.mxu0 0.0
    %4615 = vmatpush1.msra.mxu0 0.0
    %4616 = vmatprep.subr.mxu0 0.0
    %4617 = vmatpush1.msra.mxu0 0.0
    %4618 = vmatprep.subr.mxu0 0.0
    %4619 = vmatpush1.msra.mxu0 0.0
    %4620 = vmatprep.subr.mxu0 0.0
    %4621 = vmatpush1.msra.mxu0 0.0
    %4622 = vmatprep.subr.mxu0 0.0
    %4623 = vmatpush1.msra.mxu0 %v3586
    %4624 = vmatprep.subr.mxu0 0.0
    %4625 = vmatpush1.msra.mxu0 %v3580
    %4626 = vmatprep.subr.mxu0 0.0
    %4627 = vmatpush2.msra.mxu0 0.0
    %4628 = vmatprep.subr.mxu0 0.0
    %4629 = vmatpush2.msra.mxu0 0.0
    %4630 = vmatprep.subr.mxu0 0.0
    %4631 = vmatpush2.msra.mxu0 0.0
    %4632 = vmatprep.subr.mxu0 0.0
    %4633 = vmatpush2.msra.mxu0 0.0
    %4634 = vmatprep.subr.mxu0 0.0
    %4635 = vmatpush2.msra.mxu0 0.0
    %4636 = vmatprep.subr.mxu0 0.0
    %4637 = vmatpush2.msra.mxu0 0.0
    %4638 = vmatprep.subr.mxu0 0.0
    %4639 = vmatpush2.msra.mxu0 0.0
    %4640 = vmatprep.subr.mxu0 0.0
    %4641 = vmatpush2.msra.mxu0 0.0
    %4642 = vmatprep.subr.mxu0 0.0
    %4643 = vmatpush2.msra.mxu0 0.0
    %4644 = vmatprep.subr.mxu0 0.0
    %4645 = vmatpush2.msra.mxu0 0.0
    %4646 = vmatprep.subr.mxu0 0.0
    %4647 = vmatpush2.msra.mxu0 0.0
    %4648 = vmatprep.subr.mxu0 0.0
    %4649 = vmatpush2.msra.mxu0 0.0
    %4650 = vmatprep.subr.mxu0 0.0
    %4651 = vmatpush2.msra.mxu0 0.0
    %4652 = vmatprep.subr.mxu0 0.0
    %4653 = vmatpush2.msra.mxu0 0.0
    %4654 = vmatprep.subr.mxu0 0.0
    %4655 = vmatpush2.msra.mxu0 0.0
    %4656 = vmatprep.subr.mxu0 0.0
    %4657 = vmatpush2.msra.mxu0 0.0
    %4658 = vmatprep.mubr.f32.mxu0 0.0
    %4659 = vmatmul.mubr.f32.gmra.mxu0 %v4589
    %v4660 = vpop.f32.mrf.mxu0
    %v4661 = vadd.f32 0.0, %v4660
    %v4662 = vpop.f32.mrf.mxu0
    %4663 = vmatprep.mubr.f32.mxu0 0.0
    %4664 = vmatmul.mubr.f32.gmra.mxu0 %v4592
    %v4665 = vpop.f32.mrf.mxu0
    %v4666 = vadd.f32 0.0, %v4665
    %v4667 = vpop.f32.mrf.mxu0
    %4668 = vdwg.mxu0
    %v4670 = vsel %vm1965, %v4582, 0
    %v4673 = vsel %vm1965, %v4583, 0
    %4675 = vmatprep.subr.mxu0 0.0
    %4676 = vmatpush1.msra.mxu0 0.0
    %4677 = vmatprep.subr.mxu0 0.0
    %4678 = vmatpush1.msra.mxu0 0.0
    %4679 = vmatprep.subr.mxu0 0.0
    %4680 = vmatpush1.msra.mxu0 0.0
    %4681 = vmatprep.subr.mxu0 0.0
    %4682 = vmatpush1.msra.mxu0 0.0
    %4683 = vmatprep.subr.mxu0 0.0
    %4684 = vmatpush1.msra.mxu0 0.0
    %4685 = vmatprep.subr.mxu0 0.0
    %4686 = vmatpush1.msra.mxu0 0.0
    %4687 = vmatprep.subr.mxu0 0.0
    %4688 = vmatpush1.msra.mxu0 0.0
    %4689 = vmatprep.subr.mxu0 0.0
    %4690 = vmatpush1.msra.mxu0 0.0
    %4691 = vmatprep.subr.mxu0 0.0
    %4692 = vmatpush1.msra.mxu0 0.0
    %4693 = vmatprep.subr.mxu0 0.0
    %4694 = vmatpush1.msra.mxu0 0.0
    %4695 = vmatprep.subr.mxu0 0.0
    %4696 = vmatpush1.msra.mxu0 0.0
    %4697 = vmatprep.subr.mxu0 0.0
    %4698 = vmatpush1.msra.mxu0 0.0
    %4699 = vmatprep.subr.mxu0 0.0
    %4700 = vmatpush1.msra.mxu0 0.0
    %4701 = vmatprep.subr.mxu0 0.0
    %4702 = vmatpush1.msra.mxu0 0.0
    %4703 = vmatprep.subr.mxu0 0.0
    %4704 = vmatpush1.msra.mxu0 %v3617
    %4705 = vmatprep.subr.mxu0 0.0
    %4706 = vmatpush1.msra.mxu0 %v3615
    %4707 = vmatprep.subr.mxu0 0.0
    %4708 = vmatpush2.msra.mxu0 0.0
    %4709 = vmatprep.subr.mxu0 0.0
    %4710 = vmatpush2.msra.mxu0 0.0
    %4711 = vmatprep.subr.mxu0 0.0
    %4712 = vmatpush2.msra.mxu0 0.0
    %4713 = vmatprep.subr.mxu0 0.0
    %4714 = vmatpush2.msra.mxu0 0.0
    %4715 = vmatprep.subr.mxu0 0.0
    %4716 = vmatpush2.msra.mxu0 0.0
    %4717 = vmatprep.subr.mxu0 0.0
    %4718 = vmatpush2.msra.mxu0 0.0
    %4719 = vmatprep.subr.mxu0 0.0
    %4720 = vmatpush2.msra.mxu0 0.0
    %4721 = vmatprep.subr.mxu0 0.0
    %4722 = vmatpush2.msra.mxu0 0.0
    %4723 = vmatprep.subr.mxu0 0.0
    %4724 = vmatpush2.msra.mxu0 0.0
    %4725 = vmatprep.subr.mxu0 0.0
    %4726 = vmatpush2.msra.mxu0 0.0
    %4727 = vmatprep.subr.mxu0 0.0
    %4728 = vmatpush2.msra.mxu0 0.0
    %4729 = vmatprep.subr.mxu0 0.0
    %4730 = vmatpush2.msra.mxu0 0.0
    %4731 = vmatprep.subr.mxu0 0.0
    %4732 = vmatpush2.msra.mxu0 0.0
    %4733 = vmatprep.subr.mxu0 0.0
    %4734 = vmatpush2.msra.mxu0 0.0
    %4735 = vmatprep.subr.mxu0 0.0
    %4736 = vmatpush2.msra.mxu0 0.0
    %4737 = vmatprep.subr.mxu0 0.0
    %4738 = vmatpush2.msra.mxu0 0.0
    %4739 = vmatprep.mubr.f32.mxu0 0.0
    %4740 = vmatmul.mubr.f32.gmra.mxu0 %v4670
    %v4741 = vpop.f32.mrf.mxu0
    %v4742 = vadd.f32 0.0, %v4741
    %v4743 = vpop.f32.mrf.mxu0
    %4744 = vmatprep.mubr.f32.mxu0 0.0
    %4745 = vmatmul.mubr.f32.gmra.mxu0 %v4673
    %v4746 = vpop.f32.mrf.mxu0
    %v4747 = vadd.f32 0.0, %v4746
    %v4748 = vpop.f32.mrf.mxu0
    %4749 = vdwg.mxu0
    %v4751 = vsel %vm1965, %v4584, 0
    %v4754 = vsel %vm1965, %v4585, 0
    %4756 = vmatprep.subr.mxu0 0.0
    %4757 = vmatpush1.msra.mxu0 0.0
    %4758 = vmatprep.subr.mxu0 0.0
    %4759 = vmatpush1.msra.mxu0 0.0
    %4760 = vmatprep.subr.mxu0 0.0
    %4761 = vmatpush1.msra.mxu0 0.0
    %4762 = vmatprep.subr.mxu0 0.0
    %4763 = vmatpush1.msra.mxu0 0.0
    %4764 = vmatprep.subr.mxu0 0.0
    %4765 = vmatpush1.msra.mxu0 0.0
    %4766 = vmatprep.subr.mxu0 0.0
    %4767 = vmatpush1.msra.mxu0 0.0
    %4768 = vmatprep.subr.mxu0 0.0
    %4769 = vmatpush1.msra.mxu0 0.0
    %4770 = vmatprep.subr.mxu0 0.0
    %4771 = vmatpush1.msra.mxu0 0.0
    %4772 = vmatprep.subr.mxu0 0.0
    %4773 = vmatpush1.msra.mxu0 0.0
    %4774 = vmatprep.subr.mxu0 0.0
    %4775 = vmatpush1.msra.mxu0 0.0
    %4776 = vmatprep.subr.mxu0 0.0
    %4777 = vmatpush1.msra.mxu0 0.0
    %4778 = vmatprep.subr.mxu0 0.0
    %4779 = vmatpush1.msra.mxu0 0.0
    %4780 = vmatprep.subr.mxu0 0.0
    %4781 = vmatpush1.msra.mxu0 0.0
    %4782 = vmatprep.subr.mxu0 0.0
    %4783 = vmatpush1.msra.mxu0 0.0
    %4784 = vmatprep.subr.mxu0 0.0
    %4785 = vmatpush1.msra.mxu0 %v3598
    %4786 = vmatprep.subr.mxu0 0.0
    %4787 = vmatpush1.msra.mxu0 %v3592
    %4788 = vmatprep.subr.mxu0 0.0
    %4789 = vmatpush2.msra.mxu0 0.0
    %4790 = vmatprep.subr.mxu0 0.0
    %4791 = vmatpush2.msra.mxu0 0.0
    %4792 = vmatprep.subr.mxu0 0.0
    %4793 = vmatpush2.msra.mxu0 0.0
    %4794 = vmatprep.subr.mxu0 0.0
    %4795 = vmatpush2.msra.mxu0 0.0
    %4796 = vmatprep.subr.mxu0 0.0
    %4797 = vmatpush2.msra.mxu0 0.0
    %4798 = vmatprep.subr.mxu0 0.0
    %4799 = vmatpush2.msra.mxu0 0.0
    %4800 = vmatprep.subr.mxu0 0.0
    %4801 = vmatpush2.msra.mxu0 0.0
    %4802 = vmatprep.subr.mxu0 0.0
    %4803 = vmatpush2.msra.mxu0 0.0
    %4804 = vmatprep.subr.mxu0 0.0
    %4805 = vmatpush2.msra.mxu0 0.0
    %4806 = vmatprep.subr.mxu0 0.0
    %4807 = vmatpush2.msra.mxu0 0.0
    %4808 = vmatprep.subr.mxu0 0.0
    %4809 = vmatpush2.msra.mxu0 0.0
    %4810 = vmatprep.subr.mxu0 0.0
    %4811 = vmatpush2.msra.mxu0 0.0
    %4812 = vmatprep.subr.mxu0 0.0
    %4813 = vmatpush2.msra.mxu0 0.0
    %4814 = vmatprep.subr.mxu0 0.0
    %4815 = vmatpush2.msra.mxu0 0.0
    %4816 = vmatprep.subr.mxu0 0.0
    %4817 = vmatpush2.msra.mxu0 0.0
    %4818 = vmatprep.subr.mxu0 0.0
    %4819 = vmatpush2.msra.mxu0 0.0
    %4820 = vmatprep.mubr.f32.mxu0 0.0
    %4821 = vmatmul.mubr.f32.gmra.mxu0 %v4751
    %v4822 = vpop.f32.mrf.mxu0
    %v4823 = vadd.f32 0.0, %v4822
    %v4824 = vpop.f32.mrf.mxu0
    %4825 = vmatprep.mubr.f32.mxu0 0.0
    %4826 = vmatmul.mubr.f32.gmra.mxu0 %v4754
    %v4827 = vpop.f32.mrf.mxu0
    %v4828 = vadd.f32 0.0, %v4827
    %v4829 = vpop.f32.mrf.mxu0
    %4830 = vdwg.mxu0
    %v4832 = vsel %vm1965, %v4586, 0
    %v4835 = vsel %vm1965, %v4587, 0
    %4837 = vmatprep.subr.mxu0 0.0
    %4838 = vmatpush1.msra.mxu0 0.0
    %4839 = vmatprep.subr.mxu0 0.0
    %4840 = vmatpush1.msra.mxu0 0.0
    %4841 = vmatprep.subr.mxu0 0.0
    %4842 = vmatpush1.msra.mxu0 0.0
    %4843 = vmatprep.subr.mxu0 0.0
    %4844 = vmatpush1.msra.mxu0 0.0
    %4845 = vmatprep.subr.mxu0 0.0
    %4846 = vmatpush1.msra.mxu0 0.0
    %4847 = vmatprep.subr.mxu0 0.0
    %4848 = vmatpush1.msra.mxu0 0.0
    %4849 = vmatprep.subr.mxu0 0.0
    %4850 = vmatpush1.msra.mxu0 0.0
    %4851 = vmatprep.subr.mxu0 0.0
    %4852 = vmatpush1.msra.mxu0 0.0
    %4853 = vmatprep.subr.mxu0 0.0
    %4854 = vmatpush1.msra.mxu0 0.0
    %4855 = vmatprep.subr.mxu0 0.0
    %4856 = vmatpush1.msra.mxu0 0.0
    %4857 = vmatprep.subr.mxu0 0.0
    %4858 = vmatpush1.msra.mxu0 0.0
    %4859 = vmatprep.subr.mxu0 0.0
    %4860 = vmatpush1.msra.mxu0 0.0
    %4861 = vmatprep.subr.mxu0 0.0
    %4862 = vmatpush1.msra.mxu0 0.0
    %4863 = vmatprep.subr.mxu0 0.0
    %4864 = vmatpush1.msra.mxu0 0.0
    %4865 = vmatprep.subr.mxu0 0.0
    %4866 = vmatpush1.msra.mxu0 %v3625
    %4867 = vmatprep.subr.mxu0 0.0
    %4868 = vmatpush1.msra.mxu0 %v3623
    %4869 = vmatprep.subr.mxu0 0.0
    %4870 = vmatpush2.msra.mxu0 0.0
    %4871 = vmatprep.subr.mxu0 0.0
    %4872 = vmatpush2.msra.mxu0 0.0
    %4873 = vmatprep.subr.mxu0 0.0
    %4874 = vmatpush2.msra.mxu0 0.0
    %4875 = vmatprep.subr.mxu0 0.0
    %4876 = vmatpush2.msra.mxu0 0.0
    %4877 = vmatprep.subr.mxu0 0.0
    %4878 = vmatpush2.msra.mxu0 0.0
    %4879 = vmatprep.subr.mxu0 0.0
    %4880 = vmatpush2.msra.mxu0 0.0
    %4881 = vmatprep.subr.mxu0 0.0
    %4882 = vmatpush2.msra.mxu0 0.0
    %4883 = vmatprep.subr.mxu0 0.0
    %4884 = vmatpush2.msra.mxu0 0.0
    %4885 = vmatprep.subr.mxu0 0.0
    %4886 = vmatpush2.msra.mxu0 0.0
    %4887 = vmatprep.subr.mxu0 0.0
    %4888 = vmatpush2.msra.mxu0 0.0
    %4889 = vmatprep.subr.mxu0 0.0
    %4890 = vmatpush2.msra.mxu0 0.0
    %4891 = vmatprep.subr.mxu0 0.0
    %4892 = vmatpush2.msra.mxu0 0.0
    %4893 = vmatprep.subr.mxu0 0.0
    %4894 = vmatpush2.msra.mxu0 0.0
    %4895 = vmatprep.subr.mxu0 0.0
    %4896 = vmatpush2.msra.mxu0 0.0
    %4897 = vmatprep.subr.mxu0 0.0
    %4898 = vmatpush2.msra.mxu0 0.0
    %4899 = vmatprep.subr.mxu0 0.0
    %4900 = vmatpush2.msra.mxu0 0.0
    %4901 = vmatprep.mubr.f32.mxu0 0.0
    %4902 = vmatmul.mubr.f32.gmra.mxu0 %v4832
    %v4903 = vpop.f32.mrf.mxu0
    %v4904 = vadd.f32 0.0, %v4903
    %v4905 = vpop.f32.mrf.mxu0
    %4906 = vmatprep.mubr.f32.mxu0 0.0
    %4907 = vmatmul.mubr.f32.gmra.mxu0 %v4835
    %v4908 = vpop.f32.mrf.mxu0
    %v4909 = vadd.f32 0.0, %v4908
    %v4910 = vpop.f32.mrf.mxu0
    %4911 = vdwg.mxu0
    %v4912 = vld [vmem:[%s5] sm:$0xff]
    %v4913 = vld [vmem:[%s5 + $0x8] sm:$0xff]
    %v4914 = vld [vmem:[%s5 + $0x10] sm:$0xff]
    %v4915 = vld [vmem:[%s5 + $0x18] sm:$0xff]
    %4916 = vmatprep.subr.mxu0 0.0
    %4917 = vmatpush1.msra.mxu0 0.0
    %4918 = vmatprep.subr.mxu0 0.0
    %4919 = vmatpush1.msra.mxu0 0.0
    %4920 = vmatprep.subr.mxu0 0.0
    %4921 = vmatpush1.msra.mxu0 0.0
    %4922 = vmatprep.subr.mxu0 0.0
    %4923 = vmatpush1.msra.mxu0 0.0
    %4924 = vmatprep.subr.mxu0 0.0
    %4925 = vmatpush1.msra.mxu0 0.0
    %4926 = vmatprep.subr.mxu0 0.0
    %4927 = vmatpush1.msra.mxu0 0.0
    %4928 = vmatprep.subr.mxu0 0.0
    %4929 = vmatpush1.msra.mxu0 0.0
    %4930 = vmatprep.subr.mxu0 0.0
    %4931 = vmatpush1.msra.mxu0 0.0
    %4932 = vmatprep.subr.mxu0 0.0
    %4933 = vmatpush1.msra.mxu0 0.0
    %4934 = vmatprep.subr.mxu0 0.0
    %4935 = vmatpush1.msra.mxu0 0.0
    %4936 = vmatprep.subr.mxu0 0.0
    %4937 = vmatpush1.msra.mxu0 0.0
    %4938 = vmatprep.subr.mxu0 0.0
    %4939 = vmatpush1.msra.mxu0 0.0
    %4940 = vmatprep.subr.mxu0 0.0
    %4941 = vmatpush1.msra.mxu0 0.0
    %4942 = vmatprep.subr.mxu0 0.0
    %4943 = vmatpush1.msra.mxu0 0.0
    %4944 = vmatprep.subr.mxu0 %v4915
    %4945 = vmatpush1.msra.mxu0 %v4914
    %4946 = vmatprep.subr.mxu0 %v4913
    %4947 = vmatpush1.msra.mxu0 %v4912
    %4948 = vmatprep.subr.mxu0 0.0
    %4949 = vmatpush2.msra.mxu0 0.0
    %4950 = vmatprep.subr.mxu0 0.0
    %4951 = vmatpush2.msra.mxu0 0.0
    %4952 = vmatprep.subr.mxu0 0.0
    %4953 = vmatpush2.msra.mxu0 0.0
    %4954 = vmatprep.subr.mxu0 0.0
    %4955 = vmatpush2.msra.mxu0 0.0
    %4956 = vmatprep.subr.mxu0 0.0
    %4957 = vmatpush2.msra.mxu0 0.0
    %4958 = vmatprep.subr.mxu0 0.0
    %4959 = vmatpush2.msra.mxu0 0.0
    %4960 = vmatprep.subr.mxu0 0.0
    %4961 = vmatpush2.msra.mxu0 0.0
    %4962 = vmatprep.subr.mxu0 0.0
    %4963 = vmatpush2.msra.mxu0 0.0
    %4964 = vmatprep.subr.mxu0 0.0
    %4965 = vmatpush2.msra.mxu0 0.0
    %4966 = vmatprep.subr.mxu0 0.0
    %4967 = vmatpush2.msra.mxu0 0.0
    %4968 = vmatprep.subr.mxu0 0.0
    %4969 = vmatpush2.msra.mxu0 0.0
    %4970 = vmatprep.subr.mxu0 0.0
    %4971 = vmatpush2.msra.mxu0 0.0
    %4972 = vmatprep.subr.mxu0 0.0
    %4973 = vmatpush2.msra.mxu0 0.0
    %4974 = vmatprep.subr.mxu0 0.0
    %4975 = vmatpush2.msra.mxu0 0.0
    %4976 = vmatprep.subr.mxu0 0.0
    %4977 = vmatpush2.msra.mxu0 0.0
    %4978 = vmatprep.subr.mxu0 0.0
    %4979 = vmatpush2.msra.mxu0 0.0
    %4980 = vmatprep.mubr.f32.mxu0 0.0
    %4981 = vmatmul.mubr.f32.gmra.mxu0 %v4589
    %v4982 = vpop.f32.mrf.mxu0
    %v4983 = vadd.f32 0.0, %v4982
    %v4984 = vpop.f32.mrf.mxu0
    %v4985 = vadd.f32 0.0, %v4984
    %4986 = vmatprep.mubr.f32.mxu0 0.0
    %4987 = vmatmul.mubr.f32.gmra.mxu0 %v4592
    %v4988 = vpop.f32.mrf.mxu0
    %v4989 = vadd.f32 0.0, %v4988
    %v4990 = vpop.f32.mrf.mxu0
    %v4991 = vadd.f32 0.0, %v4990
    %4992 = vmatprep.mubr.f32.mxu0 0.0
    %4993 = vmatmul.mubr.f32.gmra.mxu0 %v4670
    %v4994 = vpop.f32.mrf.mxu0
    %v4995 = vadd.f32 0.0, %v4994
    %v4996 = vpop.f32.mrf.mxu0
    %v4997 = vadd.f32 0.0, %v4996
    %4998 = vmatprep.mubr.f32.mxu0 0.0
    %4999 = vmatmul.mubr.f32.gmra.mxu0 %v4673
    %v5000 = vpop.f32.mrf.mxu0
    %v5001 = vadd.f32 0.0, %v5000
    %v5002 = vpop.f32.mrf.mxu0
    %v5003 = vadd.f32 0.0, %v5002
    %5004 = vmatprep.mubr.f32.mxu0 0.0
    %5005 = vmatmul.mubr.f32.gmra.mxu0 %v4751
    %v5006 = vpop.f32.mrf.mxu0
    %v5007 = vadd.f32 0.0, %v5006
    %v5008 = vpop.f32.mrf.mxu0
    %v5009 = vadd.f32 0.0, %v5008
    %5010 = vmatprep.mubr.f32.mxu0 0.0
    %5011 = vmatmul.mubr.f32.gmra.mxu0 %v4754
    %v5012 = vpop.f32.mrf.mxu0
    %v5013 = vadd.f32 0.0, %v5012
    %v5014 = vpop.f32.mrf.mxu0
    %v5015 = vadd.f32 0.0, %v5014
    %5016 = vmatprep.mubr.f32.mxu0 0.0
    %5017 = vmatmul.mubr.f32.gmra.mxu0 %v4832
    %v5018 = vpop.f32.mrf.mxu0
    %v5019 = vadd.f32 0.0, %v5018
    %v5020 = vpop.f32.mrf.mxu0
    %v5021 = vadd.f32 0.0, %v5020
    %5022 = vmatprep.mubr.f32.mxu0 0.0
    %5023 = vmatmul.mubr.f32.gmra.mxu0 %v4835
    %v5024 = vpop.f32.mrf.mxu0
    %v5025 = vadd.f32 0.0, %v5024
    %v5026 = vpop.f32.mrf.mxu0
    %v5027 = vadd.f32 0.0, %v5026
    %5028 = vdwg.mxu0
    %v5029 = vld [vmem:[%s5 + $0x20] sm:$0xff]
    %v5030 = vld [vmem:[%s5 + $0x28] sm:$0xff]
    %v5031 = vld [vmem:[%s5 + $0x30] sm:$0xff]
    %v5032 = vld [vmem:[%s5 + $0x38] sm:$0xff]
    %v5033 = vld [vmem:[%s5 + $0x40] sm:$0xff]
    %v5034 = vld [vmem:[%s5 + $0x48] sm:$0xff]
    %v5035 = vld [vmem:[%s5 + $0x50] sm:$0xff]
    %v5036 = vld [vmem:[%s5 + $0x58] sm:$0xff]
    %v5037 = vld [vmem:[%s5 + $0x60] sm:$0xff]
    %v5038 = vld [vmem:[%s5 + $0x68] sm:$0xff]
    %v5039 = vld [vmem:[%s5 + $0x70] sm:$0xff]
    %v5040 = vld [vmem:[%s5 + $0x78] sm:$0xff]
    %v5041 = vld [vmem:[%s5 + $0x80] sm:$0xff]
    %v5042 = vld [vmem:[%s5 + $0x88] sm:$0xff]
    %v5043 = vld [vmem:[%s5 + $0x90] sm:$0xff]
    %v5044 = vld [vmem:[%s5 + $0x98] sm:$0xff]
    %v5045 = vmul.f32 %v4983, %v5029
    %v5046 = vmul.f32 %v4985, %v5030
    %v5047 = vmul.f32 %v4989, %v5031
    %v5048 = vmul.f32 %v4991, %v5032
    %v5049 = vmul.f32 %v4995, %v5033
    %v5050 = vmul.f32 %v4997, %v5034
    %v5051 = vmul.f32 %v5001, %v5035
    %v5052 = vmul.f32 %v5003, %v5036
    %v5053 = vmul.f32 %v5007, %v5037
    %v5054 = vmul.f32 %v5009, %v5038
    %v5055 = vmul.f32 %v5013, %v5039
    %v5056 = vmul.f32 %v5015, %v5040
    %v5057 = vmul.f32 %v5019, %v5041
    %v5058 = vmul.f32 %v5021, %v5042
    %v5059 = vmul.f32 %v5025, %v5043
    %v5060 = vmul.f32 %v5027, %v5044
    %5061 = vmatprep.subr.mxu0 0.0
    %5062 = vmatpush1.msra.mxu0 %v3395
    %5063 = vmatprep.subr.mxu0 0.0
    %5064 = vmatpush1.msra.mxu0 %v3394
    %5065 = vmatprep.subr.mxu0 0.0
    %5066 = vmatpush1.msra.mxu0 %v3393
    %5067 = vmatprep.subr.mxu0 0.0
    %5068 = vmatpush1.msra.mxu0 %v3392
    %5069 = vmatprep.subr.mxu0 0.0
    %5070 = vmatpush1.msra.mxu0 %v3391
    %5071 = vmatprep.subr.mxu0 0.0
    %5072 = vmatpush1.msra.mxu0 %v3390
    %5073 = vmatprep.subr.mxu0 0.0
    %5074 = vmatpush1.msra.mxu0 %v3389
    %5075 = vmatprep.subr.mxu0 0.0
    %5076 = vmatpush1.msra.mxu0 %v3388
    %5077 = vmatprep.subr.mxu0 0.0
    %5078 = vmatpush1.msra.mxu0 %v3387
    %5079 = vmatprep.subr.mxu0 0.0
    %5080 = vmatpush1.msra.mxu0 %v3386
    %5081 = vmatprep.subr.mxu0 0.0
    %5082 = vmatpush1.msra.mxu0 %v3385
    %5083 = vmatprep.subr.mxu0 0.0
    %5084 = vmatpush1.msra.mxu0 %v3384
    %5085 = vmatprep.subr.mxu0 0.0
    %5086 = vmatpush1.msra.mxu0 %v3383
    %5087 = vmatprep.subr.mxu0 0.0
    %5088 = vmatpush1.msra.mxu0 %v3382
    %5089 = vmatprep.subr.mxu0 0.0
    %5090 = vmatpush1.msra.mxu0 %v3381
    %5091 = vmatprep.subr.mxu0 0.0
    %5092 = vmatpush1.msra.mxu0 %v3380
    %5093 = vmatprep.subr.mxu0 0.0
    %5094 = vmatpush2.msra.mxu0 %v3411
    %5095 = vmatprep.subr.mxu0 0.0
    %5096 = vmatpush2.msra.mxu0 %v3410
    %5097 = vmatprep.subr.mxu0 0.0
    %5098 = vmatpush2.msra.mxu0 %v3409
    %5099 = vmatprep.subr.mxu0 0.0
    %5100 = vmatpush2.msra.mxu0 %v3408
    %5101 = vmatprep.subr.mxu0 0.0
    %5102 = vmatpush2.msra.mxu0 %v3407
    %5103 = vmatprep.subr.mxu0 0.0
    %5104 = vmatpush2.msra.mxu0 %v3406
    %5105 = vmatprep.subr.mxu0 0.0
    %5106 = vmatpush2.msra.mxu0 %v3405
    %5107 = vmatprep.subr.mxu0 0.0
    %5108 = vmatpush2.msra.mxu0 %v3404
    %5109 = vmatprep.subr.mxu0 0.0
    %5110 = vmatpush2.msra.mxu0 %v3403
    %5111 = vmatprep.subr.mxu0 0.0
    %5112 = vmatpush2.msra.mxu0 %v3402
    %5113 = vmatprep.subr.mxu0 0.0
    %5114 = vmatpush2.msra.mxu0 %v3401
    %5115 = vmatprep.subr.mxu0 0.0
    %5116 = vmatpush2.msra.mxu0 %v3400
    %5117 = vmatprep.subr.mxu0 0.0
    %5118 = vmatpush2.msra.mxu0 %v3399
    %5119 = vmatprep.subr.mxu0 0.0
    %5120 = vmatpush2.msra.mxu0 %v3398
    %5121 = vmatprep.subr.mxu0 0.0
    %5122 = vmatpush2.msra.mxu0 %v3397
    %5123 = vmatprep.subr.mxu0 0.0
    %5124 = vmatpush2.msra.mxu0 %v3396
    %5125 = vmatprep.mubr.f32.mxu0 %v5046
    %5126 = vmatmul.mubr.f32.gmra.mxu0 %v5045
    %v5127 = vpop.f32.mrf.mxu0
    %v5128 = vadd.f32 0.0, %v5127
    %v5129 = vpop.f32.mrf.mxu0
    %5130 = vmatprep.mubr.f32.mxu0 %v5048
    %5131 = vmatmul.mubr.f32.gmra.mxu0 %v5047
    %v5132 = vpop.f32.mrf.mxu0
    %v5133 = vadd.f32 0.0, %v5132
    %v5134 = vpop.f32.mrf.mxu0
    %5135 = vmatprep.mubr.f32.mxu0 %v5050
    %5136 = vmatmul.mubr.f32.gmra.mxu0 %v5049
    %v5137 = vpop.f32.mrf.mxu0
    %v5138 = vadd.f32 0.0, %v5137
    %v5139 = vpop.f32.mrf.mxu0
    %5140 = vmatprep.mubr.f32.mxu0 %v5052
    %5141 = vmatmul.mubr.f32.gmra.mxu0 %v5051
    %v5142 = vpop.f32.mrf.mxu0
    %v5143 = vadd.f32 0.0, %v5142
    %v5144 = vpop.f32.mrf.mxu0
    %5145 = vmatprep.mubr.f32.mxu0 %v5054
    %5146 = vmatmul.mubr.f32.gmra.mxu0 %v5053
    %v5147 = vpop.f32.mrf.mxu0
    %v5148 = vadd.f32 0.0, %v5147
    %v5149 = vpop.f32.mrf.mxu0
    %5150 = vmatprep.mubr.f32.mxu0 %v5056
    %5151 = vmatmul.mubr.f32.gmra.mxu0 %v5055
    %v5152 = vpop.f32.mrf.mxu0
    %v5153 = vadd.f32 0.0, %v5152
    %v5154 = vpop.f32.mrf.mxu0
    %5155 = vmatprep.mubr.f32.mxu0 %v5058
    %5156 = vmatmul.mubr.f32.gmra.mxu0 %v5057
    %v5157 = vpop.f32.mrf.mxu0
    %v5158 = vadd.f32 0.0, %v5157
    %v5159 = vpop.f32.mrf.mxu0
    %5160 = vmatprep.mubr.f32.mxu0 %v5060
    %5161 = vmatmul.mubr.f32.gmra.mxu0 %v5059
    %v5162 = vpop.f32.mrf.mxu0
    %v5163 = vadd.f32 0.0, %v5162
    %v5164 = vpop.f32.mrf.mxu0
    %5165 = vdwg.mxu0
    %v5166 = vadd.f32 %v4661, %v5128
    %v5167 = vadd.f32 %v4666, %v5133
    %v5168 = vadd.f32 %v4742, %v5138
    %v5169 = vadd.f32 %v4747, %v5143
    %v5170 = vadd.f32 %v4823, %v5148
    %v5171 = vadd.f32 %v4828, %v5153
    %v5172 = vadd.f32 %v4904, %v5158
    %v5173 = vadd.f32 %v4909, %v5163
    %5176 = vrot.lane.b32.xlu0 %v5168, 32
    %v5177 = vpop.permute.xlu0 %5176
    %5178 = vrot.lane.b32.xlu0 %v5169, 32
    %v5179 = vpop.permute.xlu0 %5178
    %v5182 = vsel %vm1108, %v5166, %v5177
    %v5183 = vsel %vm1108, %v5167, %v5179
    %5186 = vrot.lane.b32.xlu0 %v5172, 32
    %v5187 = vpop.permute.xlu0 %5186
    %5188 = vrot.lane.b32.xlu0 %v5173, 32
    %v5189 = vpop.permute.xlu0 %5188
    %v5192 = vsel %vm1108, %v5170, %v5187
    %v5193 = vsel %vm1108, %v5171, %v5189
    %5202 = vrot.lane.b32.xlu0 %v3292, 64
    %v5203 = vpop.permute.xlu0 %5202
    %5204 = vrot.lane.b32.xlu0 %v3294, 64
    %v5205 = vpop.permute.xlu0 %5204
    %5206 = vrot.lane.b32.xlu0 %v3296, 64
    %v5207 = vpop.permute.xlu0 %5206
    %5208 = vrot.lane.b32.xlu0 %v3298, 64
    %v5209 = vpop.permute.xlu0 %5208
    %5210 = vrot.lane.b32.xlu0 %v3300, 64
    %v5211 = vpop.permute.xlu0 %5210
    %5212 = vrot.lane.b32.xlu0 %v3302, 64
    %v5213 = vpop.permute.xlu0 %5212
    %5214 = vrot.lane.b32.xlu0 %v3304, 64
    %v5215 = vpop.permute.xlu0 %5214
    %5216 = vrot.lane.b32.xlu0 %v3306, 64
    %v5217 = vpop.permute.xlu0 %5216
    %v5227 = vsel %vm962, %v5182, 0
    %v5230 = vsel %vm962, %v5183, 0
    %v5233 = vsel %vm962, %v5192, 0
    %v5236 = vsel %vm962, %v5193, 0
    %5238 = vmatprep.subr.mxu0 0.0
    %5239 = vmatpush1.msra.mxu0 0.0
    %5240 = vmatprep.subr.mxu0 0.0
    %5241 = vmatpush1.msra.mxu0 0.0
    %5242 = vmatprep.subr.mxu0 0.0
    %5243 = vmatpush1.msra.mxu0 0.0
    %5244 = vmatprep.subr.mxu0 0.0
    %5245 = vmatpush1.msra.mxu0 0.0
    %5246 = vmatprep.subr.mxu0 0.0
    %5247 = vmatpush1.msra.mxu0 0.0
    %5248 = vmatprep.subr.mxu0 0.0
    %5249 = vmatpush1.msra.mxu0 0.0
    %5250 = vmatprep.subr.mxu0 0.0
    %5251 = vmatpush1.msra.mxu0 0.0
    %5252 = vmatprep.subr.mxu0 0.0
    %5253 = vmatpush1.msra.mxu0 0.0
    %5254 = vmatprep.subr.mxu0 0.0
    %5255 = vmatpush1.msra.mxu0 %v5217
    %5256 = vmatprep.subr.mxu0 0.0
    %5257 = vmatpush1.msra.mxu0 %v5215
    %5258 = vmatprep.subr.mxu0 0.0
    %5259 = vmatpush1.msra.mxu0 %v5213
    %5260 = vmatprep.subr.mxu0 0.0
    %5261 = vmatpush1.msra.mxu0 %v5211
    %5262 = vmatprep.subr.mxu0 0.0
    %5263 = vmatpush1.msra.mxu0 %v5209
    %5264 = vmatprep.subr.mxu0 0.0
    %5265 = vmatpush1.msra.mxu0 %v5207
    %5266 = vmatprep.subr.mxu0 0.0
    %5267 = vmatpush1.msra.mxu0 %v5205
    %5268 = vmatprep.subr.mxu0 0.0
    %5269 = vmatpush1.msra.mxu0 %v5203
    %5270 = vmatprep.subr.mxu0 0.0
    %5271 = vmatpush2.msra.mxu0 0.0
    %5272 = vmatprep.subr.mxu0 0.0
    %5273 = vmatpush2.msra.mxu0 0.0
    %5274 = vmatprep.subr.mxu0 0.0
    %5275 = vmatpush2.msra.mxu0 0.0
    %5276 = vmatprep.subr.mxu0 0.0
    %5277 = vmatpush2.msra.mxu0 0.0
    %5278 = vmatprep.subr.mxu0 0.0
    %5279 = vmatpush2.msra.mxu0 0.0
    %5280 = vmatprep.subr.mxu0 0.0
    %5281 = vmatpush2.msra.mxu0 0.0
    %5282 = vmatprep.subr.mxu0 0.0
    %5283 = vmatpush2.msra.mxu0 0.0
    %5284 = vmatprep.subr.mxu0 0.0
    %5285 = vmatpush2.msra.mxu0 0.0
    %5286 = vmatprep.subr.mxu0 0.0
    %5287 = vmatpush2.msra.mxu0 0.0
    %5288 = vmatprep.subr.mxu0 0.0
    %5289 = vmatpush2.msra.mxu0 0.0
    %5290 = vmatprep.subr.mxu0 0.0
    %5291 = vmatpush2.msra.mxu0 0.0
    %5292 = vmatprep.subr.mxu0 0.0
    %5293 = vmatpush2.msra.mxu0 0.0
    %5294 = vmatprep.subr.mxu0 0.0
    %5295 = vmatpush2.msra.mxu0 0.0
    %5296 = vmatprep.subr.mxu0 0.0
    %5297 = vmatpush2.msra.mxu0 0.0
    %5298 = vmatprep.subr.mxu0 0.0
    %5299 = vmatpush2.msra.mxu0 0.0
    %5300 = vmatprep.subr.mxu0 0.0
    %5301 = vmatpush2.msra.mxu0 0.0
    %5302 = vmatprep.mubr.f32.mxu0 0.0
    %5303 = vmatmul.mubr.f32.gmra.mxu0 %v5227
    %v5304 = vpop.f32.mrf.mxu0
    %v5305 = vadd.f32 %v3309, %v5304
    %v5306 = vpop.f32.mrf.mxu0
    %5307 = vmatprep.mubr.f32.mxu0 0.0
    %5308 = vmatmul.mubr.f32.gmra.mxu0 %v5230
    %v5309 = vpop.f32.mrf.mxu0
    %v5310 = vadd.f32 %v3309, %v5309
    %v5311 = vpop.f32.mrf.mxu0
    %5312 = vmatprep.mubr.f32.mxu0 0.0
    %5313 = vmatmul.mubr.f32.gmra.mxu0 %v5233
    %v5314 = vpop.f32.mrf.mxu0
    %v5315 = vadd.f32 %v3309, %v5314
    %v5316 = vpop.f32.mrf.mxu0
    %5317 = vmatprep.mubr.f32.mxu0 0.0
    %5318 = vmatmul.mubr.f32.gmra.mxu0 %v5236
    %v5319 = vpop.f32.mrf.mxu0
    %v5320 = vadd.f32 %v3309, %v5319
    %v5321 = vpop.f32.mrf.mxu0
    %5322 = vdwg.mxu0
    %v5323 = vadd.f32 %v3484, %v5305
    %v5324 = vadd.f32 %v3485, %v5310
    %v5325 = vadd.f32 %v3486, %v5315
    %v5326 = vadd.f32 %v3487, %v5320
    %v5327 = vsel %vm962, %v5323, 0.0
    %5328 = vadd.xlane.f32.xlu0 %v5327
    %v5329 = vpop.xlane.xlu0 %5328
    %v5330 = vsel %vm962, %v5324, 0.0
    %5331 = vadd.xlane.f32.xlu0 %v5330
    %v5332 = vpop.xlane.xlu0 %5331
    %v5333 = vsel %vm962, %v5325, 0.0
    %5334 = vadd.xlane.f32.xlu0 %v5333
    %v5335 = vpop.xlane.xlu0 %5334
    %v5336 = vsel %vm962, %v5326, 0.0
    %5337 = vadd.xlane.f32.xlu0 %v5336
    %v5338 = vpop.xlane.xlu0 %5337
    %v5339 = vmul.f32 %v5329, %v2805
    %v5340 = vmul.f32 %v5332, %v2805
    %v5341 = vmul.f32 %v5335, %v2805
    %v5342 = vmul.f32 %v5338, %v2805
    %v5343 = vsub.f32 %v5323, %v5339
    %v5344 = vsub.f32 %v5324, %v5340
    %v5345 = vsub.f32 %v5325, %v5341
    %v5346 = vsub.f32 %v5326, %v5342
    %v5347 = vmul.f32 %v5343, %v5343
    %v5348 = vmul.f32 %v5344, %v5344
    %v5349 = vmul.f32 %v5345, %v5345
    %v5350 = vmul.f32 %v5346, %v5346
    %v5351 = vsel %vm962, %v5347, 0.0
    %5352 = vadd.xlane.f32.xlu0 %v5351
    %v5353 = vpop.xlane.xlu0 %5352
    %v5354 = vsel %vm962, %v5348, 0.0
    %5355 = vadd.xlane.f32.xlu0 %v5354
    %v5356 = vpop.xlane.xlu0 %5355
    %v5357 = vsel %vm962, %v5349, 0.0
    %5358 = vadd.xlane.f32.xlu0 %v5357
    %v5359 = vpop.xlane.xlu0 %5358
    %v5360 = vsel %vm962, %v5350, 0.0
    %5361 = vadd.xlane.f32.xlu0 %v5360
    %v5362 = vpop.xlane.xlu0 %5361
    %v5363 = vmul.f32 %v5353, %v2805
    %v5364 = vmul.f32 %v5356, %v2805
    %v5365 = vmul.f32 %v5359, %v2805
    %v5366 = vmul.f32 %v5362, %v2805
    %v5367 = vadd.f32 %v5363, 1e-05
    %v5368 = vadd.f32 %v5364, 1e-05
    %v5369 = vadd.f32 %v5365, 1e-05
    %v5370 = vadd.f32 %v5366, 1e-05
    %v5371 = vrsqrt.pop %v5367
    %v5372 = vrsqrt.pop %v5368
    %v5373 = vrsqrt.pop %v5369
    %v5374 = vrsqrt.pop %v5370
    %v5375 = vmul.f32 %v5343, %v5371
    %v5376 = vmul.f32 %v5344, %v5372
    %v5377 = vmul.f32 %v5345, %v5373
    %v5378 = vmul.f32 %v5346, %v5374
    %v5379 = vmul.f32 %v5375, %v3310
    %v5380 = vmul.f32 %v5376, %v3310
    %v5381 = vmul.f32 %v5377, %v3310
    %v5382 = vmul.f32 %v5378, %v3310
    %v5383 = vadd.f32 %v5379, %v3311
    %v5384 = vadd.f32 %v5380, %v3311
    %v5385 = vadd.f32 %v5381, %v3311
    %v5386 = vadd.f32 %v5382, %v3311
    %v5387 = vmul.f32 %v5383, %v930
    %v5388 = vmul.f32 %v5384, %v935
    %v5389 = vmul.f32 %v5385, %v940
    %v5390 = vmul.f32 %v5386, %v945
    %v5391 = vrot.slane %v5387, 7
    %v5392 = vrot.slane %v5388, 7
    %v5393 = vrot.slane %v5389, 7
    %v5394 = vrot.slane %v5390, 7
    %v5395 = vsel %vm2862, %v5393, %v5394
    %v5396 = vsel %vm2862, %v5392, %v5393
    %v5397 = vsel %vm2862, %v5391, %v5392
    %v5398 = vsel %vm2862, %v5394, %v5391
    %v5399 = vmul.f32 %v5398, %v2870
    %v5400 = vmul.f32 %v5397, %v2875
    %v5401 = vmul.f32 %v5396, %v2870
    %v5402 = vmul.f32 %v5395, %v2875
    %v5403 = vrot.slane %v5387, 1
    %v5404 = vrot.slane %v5388, 1
    %v5405 = vrot.slane %v5389, 1
    %v5406 = vrot.slane %v5390, 1
    %v5407 = vsel %vm2885, %v5405, %v5406
    %v5408 = vsel %vm2885, %v5404, %v5405
    %v5409 = vsel %vm2885, %v5403, %v5404
    %v5410 = vsel %vm2885, %v5406, %v5403
    %v5411 = vmul.f32 %v5409, %v2893
    %v5412 = vmul.f32 %v5408, %v2898
    %v5413 = vmul.f32 %v5407, %v2893
    %v5414 = vmul.f32 %v5410, %v2898
    %5419 = vrot.lane.b32.xlu0 %v5387, 64
    %v5420 = vpop.permute.xlu0 %5419
    %5421 = vrot.lane.b32.xlu0 %v5388, 64
    %v5422 = vpop.permute.xlu0 %5421
    %5423 = vrot.lane.b32.xlu0 %v5389, 64
    %v5424 = vpop.permute.xlu0 %5423
    %5425 = vrot.lane.b32.xlu0 %v5390, 64
    %v5426 = vpop.permute.xlu0 %5425
    %v5431 = vsel %vm962, %v5399, %v5420
    %v5432 = vsel %vm962, %v5400, %v5422
    %v5433 = vsel %vm962, %v5401, %v5424
    %v5434 = vsel %vm962, %v5402, %v5426
    %v5436 = vsel %vm962, %v5411, 0
    %v5439 = vsel %vm962, %v5412, 0
    %v5442 = vsel %vm962, %v5413, 0
    %v5445 = vsel %vm962, %v5414, 0
    %5447 = vmatprep.subr.mxu0 0.0
    %5448 = vmatpush1.msra.mxu0 %v3427
    %5449 = vmatprep.subr.mxu0 0.0
    %5450 = vmatpush1.msra.mxu0 %v3426
    %5451 = vmatprep.subr.mxu0 0.0
    %5452 = vmatpush1.msra.mxu0 %v3425
    %5453 = vmatprep.subr.mxu0 0.0
    %5454 = vmatpush1.msra.mxu0 %v3424
    %5455 = vmatprep.subr.mxu0 0.0
    %5456 = vmatpush1.msra.mxu0 %v3423
    %5457 = vmatprep.subr.mxu0 0.0
    %5458 = vmatpush1.msra.mxu0 %v3422
    %5459 = vmatprep.subr.mxu0 0.0
    %5460 = vmatpush1.msra.mxu0 %v3421
    %5461 = vmatprep.subr.mxu0 0.0
    %5462 = vmatpush1.msra.mxu0 %v3420
    %5463 = vmatprep.subr.mxu0 0.0
    %5464 = vmatpush1.msra.mxu0 %v3419
    %5465 = vmatprep.subr.mxu0 0.0
    %5466 = vmatpush1.msra.mxu0 %v3418
    %5467 = vmatprep.subr.mxu0 0.0
    %5468 = vmatpush1.msra.mxu0 %v3417
    %5469 = vmatprep.subr.mxu0 0.0
    %5470 = vmatpush1.msra.mxu0 %v3416
    %5471 = vmatprep.subr.mxu0 0.0
    %5472 = vmatpush1.msra.mxu0 %v3415
    %5473 = vmatprep.subr.mxu0 0.0
    %5474 = vmatpush1.msra.mxu0 %v3414
    %5475 = vmatprep.subr.mxu0 0.0
    %5476 = vmatpush1.msra.mxu0 %v3413
    %5477 = vmatprep.subr.mxu0 0.0
    %5478 = vmatpush1.msra.mxu0 %v3412
    %5479 = vmatprep.subr.mxu0 0.0
    %5480 = vmatpush2.msra.mxu0 0.0
    %5481 = vmatprep.subr.mxu0 0.0
    %5482 = vmatpush2.msra.mxu0 0.0
    %5483 = vmatprep.subr.mxu0 0.0
    %5484 = vmatpush2.msra.mxu0 0.0
    %5485 = vmatprep.subr.mxu0 0.0
    %5486 = vmatpush2.msra.mxu0 0.0
    %5487 = vmatprep.subr.mxu0 0.0
    %5488 = vmatpush2.msra.mxu0 0.0
    %5489 = vmatprep.subr.mxu0 0.0
    %5490 = vmatpush2.msra.mxu0 0.0
    %5491 = vmatprep.subr.mxu0 0.0
    %5492 = vmatpush2.msra.mxu0 0.0
    %5493 = vmatprep.subr.mxu0 0.0
    %5494 = vmatpush2.msra.mxu0 0.0
    %5495 = vmatprep.subr.mxu0 0.0
    %5496 = vmatpush2.msra.mxu0 %v3435
    %5497 = vmatprep.subr.mxu0 0.0
    %5498 = vmatpush2.msra.mxu0 %v3434
    %5499 = vmatprep.subr.mxu0 0.0
    %5500 = vmatpush2.msra.mxu0 %v3433
    %5501 = vmatprep.subr.mxu0 0.0
    %5502 = vmatpush2.msra.mxu0 %v3432
    %5503 = vmatprep.subr.mxu0 0.0
    %5504 = vmatpush2.msra.mxu0 %v3431
    %5505 = vmatprep.subr.mxu0 0.0
    %5506 = vmatpush2.msra.mxu0 %v3430
    %5507 = vmatprep.subr.mxu0 0.0
    %5508 = vmatpush2.msra.mxu0 %v3429
    %5509 = vmatprep.subr.mxu0 0.0
    %5510 = vmatpush2.msra.mxu0 %v3428
    %5511 = vmatprep.mubr.f32.mxu0 %v5436
    %5512 = vmatmul.mubr.f32.gmra.mxu0 %v5431
    %v5513 = vpop.f32.mrf.mxu0
    %v5514 = vadd.f32 %v3312, %v5513
    %v5515 = vpop.f32.mrf.mxu0
    %5516 = vmatprep.mubr.f32.mxu0 %v5439
    %5517 = vmatmul.mubr.f32.gmra.mxu0 %v5432
    %v5518 = vpop.f32.mrf.mxu0
    %v5519 = vadd.f32 %v3312, %v5518
    %v5520 = vpop.f32.mrf.mxu0
    %5521 = vmatprep.mubr.f32.mxu0 %v5442
    %5522 = vmatmul.mubr.f32.gmra.mxu0 %v5433
    %v5523 = vpop.f32.mrf.mxu0
    %v5524 = vadd.f32 %v3312, %v5523
    %v5525 = vpop.f32.mrf.mxu0
    %5526 = vmatprep.mubr.f32.mxu0 %v5445
    %5527 = vmatmul.mubr.f32.gmra.mxu0 %v5434
    %v5528 = vpop.f32.mrf.mxu0
    %v5529 = vadd.f32 %v3312, %v5528
    %v5530 = vpop.f32.mrf.mxu0
    %5531 = vdwg.mxu0
    %v5532 = vmax.f32 %v5514, 0.0
    %v5533 = vmax.f32 %v5519, 0.0
    %v5534 = vmax.f32 %v5524, 0.0
    %v5535 = vmax.f32 %v5529, 0.0
    %v5536 = vmul.f32 %v5532, %v930
    %v5537 = vmul.f32 %v5533, %v935
    %v5538 = vmul.f32 %v5534, %v940
    %v5539 = vmul.f32 %v5535, %v945
    %v5540 = vrot.slane %v5536, 7
    %v5541 = vrot.slane %v5537, 7
    %v5542 = vrot.slane %v5538, 7
    %v5543 = vrot.slane %v5539, 7
    %v5544 = vsel %vm2862, %v5542, %v5543
    %v5545 = vsel %vm2862, %v5541, %v5542
    %v5546 = vsel %vm2862, %v5540, %v5541
    %v5547 = vsel %vm2862, %v5543, %v5540
    %v5548 = vmul.f32 %v5547, %v2870
    %v5549 = vmul.f32 %v5546, %v2875
    %v5550 = vmul.f32 %v5545, %v2870
    %v5551 = vmul.f32 %v5544, %v2875
    %v5552 = vrot.slane %v5536, 1
    %v5553 = vrot.slane %v5537, 1
    %v5554 = vrot.slane %v5538, 1
    %v5555 = vrot.slane %v5539, 1
    %v5556 = vsel %vm2885, %v5554, %v5555
    %v5557 = vsel %vm2885, %v5553, %v5554
    %v5558 = vsel %vm2885, %v5552, %v5553
    %v5559 = vsel %vm2885, %v5555, %v5552
    %v5560 = vmul.f32 %v5558, %v2893
    %v5561 = vmul.f32 %v5557, %v2898
    %v5562 = vmul.f32 %v5556, %v2893
    %v5563 = vmul.f32 %v5559, %v2898
    %5564 = vmatprep.subr.mxu0 0.0
    %5565 = vmatpush1.msra.mxu0 %v3451
    %5566 = vmatprep.subr.mxu0 0.0
    %5567 = vmatpush1.msra.mxu0 %v3450
    %5568 = vmatprep.subr.mxu0 0.0
    %5569 = vmatpush1.msra.mxu0 %v3449
    %5570 = vmatprep.subr.mxu0 0.0
    %5571 = vmatpush1.msra.mxu0 %v3448
    %5572 = vmatprep.subr.mxu0 0.0
    %5573 = vmatpush1.msra.mxu0 %v3447
    %5574 = vmatprep.subr.mxu0 0.0
    %5575 = vmatpush1.msra.mxu0 %v3446
    %5576 = vmatprep.subr.mxu0 0.0
    %5577 = vmatpush1.msra.mxu0 %v3445
    %5578 = vmatprep.subr.mxu0 0.0
    %5579 = vmatpush1.msra.mxu0 %v3444
    %5580 = vmatprep.subr.mxu0 0.0
    %5581 = vmatpush1.msra.mxu0 %v3443
    %5582 = vmatprep.subr.mxu0 0.0
    %5583 = vmatpush1.msra.mxu0 %v3442
    %5584 = vmatprep.subr.mxu0 0.0
    %5585 = vmatpush1.msra.mxu0 %v3441
    %5586 = vmatprep.subr.mxu0 0.0
    %5587 = vmatpush1.msra.mxu0 %v3440
    %5588 = vmatprep.subr.mxu0 0.0
    %5589 = vmatpush1.msra.mxu0 %v3439
    %5590 = vmatprep.subr.mxu0 0.0
    %5591 = vmatpush1.msra.mxu0 %v3438
    %5592 = vmatprep.subr.mxu0 0.0
    %5593 = vmatpush1.msra.mxu0 %v3437
    %5594 = vmatprep.subr.mxu0 0.0
    %5595 = vmatpush1.msra.mxu0 %v3436
    %5596 = vmatprep.subr.mxu0 0.0
    %5597 = vmatpush2.msra.mxu0 %v3467
    %5598 = vmatprep.subr.mxu0 0.0
    %5599 = vmatpush2.msra.mxu0 %v3466
    %5600 = vmatprep.subr.mxu0 0.0
    %5601 = vmatpush2.msra.mxu0 %v3465
    %5602 = vmatprep.subr.mxu0 0.0
    %5603 = vmatpush2.msra.mxu0 %v3464
    %5604 = vmatprep.subr.mxu0 0.0
    %5605 = vmatpush2.msra.mxu0 %v3463
    %5606 = vmatprep.subr.mxu0 0.0
    %5607 = vmatpush2.msra.mxu0 %v3462
    %5608 = vmatprep.subr.mxu0 0.0
    %5609 = vmatpush2.msra.mxu0 %v3461
    %5610 = vmatprep.subr.mxu0 0.0
    %5611 = vmatpush2.msra.mxu0 %v3460
    %5612 = vmatprep.subr.mxu0 0.0
    %5613 = vmatpush2.msra.mxu0 %v3459
    %5614 = vmatprep.subr.mxu0 0.0
    %5615 = vmatpush2.msra.mxu0 %v3458
    %5616 = vmatprep.subr.mxu0 0.0
    %5617 = vmatpush2.msra.mxu0 %v3457
    %5618 = vmatprep.subr.mxu0 0.0
    %5619 = vmatpush2.msra.mxu0 %v3456
    %5620 = vmatprep.subr.mxu0 0.0
    %5621 = vmatpush2.msra.mxu0 %v3455
    %5622 = vmatprep.subr.mxu0 0.0
    %5623 = vmatpush2.msra.mxu0 %v3454
    %5624 = vmatprep.subr.mxu0 0.0
    %5625 = vmatpush2.msra.mxu0 %v3453
    %5626 = vmatprep.subr.mxu0 0.0
    %5627 = vmatpush2.msra.mxu0 %v3452
    %5628 = vmatprep.mubr.f32.mxu0 %v5536
    %5629 = vmatmul.mubr.f32.gmra.mxu0 %v5548
    %v5630 = vpop.f32.mrf.mxu0
    %v5631 = vadd.f32 %v3313, %v5630
    %v5632 = vpop.f32.mrf.mxu0
    %5633 = vmatprep.mubr.f32.mxu0 %v5537
    %5634 = vmatmul.mubr.f32.gmra.mxu0 %v5549
    %v5635 = vpop.f32.mrf.mxu0
    %v5636 = vadd.f32 %v3313, %v5635
    %v5637 = vpop.f32.mrf.mxu0
    %5638 = vmatprep.mubr.f32.mxu0 %v5538
    %5639 = vmatmul.mubr.f32.gmra.mxu0 %v5550
    %v5640 = vpop.f32.mrf.mxu0
    %v5641 = vadd.f32 %v3313, %v5640
    %v5642 = vpop.f32.mrf.mxu0
    %5643 = vmatprep.mubr.f32.mxu0 %v5539
    %5644 = vmatmul.mubr.f32.gmra.mxu0 %v5551
    %v5645 = vpop.f32.mrf.mxu0
    %v5646 = vadd.f32 %v3313, %v5645
    %v5647 = vpop.f32.mrf.mxu0
    %5648 = vdwg.mxu0
    %5649 = vmatprep.subr.mxu0 0.0
    %5650 = vmatpush1.msra.mxu0 %v3483
    %5651 = vmatprep.subr.mxu0 0.0
    %5652 = vmatpush1.msra.mxu0 %v3482
    %5653 = vmatprep.subr.mxu0 0.0
    %5654 = vmatpush1.msra.mxu0 %v3481
    %5655 = vmatprep.subr.mxu0 0.0
    %5656 = vmatpush1.msra.mxu0 %v3480
    %5657 = vmatprep.subr.mxu0 0.0
    %5658 = vmatpush1.msra.mxu0 %v3479
    %5659 = vmatprep.subr.mxu0 0.0
    %5660 = vmatpush1.msra.mxu0 %v3478
    %5661 = vmatprep.subr.mxu0 0.0
    %5662 = vmatpush1.msra.mxu0 %v3477
    %5663 = vmatprep.subr.mxu0 0.0
    %5664 = vmatpush1.msra.mxu0 %v3476
    %5665 = vmatprep.subr.mxu0 0.0
    %5666 = vmatpush1.msra.mxu0 %v3475
    %5667 = vmatprep.subr.mxu0 0.0
    %5668 = vmatpush1.msra.mxu0 %v3474
    %5669 = vmatprep.subr.mxu0 0.0
    %5670 = vmatpush1.msra.mxu0 %v3473
    %5671 = vmatprep.subr.mxu0 0.0
    %5672 = vmatpush1.msra.mxu0 %v3472
    %5673 = vmatprep.subr.mxu0 0.0
    %5674 = vmatpush1.msra.mxu0 %v3471
    %5675 = vmatprep.subr.mxu0 0.0
    %5676 = vmatpush1.msra.mxu0 %v3470
    %5677 = vmatprep.subr.mxu0 0.0
    %5678 = vmatpush1.msra.mxu0 %v3469
    %5679 = vmatprep.subr.mxu0 0.0
    %5680 = vmatpush1.msra.mxu0 %v3468
    %5681 = vmatprep.subr.mxu0 0.0
    %5682 = vmatpush2.msra.mxu0 0.0
    %5683 = vmatprep.subr.mxu0 0.0
    %5684 = vmatpush2.msra.mxu0 0.0
    %5685 = vmatprep.subr.mxu0 0.0
    %5686 = vmatpush2.msra.mxu0 0.0
    %5687 = vmatprep.subr.mxu0 0.0
    %5688 = vmatpush2.msra.mxu0 0.0
    %5689 = vmatprep.subr.mxu0 0.0
    %5690 = vmatpush2.msra.mxu0 0.0
    %5691 = vmatprep.subr.mxu0 0.0
    %5692 = vmatpush2.msra.mxu0 0.0
    %5693 = vmatprep.subr.mxu0 0.0
    %5694 = vmatpush2.msra.mxu0 0.0
    %5695 = vmatprep.subr.mxu0 0.0
    %5696 = vmatpush2.msra.mxu0 0.0
    %5697 = vmatprep.subr.mxu0 0.0
    %5698 = vmatpush2.msra.mxu0 0.0
    %5699 = vmatprep.subr.mxu0 0.0
    %5700 = vmatpush2.msra.mxu0 0.0
    %5701 = vmatprep.subr.mxu0 0.0
    %5702 = vmatpush2.msra.mxu0 0.0
    %5703 = vmatprep.subr.mxu0 0.0
    %5704 = vmatpush2.msra.mxu0 0.0
    %5705 = vmatprep.subr.mxu0 0.0
    %5706 = vmatpush2.msra.mxu0 0.0
    %5707 = vmatprep.subr.mxu0 0.0
    %5708 = vmatpush2.msra.mxu0 0.0
    %5709 = vmatprep.subr.mxu0 0.0
    %5710 = vmatpush2.msra.mxu0 0.0
    %5711 = vmatprep.subr.mxu0 0.0
    %5712 = vmatpush2.msra.mxu0 0.0
    %5713 = vmatprep.mubr.f32.mxu0 0.0
    %5714 = vmatmul.mubr.f32.gmra.mxu0 %v5560
    %v5715 = vpop.f32.mrf.mxu0
    %v5716 = vadd.f32 %v5631, %v5715
    %v5717 = vpop.f32.mrf.mxu0
    %5718 = vmatprep.mubr.f32.mxu0 0.0
    %5719 = vmatmul.mubr.f32.gmra.mxu0 %v5561
    %v5720 = vpop.f32.mrf.mxu0
    %v5721 = vadd.f32 %v5636, %v5720
    %v5722 = vpop.f32.mrf.mxu0
    %5723 = vmatprep.mubr.f32.mxu0 0.0
    %5724 = vmatmul.mubr.f32.gmra.mxu0 %v5562
    %v5725 = vpop.f32.mrf.mxu0
    %v5726 = vadd.f32 %v5641, %v5725
    %v5727 = vpop.f32.mrf.mxu0
    %5728 = vmatprep.mubr.f32.mxu0 0.0
    %5729 = vmatmul.mubr.f32.gmra.mxu0 %v5563
    %v5730 = vpop.f32.mrf.mxu0
    %v5731 = vadd.f32 %v5646, %v5730
    %v5732 = vpop.f32.mrf.mxu0
    %5733 = vdwg.mxu0
    %v5734 = vmul.f32 %v5716, %v930
    %v5735 = vmul.f32 %v5721, %v935
    %v5736 = vmul.f32 %v5726, %v940
    %v5737 = vmul.f32 %v5731, %v945
    %v5738 = vadd.f32 %v5383, %v5734
    %v5739 = vadd.f32 %v5384, %v5735
    %v5740 = vadd.f32 %v5385, %v5736
    %v5741 = vadd.f32 %v5386, %v5737
    %v5742 = vsel %vm962, %v5738, 0.0
    %5743 = vadd.xlane.f32.xlu0 %v5742
    %v5744 = vpop.xlane.xlu0 %5743
    %v5745 = vsel %vm962, %v5739, 0.0
    %5746 = vadd.xlane.f32.xlu0 %v5745
    %v5747 = vpop.xlane.xlu0 %5746
    %v5748 = vsel %vm962, %v5740, 0.0
    %5749 = vadd.xlane.f32.xlu0 %v5748
    %v5750 = vpop.xlane.xlu0 %5749
    %v5751 = vsel %vm962, %v5741, 0.0
    %5752 = vadd.xlane.f32.xlu0 %v5751
    %v5753 = vpop.xlane.xlu0 %5752
    %v5754 = vmul.f32 %v5744, %v2805
    %v5755 = vmul.f32 %v5747, %v2805
    %v5756 = vmul.f32 %v5750, %v2805
    %v5757 = vmul.f32 %v5753, %v2805
    %v5758 = vsub.f32 %v5738, %v5754
    %v5759 = vsub.f32 %v5739, %v5755
    %v5760 = vsub.f32 %v5740, %v5756
    %v5761 = vsub.f32 %v5741, %v5757
    %v5762 = vmul.f32 %v5758, %v5758
    %v5763 = vmul.f32 %v5759, %v5759
    %v5764 = vmul.f32 %v5760, %v5760
    %v5765 = vmul.f32 %v5761, %v5761
    %v5766 = vsel %vm962, %v5762, 0.0
    %5767 = vadd.xlane.f32.xlu0 %v5766
    %v5768 = vpop.xlane.xlu0 %5767
    %v5769 = vsel %vm962, %v5763, 0.0
    %5770 = vadd.xlane.f32.xlu0 %v5769
    %v5771 = vpop.xlane.xlu0 %5770
    %v5772 = vsel %vm962, %v5764, 0.0
    %5773 = vadd.xlane.f32.xlu0 %v5772
    %v5774 = vpop.xlane.xlu0 %5773
    %v5775 = vsel %vm962, %v5765, 0.0
    %5776 = vadd.xlane.f32.xlu0 %v5775
    %v5777 = vpop.xlane.xlu0 %5776
    %v5778 = vmul.f32 %v5768, %v2805
    %v5779 = vmul.f32 %v5771, %v2805
    %v5780 = vmul.f32 %v5774, %v2805
    %v5781 = vmul.f32 %v5777, %v2805
    %v5782 = vadd.f32 %v5778, 1e-05
    %v5783 = vadd.f32 %v5779, 1e-05
    %v5784 = vadd.f32 %v5780, 1e-05
    %v5785 = vadd.f32 %v5781, 1e-05
    %v5786 = vrsqrt.pop %v5782
    %v5787 = vrsqrt.pop %v5783
    %v5788 = vrsqrt.pop %v5784
    %v5789 = vrsqrt.pop %v5785
    %v5790 = vmul.f32 %v5758, %v5786
    %v5791 = vmul.f32 %v5759, %v5787
    %v5792 = vmul.f32 %v5760, %v5788
    %v5793 = vmul.f32 %v5761, %v5789
    %v5794 = vmul.f32 %v5790, %v3314
    %v5795 = vmul.f32 %v5791, %v3314
    %v5796 = vmul.f32 %v5792, %v3314
    %v5797 = vmul.f32 %v5793, %v3314
    %v5798 = vadd.f32 %v5794, %v3315
    %v5799 = vadd.f32 %v5795, %v3315
    %v5800 = vadd.f32 %v5796, %v3315
    %v5801 = vadd.f32 %v5797, %v3315
    %v5802 = vmul.f32 %v5798, %v930
    %v5803 = vmul.f32 %v5799, %v935
    %v5804 = vmul.f32 %v5800, %v940
    %v5805 = vmul.f32 %v5801, %v945
    %v5806 = vld [vmem:[%s6 + $0x100] sm:$0xff]
    %v5807 = vld [vmem:[%s6 + $0x110] sm:$0xff]
    %v5808 = vld [vmem:[%s6 + $0x120] sm:$0xff]
    %v5809 = vld [vmem:[%s6 + $0x130] sm:$0xff]
    %v5810 = vld [vmem:[%s6 + $0x140] sm:$0xff]
    %v5811 = vld [vmem:[%s6 + $0x150] sm:$0xff]
    %v5812 = vld [vmem:[%s6 + $0x160] sm:$0xff]
    %v5813 = vld [vmem:[%s6 + $0x170] sm:$0xff]
    %v5814 = vld [vmem:[%s11 + $0x1] ss:$0 sm:$0xff]
    %v5816 = vsel %vm962, %v5802, 0
    %v5819 = vsel %vm962, %v5803, 0
    %v5822 = vsel %vm962, %v5804, 0
    %v5825 = vsel %vm962, %v5805, 0
    %5827 = vmatprep.subr.mxu0 0.0
    %5828 = vmatpush1.msra.mxu0 0.0
    %5829 = vmatprep.subr.mxu0 0.0
    %5830 = vmatpush1.msra.mxu0 0.0
    %5831 = vmatprep.subr.mxu0 0.0
    %5832 = vmatpush1.msra.mxu0 0.0
    %5833 = vmatprep.subr.mxu0 0.0
    %5834 = vmatpush1.msra.mxu0 0.0
    %5835 = vmatprep.subr.mxu0 0.0
    %5836 = vmatpush1.msra.mxu0 0.0
    %5837 = vmatprep.subr.mxu0 0.0
    %5838 = vmatpush1.msra.mxu0 0.0
    %5839 = vmatprep.subr.mxu0 0.0
    %5840 = vmatpush1.msra.mxu0 0.0
    %5841 = vmatprep.subr.mxu0 0.0
    %5842 = vmatpush1.msra.mxu0 0.0
    %5843 = vmatprep.subr.mxu0 0.0
    %5844 = vmatpush1.msra.mxu0 %v5813
    %5845 = vmatprep.subr.mxu0 0.0
    %5846 = vmatpush1.msra.mxu0 %v5812
    %5847 = vmatprep.subr.mxu0 0.0
    %5848 = vmatpush1.msra.mxu0 %v5811
    %5849 = vmatprep.subr.mxu0 0.0
    %5850 = vmatpush1.msra.mxu0 %v5810
    %5851 = vmatprep.subr.mxu0 0.0
    %5852 = vmatpush1.msra.mxu0 %v5809
    %5853 = vmatprep.subr.mxu0 0.0
    %5854 = vmatpush1.msra.mxu0 %v5808
    %5855 = vmatprep.subr.mxu0 0.0
    %5856 = vmatpush1.msra.mxu0 %v5807
    %5857 = vmatprep.subr.mxu0 0.0
    %5858 = vmatpush1.msra.mxu0 %v5806
    %5859 = vmatprep.subr.mxu0 0.0
    %5860 = vmatpush2.msra.mxu0 0.0
    %5861 = vmatprep.subr.mxu0 0.0
    %5862 = vmatpush2.msra.mxu0 0.0
    %5863 = vmatprep.subr.mxu0 0.0
    %5864 = vmatpush2.msra.mxu0 0.0
    %5865 = vmatprep.subr.mxu0 0.0
    %5866 = vmatpush2.msra.mxu0 0.0
    %5867 = vmatprep.subr.mxu0 0.0
    %5868 = vmatpush2.msra.mxu0 0.0
    %5869 = vmatprep.subr.mxu0 0.0
    %5870 = vmatpush2.msra.mxu0 0.0
    %5871 = vmatprep.subr.mxu0 0.0
    %5872 = vmatpush2.msra.mxu0 0.0
    %5873 = vmatprep.subr.mxu0 0.0
    %5874 = vmatpush2.msra.mxu0 0.0
    %5875 = vmatprep.subr.mxu0 0.0
    %5876 = vmatpush2.msra.mxu0 0.0
    %5877 = vmatprep.subr.mxu0 0.0
    %5878 = vmatpush2.msra.mxu0 0.0
    %5879 = vmatprep.subr.mxu0 0.0
    %5880 = vmatpush2.msra.mxu0 0.0
    %5881 = vmatprep.subr.mxu0 0.0
    %5882 = vmatpush2.msra.mxu0 0.0
    %5883 = vmatprep.subr.mxu0 0.0
    %5884 = vmatpush2.msra.mxu0 0.0
    %5885 = vmatprep.subr.mxu0 0.0
    %5886 = vmatpush2.msra.mxu0 0.0
    %5887 = vmatprep.subr.mxu0 0.0
    %5888 = vmatpush2.msra.mxu0 0.0
    %5889 = vmatprep.subr.mxu0 0.0
    %5890 = vmatpush2.msra.mxu0 0.0
    %5891 = vmatprep.mubr.f32.mxu0 0.0
    %5892 = vmatmul.mubr.f32.gmra.mxu0 %v5816
    %v5893 = vpop.f32.mrf.mxu0
    %v5894 = vadd.f32 %v5814, %v5893
    %v5895 = vpop.f32.mrf.mxu0
    %5896 = vmatprep.mubr.f32.mxu0 0.0
    %5897 = vmatmul.mubr.f32.gmra.mxu0 %v5819
    %v5898 = vpop.f32.mrf.mxu0
    %v5899 = vadd.f32 %v5814, %v5898
    %v5900 = vpop.f32.mrf.mxu0
    %5901 = vmatprep.mubr.f32.mxu0 0.0
    %5902 = vmatmul.mubr.f32.gmra.mxu0 %v5822
    %v5903 = vpop.f32.mrf.mxu0
    %v5904 = vadd.f32 %v5814, %v5903
    %v5905 = vpop.f32.mrf.mxu0
    %5906 = vmatprep.mubr.f32.mxu0 0.0
    %5907 = vmatmul.mubr.f32.gmra.mxu0 %v5825
    %v5908 = vpop.f32.mrf.mxu0
    %v5909 = vadd.f32 %v5814, %v5908
    %v5910 = vpop.f32.mrf.mxu0
    %5911 = vdwg.mxu0
    %v5912 = vmul.f32 %v5894, %v930
    %v5913 = vmul.f32 %v5899, %v935
    %v5914 = vmul.f32 %v5904, %v940
    %v5915 = vmul.f32 %v5909, %v945
    %vm5916 = vcmask 64512
    %5917 = vst.msk [vmem:[%s12] sm:$0xff] %vm5916, %v5912
    %5918 = vst.msk [vmem:[%s12 + $0x8] sm:$0xff] %vm5916, %v5913
    %5919 = vst.msk [vmem:[%s12 + $0x10] sm:$0xff] %vm5916, %v5914
    %5920 = vst.msk [vmem:[%s12 + $0x18] sm:$0xff] %vm5916, %v5915
    // Predicated region
    $region54: #{tpu_custom_call.1} parent=1 // pred_check
      _
    $region55: #{tpu_custom_call.1} parent=1 // pred_check_branch
      %5922 = sbr.rel (0) target = $region57
    $region56: #{tpu_custom_call.1} parent=1 // pred_region
      _
    $region57: #{tpu_custom_call.1} parent=1 // pred_fallthru
      _
    // Predicated region
    $region58: #{tpu_custom_call.1} parent=1 // pred_check
      _
    $region59: #{tpu_custom_call.1} parent=1 // pred_check_branch
      %5924 = sbr.rel (0) target = $region61
    $region60: #{tpu_custom_call.1} parent=1 // pred_region
      _
    $region61: #{tpu_custom_call.1} parent=1 // pred_fallthru
      _
    %5925 = vsyncpa [#allocation3], 1

</llo_original>
